<compile_context>
chip_gen: v6e
topology: v6e:2x2x1
jax: 0.10.0
libtpu: 0.0.40
codegen_flags: <defaults>
</compile_context>

<pallas_src>
import functools

import jax
import jax.numpy as jnp
from jax.experimental import pallas as pl
from jax.experimental.pallas import tpu as pltpu

NUM_CLASSES = 10
HEAD_PAD = 128          # lane-dense head width; sliced back to 10 in wrapper
FEAT_DIM = 4096
BETA = 0.5


# ----------------------------------------------------------------------------
# Kernel 1: Bernoulli spike encoding  (torch.where(rand <= x, 1, 0)) -> bf16
# ----------------------------------------------------------------------------
def _encode_kernel(x_ref, rand_ref, spk_ref):
    # 0.0 / 1.0 are exact in bf16; emitting bf16 halves the spike HBM traffic
    # and feeds the MXU at 2x the f32 rate downstream.
    spk_ref[0] = (rand_ref[0] <= x_ref[...]).astype(jnp.bfloat16)


def encode_spikes(x2d, rand):
    """x2d: (n, K) analog in [0,1]; rand: (T_snn, n, K) uniform -> bf16 spikes."""
    t_snn, n, k_dim = rand.shape
    return pl.pallas_call(
        _encode_kernel,
        out_shape=jax.ShapeDtypeStruct((t_snn, n, k_dim), jnp.bfloat16),
        grid=(t_snn,),
        in_specs=[
            pl.BlockSpec((n, k_dim), lambda s: (0, 0)),
            pl.BlockSpec((1, n, k_dim), lambda s: (s, 0, 0)),
        ],
        out_specs=pl.BlockSpec((1, n, k_dim), lambda s: (s, 0, 0)),
        # steps are independent -> parallel (uses both TCs on v7x)
        compiler_params=pltpu.CompilerParams(
            dimension_semantics=("parallel",)),
    )(x2d, rand)


# ----------------------------------------------------------------------------
# Kernel 2: fused backbone (stand-in linear -> 4096) + head Linear (4096->128)
#   grid = (K_tiles,)  — weights stream from HBM exactly once, f32 accumulator
#   lives in VMEM, head matmul runs as an epilogue at the last K tile.
# ----------------------------------------------------------------------------
def _backbone_head_kernel(spk_ref, wb_ref, wo_ref, b_ref, cur_ref, acc_ref):
    k = pl.program_id(0)

    @pl.when(k == 0)
    def _():
        acc_ref[...] = jnp.zeros_like(acc_ref)

    acc_ref[...] += jnp.dot(spk_ref[...], wb_ref[...],
                            preferred_element_type=jnp.float32)

    @pl.when(k == pl.num_programs(0) - 1)
    def _():
        feats = acc_ref[...].astype(jnp.bfloat16)
        cur_ref[...] = (jnp.dot(feats, wo_ref[...],
                                preferred_element_type=jnp.float32)
                        + b_ref[...])


def _pick_tk(k_dim):
    for tk in (512, 1024, 256, 128):
        if k_dim % tk == 0:
            return tk
    return k_dim


def backbone_head(spk2d, w_backbone, w_out_pad, b_out_pad):
    """spk2d: (M, K) bf16 -> pre-activation currents (M, HEAD_PAD) f32."""
    m, k_dim = spk2d.shape
    feat = w_backbone.shape[1]
    out_w = w_out_pad.shape[1]
    tk = _pick_tk(k_dim)
    # VMEM budget (bf16 weights, tk<=1024): weight tile <= 8 MB * 2 buffers,
    # head weight 1 MB, acc (M, 4096) f32 — comfortably under v7x's 64 MiB.
    return pl.pallas_call(
        _backbone_head_kernel,
        out_shape=jax.ShapeDtypeStruct((m, out_w), jnp.float32),
        grid=(k_dim // tk,),
        in_specs=[
            pl.BlockSpec((m, tk), lambda kk: (0, kk)),
            pl.BlockSpec((tk, feat), lambda kk: (kk, 0)),
            pl.BlockSpec((feat, out_w), lambda kk: (0, 0)),
            pl.BlockSpec((1, out_w), lambda kk: (0, 0)),
        ],
        out_specs=pl.BlockSpec((m, out_w), lambda kk: (0, 0)),
        scratch_shapes=[pltpu.VMEM((m, feat), jnp.float32)],
        compiler_params=pltpu.CompilerParams(
            dimension_semantics=("arbitrary",)),
    )(spk2d, w_backbone, w_out_pad, b_out_pad)


# ----------------------------------------------------------------------------
# Kernel 3: snntorch Leaky LIF recurrence over SNN time (membrane in VMEM)
# ----------------------------------------------------------------------------
def _lif_kernel(cur_ref, spk_ref, mem_ref, *, beta, thr):
    @pl.when(pl.program_id(0) == 0)
    def _():                                   # utils.reset(out_layer)
        mem_ref[...] = jnp.zeros_like(mem_ref)

    cur = cur_ref[0]
    mem_prev = mem_ref[...]
    # snntorch Leaky: reset (subtract) keyed off the PREVIOUS membrane
    reset = (mem_prev > thr).astype(jnp.float32)
    mem_new = beta * mem_prev + cur - reset * thr
    spk_ref[0] = (mem_new > thr).astype(jnp.float32)
    mem_ref[...] = mem_new


def lif_recurrence(cur3d, *, thr, beta=BETA):
    t_snn, n, out_w = cur3d.shape
    return pl.pallas_call(
        functools.partial(_lif_kernel, beta=beta, thr=thr),
        out_shape=jax.ShapeDtypeStruct((t_snn, n, out_w), jnp.float32),
        grid=(t_snn,),
        in_specs=[pl.BlockSpec((1, n, out_w), lambda s: (s, 0, 0))],
        out_specs=pl.BlockSpec((1, n, out_w), lambda s: (s, 0, 0)),
        scratch_shapes=[pltpu.VMEM((n, out_w), jnp.float32)],
        compiler_params=pltpu.CompilerParams(
            dimension_semantics=("arbitrary",)),     # carried membrane state
    )(cur3d)


# ----------------------------------------------------------------------------
# Full ECOSNN forward
# ----------------------------------------------------------------------------
def eco_snn_forward(x, params, rng_key, *, snn_time_step, snn_threshold):
    """x: [n, t, c, h, w] analog in [0,1] -> [snn_time_step, n, 10] spikes."""
    n, t, c, h, w = x.shape
    k_dim = t * c * h * w
    x2d = x.reshape(n, k_dim).astype(jnp.float32)

    # Bernoulli rate coding.  TODO(synk): in-kernel pltpu.prng_* has no
    # CPU/interpret lowering, so uniforms come from jax.random and only the
    # compare + bf16 cast runs in the Pallas encode kernel.
    rand = jax.random.uniform(rng_key, (snn_time_step, n, k_dim), jnp.float32)
    spikes = encode_spikes(x2d, rand)                       # (T, n, K) bf16
    spk2d = spikes.reshape(snn_time_step * n, k_dim)        # M = T*n rows

    # pad the 10-wide head to 128 lanes (unmasked stores, full MXU columns)
    w_out_pad = jnp.pad(params["w_out"],
                        ((0, 0), (0, HEAD_PAD - NUM_CLASSES))).astype(jnp.bfloat16)
    b_out_pad = jnp.pad(params["b_out"],
                        ((0, 0), (0, HEAD_PAD - NUM_CLASSES))).astype(jnp.float32)

    # one fused bf16 matmul for ALL SNN steps: backbone + head Linear
    cur = backbone_head(spk2d,
                        params["w_backbone"].astype(jnp.bfloat16),
                        w_out_pad, b_out_pad)               # (T*n, 128) f32
    cur3d = cur.reshape(snn_time_step, n, HEAD_PAD)

    # only the stateful part loops over SNN time
    spk = lif_recurrence(cur3d, thr=snn_threshold)          # (T, n, 128)
    return spk[..., :NUM_CLASSES]                           # (T, n, 10)


# ----------------------------------------------------------------------------
# Parameter construction (deterministic, synthetic)
# ----------------------------------------------------------------------------
def init_params(key, *, t, c, h, w, feat_dim=FEAT_DIM, num_classes=NUM_CLASSES):
    k1, k2, k3 = jax.random.split(key, 3)
    k_in = t * c * h * w
    return {
        # stored in bf16: the MXU path runs bf16 with f32 accumulation
        "w_backbone": (jax.random.normal(k1, (k_in, feat_dim), jnp.float32)
                       * (1.0 / jnp.sqrt(k_in))).astype(jnp.bfloat16),
        "w_out": (jax.random.normal(k2, (feat_dim, num_classes), jnp.float32)
                  * (1.0 / jnp.sqrt(feat_dim))),
        "b_out": jax.random.normal(k3, (1, num_classes), jnp.float32) * 0.01,
    }


if __name__ == "__main__":
    # small shapes: batch=2, time_sequence=4, channels=3, spatial=16
    n, t, c, h, w = 2, 4, 3, 16, 16
    snn_time_step = 4          # small for the demo (module default is 30)
    snn_threshold = 0.3

    key = jax.random.PRNGKey(0)
    k_x, k_p, k_enc = jax.random.split(key, 3)
    x = jax.random.uniform(k_x, (n, t, c, h, w), jnp.float32)  # analog in [0,1]
    params = init_params(k_p, t=t, c=c, h=h, w=w)

    fwd = jax.jit(functools.partial(
        eco_snn_forward,
        snn_time_step=snn_time_step,
        snn_threshold=snn_threshold,
    ))
    out = jax.block_until_ready(fwd(x, params, k_enc))

    assert out.shape == (snn_time_step, n, 10), out.shape
    assert out.dtype == jnp.float32
    # spikes are binary
    assert bool(jnp.all((out == 0.0) | (out == 1.0)))
    print("KERNEL_OK")
</pallas_src>

<mosaic_0001>
module attributes {stable_mosaic.version = 11 : i64} {
  func.func @_encode_kernel(%arg0: i32, %arg1: memref<2x3072xf32, #tpu.memory_space<vmem>>, %arg2: memref<1x2x3072xf32, #tpu.memory_space<vmem>>, %arg3: memref<1x2x3072xbf16, #tpu.memory_space<vmem>>) attributes {dimension_semantics = [#tpu.dimension_semantics<parallel>], iteration_bounds = array<i64: 4>, scalar_prefetch = 0 : i64, scratch_operands = 0 : i64, tpu.core_type = #tpu.core_type<tc>, window_params = [{pipeline_mode = #tpu.pipeline_mode<synchronous>, transform_indices = @transform_0, window_bounds = array<i64: 2, 3072>}, {transform_indices = @transform_1, window_bounds = array<i64: 1, 2, 3072>}, {transform_indices = @transform_2, window_bounds = array<i64: 1, 2, 3072>}]} {
    %c0 = arith.constant 0 : index
    %c0_0 = arith.constant 0 : index
    %c0_1 = arith.constant 0 : index
    %0 = vector.load %arg2[%c0, %c0_0, %c0_1] : memref<1x2x3072xf32, #tpu.memory_space<vmem>>, vector<1x2x3072xf32>
    %1 = vector.shape_cast %0 : vector<1x2x3072xf32> to vector<2x3072xf32>
    %c0_2 = arith.constant 0 : index
    %c0_3 = arith.constant 0 : index
    %2 = vector.load %arg1[%c0_2, %c0_3] : memref<2x3072xf32, #tpu.memory_space<vmem>>, vector<2x3072xf32>
    %3 = arith.cmpf ole, %1, %2 : vector<2x3072xf32>
    %4 = arith.extui %3 : vector<2x3072xi1> to vector<2x3072xi32>
    %5 = arith.sitofp %4 : vector<2x3072xi32> to vector<2x3072xf32>
    %6 = arith.truncf %5 : vector<2x3072xf32> to vector<2x3072xbf16>
    %c0_4 = arith.constant 0 : index
    %c0_5 = arith.constant 0 : index
    %c0_6 = arith.constant 0 : index
    %7 = vector.load %arg3[%c0_4, %c0_5, %c0_6] : memref<1x2x3072xbf16, #tpu.memory_space<vmem>>, vector<1x2x3072xbf16>
    %8 = vector.shape_cast %7 : vector<1x2x3072xbf16> to vector<2x3072xbf16>
    %9 = vector.shape_cast %6 : vector<2x3072xbf16> to vector<1x2x3072xbf16>
    tpu.vector_store %arg3[%c0_4, %c0_5, %c0_6], %9 {strides = array<i32>} : memref<1x2x3072xbf16, #tpu.memory_space<vmem>>, vector<1x2x3072xbf16>,
    return
  }
  func.func @transform_0(%arg0: i32) -> (i32, i32) {
    %c0_i32 = arith.constant 0 : i32
    %c0_i32_0 = arith.constant 0 : i32
    %c0_i32_1 = arith.constant 0 : i32
    return %c0_i32, %c0_i32_0 : i32, i32
  }
  func.func @transform_1(%arg0: i32) -> (i32, i32, i32) {
    %c0_i32 = arith.constant 0 : i32
    %c0_i32_0 = arith.constant 0 : i32
    %c0_i32_1 = arith.constant 0 : i32
    return %arg0, %c0_i32, %c0_i32_0 : i32, i32, i32
  }
  func.func @transform_2(%arg0: i32) -> (i32, i32, i32) {
    %c0_i32 = arith.constant 0 : i32
    %c0_i32_0 = arith.constant 0 : i32
    %c0_i32_1 = arith.constant 0 : i32
    return %arg0, %c0_i32, %c0_i32_0 : i32, i32, i32
  }
}

module attributes {stable_mosaic.version = 11 : i64} {
  func.func @_backbone_head_kernel(%arg0: i32, %arg1: memref<8x512xbf16, #tpu.memory_space<vmem>>, %arg2: memref<512x4096xbf16, #tpu.memory_space<vmem>>, %arg3: memref<4096x128xbf16, #tpu.memory_space<vmem>>, %arg4: memref<1x128xf32, #tpu.memory_space<vmem>>, %arg5: memref<8x128xf32, #tpu.memory_space<vmem>>, %arg6: memref<8x4096xf32, #tpu.memory_space<vmem>>) attributes {dimension_semantics = [#tpu.dimension_semantics<arbitrary>], iteration_bounds = array<i64: 6>, scalar_prefetch = 0 : i64, scratch_operands = 1 : i64, tpu.core_type = #tpu.core_type<tc>, window_params = [{transform_indices = @transform_0, window_bounds = array<i64: 8, 512>}, {transform_indices = @transform_1, window_bounds = array<i64: 512, 4096>}, {pipeline_mode = #tpu.pipeline_mode<synchronous>, transform_indices = @transform_2, window_bounds = array<i64: 4096, 128>}, {pipeline_mode = #tpu.pipeline_mode<synchronous>, transform_indices = @transform_3, window_bounds = array<i64: 1, 128>}, {pipeline_mode = #tpu.pipeline_mode<synchronous>, transform_indices = @transform_4, window_bounds = array<i64: 8, 128>}]} {
    %c0_i32 = arith.constant 0 : i32
    %0 = arith.cmpi eq, %arg0, %c0_i32 : i32
    %1 = arith.extui %0 : i1 to i32
    %c0_i32_0 = arith.constant 0 : i32
    %2 = arith.cmpi ne, %1, %c0_i32_0 : i32
    scf.if %2 {
      %cst_9 = arith.constant 0.000000e+00 : f32
      %12 = vector.broadcast %cst_9 : f32 to vector<8x4096xf32>
      %c0_10 = arith.constant 0 : index
      %c0_11 = arith.constant 0 : index
      %13 = vector.load %arg6[%c0_10, %c0_11] : memref<8x4096xf32, #tpu.memory_space<vmem>>, vector<8x4096xf32>
      tpu.vector_store %arg6[%c0_10, %c0_11], %12 {strides = array<i32>} : memref<8x4096xf32, #tpu.memory_space<vmem>>, vector<8x4096xf32>,
    } else {
    }
    %c0 = arith.constant 0 : index
    %c0_1 = arith.constant 0 : index
    %3 = vector.load %arg6[%c0, %c0_1] : memref<8x4096xf32, #tpu.memory_space<vmem>>, vector<8x4096xf32>
    %c0_2 = arith.constant 0 : index
    %c0_3 = arith.constant 0 : index
    %4 = vector.load %arg1[%c0_2, %c0_3] : memref<8x512xbf16, #tpu.memory_space<vmem>>, vector<8x512xbf16>
    %c0_4 = arith.constant 0 : index
    %c0_5 = arith.constant 0 : index
    %5 = vector.load %arg2[%c0_4, %c0_5] : memref<512x4096xbf16, #tpu.memory_space<vmem>>, vector<512x4096xbf16>
    %cst = arith.constant dense<0.000000e+00> : vector<8x4096xf32>
    %6 = tpu.matmul %4, %5, %cst {dimension_numbers = #tpu.dot_dimension_numbers<[1], [0], [0], [1], [0, 0, 1, 1], [], []>} : vector<8x512xbf16>, vector<512x4096xbf16>, vector<8x4096xf32> -> vector<8x4096xf32>
    %7 = arith.addf %3, %6 : vector<8x4096xf32>
    %c0_6 = arith.constant 0 : index
    %c0_7 = arith.constant 0 : index
    %8 = vector.load %arg6[%c0_6, %c0_7] : memref<8x4096xf32, #tpu.memory_space<vmem>>, vector<8x4096xf32>
    tpu.vector_store %arg6[%c0_6, %c0_7], %7 {strides = array<i32>} : memref<8x4096xf32, #tpu.memory_space<vmem>>, vector<8x4096xf32>,
    %c5_i32 = arith.constant 5 : i32
    %9 = arith.cmpi eq, %arg0, %c5_i32 : i32
    %10 = arith.extui %9 : i1 to i32
    %c0_i32_8 = arith.constant 0 : i32
    %11 = arith.cmpi ne, %10, %c0_i32_8 : i32
    scf.if %11 {
      %c0_9 = arith.constant 0 : index
      %c0_10 = arith.constant 0 : index
      %12 = vector.load %arg6[%c0_9, %c0_10] : memref<8x4096xf32, #tpu.memory_space<vmem>>, vector<8x4096xf32>
      %13 = arith.truncf %12 : vector<8x4096xf32> to vector<8x4096xbf16>
      %c0_11 = arith.constant 0 : index
      %c0_12 = arith.constant 0 : index
      %14 = vector.load %arg3[%c0_11, %c0_12] : memref<4096x128xbf16, #tpu.memory_space<vmem>>, vector<4096x128xbf16>
      %cst_13 = arith.constant dense<0.000000e+00> : vector<8x128xf32>
      %15 = tpu.matmul %13, %14, %cst_13 {dimension_numbers = #tpu.dot_dimension_numbers<[1], [0], [0], [1], [0, 0, 1, 1], [], []>} : vector<8x4096xbf16>, vector<4096x128xbf16>, vector<8x128xf32> -> vector<8x128xf32>
      %c0_14 = arith.constant 0 : index
      %c0_15 = arith.constant 0 : index
      %16 = vector.load %arg4[%c0_14, %c0_15] : memref<1x128xf32, #tpu.memory_space<vmem>>, vector<1x128xf32>
      %17 = vector.broadcast %16 : vector<1x128xf32> to vector<8x128xf32>
      %18 = arith.addf %15, %17 : vector<8x128xf32>
      %c0_16 = arith.constant 0 : index
      %c0_17 = arith.constant 0 : index
      %19 = vector.load %arg5[%c0_16, %c0_17] : memref<8x128xf32, #tpu.memory_space<vmem>>, vector<8x128xf32>
      tpu.vector_store %arg5[%c0_16, %c0_17], %18 {strides = array<i32>} : memref<8x128xf32, #tpu.memory_space<vmem>>, vector<8x128xf32>,
    } else {
    }
    return
  }
  func.func @transform_0(%arg0: i32) -> (i32, i32) {
    %c0_i32 = arith.constant 0 : i32
    %c0_i32_0 = arith.constant 0 : i32
    return %c0_i32, %arg0 : i32, i32
  }
  func.func @transform_1(%arg0: i32) -> (i32, i32) {
    %c0_i32 = arith.constant 0 : i32
    %c0_i32_0 = arith.constant 0 : i32
    return %arg0, %c0_i32 : i32, i32
  }
  func.func @transform_2(%arg0: i32) -> (i32, i32) {
    %c0_i32 = arith.constant 0 : i32
    %c0_i32_0 = arith.constant 0 : i32
    %c0_i32_1 = arith.constant 0 : i32
    return %c0_i32, %c0_i32_0 : i32, i32
  }
  func.func @transform_3(%arg0: i32) -> (i32, i32) {
    %c0_i32 = arith.constant 0 : i32
    %c0_i32_0 = arith.constant 0 : i32
    %c0_i32_1 = arith.constant 0 : i32
    return %c0_i32, %c0_i32_0 : i32, i32
  }
  func.func @transform_4(%arg0: i32) -> (i32, i32) {
    %c0_i32 = arith.constant 0 : i32
    %c0_i32_0 = arith.constant 0 : i32
    %c0_i32_1 = arith.constant 0 : i32
    return %c0_i32, %c0_i32_0 : i32, i32
  }
}

module attributes {stable_mosaic.version = 11 : i64} {
  func.func @_lif_kernel(%arg0: i32, %arg1: memref<1x2x128xf32, #tpu.memory_space<vmem>>, %arg2: memref<1x2x128xf32, #tpu.memory_space<vmem>>, %arg3: memref<2x128xf32, #tpu.memory_space<vmem>>) attributes {dimension_semantics = [#tpu.dimension_semantics<arbitrary>], iteration_bounds = array<i64: 4>, scalar_prefetch = 0 : i64, scratch_operands = 1 : i64, tpu.core_type = #tpu.core_type<tc>, window_params = [{transform_indices = @transform_0, window_bounds = array<i64: 1, 2, 128>}, {transform_indices = @transform_1, window_bounds = array<i64: 1, 2, 128>}]} {
    %c0_i32 = arith.constant 0 : i32
    %0 = arith.cmpi eq, %arg0, %c0_i32 : i32
    %1 = arith.extui %0 : i1 to i32
    %c0_i32_0 = arith.constant 0 : i32
    %2 = arith.cmpi ne, %1, %c0_i32_0 : i32
    scf.if %2 {
      %cst_13 = arith.constant 0.000000e+00 : f32
      %24 = vector.broadcast %cst_13 : f32 to vector<2x128xf32>
      %c0_14 = arith.constant 0 : index
      %c0_15 = arith.constant 0 : index
      %25 = vector.load %arg3[%c0_14, %c0_15] : memref<2x128xf32, #tpu.memory_space<vmem>>, vector<2x128xf32>
      tpu.vector_store %arg3[%c0_14, %c0_15], %24 {strides = array<i32>} : memref<2x128xf32, #tpu.memory_space<vmem>>, vector<2x128xf32>,
    } else {
    }
    %c0 = arith.constant 0 : index
    %c0_1 = arith.constant 0 : index
    %c0_2 = arith.constant 0 : index
    %3 = vector.load %arg1[%c0, %c0_1, %c0_2] : memref<1x2x128xf32, #tpu.memory_space<vmem>>, vector<1x2x128xf32>
    %4 = vector.shape_cast %3 : vector<1x2x128xf32> to vector<2x128xf32>
    %c0_3 = arith.constant 0 : index
    %c0_4 = arith.constant 0 : index
    %5 = vector.load %arg3[%c0_3, %c0_4] : memref<2x128xf32, #tpu.memory_space<vmem>>, vector<2x128xf32>
    %cst = arith.constant 3.000000e-01 : f32
    %6 = vector.broadcast %cst : f32 to vector<2x128xf32>
    %7 = arith.cmpf ogt, %5, %6 : vector<2x128xf32>
    %8 = arith.extui %7 : vector<2x128xi1> to vector<2x128xi32>
    %9 = arith.sitofp %8 : vector<2x128xi32> to vector<2x128xf32>
    %cst_5 = arith.constant 5.000000e-01 : f32
    %10 = vector.broadcast %cst_5 : f32 to vector<2x128xf32>
    %11 = arith.mulf %10, %5 : vector<2x128xf32>
    %12 = arith.addf %11, %4 : vector<2x128xf32>
    %cst_6 = arith.constant 3.000000e-01 : f32
    %13 = vector.broadcast %cst_6 : f32 to vector<2x128xf32>
    %14 = arith.mulf %9, %13 : vector<2x128xf32>
    %15 = arith.subf %12, %14 : vector<2x128xf32>
    %cst_7 = arith.constant 3.000000e-01 : f32
    %16 = vector.broadcast %cst_7 : f32 to vector<2x128xf32>
    %17 = arith.cmpf ogt, %15, %16 : vector<2x128xf32>
    %18 = arith.extui %17 : vector<2x128xi1> to vector<2x128xi32>
    %19 = arith.sitofp %18 : vector<2x128xi32> to vector<2x128xf32>
    %c0_8 = arith.constant 0 : index
    %c0_9 = arith.constant 0 : index
    %c0_10 = arith.constant 0 : index
    %20 = vector.load %arg2[%c0_8, %c0_9, %c0_10] : memref<1x2x128xf32, #tpu.memory_space<vmem>>, vector<1x2x128xf32>
    %21 = vector.shape_cast %20 : vector<1x2x128xf32> to vector<2x128xf32>
    %22 = vector.shape_cast %19 : vector<2x128xf32> to vector<1x2x128xf32>
    tpu.vector_store %arg2[%c0_8, %c0_9, %c0_10], %22 {strides = array<i32>} : memref<1x2x128xf32, #tpu.memory_space<vmem>>, vector<1x2x128xf32>,
    %c0_11 = arith.constant 0 : index
    %c0_12 = arith.constant 0 : index
    %23 = vector.load %arg3[%c0_11, %c0_12] : memref<2x128xf32, #tpu.memory_space<vmem>>, vector<2x128xf32>
    tpu.vector_store %arg3[%c0_11, %c0_12], %15 {strides = array<i32>} : memref<2x128xf32, #tpu.memory_space<vmem>>, vector<2x128xf32>,
    return
  }
  func.func @transform_0(%arg0: i32) -> (i32, i32, i32) {
    %c0_i32 = arith.constant 0 : i32
    %c0_i32_0 = arith.constant 0 : i32
    %c0_i32_1 = arith.constant 0 : i32
    return %arg0, %c0_i32, %c0_i32_0 : i32, i32, i32
  }
  func.func @transform_1(%arg0: i32) -> (i32, i32, i32) {
    %c0_i32 = arith.constant 0 : i32
    %c0_i32_0 = arith.constant 0 : i32
    %c0_i32_1 = arith.constant 0 : i32
    return %arg0, %c0_i32, %c0_i32_0 : i32, i32, i32
  }
}

</mosaic_0001>

<llo_original>
// kernel: eco_snn_forward.3
$region0: #{eco_snn_forward.3}
  #allocation0 [shape = 'u32[]', space=smem, size = 0x4, offset = 0x4, fixed_abs, tag = 'smem constant byte address 0x4 - core index']
  #allocation1 [shape = 'u32[144,128]{1,0:T(1,128)}', space=vmem, size = 0x12000, scoped, tag = 'internal scratch']
  %s0 = inlined_call_operand.vmem [shape: f32[2,3072], index: 0, kind: input, shape index: {}]
  %s1 = inlined_call_operand.vmem [shape: f32[4,2,3072], index: 1, kind: input, shape index: {}]
  %s2 = inlined_call_operand.vmem [shape: bf16[4,2,3072], index: 2, kind: output, shape index: {}]
  %s3 = sld [smem:[#allocation0]]
  $region41: #{eco_snn_forward.3} parent=0
    _
  %s5 = ssub.s32 1, %s3
  %s6 = scalar_select 0, %s5, %s3
  loop: start=0, step=1, limit=6
  $region2: #{eco_snn_forward.3} parent=0 // loop_pre_header
    _
  $region3: #{eco_snn_forward.3} parent=0 // loop_header
    %s8 = sphi 0, %s12
    %p9 = scmp.ge.s32.totalorder %s8, 6
    %s16 = sphi 0, %s16
    %s18 = sphi 0, %s16
    %s19 = sphi 0, %s18
    %s33 = sphi 0, %s19
    %s39 = sphi 0, %s41
    %s42 = sphi 0, %s39
    %s43 = sphi 0, %s42
    %s59 = sphi 0, %s43
    %s65 = sphi 0, %s67
    %s68 = sphi 0, %s65
    %s69 = sphi 0, %s68
    %s85 = sphi 0, %s69
  $region4: #{eco_snn_forward.3} parent=0 // loop_header_branch
    %11 = sbr.rel (%p9) target = $region8
  $region5: #{eco_snn_forward.3} parent=0 // loop_body
    %s13 = ssub.s32 %s8, 1
    %s14 = ssub.s32 %s8, 2
    %s15 = sadd.s32 %s8, 1
    %s17 = sadd.s32 %s16, 1
    %p20 = scmp.eq.s32.totalorder %s8, 3
    %p21 = scmp.ne.s32.totalorder %s16, %s18
    %p22 = scmp.eq.s32.totalorder %s8, 0
    %p23 = por %p21, %p22
    %p24 = scmp.ne.s32.totalorder %s16, %s18
    %p25 = scmp.eq.s32.totalorder %s13, 3
    %p26 = por %p24, %p25
    %p27 = scmp.ne.s32.totalorder %s18, %s19
    %p28 = scmp.eq.s32.totalorder %s13, 0
    %p29 = por %p27, %p28
    %p30 = scmp.ne.s32.totalorder %s18, %s19
    %p31 = scmp.eq.s32.totalorder %s14, 3
    %p32 = por %p30, %p31
    %p34 = scmp.ne.s32.totalorder %s19, %s33
    %p35 = scmp.eq.s32.totalorder %s14, 0
    %p36 = por %p34, %p35
    %s37 = ssub.s32 %s8, %s15
    %p38 = scmp.eq.s32.totalorder %s37, 0
    %s40 = sadd.s32 %s39, 1
    %s41 = scalar_select %p38, %s39, %s40
    %p44 = pneg %p38
    %p45 = scmp.eq.s32.totalorder %s8, 3
    %p46 = por %p44, %p45
    %p47 = scmp.ne.s32.totalorder %s39, %s42
    %p48 = scmp.eq.s32.totalorder %s8, 0
    %p49 = por %p47, %p48
    %p50 = scmp.ne.s32.totalorder %s39, %s42
    %p51 = scmp.eq.s32.totalorder %s13, 3
    %p52 = por %p50, %p51
    %p53 = scmp.ne.s32.totalorder %s42, %s43
    %p54 = scmp.eq.s32.totalorder %s13, 0
    %p55 = por %p53, %p54
    %p56 = scmp.ne.s32.totalorder %s42, %s43
    %p57 = scmp.eq.s32.totalorder %s14, 3
    %p58 = por %p56, %p57
    %p60 = scmp.ne.s32.totalorder %s43, %s59
    %p61 = scmp.eq.s32.totalorder %s14, 0
    %p62 = por %p60, %p61
    %s63 = ssub.s32 %s8, %s15
    %p64 = scmp.eq.s32.totalorder %s63, 0
    %s66 = sadd.s32 %s65, 1
    %s67 = scalar_select %p64, %s65, %s66
    %p70 = pneg %p64
    %p71 = scmp.eq.s32.totalorder %s8, 3
    %p72 = por %p70, %p71
    %p73 = scmp.ne.s32.totalorder %s65, %s68
    %p74 = scmp.eq.s32.totalorder %s8, 0
    %p75 = por %p73, %p74
    %p76 = scmp.ne.s32.totalorder %s65, %s68
    %p77 = scmp.eq.s32.totalorder %s13, 3
    %p78 = por %p76, %p77
    %p79 = scmp.ne.s32.totalorder %s68, %s69
    %p80 = scmp.eq.s32.totalorder %s13, 0
    %p81 = por %p79, %p80
    %p82 = scmp.ne.s32.totalorder %s68, %s69
    %p83 = scmp.eq.s32.totalorder %s14, 3
    %p84 = por %p82, %p83
    %p86 = scmp.ne.s32.totalorder %s69, %s85
    %p87 = scmp.eq.s32.totalorder %s14, 0
    %p88 = por %p86, %p87
    %p89 = scmp.le.s32.totalorder 1, %s8
    %p90 = scmp.lt.s32.totalorder %s8, 5
    %p91 = pnand %p89, %p90
    %p92 = pneg %p91
    // Predicated region
    $region9: #{eco_snn_forward.3} parent=5 // pred_check
      _
    $region10: #{eco_snn_forward.3} parent=5 // pred_check_branch
      %94 = sbr.rel (%p91) target = $region12
    $region11: #{eco_snn_forward.3} parent=5 // pred_region
      %s95 = ssub.s32 %s8, 1
      // Predicated region
      $region13: #{eco_snn_forward.3} parent=11 // pred_check
        %p96 = pneg %p29
      $region14: #{eco_snn_forward.3} parent=11 // pred_check_branch
        %98 = sbr.rel (%p96) target = $region16
      $region15: #{eco_snn_forward.3} parent=11 // pred_region
        _
      $region16: #{eco_snn_forward.3} parent=11 // pred_fallthru
        _
    $region12: #{eco_snn_forward.3} parent=5 // pred_fallthru
      _
    %p99 = scmp.lt.s32.totalorder %s8, 4
    // Predicated region
    $region17: #{eco_snn_forward.3} parent=5 // pred_check
      %p100 = pneg %p99
    $region18: #{eco_snn_forward.3} parent=5 // pred_check_branch
      %102 = sbr.rel (%p100) target = $region20
    $region19: #{eco_snn_forward.3} parent=5 // pred_region
      // Predicated region
      $region21: #{eco_snn_forward.3} parent=19 // pred_check
        %p103 = pneg %p49
      $region22: #{eco_snn_forward.3} parent=19 // pred_check_branch
        %105 = sbr.rel (%p103) target = $region24
      $region23: #{eco_snn_forward.3} parent=19 // pred_region
        %p106 = scmp.lt.s32.totalorder %s8, 3
        %s107 = scalar_select %p106, %s8, 3
        %s108 = smul.addr %s107, 24
        %s109 = smul.addr %s108, 2
        %s110 = scalar_lea.vmem %s1, %s109
      $region24: #{eco_snn_forward.3} parent=19 // pred_fallthru
        _
    $region20: #{eco_snn_forward.3} parent=5 // pred_fallthru
      _
    %p111 = scmp.le.s32.totalorder 1, %s8
    %p112 = scmp.lt.s32.totalorder %s8, 5
    %p113 = pnand %p111, %p112
    %p114 = pneg %p113
    // Predicated region
    $region25: #{eco_snn_forward.3} parent=5 // pred_check
      _
    $region26: #{eco_snn_forward.3} parent=5 // pred_check_branch
      %116 = sbr.rel (%p113) target = $region28
    $region27: #{eco_snn_forward.3} parent=5 // pred_region
      %s117 = ssub.s32 %s8, 1
      %p118 = pneg %p29
      %p119 = pneg %p26
      %p120 = scmp.lt.s32.totalorder %s13, 3
      %s121 = scalar_select %p120, %s13, 3
      %s122 = smul.addr %s121, 24
      %s123 = smul.addr %s122, 2
      %s124 = scalar_lea.vmem %s1, %s123
      %p125 = pneg %p55
      %p126 = pneg %p52
      %p127 = pneg %p81
      %p128 = pneg %p78
      %p129 = scmp.lt.s32.totalorder %s13, 3
      %s130 = scalar_select %p129, %s13, 3
      %s131 = smul.addr %s130, 24
      %s132 = scalar_lea.vmem %s2, %s131
      %p133 = scmp.lt.s32.totalorder %s13, 3
      %s134 = scalar_select %p133, %s13, 3
      %s135 = smul.addr %s134, 24
      %s136 = smul.addr %s135, 2
      %s137 = scalar_lea.vmem %s1, %s136
      %p138 = scmp.lt.s32.totalorder %s13, 3
      %s139 = scalar_select %p138, %s13, 3
      %s140 = smul.addr %s139, 24
      %s141 = scalar_lea.vmem %s2, %s140
      %v142 = vld [vmem:[%s137] sm:$0xff]
      %v143 = vld [vmem:[%s137 + $0x8] sm:$0xff]
      %v144 = vld [vmem:[%s137 + $0x10] sm:$0xff]
      %v145 = vld [vmem:[%s137 + $0x18] sm:$0xff]
      %v146 = vld [vmem:[%s137 + $0x20] sm:$0xff]
      %v147 = vld [vmem:[%s137 + $0x28] sm:$0xff]
      %v148 = vld [vmem:[%s0] sm:$0xff]
      %v149 = vld [vmem:[%s0 + $0x8] sm:$0xff]
      %v150 = vld [vmem:[%s0 + $0x10] sm:$0xff]
      %v151 = vld [vmem:[%s0 + $0x18] sm:$0xff]
      %v152 = vld [vmem:[%s0 + $0x20] sm:$0xff]
      %v153 = vld [vmem:[%s0 + $0x28] sm:$0xff]
      %vm154 = vcmp.le.f32.partialorder %v142, %v148
      %vm155 = vcmp.le.f32.partialorder %v143, %v149
      %vm156 = vcmp.le.f32.partialorder %v144, %v150
      %vm157 = vcmp.le.f32.partialorder %v145, %v151
      %vm158 = vcmp.le.f32.partialorder %v146, %v152
      %vm159 = vcmp.le.f32.partialorder %v147, %v153
      %v160 = vsel %vm154, 1, 0
      %v161 = vsel %vm155, 1, 0
      %v162 = vsel %vm156, 1, 0
      %v163 = vsel %vm157, 1, 0
      %v164 = vsel %vm158, 1, 0
      %v165 = vsel %vm159, 1, 0
      %v166 = vcvt.s32.f32 %v160
      %v167 = vcvt.s32.f32 %v161
      %v168 = vcvt.s32.f32 %v162
      %v169 = vcvt.s32.f32 %v163
      %v170 = vcvt.s32.f32 %v164
      %v171 = vcvt.s32.f32 %v165
      %v178 = vcombine.high %v166, %v166
      %v180 = vunpack.c.l.s4 1983009808
      %v181 = vunpack.c.0.s8 %v180
      %v182 = vlaneseq
      %v183 = vshrl.u32 %v182, 7
      %v184 = vsub.s32 %v181, %v183
      %v185 = vrot.slane %v166, %v184
      %v187 = vunpack.c.l.s4 1983009808
      %v188 = vunpack.c.0.s8 %v187
      %v189 = vlaneseq
      %v190 = vshrl.u32 %v189, 7
      %v191 = vsub.s32 %v188, %v190
      %v192 = vrot.slane %v178, %v191
      %v193 = vcombine.high %v185, %v185
      %v194 = vcombine.high %v192, %v192
      %v195 = vcombine.high %v167, %v167
      %v197 = vunpack.c.l.s4 1983009808
      %v198 = vunpack.c.0.s8 %v197
      %v199 = vlaneseq
      %v200 = vshrl.u32 %v199, 7
      %v201 = vsub.s32 %v198, %v200
      %v202 = vrot.slane %v167, %v201
      %v204 = vunpack.c.l.s4 1983009808
      %v205 = vunpack.c.0.s8 %v204
      %v206 = vlaneseq
      %v207 = vshrl.u32 %v206, 7
      %v208 = vsub.s32 %v205, %v207
      %v209 = vrot.slane %v195, %v208
      %v210 = vcombine.high %v202, %v202
      %v211 = vcombine.high %v209, %v209
      %v212 = vcombine.high %v168, %v168
      %v214 = vunpack.c.l.s4 1983009808
      %v215 = vunpack.c.0.s8 %v214
      %v216 = vlaneseq
      %v217 = vshrl.u32 %v216, 7
      %v218 = vsub.s32 %v215, %v217
      %v219 = vrot.slane %v168, %v218
      %v221 = vunpack.c.l.s4 1983009808
      %v222 = vunpack.c.0.s8 %v221
      %v223 = vlaneseq
      %v224 = vshrl.u32 %v223, 7
      %v225 = vsub.s32 %v222, %v224
      %v226 = vrot.slane %v212, %v225
      %v227 = vcombine.high %v219, %v219
      %v228 = vcombine.high %v226, %v226
      %v229 = vcombine.high %v169, %v169
      %v231 = vunpack.c.l.s4 1983009808
      %v232 = vunpack.c.0.s8 %v231
      %v233 = vlaneseq
      %v234 = vshrl.u32 %v233, 7
      %v235 = vsub.s32 %v232, %v234
      %v236 = vrot.slane %v169, %v235
      %v238 = vunpack.c.l.s4 1983009808
      %v239 = vunpack.c.0.s8 %v238
      %v240 = vlaneseq
      %v241 = vshrl.u32 %v240, 7
      %v242 = vsub.s32 %v239, %v241
      %v243 = vrot.slane %v229, %v242
      %v244 = vcombine.high %v236, %v236
      %v245 = vcombine.high %v243, %v243
      %v246 = vcombine.high %v170, %v170
      %v248 = vunpack.c.l.s4 1983009808
      %v249 = vunpack.c.0.s8 %v248
      %v250 = vlaneseq
      %v251 = vshrl.u32 %v250, 7
      %v252 = vsub.s32 %v249, %v251
      %v253 = vrot.slane %v170, %v252
      %v255 = vunpack.c.l.s4 1983009808
      %v256 = vunpack.c.0.s8 %v255
      %v257 = vlaneseq
      %v258 = vshrl.u32 %v257, 7
      %v259 = vsub.s32 %v256, %v258
      %v260 = vrot.slane %v246, %v259
      %v261 = vcombine.high %v253, %v253
      %v262 = vcombine.high %v260, %v260
      %v263 = vcombine.high %v171, %v171
      %v265 = vunpack.c.l.s4 1983009808
      %v266 = vunpack.c.0.s8 %v265
      %v267 = vlaneseq
      %v268 = vshrl.u32 %v267, 7
      %v269 = vsub.s32 %v266, %v268
      %v270 = vrot.slane %v171, %v269
      %v272 = vunpack.c.l.s4 1983009808
      %v273 = vunpack.c.0.s8 %v272
      %v274 = vlaneseq
      %v275 = vshrl.u32 %v274, 7
      %v276 = vsub.s32 %v273, %v275
      %v277 = vrot.slane %v263, %v276
      %v278 = vcombine.high %v270, %v270
      %v279 = vcombine.high %v277, %v277
      %v304 = vpack.c.bf16 %v185, %v185
      %v305 = vpack.c.bf16 %v193, %v193
      %v306 = vpack.c.bf16 %v192, %v192
      %v307 = vpack.c.bf16 %v194, %v194
      %v308 = vpack.c.bf16 %v202, %v202
      %v309 = vpack.c.bf16 %v210, %v210
      %v310 = vpack.c.bf16 %v209, %v209
      %v311 = vpack.c.bf16 %v211, %v211
      %v312 = vpack.c.bf16 %v219, %v219
      %v313 = vpack.c.bf16 %v227, %v227
      %v314 = vpack.c.bf16 %v226, %v226
      %v315 = vpack.c.bf16 %v228, %v228
      %v316 = vpack.c.bf16 %v236, %v236
      %v317 = vpack.c.bf16 %v244, %v244
      %v318 = vpack.c.bf16 %v243, %v243
      %v319 = vpack.c.bf16 %v245, %v245
      %v320 = vpack.c.bf16 %v253, %v253
      %v321 = vpack.c.bf16 %v261, %v261
      %v322 = vpack.c.bf16 %v260, %v260
      %v323 = vpack.c.bf16 %v262, %v262
      %v324 = vpack.c.bf16 %v270, %v270
      %v325 = vpack.c.bf16 %v278, %v278
      %v326 = vpack.c.bf16 %v277, %v277
      %v327 = vpack.c.bf16 %v279, %v279
      %v352 = vcombine.low %v304, %v305
      %v353 = vcombine.low %v306, %v307
      %v354 = vcombine.low %v308, %v309
      %v355 = vcombine.low %v310, %v311
      %v357 = vunpack.c.l.s4 1966171168
      %v358 = vunpack.c.0.s8 %v357
      %v359 = vlaneseq
      %v360 = vshrl.u32 %v359, 7
      %v361 = vsub.s32 %v358, %v360
      %v362 = vrot.slane %v352, %v361
      %v364 = vunpack.c.l.s4 1966171168
      %v365 = vunpack.c.0.s8 %v364
      %v366 = vlaneseq
      %v367 = vshrl.u32 %v366, 7
      %v368 = vsub.s32 %v365, %v367
      %v369 = vrot.slane %v353, %v368
      %v371 = vunpack.c.l.s4 1966171168
      %v372 = vunpack.c.0.s8 %v371
      %v373 = vlaneseq
      %v374 = vshrl.u32 %v373, 7
      %v375 = vsub.s32 %v372, %v374
      %v376 = vrot.slane %v354, %v375
      %v378 = vunpack.c.l.s4 1966171168
      %v379 = vunpack.c.0.s8 %v378
      %v380 = vlaneseq
      %v381 = vshrl.u32 %v380, 7
      %v382 = vsub.s32 %v379, %v381
      %v383 = vrot.slane %v355, %v382
      %v384 = vcombine.low %v362, %v369
      %v385 = vcombine.low %v376, %v383
      %v387 = vunpack.c.l.s4 1966171168
      %v388 = vunpack.c.0.s8 %v387
      %v389 = vlaneseq
      %v390 = vshrl.u32 %v389, 7
      %v391 = vsub.s32 %v388, %v390
      %v392 = vrot.slane %v384, %v391
      %v394 = vunpack.c.l.s4 1966171168
      %v395 = vunpack.c.0.s8 %v394
      %v396 = vlaneseq
      %v397 = vshrl.u32 %v396, 7
      %v398 = vsub.s32 %v395, %v397
      %v399 = vrot.slane %v385, %v398
      %v400 = vcombine.low %v392, %v399
      %v401 = vcombine.low %v312, %v313
      %v402 = vcombine.low %v314, %v315
      %v403 = vcombine.low %v316, %v317
      %v404 = vcombine.low %v318, %v319
      %v406 = vunpack.c.l.s4 1966171168
      %v407 = vunpack.c.0.s8 %v406
      %v408 = vlaneseq
      %v409 = vshrl.u32 %v408, 7
      %v410 = vsub.s32 %v407, %v409
      %v411 = vrot.slane %v401, %v410
      %v413 = vunpack.c.l.s4 1966171168
      %v414 = vunpack.c.0.s8 %v413
      %v415 = vlaneseq
      %v416 = vshrl.u32 %v415, 7
      %v417 = vsub.s32 %v414, %v416
      %v418 = vrot.slane %v402, %v417
      %v420 = vunpack.c.l.s4 1966171168
      %v421 = vunpack.c.0.s8 %v420
      %v422 = vlaneseq
      %v423 = vshrl.u32 %v422, 7
      %v424 = vsub.s32 %v421, %v423
      %v425 = vrot.slane %v403, %v424
      %v427 = vunpack.c.l.s4 1966171168
      %v428 = vunpack.c.0.s8 %v427
      %v429 = vlaneseq
      %v430 = vshrl.u32 %v429, 7
      %v431 = vsub.s32 %v428, %v430
      %v432 = vrot.slane %v404, %v431
      %v433 = vcombine.low %v411, %v418
      %v434 = vcombine.low %v425, %v432
      %v436 = vunpack.c.l.s4 1966171168
      %v437 = vunpack.c.0.s8 %v436
      %v438 = vlaneseq
      %v439 = vshrl.u32 %v438, 7
      %v440 = vsub.s32 %v437, %v439
      %v441 = vrot.slane %v433, %v440
      %v443 = vunpack.c.l.s4 1966171168
      %v444 = vunpack.c.0.s8 %v443
      %v445 = vlaneseq
      %v446 = vshrl.u32 %v445, 7
      %v447 = vsub.s32 %v444, %v446
      %v448 = vrot.slane %v434, %v447
      %v449 = vcombine.low %v441, %v448
      %v450 = vcombine.low %v320, %v321
      %v451 = vcombine.low %v322, %v323
      %v452 = vcombine.low %v324, %v325
      %v453 = vcombine.low %v326, %v327
      %v455 = vunpack.c.l.s4 1966171168
      %v456 = vunpack.c.0.s8 %v455
      %v457 = vlaneseq
      %v458 = vshrl.u32 %v457, 7
      %v459 = vsub.s32 %v456, %v458
      %v460 = vrot.slane %v450, %v459
      %v462 = vunpack.c.l.s4 1966171168
      %v463 = vunpack.c.0.s8 %v462
      %v464 = vlaneseq
      %v465 = vshrl.u32 %v464, 7
      %v466 = vsub.s32 %v463, %v465
      %v467 = vrot.slane %v451, %v466
      %v469 = vunpack.c.l.s4 1966171168
      %v470 = vunpack.c.0.s8 %v469
      %v471 = vlaneseq
      %v472 = vshrl.u32 %v471, 7
      %v473 = vsub.s32 %v470, %v472
      %v474 = vrot.slane %v452, %v473
      %v476 = vunpack.c.l.s4 1966171168
      %v477 = vunpack.c.0.s8 %v476
      %v478 = vlaneseq
      %v479 = vshrl.u32 %v478, 7
      %v480 = vsub.s32 %v477, %v479
      %v481 = vrot.slane %v453, %v480
      %v482 = vcombine.low %v460, %v467
      %v483 = vcombine.low %v474, %v481
      %v485 = vunpack.c.l.s4 1966171168
      %v486 = vunpack.c.0.s8 %v485
      %v487 = vlaneseq
      %v488 = vshrl.u32 %v487, 7
      %v489 = vsub.s32 %v486, %v488
      %v490 = vrot.slane %v482, %v489
      %v492 = vunpack.c.l.s4 1966171168
      %v493 = vunpack.c.0.s8 %v492
      %v494 = vlaneseq
      %v495 = vshrl.u32 %v494, 7
      %v496 = vsub.s32 %v493, %v495
      %v497 = vrot.slane %v483, %v496
      %v498 = vcombine.low %v490, %v497
      %502 = vst [vmem:[%s141] sm:$0xff] %v400
      %503 = vst [vmem:[%s141 + $0x8] sm:$0xff] %v449
      %504 = vst [vmem:[%s141 + $0x10] sm:$0xff] %v498
      %p505 = scmp.lt.s32.totalorder %s13, 3
      %s506 = scalar_select %p505, %s13, 3
      %s507 = smul.addr %s506, 24
      %s508 = scalar_lea.vmem %s2, %s507
      // Predicated region
      $region29: #{eco_snn_forward.3} parent=27 // pred_check
        %p509 = pneg %p78
      $region30: #{eco_snn_forward.3} parent=27 // pred_check_branch
        %511 = sbr.rel (%p509) target = $region32
      $region31: #{eco_snn_forward.3} parent=27 // pred_region
        _
      $region32: #{eco_snn_forward.3} parent=27 // pred_fallthru
        _
    $region28: #{eco_snn_forward.3} parent=5 // pred_fallthru
      _
    %p512 = scmp.le.s32.totalorder 2, %s8
    // Predicated region
    $region33: #{eco_snn_forward.3} parent=5 // pred_check
      %p513 = pneg %p512
    $region34: #{eco_snn_forward.3} parent=5 // pred_check_branch
      %515 = sbr.rel (%p513) target = $region36
    $region35: #{eco_snn_forward.3} parent=5 // pred_region
      %s516 = ssub.s32 %s8, 2
      // Predicated region
      $region37: #{eco_snn_forward.3} parent=35 // pred_check
        %p517 = pneg %p84
      $region38: #{eco_snn_forward.3} parent=35 // pred_check_branch
        %519 = sbr.rel (%p517) target = $region40
      $region39: #{eco_snn_forward.3} parent=35 // pred_region
        %p520 = scmp.lt.s32.totalorder %s14, 3
        %s521 = scalar_select %p520, %s14, 3
        %s522 = smul.addr %s521, 24
        %s523 = scalar_lea.vmem %s2, %s522
      $region40: #{eco_snn_forward.3} parent=35 // pred_fallthru
        _
    $region36: #{eco_snn_forward.3} parent=5 // pred_fallthru
      _
  $region6: #{eco_snn_forward.3} parent=0 // loop_footer
    %s12 = sadd.s32 1, %s8
  $region7: #{eco_snn_forward.3} parent=0 // loop_footer_branch
    %7 = sbr.rel target = $region3
  $region8: #{eco_snn_forward.3} parent=0 // loop_exit
    _

// kernel: eco_snn_forward.5
$region0: #{eco_snn_forward.5}
  #allocation0 [shape = 'u32[]', space=smem, size = 0x4, offset = 0x4, fixed_abs, tag = 'smem constant byte address 0x4 - core index']
  #allocation1 [shape = 'u32[144,128]{1,0:T(1,128)}', space=vmem, size = 0x12000, scoped, tag = 'internal scratch']
  #allocation2 [shape = 'f32[2,128]{1,0:T(2,128)}', space=vmem, size = 0x400, scoped, tag = 'scratch operand']
  %s0 = inlined_call_operand.vmem [shape: f32[4,2,128], index: 0, kind: input, shape index: {}]
  %s1 = inlined_call_operand.hbm [shape: f32[4,2,128], index: 1, kind: output, shape index: {}]
  %s2 = sld [smem:[#allocation0]]
  $region41: #{eco_snn_forward.5} parent=0
    _
  %s4 = ssub.s32 1, %s2
  %s5 = scalar_select 0, %s4, %s2
  $region1: #{eco_snn_forward.5} parent=0
    #allocation3 [shape = 'u8[2048]{0}', space=vmem, size = 0x800, scoped, tag = 'output window, operand 0']
    #allocation4 [shape = 's32[2]{0}', space=sflag, size = 0x8, scoped, tag = 'scoped memory for eco_snn_forward.5']
    %6 = vsyncpa [#allocation4], 0
    %s7 = scalar_lea.sflag [#allocation4], 1
    %8 = vsyncpa %s7, 0
    loop: start=0, step=1, limit=6
    $region2: #{eco_snn_forward.5} parent=1 // loop_pre_header
      _
    $region3: #{eco_snn_forward.5} parent=1 // loop_header
      %s10 = sphi 0, %s14
      %p11 = scmp.ge.s32.totalorder %s10, 6
      %s20 = sphi 0, %s22
      %s23 = sphi 0, %s20
      %s24 = sphi 0, %s23
      %s40 = sphi 0, %s24
      %s46 = sphi 0, %s48
      %s49 = sphi 0, %s46
      %s50 = sphi 0, %s49
      %s66 = sphi 0, %s50
    $region4: #{eco_snn_forward.5} parent=1 // loop_header_branch
      %13 = sbr.rel (%p11) target = $region8
    $region5: #{eco_snn_forward.5} parent=1 // loop_body
      %s15 = ssub.s32 %s10, 1
      %s16 = ssub.s32 %s10, 2
      %s17 = sadd.s32 %s10, 1
      %s18 = ssub.s32 %s10, %s17
      %p19 = scmp.eq.s32.totalorder %s18, 0
      %s21 = sadd.s32 %s20, 1
      %s22 = scalar_select %p19, %s20, %s21
      %p25 = pneg %p19
      %p26 = scmp.eq.s32.totalorder %s10, 3
      %p27 = por %p25, %p26
      %p28 = scmp.ne.s32.totalorder %s20, %s23
      %p29 = scmp.eq.s32.totalorder %s10, 0
      %p30 = por %p28, %p29
      %p31 = scmp.ne.s32.totalorder %s20, %s23
      %p32 = scmp.eq.s32.totalorder %s15, 3
      %p33 = por %p31, %p32
      %p34 = scmp.ne.s32.totalorder %s23, %s24
      %p35 = scmp.eq.s32.totalorder %s15, 0
      %p36 = por %p34, %p35
      %p37 = scmp.ne.s32.totalorder %s23, %s24
      %p38 = scmp.eq.s32.totalorder %s16, 3
      %p39 = por %p37, %p38
      %p41 = scmp.ne.s32.totalorder %s24, %s40
      %p42 = scmp.eq.s32.totalorder %s16, 0
      %p43 = por %p41, %p42
      %s44 = ssub.s32 %s10, %s17
      %p45 = scmp.eq.s32.totalorder %s44, 0
      %s47 = sadd.s32 %s46, 1
      %s48 = scalar_select %p45, %s46, %s47
      %p51 = pneg %p45
      %p52 = scmp.eq.s32.totalorder %s10, 3
      %p53 = por %p51, %p52
      %p54 = scmp.ne.s32.totalorder %s46, %s49
      %p55 = scmp.eq.s32.totalorder %s10, 0
      %p56 = por %p54, %p55
      %p57 = scmp.ne.s32.totalorder %s46, %s49
      %p58 = scmp.eq.s32.totalorder %s15, 3
      %p59 = por %p57, %p58
      %p60 = scmp.ne.s32.totalorder %s49, %s50
      %p61 = scmp.eq.s32.totalorder %s15, 0
      %p62 = por %p60, %p61
      %p63 = scmp.ne.s32.totalorder %s49, %s50
      %p64 = scmp.eq.s32.totalorder %s16, 3
      %p65 = por %p63, %p64
      %p67 = scmp.ne.s32.totalorder %s50, %s66
      %p68 = scmp.eq.s32.totalorder %s16, 0
      %p69 = por %p67, %p68
      %p70 = scmp.le.s32.totalorder 1, %s10
      %p71 = scmp.lt.s32.totalorder %s10, 5
      %p72 = pnand %p70, %p71
      %p73 = pneg %p72
      // Predicated region
      $region9: #{eco_snn_forward.5} parent=5 // pred_check
        _
      $region10: #{eco_snn_forward.5} parent=5 // pred_check_branch
        %75 = sbr.rel (%p72) target = $region12
      $region11: #{eco_snn_forward.5} parent=5 // pred_region
        %s76 = ssub.s32 %s10, 1
      $region12: #{eco_snn_forward.5} parent=5 // pred_fallthru
        _
      %p77 = scmp.lt.s32.totalorder %s10, 4
      // Predicated region
      $region13: #{eco_snn_forward.5} parent=5 // pred_check
        %p78 = pneg %p77
      $region14: #{eco_snn_forward.5} parent=5 // pred_check_branch
        %80 = sbr.rel (%p78) target = $region16
      $region15: #{eco_snn_forward.5} parent=5 // pred_region
        // Predicated region
        $region17: #{eco_snn_forward.5} parent=15 // pred_check
          %p81 = pneg %p30
        $region18: #{eco_snn_forward.5} parent=15 // pred_check_branch
          %83 = sbr.rel (%p81) target = $region20
        $region19: #{eco_snn_forward.5} parent=15 // pred_region
          %p84 = scmp.lt.s32.totalorder %s10, 3
          %s85 = scalar_select %p84, %s10, 3
          %s86 = smul.addr %s85, 2
          %s87 = scalar_lea.vmem %s0, %s86
        $region20: #{eco_snn_forward.5} parent=15 // pred_fallthru
          _
      $region16: #{eco_snn_forward.5} parent=5 // pred_fallthru
        _
      %p88 = scmp.le.s32.totalorder 1, %s10
      %p89 = scmp.lt.s32.totalorder %s10, 5
      %p90 = pnand %p88, %p89
      %p91 = pneg %p90
      // Predicated region
      $region21: #{eco_snn_forward.5} parent=5 // pred_check
        _
      $region22: #{eco_snn_forward.5} parent=5 // pred_check_branch
        %93 = sbr.rel (%p90) target = $region24
      $region23: #{eco_snn_forward.5} parent=5 // pred_region
        %s94 = ssub.s32 %s10, 1
        %p95 = scmp.lt.s32.totalorder %s15, 3
        %s96 = scalar_select %p95, %s15, 3
        %s97 = smul.addr %s96, 2
        %s98 = scalar_lea.vmem %s0, %s97
        %p99 = pneg %p36
        %p100 = pneg %p33
        %p101 = pneg %p62
        %p102 = pneg %p59
        %s103 = sand.u32 %s49, 1
        %s104 = scalar_lea.sflag [#allocation4], %s103
        %s105 = sand.u32 %s49, 1
        %s106 = smul.addr %s105, 2
        %s107 = scalar_lea.vmem [#allocation3], %s106
        %p108 = scmp.lt.s32.totalorder %s15, 3
        %s109 = scalar_select %p108, %s15, 3
        %s110 = smul.addr %s109, 2
        %s111 = scalar_lea.vmem %s0, %s110
        %p112 = scmp.eq.s32.totalorder %s15, 0
        // Predicated region
        $region25: #{eco_snn_forward.5} parent=23 // pred_check
          %p113 = pneg %p112
        $region26: #{eco_snn_forward.5} parent=23 // pred_check_branch
          %115 = sbr.rel (%p113) target = $region28
        $region27: #{eco_snn_forward.5} parent=23 // pred_region
          %116 = vst [vmem:[#allocation2] sm:$0x3] 0.0
        $region28: #{eco_snn_forward.5} parent=23 // pred_fallthru
          _
        %v117 = vld [vmem:[%s111] sm:$0x3]
        %v118 = vld [vmem:[#allocation2] sm:$0x3]
        %vm119 = vcmp.gt.f32.partialorder %v118, 0.3
        %v120 = vsel %vm119, 1, 0
        %v121 = vcvt.s32.f32 %v120
        %v122 = vmul.f32 %v118, 0.5
        %v123 = vadd.f32 %v122, %v117
        %v124 = vmul.f32 %v121, 0.3
        %v125 = vsub.f32 %v123, %v124
        %vm126 = vcmp.gt.f32.partialorder %v125, 0.3
        %v127 = vsel %vm126, 1, 0
        %v128 = vcvt.s32.f32 %v127
        %129 = vst [vmem:[%s107] sm:$0x3] %v128
        %130 = vst [vmem:[#allocation2] sm:$0x3] %v125
        %s131 = sand.u32 %s49, 1
        %s132 = scalar_lea.sflag [#allocation4], %s131
        %s133 = sand.u32 %s49, 1
        %s134 = smul.addr %s133, 2
        %s135 = scalar_lea.vmem [#allocation3], %s134
        // Predicated region
        $region29: #{eco_snn_forward.5} parent=23 // pred_check
          %p136 = pneg %p59
        $region30: #{eco_snn_forward.5} parent=23 // pred_check_branch
          %138 = sbr.rel (%p136) target = $region32
        $region31: #{eco_snn_forward.5} parent=23 // pred_region
          %s140 = ssub.s32 32, 32
          %141 = vsyncadd %s132, %s140
          %s142 = smul.addr %s15, 32
          %s143 = scalar_lea.hbm %s1, %s142
          %s145 = sshll.u32 %s135, 4
          %s146 = int_to_ptr.vmem [resolvable:$true] %s145
          %148 = dma.vmem_to_hbm [thread:$0]  %s146, 32, %s143, %s132
        $region32: #{eco_snn_forward.5} parent=23 // pred_fallthru
          _
      $region24: #{eco_snn_forward.5} parent=5 // pred_fallthru
        _
      %p149 = scmp.le.s32.totalorder 2, %s10
      // Predicated region
      $region33: #{eco_snn_forward.5} parent=5 // pred_check
        %p150 = pneg %p149
      $region34: #{eco_snn_forward.5} parent=5 // pred_check_branch
        %152 = sbr.rel (%p150) target = $region36
      $region35: #{eco_snn_forward.5} parent=5 // pred_region
        %s153 = ssub.s32 %s10, 2
        // Predicated region
        $region37: #{eco_snn_forward.5} parent=35 // pred_check
          %p154 = pneg %p65
        $region38: #{eco_snn_forward.5} parent=35 // pred_check_branch
          %156 = sbr.rel (%p154) target = $region40
        $region39: #{eco_snn_forward.5} parent=35 // pred_region
          %s157 = sand.u32 %s50, 1
          %s158 = scalar_lea.sflag [#allocation4], %s157
          %s159 = sand.u32 %s50, 1
          %s160 = smul.addr %s159, 2
          %s161 = scalar_lea.vmem [#allocation3], %s160
          %162 = dma.done %s158, 32
        $region40: #{eco_snn_forward.5} parent=35 // pred_fallthru
          _
      $region36: #{eco_snn_forward.5} parent=5 // pred_fallthru
        _
    $region6: #{eco_snn_forward.5} parent=1 // loop_footer
      %s14 = sadd.s32 1, %s10
    $region7: #{eco_snn_forward.5} parent=1 // loop_footer_branch
      %9 = sbr.rel target = $region3
    $region8: #{eco_snn_forward.5} parent=1 // loop_exit
      _
    %163 = vsyncpa [#allocation4], 1
    %s164 = scalar_lea.sflag [#allocation4], 1
    %165 = vsyncpa %s164, 1

// kernel: eco_snn_forward.4
$region0: #{eco_snn_forward.4}
  #allocation0 [shape = 'u32[]', space=smem, size = 0x4, offset = 0x4, fixed_abs, tag = 'smem constant byte address 0x4 - core index']
  #allocation1 [shape = 'u32[144,128]{1,0:T(1,128)}', space=vmem, size = 0x12000, scoped, tag = 'internal scratch']
  #allocation2 [shape = 'f32[8,4096]{1,0:T(8,128)}', space=vmem, size = 0x20000, scoped, tag = 'scratch operand']
  %s0 = inlined_call_operand.vmem [shape: bf16[8,3072], index: 0, kind: input, shape index: {}]
  %s1 = inlined_call_operand.hbm [shape: bf16[3072,4096], index: 1, kind: input, shape index: {}]
  %s2 = inlined_call_operand.vmem [shape: bf16[4096,128], index: 2, kind: input, shape index: {}]
  %s3 = inlined_call_operand.vmem [shape: f32[1,128], index: 3, kind: input, shape index: {}]
  %s4 = inlined_call_operand.vmem [shape: f32[8,128], index: 4, kind: output, shape index: {}]
  %s5 = sld [smem:[#allocation0]]
  $region61: #{eco_snn_forward.4} parent=0
    _
  %s7 = ssub.s32 1, %s5
  %s8 = scalar_select 0, %s7, %s5
  $region1: #{eco_snn_forward.4} parent=0
    #allocation3 [shape = 'u8[8388608]{0}', space=vmem, size = 0x800000, scoped, tag = 'input window, operand 1']
    #allocation4 [shape = 's32[2]{0}', space=sflag, size = 0x8, scoped, tag = 'scoped memory for eco_snn_forward.4']
    %9 = vsyncpa [#allocation4], 0
    %s10 = scalar_lea.sflag [#allocation4], 1
    %11 = vsyncpa %s10, 0
    loop: start=0, step=1, limit=8
    $region2: #{eco_snn_forward.4} parent=1 // loop_pre_header
      _
    $region3: #{eco_snn_forward.4} parent=1 // loop_header
      %s13 = sphi 0, %s17
      %p14 = scmp.ge.s32.totalorder %s13, 8
      %s23 = sphi 0, %s25
      %s26 = sphi 0, %s23
      %s27 = sphi 0, %s26
      %s43 = sphi 0, %s27
      %s49 = sphi 0, %s51
      %s52 = sphi 0, %s49
      %s53 = sphi 0, %s52
      %s69 = sphi 0, %s53
      %s73 = sphi 0, %s73
      %s75 = sphi 0, %s73
      %s76 = sphi 0, %s75
      %s90 = sphi 0, %s76
      %s94 = sphi 0, %s94
      %s96 = sphi 0, %s94
      %s97 = sphi 0, %s96
      %s111 = sphi 0, %s97
      %s115 = sphi 0, %s115
      %s117 = sphi 0, %s115
      %s118 = sphi 0, %s117
      %s132 = sphi 0, %s118
    $region4: #{eco_snn_forward.4} parent=1 // loop_header_branch
      %16 = sbr.rel (%p14) target = $region8
    $region5: #{eco_snn_forward.4} parent=1 // loop_body
      %s18 = ssub.s32 %s13, 1
      %s19 = ssub.s32 %s13, 2
      %s20 = sadd.s32 %s13, 1
      %s21 = ssub.s32 %s13, %s20
      %p22 = scmp.eq.s32.totalorder %s21, 0
      %s24 = sadd.s32 %s23, 1
      %s25 = scalar_select %p22, %s23, %s24
      %p28 = pneg %p22
      %p29 = scmp.eq.s32.totalorder %s13, 5
      %p30 = por %p28, %p29
      %p31 = scmp.ne.s32.totalorder %s23, %s26
      %p32 = scmp.eq.s32.totalorder %s13, 0
      %p33 = por %p31, %p32
      %p34 = scmp.ne.s32.totalorder %s23, %s26
      %p35 = scmp.eq.s32.totalorder %s18, 5
      %p36 = por %p34, %p35
      %p37 = scmp.ne.s32.totalorder %s26, %s27
      %p38 = scmp.eq.s32.totalorder %s18, 0
      %p39 = por %p37, %p38
      %p40 = scmp.ne.s32.totalorder %s26, %s27
      %p41 = scmp.eq.s32.totalorder %s19, 5
      %p42 = por %p40, %p41
      %p44 = scmp.ne.s32.totalorder %s27, %s43
      %p45 = scmp.eq.s32.totalorder %s19, 0
      %p46 = por %p44, %p45
      %s47 = ssub.s32 %s13, %s20
      %p48 = scmp.eq.s32.totalorder %s47, 0
      %s50 = sadd.s32 %s49, 1
      %s51 = scalar_select %p48, %s49, %s50
      %p54 = pneg %p48
      %p55 = scmp.eq.s32.totalorder %s13, 5
      %p56 = por %p54, %p55
      %p57 = scmp.ne.s32.totalorder %s49, %s52
      %p58 = scmp.eq.s32.totalorder %s13, 0
      %p59 = por %p57, %p58
      %p60 = scmp.ne.s32.totalorder %s49, %s52
      %p61 = scmp.eq.s32.totalorder %s18, 5
      %p62 = por %p60, %p61
      %p63 = scmp.ne.s32.totalorder %s52, %s53
      %p64 = scmp.eq.s32.totalorder %s18, 0
      %p65 = por %p63, %p64
      %p66 = scmp.ne.s32.totalorder %s52, %s53
      %p67 = scmp.eq.s32.totalorder %s19, 5
      %p68 = por %p66, %p67
      %p70 = scmp.ne.s32.totalorder %s53, %s69
      %p71 = scmp.eq.s32.totalorder %s19, 0
      %p72 = por %p70, %p71
      %s74 = sadd.s32 %s73, 1
      %p77 = scmp.eq.s32.totalorder %s13, 5
      %p78 = scmp.ne.s32.totalorder %s73, %s75
      %p79 = scmp.eq.s32.totalorder %s13, 0
      %p80 = por %p78, %p79
      %p81 = scmp.ne.s32.totalorder %s73, %s75
      %p82 = scmp.eq.s32.totalorder %s18, 5
      %p83 = por %p81, %p82
      %p84 = scmp.ne.s32.totalorder %s75, %s76
      %p85 = scmp.eq.s32.totalorder %s18, 0
      %p86 = por %p84, %p85
      %p87 = scmp.ne.s32.totalorder %s75, %s76
      %p88 = scmp.eq.s32.totalorder %s19, 5
      %p89 = por %p87, %p88
      %p91 = scmp.ne.s32.totalorder %s76, %s90
      %p92 = scmp.eq.s32.totalorder %s19, 0
      %p93 = por %p91, %p92
      %s95 = sadd.s32 %s94, 1
      %p98 = scmp.eq.s32.totalorder %s13, 5
      %p99 = scmp.ne.s32.totalorder %s94, %s96
      %p100 = scmp.eq.s32.totalorder %s13, 0
      %p101 = por %p99, %p100
      %p102 = scmp.ne.s32.totalorder %s94, %s96
      %p103 = scmp.eq.s32.totalorder %s18, 5
      %p104 = por %p102, %p103
      %p105 = scmp.ne.s32.totalorder %s96, %s97
      %p106 = scmp.eq.s32.totalorder %s18, 0
      %p107 = por %p105, %p106
      %p108 = scmp.ne.s32.totalorder %s96, %s97
      %p109 = scmp.eq.s32.totalorder %s19, 5
      %p110 = por %p108, %p109
      %p112 = scmp.ne.s32.totalorder %s97, %s111
      %p113 = scmp.eq.s32.totalorder %s19, 0
      %p114 = por %p112, %p113
      %s116 = sadd.s32 %s115, 1
      %p119 = scmp.eq.s32.totalorder %s13, 5
      %p120 = scmp.ne.s32.totalorder %s115, %s117
      %p121 = scmp.eq.s32.totalorder %s13, 0
      %p122 = por %p120, %p121
      %p123 = scmp.ne.s32.totalorder %s115, %s117
      %p124 = scmp.eq.s32.totalorder %s18, 5
      %p125 = por %p123, %p124
      %p126 = scmp.ne.s32.totalorder %s117, %s118
      %p127 = scmp.eq.s32.totalorder %s18, 0
      %p128 = por %p126, %p127
      %p129 = scmp.ne.s32.totalorder %s117, %s118
      %p130 = scmp.eq.s32.totalorder %s19, 5
      %p131 = por %p129, %p130
      %p133 = scmp.ne.s32.totalorder %s118, %s132
      %p134 = scmp.eq.s32.totalorder %s19, 0
      %p135 = por %p133, %p134
      %p136 = scmp.le.s32.totalorder 1, %s13
      %p137 = scmp.lt.s32.totalorder %s13, 7
      %p138 = pnand %p136, %p137
      %p139 = pneg %p138
      // Predicated region
      $region9: #{eco_snn_forward.4} parent=5 // pred_check
        _
      $region10: #{eco_snn_forward.4} parent=5 // pred_check_branch
        %141 = sbr.rel (%p138) target = $region12
      $region11: #{eco_snn_forward.4} parent=5 // pred_region
        %s142 = ssub.s32 %s13, 1
        // Predicated region
        $region13: #{eco_snn_forward.4} parent=11 // pred_check
          %p143 = pneg %p86
        $region14: #{eco_snn_forward.4} parent=11 // pred_check_branch
          %145 = sbr.rel (%p143) target = $region16
        $region15: #{eco_snn_forward.4} parent=11 // pred_region
          _
        $region16: #{eco_snn_forward.4} parent=11 // pred_fallthru
          _
        // Predicated region
        $region17: #{eco_snn_forward.4} parent=11 // pred_check
          %p146 = pneg %p107
        $region18: #{eco_snn_forward.4} parent=11 // pred_check_branch
          %148 = sbr.rel (%p146) target = $region20
        $region19: #{eco_snn_forward.4} parent=11 // pred_region
          _
        $region20: #{eco_snn_forward.4} parent=11 // pred_fallthru
          _
      $region12: #{eco_snn_forward.4} parent=5 // pred_fallthru
        _
      %p149 = scmp.lt.s32.totalorder %s13, 6
      // Predicated region
      $region21: #{eco_snn_forward.4} parent=5 // pred_check
        %p150 = pneg %p149
      $region22: #{eco_snn_forward.4} parent=5 // pred_check_branch
        %152 = sbr.rel (%p150) target = $region24
      $region23: #{eco_snn_forward.4} parent=5 // pred_region
        // Predicated region
        $region25: #{eco_snn_forward.4} parent=23 // pred_check
          %p153 = pneg %p33
        $region26: #{eco_snn_forward.4} parent=23 // pred_check_branch
          %155 = sbr.rel (%p153) target = $region28
        $region27: #{eco_snn_forward.4} parent=23 // pred_region
          %s156 = smul.u32 4, %s13
          %p157 = scmp.lt.s32.totalorder %s156, 23
          %s158 = scalar_select %p157, %s156, 23
          %s159 = smul.addr %s158, 4
          %s160 = scalar_lea.vmem %s0, %s159
          %s161 = smul.u32 4, %s13
        $region28: #{eco_snn_forward.4} parent=23 // pred_fallthru
          _
        // Predicated region
        $region29: #{eco_snn_forward.4} parent=23 // pred_check
          %p162 = pneg %p59
        $region30: #{eco_snn_forward.4} parent=23 // pred_check_branch
          %164 = sbr.rel (%p162) target = $region32
        $region31: #{eco_snn_forward.4} parent=23 // pred_region
          %s165 = sand.u32 %s49, 1
          %s166 = scalar_lea.sflag [#allocation4], %s165
          %s167 = sand.u32 %s49, 1
          %s168 = smul.addr %s167, 8192
          %s169 = scalar_lea.vmem [#allocation3], %s168
          %s170 = smul.u32 64, %s13
          %s172 = ssub.s32 131072, 131072
          %173 = vsyncadd %s166, %s172
          %s174 = smul.addr %s170, 32
          %s175 = smul.addr %s174, 64
          %s176 = scalar_lea.hbm %s1, %s175
          %s177 = sshll.u32 %s169, 4
          %s178 = int_to_ptr.vmem [resolvable:$true] %s177
          %183 = dma.hbm_to_vmem [thread:$0]  %s176, 131072, %s178, %s166, 2048, 2048, 128
        $region32: #{eco_snn_forward.4} parent=23 // pred_fallthru
          _
      $region24: #{eco_snn_forward.4} parent=5 // pred_fallthru
        _
      %p184 = scmp.le.s32.totalorder 1, %s13
      %p185 = scmp.lt.s32.totalorder %s13, 7
      %p186 = pnand %p184, %p185
      %p187 = pneg %p186
      // Predicated region
      $region33: #{eco_snn_forward.4} parent=5 // pred_check
        _
      $region34: #{eco_snn_forward.4} parent=5 // pred_check_branch
        %189 = sbr.rel (%p186) target = $region36
      $region35: #{eco_snn_forward.4} parent=5 // pred_region
        %s190 = ssub.s32 %s13, 1
        %s191 = sand.u32 %s52, 1
        %s192 = scalar_lea.sflag [#allocation4], %s191
        %s193 = sand.u32 %s52, 1
        %s194 = smul.addr %s193, 8192
        %s195 = scalar_lea.vmem [#allocation3], %s194
        // Predicated region
        $region37: #{eco_snn_forward.4} parent=35 // pred_check
          %p196 = pneg %p65
        $region38: #{eco_snn_forward.4} parent=35 // pred_check_branch
          %198 = sbr.rel (%p196) target = $region40
        $region39: #{eco_snn_forward.4} parent=35 // pred_region
          %199 = dma.done %s192, 131072
        $region40: #{eco_snn_forward.4} parent=35 // pred_fallthru
          _
        %s200 = smul.u32 4, %s18
        %p201 = scmp.lt.s32.totalorder %s200, 23
        %s202 = scalar_select %p201, %s200, 23
        %s203 = smul.addr %s202, 4
        %s204 = scalar_lea.vmem %s0, %s203
        %p205 = pneg %p39
        %p206 = pneg %p36
        %s207 = sand.u32 %s52, 1
        %s208 = scalar_lea.sflag [#allocation4], %s207
        %s209 = sand.u32 %s52, 1
        %s210 = smul.addr %s209, 8192
        %s211 = scalar_lea.vmem [#allocation3], %s210
        %p212 = pneg %p65
        %p213 = pneg %p62
        %p214 = pneg %p86
        %p215 = pneg %p83
        %p216 = pneg %p107
        %p217 = pneg %p104
        %p218 = pneg %p128
        %p219 = pneg %p125
        %s220 = smul.u32 4, %s18
        %p221 = scmp.lt.s32.totalorder %s220, 23
        %s222 = scalar_select %p221, %s220, 23
        %s223 = smul.addr %s222, 4
        %s224 = scalar_lea.vmem %s0, %s223
        %s225 = smul.u32 4, %s18
        %s226 = smul.u32 64, %s18
        %p228 = scmp.eq.s32.totalorder %s18, 0
        // Predicated region
        $region41: #{eco_snn_forward.4} parent=35 // pred_check
          %p229 = pneg %p228
        $region42: #{eco_snn_forward.4} parent=35 // pred_check_branch
          %231 = sbr.rel (%p229) target = $region44
        $region43: #{eco_snn_forward.4} parent=35 // pred_region
          %232 = vst [vmem:[#allocation2] sm:$0xff] 0.0
          %233 = vst [vmem:[#allocation2 + $0x8] sm:$0xff] 0.0
          %234 = vst [vmem:[#allocation2 + $0x10] sm:$0xff] 0.0
          %235 = vst [vmem:[#allocation2 + $0x18] sm:$0xff] 0.0
          %236 = vst [vmem:[#allocation2 + $0x20] sm:$0xff] 0.0
          %237 = vst [vmem:[#allocation2 + $0x28] sm:$0xff] 0.0
          %238 = vst [vmem:[#allocation2 + $0x30] sm:$0xff] 0.0
          %239 = vst [vmem:[#allocation2 + $0x38] sm:$0xff] 0.0
          %240 = vst [vmem:[#allocation2 + $0x40] sm:$0xff] 0.0
          %241 = vst [vmem:[#allocation2 + $0x48] sm:$0xff] 0.0
          %242 = vst [vmem:[#allocation2 + $0x50] sm:$0xff] 0.0
          %243 = vst [vmem:[#allocation2 + $0x58] sm:$0xff] 0.0
          %244 = vst [vmem:[#allocation2 + $0x60] sm:$0xff] 0.0
          %245 = vst [vmem:[#allocation2 + $0x68] sm:$0xff] 0.0
          %246 = vst [vmem:[#allocation2 + $0x70] sm:$0xff] 0.0
          %247 = vst [vmem:[#allocation2 + $0x78] sm:$0xff] 0.0
          %248 = vst [vmem:[#allocation2 + $0x80] sm:$0xff] 0.0
          %249 = vst [vmem:[#allocation2 + $0x88] sm:$0xff] 0.0
          %250 = vst [vmem:[#allocation2 + $0x90] sm:$0xff] 0.0
          %251 = vst [vmem:[#allocation2 + $0x98] sm:$0xff] 0.0
          %252 = vst [vmem:[#allocation2 + $0xa0] sm:$0xff] 0.0
          %253 = vst [vmem:[#allocation2 + $0xa8] sm:$0xff] 0.0
          %254 = vst [vmem:[#allocation2 + $0xb0] sm:$0xff] 0.0
          %255 = vst [vmem:[#allocation2 + $0xb8] sm:$0xff] 0.0
          %256 = vst [vmem:[#allocation2 + $0xc0] sm:$0xff] 0.0
          %257 = vst [vmem:[#allocation2 + $0xc8] sm:$0xff] 0.0
          %258 = vst [vmem:[#allocation2 + $0xd0] sm:$0xff] 0.0
          %259 = vst [vmem:[#allocation2 + $0xd8] sm:$0xff] 0.0
          %260 = vst [vmem:[#allocation2 + $0xe0] sm:$0xff] 0.0
          %261 = vst [vmem:[#allocation2 + $0xe8] sm:$0xff] 0.0
          %262 = vst [vmem:[#allocation2 + $0xf0] sm:$0xff] 0.0
          %263 = vst [vmem:[#allocation2 + $0xf8] sm:$0xff] 0.0
        $region44: #{eco_snn_forward.4} parent=35 // pred_fallthru
          _
        %v264 = vld [vmem:[#allocation2] sm:$0xff]
        %v265 = vld [vmem:[#allocation2 + $0x8] sm:$0xff]
        %v266 = vld [vmem:[#allocation2 + $0x10] sm:$0xff]
        %v267 = vld [vmem:[#allocation2 + $0x18] sm:$0xff]
        %v268 = vld [vmem:[#allocation2 + $0x20] sm:$0xff]
        %v269 = vld [vmem:[#allocation2 + $0x28] sm:$0xff]
        %v270 = vld [vmem:[#allocation2 + $0x30] sm:$0xff]
        %v271 = vld [vmem:[#allocation2 + $0x38] sm:$0xff]
        %v272 = vld [vmem:[#allocation2 + $0x40] sm:$0xff]
        %v273 = vld [vmem:[#allocation2 + $0x48] sm:$0xff]
        %v274 = vld [vmem:[#allocation2 + $0x50] sm:$0xff]
        %v275 = vld [vmem:[#allocation2 + $0x58] sm:$0xff]
        %v276 = vld [vmem:[#allocation2 + $0x60] sm:$0xff]
        %v277 = vld [vmem:[#allocation2 + $0x68] sm:$0xff]
        %v278 = vld [vmem:[#allocation2 + $0x70] sm:$0xff]
        %v279 = vld [vmem:[#allocation2 + $0x78] sm:$0xff]
        %v280 = vld [vmem:[#allocation2 + $0x80] sm:$0xff]
        %v281 = vld [vmem:[#allocation2 + $0x88] sm:$0xff]
        %v282 = vld [vmem:[#allocation2 + $0x90] sm:$0xff]
        %v283 = vld [vmem:[#allocation2 + $0x98] sm:$0xff]
        %v284 = vld [vmem:[#allocation2 + $0xa0] sm:$0xff]
        %v285 = vld [vmem:[#allocation2 + $0xa8] sm:$0xff]
        %v286 = vld [vmem:[#allocation2 + $0xb0] sm:$0xff]
        %v287 = vld [vmem:[#allocation2 + $0xb8] sm:$0xff]
        %v288 = vld [vmem:[#allocation2 + $0xc0] sm:$0xff]
        %v289 = vld [vmem:[#allocation2 + $0xc8] sm:$0xff]
        %v290 = vld [vmem:[#allocation2 + $0xd0] sm:$0xff]
        %v291 = vld [vmem:[#allocation2 + $0xd8] sm:$0xff]
        %v292 = vld [vmem:[#allocation2 + $0xe0] sm:$0xff]
        %v293 = vld [vmem:[#allocation2 + $0xe8] sm:$0xff]
        %v294 = vld [vmem:[#allocation2 + $0xf0] sm:$0xff]
        %v295 = vld [vmem:[#allocation2 + $0xf8] sm:$0xff]
        %v296 = vld [vmem:[%s224] sm:$0xff]
        %v297 = vld [vmem:[%s224 + $0x8] sm:$0xff]
        %v298 = vld [vmem:[%s195] sm:$0xff]
        %v299 = vld [vmem:[%s195 + $0x8] sm:$0xff]
        %v300 = vld [vmem:[%s195 + $0x10] sm:$0xff]
        %v301 = vld [vmem:[%s195 + $0x18] sm:$0xff]
        %v302 = vld [vmem:[%s195 + $0x20] sm:$0xff]
        %v303 = vld [vmem:[%s195 + $0x28] sm:$0xff]
        %v304 = vld [vmem:[%s195 + $0x30] sm:$0xff]
        %v305 = vld [vmem:[%s195 + $0x38] sm:$0xff]
        %v306 = vld [vmem:[%s195 + $0x40] sm:$0xff]
        %v307 = vld [vmem:[%s195 + $0x48] sm:$0xff]
        %v308 = vld [vmem:[%s195 + $0x50] sm:$0xff]
        %v309 = vld [vmem:[%s195 + $0x58] sm:$0xff]
        %v310 = vld [vmem:[%s195 + $0x60] sm:$0xff]
        %v311 = vld [vmem:[%s195 + $0x68] sm:$0xff]
        %v312 = vld [vmem:[%s195 + $0x70] sm:$0xff]
        %v313 = vld [vmem:[%s195 + $0x78] sm:$0xff]
        %v314 = vld [vmem:[%s195 + $0x80] sm:$0xff]
        %v315 = vld [vmem:[%s195 + $0x88] sm:$0xff]
        %v316 = vld [vmem:[%s195 + $0x90] sm:$0xff]
        %v317 = vld [vmem:[%s195 + $0x98] sm:$0xff]
        %v318 = vld [vmem:[%s195 + $0xa0] sm:$0xff]
        %v319 = vld [vmem:[%s195 + $0xa8] sm:$0xff]
        %v320 = vld [vmem:[%s195 + $0xb0] sm:$0xff]
        %v321 = vld [vmem:[%s195 + $0xb8] sm:$0xff]
        %v322 = vld [vmem:[%s195 + $0xc0] sm:$0xff]
        %v323 = vld [vmem:[%s195 + $0xc8] sm:$0xff]
        %v324 = vld [vmem:[%s195 + $0xd0] sm:$0xff]
        %v325 = vld [vmem:[%s195 + $0xd8] sm:$0xff]
        %v326 = vld [vmem:[%s195 + $0xe0] sm:$0xff]
        %v327 = vld [vmem:[%s195 + $0xe8] sm:$0xff]
        %v328 = vld [vmem:[%s195 + $0xf0] sm:$0xff]
        %v329 = vld [vmem:[%s195 + $0xf8] sm:$0xff]
        %v330 = vld [vmem:[%s195 + $0x100] sm:$0xff]
        %v331 = vld [vmem:[%s195 + $0x108] sm:$0xff]
        %v332 = vld [vmem:[%s195 + $0x110] sm:$0xff]
        %v333 = vld [vmem:[%s195 + $0x118] sm:$0xff]
        %v334 = vld [vmem:[%s195 + $0x120] sm:$0xff]
        %v335 = vld [vmem:[%s195 + $0x128] sm:$0xff]
        %v336 = vld [vmem:[%s195 + $0x130] sm:$0xff]
        %v337 = vld [vmem:[%s195 + $0x138] sm:$0xff]
        %v338 = vld [vmem:[%s195 + $0x140] sm:$0xff]
        %v339 = vld [vmem:[%s195 + $0x148] sm:$0xff]
        %v340 = vld [vmem:[%s195 + $0x150] sm:$0xff]
        %v341 = vld [vmem:[%s195 + $0x158] sm:$0xff]
        %v342 = vld [vmem:[%s195 + $0x160] sm:$0xff]
        %v343 = vld [vmem:[%s195 + $0x168] sm:$0xff]
        %v344 = vld [vmem:[%s195 + $0x170] sm:$0xff]
        %v345 = vld [vmem:[%s195 + $0x178] sm:$0xff]
        %v346 = vld [vmem:[%s195 + $0x180] sm:$0xff]
        %v347 = vld [vmem:[%s195 + $0x188] sm:$0xff]
        %v348 = vld [vmem:[%s195 + $0x190] sm:$0xff]
        %v349 = vld [vmem:[%s195 + $0x198] sm:$0xff]
        %v350 = vld [vmem:[%s195 + $0x1a0] sm:$0xff]
        %v351 = vld [vmem:[%s195 + $0x1a8] sm:$0xff]
        %v352 = vld [vmem:[%s195 + $0x1b0] sm:$0xff]
        %v353 = vld [vmem:[%s195 + $0x1b8] sm:$0xff]
        %v354 = vld [vmem:[%s195 + $0x1c0] sm:$0xff]
        %v355 = vld [vmem:[%s195 + $0x1c8] sm:$0xff]
        %v356 = vld [vmem:[%s195 + $0x1d0] sm:$0xff]
        %v357 = vld [vmem:[%s195 + $0x1d8] sm:$0xff]
        %v358 = vld [vmem:[%s195 + $0x1e0] sm:$0xff]
        %v359 = vld [vmem:[%s195 + $0x1e8] sm:$0xff]
        %v360 = vld [vmem:[%s195 + $0x1f0] sm:$0xff]
        %v361 = vld [vmem:[%s195 + $0x1f8] sm:$0xff]
        %v362 = vld [vmem:[%s195 + $0x200] sm:$0xff]
        %v363 = vld [vmem:[%s195 + $0x208] sm:$0xff]
        %v364 = vld [vmem:[%s195 + $0x210] sm:$0xff]
        %v365 = vld [vmem:[%s195 + $0x218] sm:$0xff]
        %v366 = vld [vmem:[%s195 + $0x220] sm:$0xff]
        %v367 = vld [vmem:[%s195 + $0x228] sm:$0xff]
        %v368 = vld [vmem:[%s195 + $0x230] sm:$0xff]
        %v369 = vld [vmem:[%s195 + $0x238] sm:$0xff]
        %v370 = vld [vmem:[%s195 + $0x240] sm:$0xff]
        %v371 = vld [vmem:[%s195 + $0x248] sm:$0xff]
        %v372 = vld [vmem:[%s195 + $0x250] sm:$0xff]
        %v373 = vld [vmem:[%s195 + $0x258] sm:$0xff]
        %v374 = vld [vmem:[%s195 + $0x260] sm:$0xff]
        %v375 = vld [vmem:[%s195 + $0x268] sm:$0xff]
        %v376 = vld [vmem:[%s195 + $0x270] sm:$0xff]
        %v377 = vld [vmem:[%s195 + $0x278] sm:$0xff]
        %v378 = vld [vmem:[%s195 + $0x280] sm:$0xff]
        %v379 = vld [vmem:[%s195 + $0x288] sm:$0xff]
        %v380 = vld [vmem:[%s195 + $0x290] sm:$0xff]
        %v381 = vld [vmem:[%s195 + $0x298] sm:$0xff]
        %v382 = vld [vmem:[%s195 + $0x2a0] sm:$0xff]
        %v383 = vld [vmem:[%s195 + $0x2a8] sm:$0xff]
        %v384 = vld [vmem:[%s195 + $0x2b0] sm:$0xff]
        %v385 = vld [vmem:[%s195 + $0x2b8] sm:$0xff]
        %v386 = vld [vmem:[%s195 + $0x2c0] sm:$0xff]
        %v387 = vld [vmem:[%s195 + $0x2c8] sm:$0xff]
        %v388 = vld [vmem:[%s195 + $0x2d0] sm:$0xff]
        %v389 = vld [vmem:[%s195 + $0x2d8] sm:$0xff]
        %v390 = vld [vmem:[%s195 + $0x2e0] sm:$0xff]
        %v391 = vld [vmem:[%s195 + $0x2e8] sm:$0xff]
        %v392 = vld [vmem:[%s195 + $0x2f0] sm:$0xff]
        %v393 = vld [vmem:[%s195 + $0x2f8] sm:$0xff]
        %v394 = vld [vmem:[%s195 + $0x300] sm:$0xff]
        %v395 = vld [vmem:[%s195 + $0x308] sm:$0xff]
        %v396 = vld [vmem:[%s195 + $0x310] sm:$0xff]
        %v397 = vld [vmem:[%s195 + $0x318] sm:$0xff]
        %v398 = vld [vmem:[%s195 + $0x320] sm:$0xff]
        %v399 = vld [vmem:[%s195 + $0x328] sm:$0xff]
        %v400 = vld [vmem:[%s195 + $0x330] sm:$0xff]
        %v401 = vld [vmem:[%s195 + $0x338] sm:$0xff]
        %v402 = vld [vmem:[%s195 + $0x340] sm:$0xff]
        %v403 = vld [vmem:[%s195 + $0x348] sm:$0xff]
        %v404 = vld [vmem:[%s195 + $0x350] sm:$0xff]
        %v405 = vld [vmem:[%s195 + $0x358] sm:$0xff]
        %v406 = vld [vmem:[%s195 + $0x360] sm:$0xff]
        %v407 = vld [vmem:[%s195 + $0x368] sm:$0xff]
        %v408 = vld [vmem:[%s195 + $0x370] sm:$0xff]
        %v409 = vld [vmem:[%s195 + $0x378] sm:$0xff]
        %v410 = vld [vmem:[%s195 + $0x380] sm:$0xff]
        %v411 = vld [vmem:[%s195 + $0x388] sm:$0xff]
        %v412 = vld [vmem:[%s195 + $0x390] sm:$0xff]
        %v413 = vld [vmem:[%s195 + $0x398] sm:$0xff]
        %v414 = vld [vmem:[%s195 + $0x3a0] sm:$0xff]
        %v415 = vld [vmem:[%s195 + $0x3a8] sm:$0xff]
        %v416 = vld [vmem:[%s195 + $0x3b0] sm:$0xff]
        %v417 = vld [vmem:[%s195 + $0x3b8] sm:$0xff]
        %v418 = vld [vmem:[%s195 + $0x3c0] sm:$0xff]
        %v419 = vld [vmem:[%s195 + $0x3c8] sm:$0xff]
        %v420 = vld [vmem:[%s195 + $0x3d0] sm:$0xff]
        %v421 = vld [vmem:[%s195 + $0x3d8] sm:$0xff]
        %v422 = vld [vmem:[%s195 + $0x3e0] sm:$0xff]
        %v423 = vld [vmem:[%s195 + $0x3e8] sm:$0xff]
        %v424 = vld [vmem:[%s195 + $0x3f0] sm:$0xff]
        %v425 = vld [vmem:[%s195 + $0x3f8] sm:$0xff]
        %v426 = vld [vmem:[%s195 + $0x400] sm:$0xff]
        %v427 = vld [vmem:[%s195 + $0x408] sm:$0xff]
        %v428 = vld [vmem:[%s195 + $0x410] sm:$0xff]
        %v429 = vld [vmem:[%s195 + $0x418] sm:$0xff]
        %v430 = vld [vmem:[%s195 + $0x420] sm:$0xff]
        %v431 = vld [vmem:[%s195 + $0x428] sm:$0xff]
        %v432 = vld [vmem:[%s195 + $0x430] sm:$0xff]
        %v433 = vld [vmem:[%s195 + $0x438] sm:$0xff]
        %v434 = vld [vmem:[%s195 + $0x440] sm:$0xff]
        %v435 = vld [vmem:[%s195 + $0x448] sm:$0xff]
        %v436 = vld [vmem:[%s195 + $0x450] sm:$0xff]
        %v437 = vld [vmem:[%s195 + $0x458] sm:$0xff]
        %v438 = vld [vmem:[%s195 + $0x460] sm:$0xff]
        %v439 = vld [vmem:[%s195 + $0x468] sm:$0xff]
        %v440 = vld [vmem:[%s195 + $0x470] sm:$0xff]
        %v441 = vld [vmem:[%s195 + $0x478] sm:$0xff]
        %v442 = vld [vmem:[%s195 + $0x480] sm:$0xff]
        %v443 = vld [vmem:[%s195 + $0x488] sm:$0xff]
        %v444 = vld [vmem:[%s195 + $0x490] sm:$0xff]
        %v445 = vld [vmem:[%s195 + $0x498] sm:$0xff]
        %v446 = vld [vmem:[%s195 + $0x4a0] sm:$0xff]
        %v447 = vld [vmem:[%s195 + $0x4a8] sm:$0xff]
        %v448 = vld [vmem:[%s195 + $0x4b0] sm:$0xff]
        %v449 = vld [vmem:[%s195 + $0x4b8] sm:$0xff]
        %v450 = vld [vmem:[%s195 + $0x4c0] sm:$0xff]
        %v451 = vld [vmem:[%s195 + $0x4c8] sm:$0xff]
        %v452 = vld [vmem:[%s195 + $0x4d0] sm:$0xff]
        %v453 = vld [vmem:[%s195 + $0x4d8] sm:$0xff]
        %v454 = vld [vmem:[%s195 + $0x4e0] sm:$0xff]
        %v455 = vld [vmem:[%s195 + $0x4e8] sm:$0xff]
        %v456 = vld [vmem:[%s195 + $0x4f0] sm:$0xff]
        %v457 = vld [vmem:[%s195 + $0x4f8] sm:$0xff]
        %v458 = vld [vmem:[%s195 + $0x500] sm:$0xff]
        %v459 = vld [vmem:[%s195 + $0x508] sm:$0xff]
        %v460 = vld [vmem:[%s195 + $0x510] sm:$0xff]
        %v461 = vld [vmem:[%s195 + $0x518] sm:$0xff]
        %v462 = vld [vmem:[%s195 + $0x520] sm:$0xff]
        %v463 = vld [vmem:[%s195 + $0x528] sm:$0xff]
        %v464 = vld [vmem:[%s195 + $0x530] sm:$0xff]
        %v465 = vld [vmem:[%s195 + $0x538] sm:$0xff]
        %v466 = vld [vmem:[%s195 + $0x540] sm:$0xff]
        %v467 = vld [vmem:[%s195 + $0x548] sm:$0xff]
        %v468 = vld [vmem:[%s195 + $0x550] sm:$0xff]
        %v469 = vld [vmem:[%s195 + $0x558] sm:$0xff]
        %v470 = vld [vmem:[%s195 + $0x560] sm:$0xff]
        %v471 = vld [vmem:[%s195 + $0x568] sm:$0xff]
        %v472 = vld [vmem:[%s195 + $0x570] sm:$0xff]
        %v473 = vld [vmem:[%s195 + $0x578] sm:$0xff]
        %v474 = vld [vmem:[%s195 + $0x580] sm:$0xff]
        %v475 = vld [vmem:[%s195 + $0x588] sm:$0xff]
        %v476 = vld [vmem:[%s195 + $0x590] sm:$0xff]
        %v477 = vld [vmem:[%s195 + $0x598] sm:$0xff]
        %v478 = vld [vmem:[%s195 + $0x5a0] sm:$0xff]
        %v479 = vld [vmem:[%s195 + $0x5a8] sm:$0xff]
        %v480 = vld [vmem:[%s195 + $0x5b0] sm:$0xff]
        %v481 = vld [vmem:[%s195 + $0x5b8] sm:$0xff]
        %v482 = vld [vmem:[%s195 + $0x5c0] sm:$0xff]
        %v483 = vld [vmem:[%s195 + $0x5c8] sm:$0xff]
        %v484 = vld [vmem:[%s195 + $0x5d0] sm:$0xff]
        %v485 = vld [vmem:[%s195 + $0x5d8] sm:$0xff]
        %v486 = vld [vmem:[%s195 + $0x5e0] sm:$0xff]
        %v487 = vld [vmem:[%s195 + $0x5e8] sm:$0xff]
        %v488 = vld [vmem:[%s195 + $0x5f0] sm:$0xff]
        %v489 = vld [vmem:[%s195 + $0x5f8] sm:$0xff]
        %v490 = vld [vmem:[%s195 + $0x600] sm:$0xff]
        %v491 = vld [vmem:[%s195 + $0x608] sm:$0xff]
        %v492 = vld [vmem:[%s195 + $0x610] sm:$0xff]
        %v493 = vld [vmem:[%s195 + $0x618] sm:$0xff]
        %v494 = vld [vmem:[%s195 + $0x620] sm:$0xff]
        %v495 = vld [vmem:[%s195 + $0x628] sm:$0xff]
        %v496 = vld [vmem:[%s195 + $0x630] sm:$0xff]
        %v497 = vld [vmem:[%s195 + $0x638] sm:$0xff]
        %v498 = vld [vmem:[%s195 + $0x640] sm:$0xff]
        %v499 = vld [vmem:[%s195 + $0x648] sm:$0xff]
        %v500 = vld [vmem:[%s195 + $0x650] sm:$0xff]
        %v501 = vld [vmem:[%s195 + $0x658] sm:$0xff]
        %v502 = vld [vmem:[%s195 + $0x660] sm:$0xff]
        %v503 = vld [vmem:[%s195 + $0x668] sm:$0xff]
        %v504 = vld [vmem:[%s195 + $0x670] sm:$0xff]
        %v505 = vld [vmem:[%s195 + $0x678] sm:$0xff]
        %v506 = vld [vmem:[%s195 + $0x680] sm:$0xff]
        %v507 = vld [vmem:[%s195 + $0x688] sm:$0xff]
        %v508 = vld [vmem:[%s195 + $0x690] sm:$0xff]
        %v509 = vld [vmem:[%s195 + $0x698] sm:$0xff]
        %v510 = vld [vmem:[%s195 + $0x6a0] sm:$0xff]
        %v511 = vld [vmem:[%s195 + $0x6a8] sm:$0xff]
        %v512 = vld [vmem:[%s195 + $0x6b0] sm:$0xff]
        %v513 = vld [vmem:[%s195 + $0x6b8] sm:$0xff]
        %v514 = vld [vmem:[%s195 + $0x6c0] sm:$0xff]
        %v515 = vld [vmem:[%s195 + $0x6c8] sm:$0xff]
        %v516 = vld [vmem:[%s195 + $0x6d0] sm:$0xff]
        %v517 = vld [vmem:[%s195 + $0x6d8] sm:$0xff]
        %v518 = vld [vmem:[%s195 + $0x6e0] sm:$0xff]
        %v519 = vld [vmem:[%s195 + $0x6e8] sm:$0xff]
        %v520 = vld [vmem:[%s195 + $0x6f0] sm:$0xff]
        %v521 = vld [vmem:[%s195 + $0x6f8] sm:$0xff]
        %v522 = vld [vmem:[%s195 + $0x700] sm:$0xff]
        %v523 = vld [vmem:[%s195 + $0x708] sm:$0xff]
        %v524 = vld [vmem:[%s195 + $0x710] sm:$0xff]
        %v525 = vld [vmem:[%s195 + $0x718] sm:$0xff]
        %v526 = vld [vmem:[%s195 + $0x720] sm:$0xff]
        %v527 = vld [vmem:[%s195 + $0x728] sm:$0xff]
        %v528 = vld [vmem:[%s195 + $0x730] sm:$0xff]
        %v529 = vld [vmem:[%s195 + $0x738] sm:$0xff]
        %v530 = vld [vmem:[%s195 + $0x740] sm:$0xff]
        %v531 = vld [vmem:[%s195 + $0x748] sm:$0xff]
        %v532 = vld [vmem:[%s195 + $0x750] sm:$0xff]
        %v533 = vld [vmem:[%s195 + $0x758] sm:$0xff]
        %v534 = vld [vmem:[%s195 + $0x760] sm:$0xff]
        %v535 = vld [vmem:[%s195 + $0x768] sm:$0xff]
        %v536 = vld [vmem:[%s195 + $0x770] sm:$0xff]
        %v537 = vld [vmem:[%s195 + $0x778] sm:$0xff]
        %v538 = vld [vmem:[%s195 + $0x780] sm:$0xff]
        %v539 = vld [vmem:[%s195 + $0x788] sm:$0xff]
        %v540 = vld [vmem:[%s195 + $0x790] sm:$0xff]
        %v541 = vld [vmem:[%s195 + $0x798] sm:$0xff]
        %v542 = vld [vmem:[%s195 + $0x7a0] sm:$0xff]
        %v543 = vld [vmem:[%s195 + $0x7a8] sm:$0xff]
        %v544 = vld [vmem:[%s195 + $0x7b0] sm:$0xff]
        %v545 = vld [vmem:[%s195 + $0x7b8] sm:$0xff]
        %v546 = vld [vmem:[%s195 + $0x7c0] sm:$0xff]
        %v547 = vld [vmem:[%s195 + $0x7c8] sm:$0xff]
        %v548 = vld [vmem:[%s195 + $0x7d0] sm:$0xff]
        %v549 = vld [vmem:[%s195 + $0x7d8] sm:$0xff]
        %v550 = vld [vmem:[%s195 + $0x7e0] sm:$0xff]
        %v551 = vld [vmem:[%s195 + $0x7e8] sm:$0xff]
        %v552 = vld [vmem:[%s195 + $0x7f0] sm:$0xff]
        %v553 = vld [vmem:[%s195 + $0x7f8] sm:$0xff]
        %v554 = vld [vmem:[%s195 + $0x800] sm:$0xff]
        %v555 = vld [vmem:[%s195 + $0x808] sm:$0xff]
        %v556 = vld [vmem:[%s195 + $0x810] sm:$0xff]
        %v557 = vld [vmem:[%s195 + $0x818] sm:$0xff]
        %v558 = vld [vmem:[%s195 + $0x820] sm:$0xff]
        %v559 = vld [vmem:[%s195 + $0x828] sm:$0xff]
        %v560 = vld [vmem:[%s195 + $0x830] sm:$0xff]
        %v561 = vld [vmem:[%s195 + $0x838] sm:$0xff]
        %v562 = vld [vmem:[%s195 + $0x840] sm:$0xff]
        %v563 = vld [vmem:[%s195 + $0x848] sm:$0xff]
        %v564 = vld [vmem:[%s195 + $0x850] sm:$0xff]
        %v565 = vld [vmem:[%s195 + $0x858] sm:$0xff]
        %v566 = vld [vmem:[%s195 + $0x860] sm:$0xff]
        %v567 = vld [vmem:[%s195 + $0x868] sm:$0xff]
        %v568 = vld [vmem:[%s195 + $0x870] sm:$0xff]
        %v569 = vld [vmem:[%s195 + $0x878] sm:$0xff]
        %v570 = vld [vmem:[%s195 + $0x880] sm:$0xff]
        %v571 = vld [vmem:[%s195 + $0x888] sm:$0xff]
        %v572 = vld [vmem:[%s195 + $0x890] sm:$0xff]
        %v573 = vld [vmem:[%s195 + $0x898] sm:$0xff]
        %v574 = vld [vmem:[%s195 + $0x8a0] sm:$0xff]
        %v575 = vld [vmem:[%s195 + $0x8a8] sm:$0xff]
        %v576 = vld [vmem:[%s195 + $0x8b0] sm:$0xff]
        %v577 = vld [vmem:[%s195 + $0x8b8] sm:$0xff]
        %v578 = vld [vmem:[%s195 + $0x8c0] sm:$0xff]
        %v579 = vld [vmem:[%s195 + $0x8c8] sm:$0xff]
        %v580 = vld [vmem:[%s195 + $0x8d0] sm:$0xff]
        %v581 = vld [vmem:[%s195 + $0x8d8] sm:$0xff]
        %v582 = vld [vmem:[%s195 + $0x8e0] sm:$0xff]
        %v583 = vld [vmem:[%s195 + $0x8e8] sm:$0xff]
        %v584 = vld [vmem:[%s195 + $0x8f0] sm:$0xff]
        %v585 = vld [vmem:[%s195 + $0x8f8] sm:$0xff]
        %v586 = vld [vmem:[%s195 + $0x900] sm:$0xff]
        %v587 = vld [vmem:[%s195 + $0x908] sm:$0xff]
        %v588 = vld [vmem:[%s195 + $0x910] sm:$0xff]
        %v589 = vld [vmem:[%s195 + $0x918] sm:$0xff]
        %v590 = vld [vmem:[%s195 + $0x920] sm:$0xff]
        %v591 = vld [vmem:[%s195 + $0x928] sm:$0xff]
        %v592 = vld [vmem:[%s195 + $0x930] sm:$0xff]
        %v593 = vld [vmem:[%s195 + $0x938] sm:$0xff]
        %v594 = vld [vmem:[%s195 + $0x940] sm:$0xff]
        %v595 = vld [vmem:[%s195 + $0x948] sm:$0xff]
        %v596 = vld [vmem:[%s195 + $0x950] sm:$0xff]
        %v597 = vld [vmem:[%s195 + $0x958] sm:$0xff]
        %v598 = vld [vmem:[%s195 + $0x960] sm:$0xff]
        %v599 = vld [vmem:[%s195 + $0x968] sm:$0xff]
        %v600 = vld [vmem:[%s195 + $0x970] sm:$0xff]
        %v601 = vld [vmem:[%s195 + $0x978] sm:$0xff]
        %v602 = vld [vmem:[%s195 + $0x980] sm:$0xff]
        %v603 = vld [vmem:[%s195 + $0x988] sm:$0xff]
        %v604 = vld [vmem:[%s195 + $0x990] sm:$0xff]
        %v605 = vld [vmem:[%s195 + $0x998] sm:$0xff]
        %v606 = vld [vmem:[%s195 + $0x9a0] sm:$0xff]
        %v607 = vld [vmem:[%s195 + $0x9a8] sm:$0xff]
        %v608 = vld [vmem:[%s195 + $0x9b0] sm:$0xff]
        %v609 = vld [vmem:[%s195 + $0x9b8] sm:$0xff]
        %v610 = vld [vmem:[%s195 + $0x9c0] sm:$0xff]
        %v611 = vld [vmem:[%s195 + $0x9c8] sm:$0xff]
        %v612 = vld [vmem:[%s195 + $0x9d0] sm:$0xff]
        %v613 = vld [vmem:[%s195 + $0x9d8] sm:$0xff]
        %v614 = vld [vmem:[%s195 + $0x9e0] sm:$0xff]
        %v615 = vld [vmem:[%s195 + $0x9e8] sm:$0xff]
        %v616 = vld [vmem:[%s195 + $0x9f0] sm:$0xff]
        %v617 = vld [vmem:[%s195 + $0x9f8] sm:$0xff]
        %v618 = vld [vmem:[%s195 + $0xa00] sm:$0xff]
        %v619 = vld [vmem:[%s195 + $0xa08] sm:$0xff]
        %v620 = vld [vmem:[%s195 + $0xa10] sm:$0xff]
        %v621 = vld [vmem:[%s195 + $0xa18] sm:$0xff]
        %v622 = vld [vmem:[%s195 + $0xa20] sm:$0xff]
        %v623 = vld [vmem:[%s195 + $0xa28] sm:$0xff]
        %v624 = vld [vmem:[%s195 + $0xa30] sm:$0xff]
        %v625 = vld [vmem:[%s195 + $0xa38] sm:$0xff]
        %v626 = vld [vmem:[%s195 + $0xa40] sm:$0xff]
        %v627 = vld [vmem:[%s195 + $0xa48] sm:$0xff]
        %v628 = vld [vmem:[%s195 + $0xa50] sm:$0xff]
        %v629 = vld [vmem:[%s195 + $0xa58] sm:$0xff]
        %v630 = vld [vmem:[%s195 + $0xa60] sm:$0xff]
        %v631 = vld [vmem:[%s195 + $0xa68] sm:$0xff]
        %v632 = vld [vmem:[%s195 + $0xa70] sm:$0xff]
        %v633 = vld [vmem:[%s195 + $0xa78] sm:$0xff]
        %v634 = vld [vmem:[%s195 + $0xa80] sm:$0xff]
        %v635 = vld [vmem:[%s195 + $0xa88] sm:$0xff]
        %v636 = vld [vmem:[%s195 + $0xa90] sm:$0xff]
        %v637 = vld [vmem:[%s195 + $0xa98] sm:$0xff]
        %v638 = vld [vmem:[%s195 + $0xaa0] sm:$0xff]
        %v639 = vld [vmem:[%s195 + $0xaa8] sm:$0xff]
        %v640 = vld [vmem:[%s195 + $0xab0] sm:$0xff]
        %v641 = vld [vmem:[%s195 + $0xab8] sm:$0xff]
        %v642 = vld [vmem:[%s195 + $0xac0] sm:$0xff]
        %v643 = vld [vmem:[%s195 + $0xac8] sm:$0xff]
        %v644 = vld [vmem:[%s195 + $0xad0] sm:$0xff]
        %v645 = vld [vmem:[%s195 + $0xad8] sm:$0xff]
        %v646 = vld [vmem:[%s195 + $0xae0] sm:$0xff]
        %v647 = vld [vmem:[%s195 + $0xae8] sm:$0xff]
        %v648 = vld [vmem:[%s195 + $0xaf0] sm:$0xff]
        %v649 = vld [vmem:[%s195 + $0xaf8] sm:$0xff]
        %v650 = vld [vmem:[%s195 + $0xb00] sm:$0xff]
        %v651 = vld [vmem:[%s195 + $0xb08] sm:$0xff]
        %v652 = vld [vmem:[%s195 + $0xb10] sm:$0xff]
        %v653 = vld [vmem:[%s195 + $0xb18] sm:$0xff]
        %v654 = vld [vmem:[%s195 + $0xb20] sm:$0xff]
        %v655 = vld [vmem:[%s195 + $0xb28] sm:$0xff]
        %v656 = vld [vmem:[%s195 + $0xb30] sm:$0xff]
        %v657 = vld [vmem:[%s195 + $0xb38] sm:$0xff]
        %v658 = vld [vmem:[%s195 + $0xb40] sm:$0xff]
        %v659 = vld [vmem:[%s195 + $0xb48] sm:$0xff]
        %v660 = vld [vmem:[%s195 + $0xb50] sm:$0xff]
        %v661 = vld [vmem:[%s195 + $0xb58] sm:$0xff]
        %v662 = vld [vmem:[%s195 + $0xb60] sm:$0xff]
        %v663 = vld [vmem:[%s195 + $0xb68] sm:$0xff]
        %v664 = vld [vmem:[%s195 + $0xb70] sm:$0xff]
        %v665 = vld [vmem:[%s195 + $0xb78] sm:$0xff]
        %v666 = vld [vmem:[%s195 + $0xb80] sm:$0xff]
        %v667 = vld [vmem:[%s195 + $0xb88] sm:$0xff]
        %v668 = vld [vmem:[%s195 + $0xb90] sm:$0xff]
        %v669 = vld [vmem:[%s195 + $0xb98] sm:$0xff]
        %v670 = vld [vmem:[%s195 + $0xba0] sm:$0xff]
        %v671 = vld [vmem:[%s195 + $0xba8] sm:$0xff]
        %v672 = vld [vmem:[%s195 + $0xbb0] sm:$0xff]
        %v673 = vld [vmem:[%s195 + $0xbb8] sm:$0xff]
        %v674 = vld [vmem:[%s195 + $0xbc0] sm:$0xff]
        %v675 = vld [vmem:[%s195 + $0xbc8] sm:$0xff]
        %v676 = vld [vmem:[%s195 + $0xbd0] sm:$0xff]
        %v677 = vld [vmem:[%s195 + $0xbd8] sm:$0xff]
        %v678 = vld [vmem:[%s195 + $0xbe0] sm:$0xff]
        %v679 = vld [vmem:[%s195 + $0xbe8] sm:$0xff]
        %v680 = vld [vmem:[%s195 + $0xbf0] sm:$0xff]
        %v681 = vld [vmem:[%s195 + $0xbf8] sm:$0xff]
        %v682 = vld [vmem:[%s195 + $0xc00] sm:$0xff]
        %v683 = vld [vmem:[%s195 + $0xc08] sm:$0xff]
        %v684 = vld [vmem:[%s195 + $0xc10] sm:$0xff]
        %v685 = vld [vmem:[%s195 + $0xc18] sm:$0xff]
        %v686 = vld [vmem:[%s195 + $0xc20] sm:$0xff]
        %v687 = vld [vmem:[%s195 + $0xc28] sm:$0xff]
        %v688 = vld [vmem:[%s195 + $0xc30] sm:$0xff]
        %v689 = vld [vmem:[%s195 + $0xc38] sm:$0xff]
        %v690 = vld [vmem:[%s195 + $0xc40] sm:$0xff]
        %v691 = vld [vmem:[%s195 + $0xc48] sm:$0xff]
        %v692 = vld [vmem:[%s195 + $0xc50] sm:$0xff]
        %v693 = vld [vmem:[%s195 + $0xc58] sm:$0xff]
        %v694 = vld [vmem:[%s195 + $0xc60] sm:$0xff]
        %v695 = vld [vmem:[%s195 + $0xc68] sm:$0xff]
        %v696 = vld [vmem:[%s195 + $0xc70] sm:$0xff]
        %v697 = vld [vmem:[%s195 + $0xc78] sm:$0xff]
        %v698 = vld [vmem:[%s195 + $0xc80] sm:$0xff]
        %v699 = vld [vmem:[%s195 + $0xc88] sm:$0xff]
        %v700 = vld [vmem:[%s195 + $0xc90] sm:$0xff]
        %v701 = vld [vmem:[%s195 + $0xc98] sm:$0xff]
        %v702 = vld [vmem:[%s195 + $0xca0] sm:$0xff]
        %v703 = vld [vmem:[%s195 + $0xca8] sm:$0xff]
        %v704 = vld [vmem:[%s195 + $0xcb0] sm:$0xff]
        %v705 = vld [vmem:[%s195 + $0xcb8] sm:$0xff]
        %v706 = vld [vmem:[%s195 + $0xcc0] sm:$0xff]
        %v707 = vld [vmem:[%s195 + $0xcc8] sm:$0xff]
        %v708 = vld [vmem:[%s195 + $0xcd0] sm:$0xff]
        %v709 = vld [vmem:[%s195 + $0xcd8] sm:$0xff]
        %v710 = vld [vmem:[%s195 + $0xce0] sm:$0xff]
        %v711 = vld [vmem:[%s195 + $0xce8] sm:$0xff]
        %v712 = vld [vmem:[%s195 + $0xcf0] sm:$0xff]
        %v713 = vld [vmem:[%s195 + $0xcf8] sm:$0xff]
        %v714 = vld [vmem:[%s195 + $0xd00] sm:$0xff]
        %v715 = vld [vmem:[%s195 + $0xd08] sm:$0xff]
        %v716 = vld [vmem:[%s195 + $0xd10] sm:$0xff]
        %v717 = vld [vmem:[%s195 + $0xd18] sm:$0xff]
        %v718 = vld [vmem:[%s195 + $0xd20] sm:$0xff]
        %v719 = vld [vmem:[%s195 + $0xd28] sm:$0xff]
        %v720 = vld [vmem:[%s195 + $0xd30] sm:$0xff]
        %v721 = vld [vmem:[%s195 + $0xd38] sm:$0xff]
        %v722 = vld [vmem:[%s195 + $0xd40] sm:$0xff]
        %v723 = vld [vmem:[%s195 + $0xd48] sm:$0xff]
        %v724 = vld [vmem:[%s195 + $0xd50] sm:$0xff]
        %v725 = vld [vmem:[%s195 + $0xd58] sm:$0xff]
        %v726 = vld [vmem:[%s195 + $0xd60] sm:$0xff]
        %v727 = vld [vmem:[%s195 + $0xd68] sm:$0xff]
        %v728 = vld [vmem:[%s195 + $0xd70] sm:$0xff]
        %v729 = vld [vmem:[%s195 + $0xd78] sm:$0xff]
        %v730 = vld [vmem:[%s195 + $0xd80] sm:$0xff]
        %v731 = vld [vmem:[%s195 + $0xd88] sm:$0xff]
        %v732 = vld [vmem:[%s195 + $0xd90] sm:$0xff]
        %v733 = vld [vmem:[%s195 + $0xd98] sm:$0xff]
        %v734 = vld [vmem:[%s195 + $0xda0] sm:$0xff]
        %v735 = vld [vmem:[%s195 + $0xda8] sm:$0xff]
        %v736 = vld [vmem:[%s195 + $0xdb0] sm:$0xff]
        %v737 = vld [vmem:[%s195 + $0xdb8] sm:$0xff]
        %v738 = vld [vmem:[%s195 + $0xdc0] sm:$0xff]
        %v739 = vld [vmem:[%s195 + $0xdc8] sm:$0xff]
        %v740 = vld [vmem:[%s195 + $0xdd0] sm:$0xff]
        %v741 = vld [vmem:[%s195 + $0xdd8] sm:$0xff]
        %v742 = vld [vmem:[%s195 + $0xde0] sm:$0xff]
        %v743 = vld [vmem:[%s195 + $0xde8] sm:$0xff]
        %v744 = vld [vmem:[%s195 + $0xdf0] sm:$0xff]
        %v745 = vld [vmem:[%s195 + $0xdf8] sm:$0xff]
        %v746 = vld [vmem:[%s195 + $0xe00] sm:$0xff]
        %v747 = vld [vmem:[%s195 + $0xe08] sm:$0xff]
        %v748 = vld [vmem:[%s195 + $0xe10] sm:$0xff]
        %v749 = vld [vmem:[%s195 + $0xe18] sm:$0xff]
        %v750 = vld [vmem:[%s195 + $0xe20] sm:$0xff]
        %v751 = vld [vmem:[%s195 + $0xe28] sm:$0xff]
        %v752 = vld [vmem:[%s195 + $0xe30] sm:$0xff]
        %v753 = vld [vmem:[%s195 + $0xe38] sm:$0xff]
        %v754 = vld [vmem:[%s195 + $0xe40] sm:$0xff]
        %v755 = vld [vmem:[%s195 + $0xe48] sm:$0xff]
        %v756 = vld [vmem:[%s195 + $0xe50] sm:$0xff]
        %v757 = vld [vmem:[%s195 + $0xe58] sm:$0xff]
        %v758 = vld [vmem:[%s195 + $0xe60] sm:$0xff]
        %v759 = vld [vmem:[%s195 + $0xe68] sm:$0xff]
        %v760 = vld [vmem:[%s195 + $0xe70] sm:$0xff]
        %v761 = vld [vmem:[%s195 + $0xe78] sm:$0xff]
        %v762 = vld [vmem:[%s195 + $0xe80] sm:$0xff]
        %v763 = vld [vmem:[%s195 + $0xe88] sm:$0xff]
        %v764 = vld [vmem:[%s195 + $0xe90] sm:$0xff]
        %v765 = vld [vmem:[%s195 + $0xe98] sm:$0xff]
        %v766 = vld [vmem:[%s195 + $0xea0] sm:$0xff]
        %v767 = vld [vmem:[%s195 + $0xea8] sm:$0xff]
        %v768 = vld [vmem:[%s195 + $0xeb0] sm:$0xff]
        %v769 = vld [vmem:[%s195 + $0xeb8] sm:$0xff]
        %v770 = vld [vmem:[%s195 + $0xec0] sm:$0xff]
        %v771 = vld [vmem:[%s195 + $0xec8] sm:$0xff]
        %v772 = vld [vmem:[%s195 + $0xed0] sm:$0xff]
        %v773 = vld [vmem:[%s195 + $0xed8] sm:$0xff]
        %v774 = vld [vmem:[%s195 + $0xee0] sm:$0xff]
        %v775 = vld [vmem:[%s195 + $0xee8] sm:$0xff]
        %v776 = vld [vmem:[%s195 + $0xef0] sm:$0xff]
        %v777 = vld [vmem:[%s195 + $0xef8] sm:$0xff]
        %v778 = vld [vmem:[%s195 + $0xf00] sm:$0xff]
        %v779 = vld [vmem:[%s195 + $0xf08] sm:$0xff]
        %v780 = vld [vmem:[%s195 + $0xf10] sm:$0xff]
        %v781 = vld [vmem:[%s195 + $0xf18] sm:$0xff]
        %v782 = vld [vmem:[%s195 + $0xf20] sm:$0xff]
        %v783 = vld [vmem:[%s195 + $0xf28] sm:$0xff]
        %v784 = vld [vmem:[%s195 + $0xf30] sm:$0xff]
        %v785 = vld [vmem:[%s195 + $0xf38] sm:$0xff]
        %v786 = vld [vmem:[%s195 + $0xf40] sm:$0xff]
        %v787 = vld [vmem:[%s195 + $0xf48] sm:$0xff]
        %v788 = vld [vmem:[%s195 + $0xf50] sm:$0xff]
        %v789 = vld [vmem:[%s195 + $0xf58] sm:$0xff]
        %v790 = vld [vmem:[%s195 + $0xf60] sm:$0xff]
        %v791 = vld [vmem:[%s195 + $0xf68] sm:$0xff]
        %v792 = vld [vmem:[%s195 + $0xf70] sm:$0xff]
        %v793 = vld [vmem:[%s195 + $0xf78] sm:$0xff]
        %v794 = vld [vmem:[%s195 + $0xf80] sm:$0xff]
        %v795 = vld [vmem:[%s195 + $0xf88] sm:$0xff]
        %v796 = vld [vmem:[%s195 + $0xf90] sm:$0xff]
        %v797 = vld [vmem:[%s195 + $0xf98] sm:$0xff]
        %v798 = vld [vmem:[%s195 + $0xfa0] sm:$0xff]
        %v799 = vld [vmem:[%s195 + $0xfa8] sm:$0xff]
        %v800 = vld [vmem:[%s195 + $0xfb0] sm:$0xff]
        %v801 = vld [vmem:[%s195 + $0xfb8] sm:$0xff]
        %v802 = vld [vmem:[%s195 + $0xfc0] sm:$0xff]
        %v803 = vld [vmem:[%s195 + $0xfc8] sm:$0xff]
        %v804 = vld [vmem:[%s195 + $0xfd0] sm:$0xff]
        %v805 = vld [vmem:[%s195 + $0xfd8] sm:$0xff]
        %v806 = vld [vmem:[%s195 + $0xfe0] sm:$0xff]
        %v807 = vld [vmem:[%s195 + $0xfe8] sm:$0xff]
        %v808 = vld [vmem:[%s195 + $0xff0] sm:$0xff]
        %v809 = vld [vmem:[%s195 + $0xff8] sm:$0xff]
        %v810 = vld [vmem:[%s195 + $0x1000] sm:$0xff]
        %v811 = vld [vmem:[%s195 + $0x1008] sm:$0xff]
        %v812 = vld [vmem:[%s195 + $0x1010] sm:$0xff]
        %v813 = vld [vmem:[%s195 + $0x1018] sm:$0xff]
        %v814 = vld [vmem:[%s195 + $0x1020] sm:$0xff]
        %v815 = vld [vmem:[%s195 + $0x1028] sm:$0xff]
        %v816 = vld [vmem:[%s195 + $0x1030] sm:$0xff]
        %v817 = vld [vmem:[%s195 + $0x1038] sm:$0xff]
        %v818 = vld [vmem:[%s195 + $0x1040] sm:$0xff]
        %v819 = vld [vmem:[%s195 + $0x1048] sm:$0xff]
        %v820 = vld [vmem:[%s195 + $0x1050] sm:$0xff]
        %v821 = vld [vmem:[%s195 + $0x1058] sm:$0xff]
        %v822 = vld [vmem:[%s195 + $0x1060] sm:$0xff]
        %v823 = vld [vmem:[%s195 + $0x1068] sm:$0xff]
        %v824 = vld [vmem:[%s195 + $0x1070] sm:$0xff]
        %v825 = vld [vmem:[%s195 + $0x1078] sm:$0xff]
        %v826 = vld [vmem:[%s195 + $0x1080] sm:$0xff]
        %v827 = vld [vmem:[%s195 + $0x1088] sm:$0xff]
        %v828 = vld [vmem:[%s195 + $0x1090] sm:$0xff]
        %v829 = vld [vmem:[%s195 + $0x1098] sm:$0xff]
        %v830 = vld [vmem:[%s195 + $0x10a0] sm:$0xff]
        %v831 = vld [vmem:[%s195 + $0x10a8] sm:$0xff]
        %v832 = vld [vmem:[%s195 + $0x10b0] sm:$0xff]
        %v833 = vld [vmem:[%s195 + $0x10b8] sm:$0xff]
        %v834 = vld [vmem:[%s195 + $0x10c0] sm:$0xff]
        %v835 = vld [vmem:[%s195 + $0x10c8] sm:$0xff]
        %v836 = vld [vmem:[%s195 + $0x10d0] sm:$0xff]
        %v837 = vld [vmem:[%s195 + $0x10d8] sm:$0xff]
        %v838 = vld [vmem:[%s195 + $0x10e0] sm:$0xff]
        %v839 = vld [vmem:[%s195 + $0x10e8] sm:$0xff]
        %v840 = vld [vmem:[%s195 + $0x10f0] sm:$0xff]
        %v841 = vld [vmem:[%s195 + $0x10f8] sm:$0xff]
        %v842 = vld [vmem:[%s195 + $0x1100] sm:$0xff]
        %v843 = vld [vmem:[%s195 + $0x1108] sm:$0xff]
        %v844 = vld [vmem:[%s195 + $0x1110] sm:$0xff]
        %v845 = vld [vmem:[%s195 + $0x1118] sm:$0xff]
        %v846 = vld [vmem:[%s195 + $0x1120] sm:$0xff]
        %v847 = vld [vmem:[%s195 + $0x1128] sm:$0xff]
        %v848 = vld [vmem:[%s195 + $0x1130] sm:$0xff]
        %v849 = vld [vmem:[%s195 + $0x1138] sm:$0xff]
        %v850 = vld [vmem:[%s195 + $0x1140] sm:$0xff]
        %v851 = vld [vmem:[%s195 + $0x1148] sm:$0xff]
        %v852 = vld [vmem:[%s195 + $0x1150] sm:$0xff]
        %v853 = vld [vmem:[%s195 + $0x1158] sm:$0xff]
        %v854 = vld [vmem:[%s195 + $0x1160] sm:$0xff]
        %v855 = vld [vmem:[%s195 + $0x1168] sm:$0xff]
        %v856 = vld [vmem:[%s195 + $0x1170] sm:$0xff]
        %v857 = vld [vmem:[%s195 + $0x1178] sm:$0xff]
        %v858 = vld [vmem:[%s195 + $0x1180] sm:$0xff]
        %v859 = vld [vmem:[%s195 + $0x1188] sm:$0xff]
        %v860 = vld [vmem:[%s195 + $0x1190] sm:$0xff]
        %v861 = vld [vmem:[%s195 + $0x1198] sm:$0xff]
        %v862 = vld [vmem:[%s195 + $0x11a0] sm:$0xff]
        %v863 = vld [vmem:[%s195 + $0x11a8] sm:$0xff]
        %v864 = vld [vmem:[%s195 + $0x11b0] sm:$0xff]
        %v865 = vld [vmem:[%s195 + $0x11b8] sm:$0xff]
        %v866 = vld [vmem:[%s195 + $0x11c0] sm:$0xff]
        %v867 = vld [vmem:[%s195 + $0x11c8] sm:$0xff]
        %v868 = vld [vmem:[%s195 + $0x11d0] sm:$0xff]
        %v869 = vld [vmem:[%s195 + $0x11d8] sm:$0xff]
        %v870 = vld [vmem:[%s195 + $0x11e0] sm:$0xff]
        %v871 = vld [vmem:[%s195 + $0x11e8] sm:$0xff]
        %v872 = vld [vmem:[%s195 + $0x11f0] sm:$0xff]
        %v873 = vld [vmem:[%s195 + $0x11f8] sm:$0xff]
        %v874 = vld [vmem:[%s195 + $0x1200] sm:$0xff]
        %v875 = vld [vmem:[%s195 + $0x1208] sm:$0xff]
        %v876 = vld [vmem:[%s195 + $0x1210] sm:$0xff]
        %v877 = vld [vmem:[%s195 + $0x1218] sm:$0xff]
        %v878 = vld [vmem:[%s195 + $0x1220] sm:$0xff]
        %v879 = vld [vmem:[%s195 + $0x1228] sm:$0xff]
        %v880 = vld [vmem:[%s195 + $0x1230] sm:$0xff]
        %v881 = vld [vmem:[%s195 + $0x1238] sm:$0xff]
        %v882 = vld [vmem:[%s195 + $0x1240] sm:$0xff]
        %v883 = vld [vmem:[%s195 + $0x1248] sm:$0xff]
        %v884 = vld [vmem:[%s195 + $0x1250] sm:$0xff]
        %v885 = vld [vmem:[%s195 + $0x1258] sm:$0xff]
        %v886 = vld [vmem:[%s195 + $0x1260] sm:$0xff]
        %v887 = vld [vmem:[%s195 + $0x1268] sm:$0xff]
        %v888 = vld [vmem:[%s195 + $0x1270] sm:$0xff]
        %v889 = vld [vmem:[%s195 + $0x1278] sm:$0xff]
        %v890 = vld [vmem:[%s195 + $0x1280] sm:$0xff]
        %v891 = vld [vmem:[%s195 + $0x1288] sm:$0xff]
        %v892 = vld [vmem:[%s195 + $0x1290] sm:$0xff]
        %v893 = vld [vmem:[%s195 + $0x1298] sm:$0xff]
        %v894 = vld [vmem:[%s195 + $0x12a0] sm:$0xff]
        %v895 = vld [vmem:[%s195 + $0x12a8] sm:$0xff]
        %v896 = vld [vmem:[%s195 + $0x12b0] sm:$0xff]
        %v897 = vld [vmem:[%s195 + $0x12b8] sm:$0xff]
        %v898 = vld [vmem:[%s195 + $0x12c0] sm:$0xff]
        %v899 = vld [vmem:[%s195 + $0x12c8] sm:$0xff]
        %v900 = vld [vmem:[%s195 + $0x12d0] sm:$0xff]
        %v901 = vld [vmem:[%s195 + $0x12d8] sm:$0xff]
        %v902 = vld [vmem:[%s195 + $0x12e0] sm:$0xff]
        %v903 = vld [vmem:[%s195 + $0x12e8] sm:$0xff]
        %v904 = vld [vmem:[%s195 + $0x12f0] sm:$0xff]
        %v905 = vld [vmem:[%s195 + $0x12f8] sm:$0xff]
        %v906 = vld [vmem:[%s195 + $0x1300] sm:$0xff]
        %v907 = vld [vmem:[%s195 + $0x1308] sm:$0xff]
        %v908 = vld [vmem:[%s195 + $0x1310] sm:$0xff]
        %v909 = vld [vmem:[%s195 + $0x1318] sm:$0xff]
        %v910 = vld [vmem:[%s195 + $0x1320] sm:$0xff]
        %v911 = vld [vmem:[%s195 + $0x1328] sm:$0xff]
        %v912 = vld [vmem:[%s195 + $0x1330] sm:$0xff]
        %v913 = vld [vmem:[%s195 + $0x1338] sm:$0xff]
        %v914 = vld [vmem:[%s195 + $0x1340] sm:$0xff]
        %v915 = vld [vmem:[%s195 + $0x1348] sm:$0xff]
        %v916 = vld [vmem:[%s195 + $0x1350] sm:$0xff]
        %v917 = vld [vmem:[%s195 + $0x1358] sm:$0xff]
        %v918 = vld [vmem:[%s195 + $0x1360] sm:$0xff]
        %v919 = vld [vmem:[%s195 + $0x1368] sm:$0xff]
        %v920 = vld [vmem:[%s195 + $0x1370] sm:$0xff]
        %v921 = vld [vmem:[%s195 + $0x1378] sm:$0xff]
        %v922 = vld [vmem:[%s195 + $0x1380] sm:$0xff]
        %v923 = vld [vmem:[%s195 + $0x1388] sm:$0xff]
        %v924 = vld [vmem:[%s195 + $0x1390] sm:$0xff]
        %v925 = vld [vmem:[%s195 + $0x1398] sm:$0xff]
        %v926 = vld [vmem:[%s195 + $0x13a0] sm:$0xff]
        %v927 = vld [vmem:[%s195 + $0x13a8] sm:$0xff]
        %v928 = vld [vmem:[%s195 + $0x13b0] sm:$0xff]
        %v929 = vld [vmem:[%s195 + $0x13b8] sm:$0xff]
        %v930 = vld [vmem:[%s195 + $0x13c0] sm:$0xff]
        %v931 = vld [vmem:[%s195 + $0x13c8] sm:$0xff]
        %v932 = vld [vmem:[%s195 + $0x13d0] sm:$0xff]
        %v933 = vld [vmem:[%s195 + $0x13d8] sm:$0xff]
        %v934 = vld [vmem:[%s195 + $0x13e0] sm:$0xff]
        %v935 = vld [vmem:[%s195 + $0x13e8] sm:$0xff]
        %v936 = vld [vmem:[%s195 + $0x13f0] sm:$0xff]
        %v937 = vld [vmem:[%s195 + $0x13f8] sm:$0xff]
        %v938 = vld [vmem:[%s195 + $0x1400] sm:$0xff]
        %v939 = vld [vmem:[%s195 + $0x1408] sm:$0xff]
        %v940 = vld [vmem:[%s195 + $0x1410] sm:$0xff]
        %v941 = vld [vmem:[%s195 + $0x1418] sm:$0xff]
        %v942 = vld [vmem:[%s195 + $0x1420] sm:$0xff]
        %v943 = vld [vmem:[%s195 + $0x1428] sm:$0xff]
        %v944 = vld [vmem:[%s195 + $0x1430] sm:$0xff]
        %v945 = vld [vmem:[%s195 + $0x1438] sm:$0xff]
        %v946 = vld [vmem:[%s195 + $0x1440] sm:$0xff]
        %v947 = vld [vmem:[%s195 + $0x1448] sm:$0xff]
        %v948 = vld [vmem:[%s195 + $0x1450] sm:$0xff]
        %v949 = vld [vmem:[%s195 + $0x1458] sm:$0xff]
        %v950 = vld [vmem:[%s195 + $0x1460] sm:$0xff]
        %v951 = vld [vmem:[%s195 + $0x1468] sm:$0xff]
        %v952 = vld [vmem:[%s195 + $0x1470] sm:$0xff]
        %v953 = vld [vmem:[%s195 + $0x1478] sm:$0xff]
        %v954 = vld [vmem:[%s195 + $0x1480] sm:$0xff]
        %v955 = vld [vmem:[%s195 + $0x1488] sm:$0xff]
        %v956 = vld [vmem:[%s195 + $0x1490] sm:$0xff]
        %v957 = vld [vmem:[%s195 + $0x1498] sm:$0xff]
        %v958 = vld [vmem:[%s195 + $0x14a0] sm:$0xff]
        %v959 = vld [vmem:[%s195 + $0x14a8] sm:$0xff]
        %v960 = vld [vmem:[%s195 + $0x14b0] sm:$0xff]
        %v961 = vld [vmem:[%s195 + $0x14b8] sm:$0xff]
        %v962 = vld [vmem:[%s195 + $0x14c0] sm:$0xff]
        %v963 = vld [vmem:[%s195 + $0x14c8] sm:$0xff]
        %v964 = vld [vmem:[%s195 + $0x14d0] sm:$0xff]
        %v965 = vld [vmem:[%s195 + $0x14d8] sm:$0xff]
        %v966 = vld [vmem:[%s195 + $0x14e0] sm:$0xff]
        %v967 = vld [vmem:[%s195 + $0x14e8] sm:$0xff]
        %v968 = vld [vmem:[%s195 + $0x14f0] sm:$0xff]
        %v969 = vld [vmem:[%s195 + $0x14f8] sm:$0xff]
        %v970 = vld [vmem:[%s195 + $0x1500] sm:$0xff]
        %v971 = vld [vmem:[%s195 + $0x1508] sm:$0xff]
        %v972 = vld [vmem:[%s195 + $0x1510] sm:$0xff]
        %v973 = vld [vmem:[%s195 + $0x1518] sm:$0xff]
        %v974 = vld [vmem:[%s195 + $0x1520] sm:$0xff]
        %v975 = vld [vmem:[%s195 + $0x1528] sm:$0xff]
        %v976 = vld [vmem:[%s195 + $0x1530] sm:$0xff]
        %v977 = vld [vmem:[%s195 + $0x1538] sm:$0xff]
        %v978 = vld [vmem:[%s195 + $0x1540] sm:$0xff]
        %v979 = vld [vmem:[%s195 + $0x1548] sm:$0xff]
        %v980 = vld [vmem:[%s195 + $0x1550] sm:$0xff]
        %v981 = vld [vmem:[%s195 + $0x1558] sm:$0xff]
        %v982 = vld [vmem:[%s195 + $0x1560] sm:$0xff]
        %v983 = vld [vmem:[%s195 + $0x1568] sm:$0xff]
        %v984 = vld [vmem:[%s195 + $0x1570] sm:$0xff]
        %v985 = vld [vmem:[%s195 + $0x1578] sm:$0xff]
        %v986 = vld [vmem:[%s195 + $0x1580] sm:$0xff]
        %v987 = vld [vmem:[%s195 + $0x1588] sm:$0xff]
        %v988 = vld [vmem:[%s195 + $0x1590] sm:$0xff]
        %v989 = vld [vmem:[%s195 + $0x1598] sm:$0xff]
        %v990 = vld [vmem:[%s195 + $0x15a0] sm:$0xff]
        %v991 = vld [vmem:[%s195 + $0x15a8] sm:$0xff]
        %v992 = vld [vmem:[%s195 + $0x15b0] sm:$0xff]
        %v993 = vld [vmem:[%s195 + $0x15b8] sm:$0xff]
        %v994 = vld [vmem:[%s195 + $0x15c0] sm:$0xff]
        %v995 = vld [vmem:[%s195 + $0x15c8] sm:$0xff]
        %v996 = vld [vmem:[%s195 + $0x15d0] sm:$0xff]
        %v997 = vld [vmem:[%s195 + $0x15d8] sm:$0xff]
        %v998 = vld [vmem:[%s195 + $0x15e0] sm:$0xff]
        %v999 = vld [vmem:[%s195 + $0x15e8] sm:$0xff]
        %v1000 = vld [vmem:[%s195 + $0x15f0] sm:$0xff]
        %v1001 = vld [vmem:[%s195 + $0x15f8] sm:$0xff]
        %v1002 = vld [vmem:[%s195 + $0x1600] sm:$0xff]
        %v1003 = vld [vmem:[%s195 + $0x1608] sm:$0xff]
        %v1004 = vld [vmem:[%s195 + $0x1610] sm:$0xff]
        %v1005 = vld [vmem:[%s195 + $0x1618] sm:$0xff]
        %v1006 = vld [vmem:[%s195 + $0x1620] sm:$0xff]
        %v1007 = vld [vmem:[%s195 + $0x1628] sm:$0xff]
        %v1008 = vld [vmem:[%s195 + $0x1630] sm:$0xff]
        %v1009 = vld [vmem:[%s195 + $0x1638] sm:$0xff]
        %v1010 = vld [vmem:[%s195 + $0x1640] sm:$0xff]
        %v1011 = vld [vmem:[%s195 + $0x1648] sm:$0xff]
        %v1012 = vld [vmem:[%s195 + $0x1650] sm:$0xff]
        %v1013 = vld [vmem:[%s195 + $0x1658] sm:$0xff]
        %v1014 = vld [vmem:[%s195 + $0x1660] sm:$0xff]
        %v1015 = vld [vmem:[%s195 + $0x1668] sm:$0xff]
        %v1016 = vld [vmem:[%s195 + $0x1670] sm:$0xff]
        %v1017 = vld [vmem:[%s195 + $0x1678] sm:$0xff]
        %v1018 = vld [vmem:[%s195 + $0x1680] sm:$0xff]
        %v1019 = vld [vmem:[%s195 + $0x1688] sm:$0xff]
        %v1020 = vld [vmem:[%s195 + $0x1690] sm:$0xff]
        %v1021 = vld [vmem:[%s195 + $0x1698] sm:$0xff]
        %v1022 = vld [vmem:[%s195 + $0x16a0] sm:$0xff]
        %v1023 = vld [vmem:[%s195 + $0x16a8] sm:$0xff]
        %v1024 = vld [vmem:[%s195 + $0x16b0] sm:$0xff]
        %v1025 = vld [vmem:[%s195 + $0x16b8] sm:$0xff]
        %v1026 = vld [vmem:[%s195 + $0x16c0] sm:$0xff]
        %v1027 = vld [vmem:[%s195 + $0x16c8] sm:$0xff]
        %v1028 = vld [vmem:[%s195 + $0x16d0] sm:$0xff]
        %v1029 = vld [vmem:[%s195 + $0x16d8] sm:$0xff]
        %v1030 = vld [vmem:[%s195 + $0x16e0] sm:$0xff]
        %v1031 = vld [vmem:[%s195 + $0x16e8] sm:$0xff]
        %v1032 = vld [vmem:[%s195 + $0x16f0] sm:$0xff]
        %v1033 = vld [vmem:[%s195 + $0x16f8] sm:$0xff]
        %v1034 = vld [vmem:[%s195 + $0x1700] sm:$0xff]
        %v1035 = vld [vmem:[%s195 + $0x1708] sm:$0xff]
        %v1036 = vld [vmem:[%s195 + $0x1710] sm:$0xff]
        %v1037 = vld [vmem:[%s195 + $0x1718] sm:$0xff]
        %v1038 = vld [vmem:[%s195 + $0x1720] sm:$0xff]
        %v1039 = vld [vmem:[%s195 + $0x1728] sm:$0xff]
        %v1040 = vld [vmem:[%s195 + $0x1730] sm:$0xff]
        %v1041 = vld [vmem:[%s195 + $0x1738] sm:$0xff]
        %v1042 = vld [vmem:[%s195 + $0x1740] sm:$0xff]
        %v1043 = vld [vmem:[%s195 + $0x1748] sm:$0xff]
        %v1044 = vld [vmem:[%s195 + $0x1750] sm:$0xff]
        %v1045 = vld [vmem:[%s195 + $0x1758] sm:$0xff]
        %v1046 = vld [vmem:[%s195 + $0x1760] sm:$0xff]
        %v1047 = vld [vmem:[%s195 + $0x1768] sm:$0xff]
        %v1048 = vld [vmem:[%s195 + $0x1770] sm:$0xff]
        %v1049 = vld [vmem:[%s195 + $0x1778] sm:$0xff]
        %v1050 = vld [vmem:[%s195 + $0x1780] sm:$0xff]
        %v1051 = vld [vmem:[%s195 + $0x1788] sm:$0xff]
        %v1052 = vld [vmem:[%s195 + $0x1790] sm:$0xff]
        %v1053 = vld [vmem:[%s195 + $0x1798] sm:$0xff]
        %v1054 = vld [vmem:[%s195 + $0x17a0] sm:$0xff]
        %v1055 = vld [vmem:[%s195 + $0x17a8] sm:$0xff]
        %v1056 = vld [vmem:[%s195 + $0x17b0] sm:$0xff]
        %v1057 = vld [vmem:[%s195 + $0x17b8] sm:$0xff]
        %v1058 = vld [vmem:[%s195 + $0x17c0] sm:$0xff]
        %v1059 = vld [vmem:[%s195 + $0x17c8] sm:$0xff]
        %v1060 = vld [vmem:[%s195 + $0x17d0] sm:$0xff]
        %v1061 = vld [vmem:[%s195 + $0x17d8] sm:$0xff]
        %v1062 = vld [vmem:[%s195 + $0x17e0] sm:$0xff]
        %v1063 = vld [vmem:[%s195 + $0x17e8] sm:$0xff]
        %v1064 = vld [vmem:[%s195 + $0x17f0] sm:$0xff]
        %v1065 = vld [vmem:[%s195 + $0x17f8] sm:$0xff]
        %v1066 = vld [vmem:[%s195 + $0x1800] sm:$0xff]
        %v1067 = vld [vmem:[%s195 + $0x1808] sm:$0xff]
        %v1068 = vld [vmem:[%s195 + $0x1810] sm:$0xff]
        %v1069 = vld [vmem:[%s195 + $0x1818] sm:$0xff]
        %v1070 = vld [vmem:[%s195 + $0x1820] sm:$0xff]
        %v1071 = vld [vmem:[%s195 + $0x1828] sm:$0xff]
        %v1072 = vld [vmem:[%s195 + $0x1830] sm:$0xff]
        %v1073 = vld [vmem:[%s195 + $0x1838] sm:$0xff]
        %v1074 = vld [vmem:[%s195 + $0x1840] sm:$0xff]
        %v1075 = vld [vmem:[%s195 + $0x1848] sm:$0xff]
        %v1076 = vld [vmem:[%s195 + $0x1850] sm:$0xff]
        %v1077 = vld [vmem:[%s195 + $0x1858] sm:$0xff]
        %v1078 = vld [vmem:[%s195 + $0x1860] sm:$0xff]
        %v1079 = vld [vmem:[%s195 + $0x1868] sm:$0xff]
        %v1080 = vld [vmem:[%s195 + $0x1870] sm:$0xff]
        %v1081 = vld [vmem:[%s195 + $0x1878] sm:$0xff]
        %v1082 = vld [vmem:[%s195 + $0x1880] sm:$0xff]
        %v1083 = vld [vmem:[%s195 + $0x1888] sm:$0xff]
        %v1084 = vld [vmem:[%s195 + $0x1890] sm:$0xff]
        %v1085 = vld [vmem:[%s195 + $0x1898] sm:$0xff]
        %v1086 = vld [vmem:[%s195 + $0x18a0] sm:$0xff]
        %v1087 = vld [vmem:[%s195 + $0x18a8] sm:$0xff]
        %v1088 = vld [vmem:[%s195 + $0x18b0] sm:$0xff]
        %v1089 = vld [vmem:[%s195 + $0x18b8] sm:$0xff]
        %v1090 = vld [vmem:[%s195 + $0x18c0] sm:$0xff]
        %v1091 = vld [vmem:[%s195 + $0x18c8] sm:$0xff]
        %v1092 = vld [vmem:[%s195 + $0x18d0] sm:$0xff]
        %v1093 = vld [vmem:[%s195 + $0x18d8] sm:$0xff]
        %v1094 = vld [vmem:[%s195 + $0x18e0] sm:$0xff]
        %v1095 = vld [vmem:[%s195 + $0x18e8] sm:$0xff]
        %v1096 = vld [vmem:[%s195 + $0x18f0] sm:$0xff]
        %v1097 = vld [vmem:[%s195 + $0x18f8] sm:$0xff]
        %v1098 = vld [vmem:[%s195 + $0x1900] sm:$0xff]
        %v1099 = vld [vmem:[%s195 + $0x1908] sm:$0xff]
        %v1100 = vld [vmem:[%s195 + $0x1910] sm:$0xff]
        %v1101 = vld [vmem:[%s195 + $0x1918] sm:$0xff]
        %v1102 = vld [vmem:[%s195 + $0x1920] sm:$0xff]
        %v1103 = vld [vmem:[%s195 + $0x1928] sm:$0xff]
        %v1104 = vld [vmem:[%s195 + $0x1930] sm:$0xff]
        %v1105 = vld [vmem:[%s195 + $0x1938] sm:$0xff]
        %v1106 = vld [vmem:[%s195 + $0x1940] sm:$0xff]
        %v1107 = vld [vmem:[%s195 + $0x1948] sm:$0xff]
        %v1108 = vld [vmem:[%s195 + $0x1950] sm:$0xff]
        %v1109 = vld [vmem:[%s195 + $0x1958] sm:$0xff]
        %v1110 = vld [vmem:[%s195 + $0x1960] sm:$0xff]
        %v1111 = vld [vmem:[%s195 + $0x1968] sm:$0xff]
        %v1112 = vld [vmem:[%s195 + $0x1970] sm:$0xff]
        %v1113 = vld [vmem:[%s195 + $0x1978] sm:$0xff]
        %v1114 = vld [vmem:[%s195 + $0x1980] sm:$0xff]
        %v1115 = vld [vmem:[%s195 + $0x1988] sm:$0xff]
        %v1116 = vld [vmem:[%s195 + $0x1990] sm:$0xff]
        %v1117 = vld [vmem:[%s195 + $0x1998] sm:$0xff]
        %v1118 = vld [vmem:[%s195 + $0x19a0] sm:$0xff]
        %v1119 = vld [vmem:[%s195 + $0x19a8] sm:$0xff]
        %v1120 = vld [vmem:[%s195 + $0x19b0] sm:$0xff]
        %v1121 = vld [vmem:[%s195 + $0x19b8] sm:$0xff]
        %v1122 = vld [vmem:[%s195 + $0x19c0] sm:$0xff]
        %v1123 = vld [vmem:[%s195 + $0x19c8] sm:$0xff]
        %v1124 = vld [vmem:[%s195 + $0x19d0] sm:$0xff]
        %v1125 = vld [vmem:[%s195 + $0x19d8] sm:$0xff]
        %v1126 = vld [vmem:[%s195 + $0x19e0] sm:$0xff]
        %v1127 = vld [vmem:[%s195 + $0x19e8] sm:$0xff]
        %v1128 = vld [vmem:[%s195 + $0x19f0] sm:$0xff]
        %v1129 = vld [vmem:[%s195 + $0x19f8] sm:$0xff]
        %v1130 = vld [vmem:[%s195 + $0x1a00] sm:$0xff]
        %v1131 = vld [vmem:[%s195 + $0x1a08] sm:$0xff]
        %v1132 = vld [vmem:[%s195 + $0x1a10] sm:$0xff]
        %v1133 = vld [vmem:[%s195 + $0x1a18] sm:$0xff]
        %v1134 = vld [vmem:[%s195 + $0x1a20] sm:$0xff]
        %v1135 = vld [vmem:[%s195 + $0x1a28] sm:$0xff]
        %v1136 = vld [vmem:[%s195 + $0x1a30] sm:$0xff]
        %v1137 = vld [vmem:[%s195 + $0x1a38] sm:$0xff]
        %v1138 = vld [vmem:[%s195 + $0x1a40] sm:$0xff]
        %v1139 = vld [vmem:[%s195 + $0x1a48] sm:$0xff]
        %v1140 = vld [vmem:[%s195 + $0x1a50] sm:$0xff]
        %v1141 = vld [vmem:[%s195 + $0x1a58] sm:$0xff]
        %v1142 = vld [vmem:[%s195 + $0x1a60] sm:$0xff]
        %v1143 = vld [vmem:[%s195 + $0x1a68] sm:$0xff]
        %v1144 = vld [vmem:[%s195 + $0x1a70] sm:$0xff]
        %v1145 = vld [vmem:[%s195 + $0x1a78] sm:$0xff]
        %v1146 = vld [vmem:[%s195 + $0x1a80] sm:$0xff]
        %v1147 = vld [vmem:[%s195 + $0x1a88] sm:$0xff]
        %v1148 = vld [vmem:[%s195 + $0x1a90] sm:$0xff]
        %v1149 = vld [vmem:[%s195 + $0x1a98] sm:$0xff]
        %v1150 = vld [vmem:[%s195 + $0x1aa0] sm:$0xff]
        %v1151 = vld [vmem:[%s195 + $0x1aa8] sm:$0xff]
        %v1152 = vld [vmem:[%s195 + $0x1ab0] sm:$0xff]
        %v1153 = vld [vmem:[%s195 + $0x1ab8] sm:$0xff]
        %v1154 = vld [vmem:[%s195 + $0x1ac0] sm:$0xff]
        %v1155 = vld [vmem:[%s195 + $0x1ac8] sm:$0xff]
        %v1156 = vld [vmem:[%s195 + $0x1ad0] sm:$0xff]
        %v1157 = vld [vmem:[%s195 + $0x1ad8] sm:$0xff]
        %v1158 = vld [vmem:[%s195 + $0x1ae0] sm:$0xff]
        %v1159 = vld [vmem:[%s195 + $0x1ae8] sm:$0xff]
        %v1160 = vld [vmem:[%s195 + $0x1af0] sm:$0xff]
        %v1161 = vld [vmem:[%s195 + $0x1af8] sm:$0xff]
        %v1162 = vld [vmem:[%s195 + $0x1b00] sm:$0xff]
        %v1163 = vld [vmem:[%s195 + $0x1b08] sm:$0xff]
        %v1164 = vld [vmem:[%s195 + $0x1b10] sm:$0xff]
        %v1165 = vld [vmem:[%s195 + $0x1b18] sm:$0xff]
        %v1166 = vld [vmem:[%s195 + $0x1b20] sm:$0xff]
        %v1167 = vld [vmem:[%s195 + $0x1b28] sm:$0xff]
        %v1168 = vld [vmem:[%s195 + $0x1b30] sm:$0xff]
        %v1169 = vld [vmem:[%s195 + $0x1b38] sm:$0xff]
        %v1170 = vld [vmem:[%s195 + $0x1b40] sm:$0xff]
        %v1171 = vld [vmem:[%s195 + $0x1b48] sm:$0xff]
        %v1172 = vld [vmem:[%s195 + $0x1b50] sm:$0xff]
        %v1173 = vld [vmem:[%s195 + $0x1b58] sm:$0xff]
        %v1174 = vld [vmem:[%s195 + $0x1b60] sm:$0xff]
        %v1175 = vld [vmem:[%s195 + $0x1b68] sm:$0xff]
        %v1176 = vld [vmem:[%s195 + $0x1b70] sm:$0xff]
        %v1177 = vld [vmem:[%s195 + $0x1b78] sm:$0xff]
        %v1178 = vld [vmem:[%s195 + $0x1b80] sm:$0xff]
        %v1179 = vld [vmem:[%s195 + $0x1b88] sm:$0xff]
        %v1180 = vld [vmem:[%s195 + $0x1b90] sm:$0xff]
        %v1181 = vld [vmem:[%s195 + $0x1b98] sm:$0xff]
        %v1182 = vld [vmem:[%s195 + $0x1ba0] sm:$0xff]
        %v1183 = vld [vmem:[%s195 + $0x1ba8] sm:$0xff]
        %v1184 = vld [vmem:[%s195 + $0x1bb0] sm:$0xff]
        %v1185 = vld [vmem:[%s195 + $0x1bb8] sm:$0xff]
        %v1186 = vld [vmem:[%s195 + $0x1bc0] sm:$0xff]
        %v1187 = vld [vmem:[%s195 + $0x1bc8] sm:$0xff]
        %v1188 = vld [vmem:[%s195 + $0x1bd0] sm:$0xff]
        %v1189 = vld [vmem:[%s195 + $0x1bd8] sm:$0xff]
        %v1190 = vld [vmem:[%s195 + $0x1be0] sm:$0xff]
        %v1191 = vld [vmem:[%s195 + $0x1be8] sm:$0xff]
        %v1192 = vld [vmem:[%s195 + $0x1bf0] sm:$0xff]
        %v1193 = vld [vmem:[%s195 + $0x1bf8] sm:$0xff]
        %v1194 = vld [vmem:[%s195 + $0x1c00] sm:$0xff]
        %v1195 = vld [vmem:[%s195 + $0x1c08] sm:$0xff]
        %v1196 = vld [vmem:[%s195 + $0x1c10] sm:$0xff]
        %v1197 = vld [vmem:[%s195 + $0x1c18] sm:$0xff]
        %v1198 = vld [vmem:[%s195 + $0x1c20] sm:$0xff]
        %v1199 = vld [vmem:[%s195 + $0x1c28] sm:$0xff]
        %v1200 = vld [vmem:[%s195 + $0x1c30] sm:$0xff]
        %v1201 = vld [vmem:[%s195 + $0x1c38] sm:$0xff]
        %v1202 = vld [vmem:[%s195 + $0x1c40] sm:$0xff]
        %v1203 = vld [vmem:[%s195 + $0x1c48] sm:$0xff]
        %v1204 = vld [vmem:[%s195 + $0x1c50] sm:$0xff]
        %v1205 = vld [vmem:[%s195 + $0x1c58] sm:$0xff]
        %v1206 = vld [vmem:[%s195 + $0x1c60] sm:$0xff]
        %v1207 = vld [vmem:[%s195 + $0x1c68] sm:$0xff]
        %v1208 = vld [vmem:[%s195 + $0x1c70] sm:$0xff]
        %v1209 = vld [vmem:[%s195 + $0x1c78] sm:$0xff]
        %v1210 = vld [vmem:[%s195 + $0x1c80] sm:$0xff]
        %v1211 = vld [vmem:[%s195 + $0x1c88] sm:$0xff]
        %v1212 = vld [vmem:[%s195 + $0x1c90] sm:$0xff]
        %v1213 = vld [vmem:[%s195 + $0x1c98] sm:$0xff]
        %v1214 = vld [vmem:[%s195 + $0x1ca0] sm:$0xff]
        %v1215 = vld [vmem:[%s195 + $0x1ca8] sm:$0xff]
        %v1216 = vld [vmem:[%s195 + $0x1cb0] sm:$0xff]
        %v1217 = vld [vmem:[%s195 + $0x1cb8] sm:$0xff]
        %v1218 = vld [vmem:[%s195 + $0x1cc0] sm:$0xff]
        %v1219 = vld [vmem:[%s195 + $0x1cc8] sm:$0xff]
        %v1220 = vld [vmem:[%s195 + $0x1cd0] sm:$0xff]
        %v1221 = vld [vmem:[%s195 + $0x1cd8] sm:$0xff]
        %v1222 = vld [vmem:[%s195 + $0x1ce0] sm:$0xff]
        %v1223 = vld [vmem:[%s195 + $0x1ce8] sm:$0xff]
        %v1224 = vld [vmem:[%s195 + $0x1cf0] sm:$0xff]
        %v1225 = vld [vmem:[%s195 + $0x1cf8] sm:$0xff]
        %v1226 = vld [vmem:[%s195 + $0x1d00] sm:$0xff]
        %v1227 = vld [vmem:[%s195 + $0x1d08] sm:$0xff]
        %v1228 = vld [vmem:[%s195 + $0x1d10] sm:$0xff]
        %v1229 = vld [vmem:[%s195 + $0x1d18] sm:$0xff]
        %v1230 = vld [vmem:[%s195 + $0x1d20] sm:$0xff]
        %v1231 = vld [vmem:[%s195 + $0x1d28] sm:$0xff]
        %v1232 = vld [vmem:[%s195 + $0x1d30] sm:$0xff]
        %v1233 = vld [vmem:[%s195 + $0x1d38] sm:$0xff]
        %v1234 = vld [vmem:[%s195 + $0x1d40] sm:$0xff]
        %v1235 = vld [vmem:[%s195 + $0x1d48] sm:$0xff]
        %v1236 = vld [vmem:[%s195 + $0x1d50] sm:$0xff]
        %v1237 = vld [vmem:[%s195 + $0x1d58] sm:$0xff]
        %v1238 = vld [vmem:[%s195 + $0x1d60] sm:$0xff]
        %v1239 = vld [vmem:[%s195 + $0x1d68] sm:$0xff]
        %v1240 = vld [vmem:[%s195 + $0x1d70] sm:$0xff]
        %v1241 = vld [vmem:[%s195 + $0x1d78] sm:$0xff]
        %v1242 = vld [vmem:[%s195 + $0x1d80] sm:$0xff]
        %v1243 = vld [vmem:[%s195 + $0x1d88] sm:$0xff]
        %v1244 = vld [vmem:[%s195 + $0x1d90] sm:$0xff]
        %v1245 = vld [vmem:[%s195 + $0x1d98] sm:$0xff]
        %v1246 = vld [vmem:[%s195 + $0x1da0] sm:$0xff]
        %v1247 = vld [vmem:[%s195 + $0x1da8] sm:$0xff]
        %v1248 = vld [vmem:[%s195 + $0x1db0] sm:$0xff]
        %v1249 = vld [vmem:[%s195 + $0x1db8] sm:$0xff]
        %v1250 = vld [vmem:[%s195 + $0x1dc0] sm:$0xff]
        %v1251 = vld [vmem:[%s195 + $0x1dc8] sm:$0xff]
        %v1252 = vld [vmem:[%s195 + $0x1dd0] sm:$0xff]
        %v1253 = vld [vmem:[%s195 + $0x1dd8] sm:$0xff]
        %v1254 = vld [vmem:[%s195 + $0x1de0] sm:$0xff]
        %v1255 = vld [vmem:[%s195 + $0x1de8] sm:$0xff]
        %v1256 = vld [vmem:[%s195 + $0x1df0] sm:$0xff]
        %v1257 = vld [vmem:[%s195 + $0x1df8] sm:$0xff]
        %v1258 = vld [vmem:[%s195 + $0x1e00] sm:$0xff]
        %v1259 = vld [vmem:[%s195 + $0x1e08] sm:$0xff]
        %v1260 = vld [vmem:[%s195 + $0x1e10] sm:$0xff]
        %v1261 = vld [vmem:[%s195 + $0x1e18] sm:$0xff]
        %v1262 = vld [vmem:[%s195 + $0x1e20] sm:$0xff]
        %v1263 = vld [vmem:[%s195 + $0x1e28] sm:$0xff]
        %v1264 = vld [vmem:[%s195 + $0x1e30] sm:$0xff]
        %v1265 = vld [vmem:[%s195 + $0x1e38] sm:$0xff]
        %v1266 = vld [vmem:[%s195 + $0x1e40] sm:$0xff]
        %v1267 = vld [vmem:[%s195 + $0x1e48] sm:$0xff]
        %v1268 = vld [vmem:[%s195 + $0x1e50] sm:$0xff]
        %v1269 = vld [vmem:[%s195 + $0x1e58] sm:$0xff]
        %v1270 = vld [vmem:[%s195 + $0x1e60] sm:$0xff]
        %v1271 = vld [vmem:[%s195 + $0x1e68] sm:$0xff]
        %v1272 = vld [vmem:[%s195 + $0x1e70] sm:$0xff]
        %v1273 = vld [vmem:[%s195 + $0x1e78] sm:$0xff]
        %v1274 = vld [vmem:[%s195 + $0x1e80] sm:$0xff]
        %v1275 = vld [vmem:[%s195 + $0x1e88] sm:$0xff]
        %v1276 = vld [vmem:[%s195 + $0x1e90] sm:$0xff]
        %v1277 = vld [vmem:[%s195 + $0x1e98] sm:$0xff]
        %v1278 = vld [vmem:[%s195 + $0x1ea0] sm:$0xff]
        %v1279 = vld [vmem:[%s195 + $0x1ea8] sm:$0xff]
        %v1280 = vld [vmem:[%s195 + $0x1eb0] sm:$0xff]
        %v1281 = vld [vmem:[%s195 + $0x1eb8] sm:$0xff]
        %v1282 = vld [vmem:[%s195 + $0x1ec0] sm:$0xff]
        %v1283 = vld [vmem:[%s195 + $0x1ec8] sm:$0xff]
        %v1284 = vld [vmem:[%s195 + $0x1ed0] sm:$0xff]
        %v1285 = vld [vmem:[%s195 + $0x1ed8] sm:$0xff]
        %v1286 = vld [vmem:[%s195 + $0x1ee0] sm:$0xff]
        %v1287 = vld [vmem:[%s195 + $0x1ee8] sm:$0xff]
        %v1288 = vld [vmem:[%s195 + $0x1ef0] sm:$0xff]
        %v1289 = vld [vmem:[%s195 + $0x1ef8] sm:$0xff]
        %v1290 = vld [vmem:[%s195 + $0x1f00] sm:$0xff]
        %v1291 = vld [vmem:[%s195 + $0x1f08] sm:$0xff]
        %v1292 = vld [vmem:[%s195 + $0x1f10] sm:$0xff]
        %v1293 = vld [vmem:[%s195 + $0x1f18] sm:$0xff]
        %v1294 = vld [vmem:[%s195 + $0x1f20] sm:$0xff]
        %v1295 = vld [vmem:[%s195 + $0x1f28] sm:$0xff]
        %v1296 = vld [vmem:[%s195 + $0x1f30] sm:$0xff]
        %v1297 = vld [vmem:[%s195 + $0x1f38] sm:$0xff]
        %v1298 = vld [vmem:[%s195 + $0x1f40] sm:$0xff]
        %v1299 = vld [vmem:[%s195 + $0x1f48] sm:$0xff]
        %v1300 = vld [vmem:[%s195 + $0x1f50] sm:$0xff]
        %v1301 = vld [vmem:[%s195 + $0x1f58] sm:$0xff]
        %v1302 = vld [vmem:[%s195 + $0x1f60] sm:$0xff]
        %v1303 = vld [vmem:[%s195 + $0x1f68] sm:$0xff]
        %v1304 = vld [vmem:[%s195 + $0x1f70] sm:$0xff]
        %v1305 = vld [vmem:[%s195 + $0x1f78] sm:$0xff]
        %v1306 = vld [vmem:[%s195 + $0x1f80] sm:$0xff]
        %v1307 = vld [vmem:[%s195 + $0x1f88] sm:$0xff]
        %v1308 = vld [vmem:[%s195 + $0x1f90] sm:$0xff]
        %v1309 = vld [vmem:[%s195 + $0x1f98] sm:$0xff]
        %v1310 = vld [vmem:[%s195 + $0x1fa0] sm:$0xff]
        %v1311 = vld [vmem:[%s195 + $0x1fa8] sm:$0xff]
        %v1312 = vld [vmem:[%s195 + $0x1fb0] sm:$0xff]
        %v1313 = vld [vmem:[%s195 + $0x1fb8] sm:$0xff]
        %v1314 = vld [vmem:[%s195 + $0x1fc0] sm:$0xff]
        %v1315 = vld [vmem:[%s195 + $0x1fc8] sm:$0xff]
        %v1316 = vld [vmem:[%s195 + $0x1fd0] sm:$0xff]
        %v1317 = vld [vmem:[%s195 + $0x1fd8] sm:$0xff]
        %v1318 = vld [vmem:[%s195 + $0x1fe0] sm:$0xff]
        %v1319 = vld [vmem:[%s195 + $0x1fe8] sm:$0xff]
        %v1320 = vld [vmem:[%s195 + $0x1ff0] sm:$0xff]
        %v1321 = vld [vmem:[%s195 + $0x1ff8] sm:$0xff]
        %v1324 = vunpack.c.l.b16 %v296
        %v1325 = vunpack.c.h.b16 %v296
        %v1326 = vunpack.c.l.b16 %v297
        %v1327 = vunpack.c.h.b16 %v297
        %v1328 = vpack.c.b16 %v1324, %v1324
        %v1329 = vpack.c.b16 %v1325, %v1325
        %v1330 = vpack.c.b16 %v1326, %v1326
        %v1331 = vpack.c.b16 %v1327, %v1327
        %v2360 = vunpack.c.l.b16 %v298
        %v2361 = vunpack.c.h.b16 %v298
        %v2362 = vunpack.c.l.b16 %v299
        %v2363 = vunpack.c.h.b16 %v299
        %v2364 = vunpack.c.l.b16 %v300
        %v2365 = vunpack.c.h.b16 %v300
        %v2366 = vunpack.c.l.b16 %v301
        %v2367 = vunpack.c.h.b16 %v301
        %v2368 = vunpack.c.l.b16 %v302
        %v2369 = vunpack.c.h.b16 %v302
        %v2370 = vunpack.c.l.b16 %v303
        %v2371 = vunpack.c.h.b16 %v303
        %v2372 = vunpack.c.l.b16 %v304
        %v2373 = vunpack.c.h.b16 %v304
        %v2374 = vunpack.c.l.b16 %v305
        %v2375 = vunpack.c.h.b16 %v305
        %v2376 = vunpack.c.l.b16 %v306
        %v2377 = vunpack.c.h.b16 %v306
        %v2378 = vunpack.c.l.b16 %v307
        %v2379 = vunpack.c.h.b16 %v307
        %v2380 = vunpack.c.l.b16 %v308
        %v2381 = vunpack.c.h.b16 %v308
        %v2382 = vunpack.c.l.b16 %v309
        %v2383 = vunpack.c.h.b16 %v309
        %v2384 = vunpack.c.l.b16 %v310
        %v2385 = vunpack.c.h.b16 %v310
        %v2386 = vunpack.c.l.b16 %v311
        %v2387 = vunpack.c.h.b16 %v311
        %v2388 = vunpack.c.l.b16 %v312
        %v2389 = vunpack.c.h.b16 %v312
        %v2390 = vunpack.c.l.b16 %v313
        %v2391 = vunpack.c.h.b16 %v313
        %v2392 = vunpack.c.l.b16 %v314
        %v2393 = vunpack.c.h.b16 %v314
        %v2394 = vunpack.c.l.b16 %v315
        %v2395 = vunpack.c.h.b16 %v315
        %v2396 = vunpack.c.l.b16 %v316
        %v2397 = vunpack.c.h.b16 %v316
        %v2398 = vunpack.c.l.b16 %v317
        %v2399 = vunpack.c.h.b16 %v317
        %v2400 = vunpack.c.l.b16 %v318
        %v2401 = vunpack.c.h.b16 %v318
        %v2402 = vunpack.c.l.b16 %v319
        %v2403 = vunpack.c.h.b16 %v319
        %v2404 = vunpack.c.l.b16 %v320
        %v2405 = vunpack.c.h.b16 %v320
        %v2406 = vunpack.c.l.b16 %v321
        %v2407 = vunpack.c.h.b16 %v321
        %v2408 = vunpack.c.l.b16 %v322
        %v2409 = vunpack.c.h.b16 %v322
        %v2410 = vunpack.c.l.b16 %v323
        %v2411 = vunpack.c.h.b16 %v323
        %v2412 = vunpack.c.l.b16 %v324
        %v2413 = vunpack.c.h.b16 %v324
        %v2414 = vunpack.c.l.b16 %v325
        %v2415 = vunpack.c.h.b16 %v325
        %v2416 = vunpack.c.l.b16 %v326
        %v2417 = vunpack.c.h.b16 %v326
        %v2418 = vunpack.c.l.b16 %v327
        %v2419 = vunpack.c.h.b16 %v327
        %v2420 = vunpack.c.l.b16 %v328
        %v2421 = vunpack.c.h.b16 %v328
        %v2422 = vunpack.c.l.b16 %v329
        %v2423 = vunpack.c.h.b16 %v329
        %v2424 = vunpack.c.l.b16 %v330
        %v2425 = vunpack.c.h.b16 %v330
        %v2426 = vunpack.c.l.b16 %v331
        %v2427 = vunpack.c.h.b16 %v331
        %v2428 = vunpack.c.l.b16 %v332
        %v2429 = vunpack.c.h.b16 %v332
        %v2430 = vunpack.c.l.b16 %v333
        %v2431 = vunpack.c.h.b16 %v333
        %v2432 = vunpack.c.l.b16 %v334
        %v2433 = vunpack.c.h.b16 %v334
        %v2434 = vunpack.c.l.b16 %v335
        %v2435 = vunpack.c.h.b16 %v335
        %v2436 = vunpack.c.l.b16 %v336
        %v2437 = vunpack.c.h.b16 %v336
        %v2438 = vunpack.c.l.b16 %v337
        %v2439 = vunpack.c.h.b16 %v337
        %v2440 = vunpack.c.l.b16 %v338
        %v2441 = vunpack.c.h.b16 %v338
        %v2442 = vunpack.c.l.b16 %v339
        %v2443 = vunpack.c.h.b16 %v339
        %v2444 = vunpack.c.l.b16 %v340
        %v2445 = vunpack.c.h.b16 %v340
        %v2446 = vunpack.c.l.b16 %v341
        %v2447 = vunpack.c.h.b16 %v341
        %v2448 = vunpack.c.l.b16 %v342
        %v2449 = vunpack.c.h.b16 %v342
        %v2450 = vunpack.c.l.b16 %v343
        %v2451 = vunpack.c.h.b16 %v343
        %v2452 = vunpack.c.l.b16 %v344
        %v2453 = vunpack.c.h.b16 %v344
        %v2454 = vunpack.c.l.b16 %v345
        %v2455 = vunpack.c.h.b16 %v345
        %v2456 = vunpack.c.l.b16 %v346
        %v2457 = vunpack.c.h.b16 %v346
        %v2458 = vunpack.c.l.b16 %v347
        %v2459 = vunpack.c.h.b16 %v347
        %v2460 = vunpack.c.l.b16 %v348
        %v2461 = vunpack.c.h.b16 %v348
        %v2462 = vunpack.c.l.b16 %v349
        %v2463 = vunpack.c.h.b16 %v349
        %v2464 = vunpack.c.l.b16 %v350
        %v2465 = vunpack.c.h.b16 %v350
        %v2466 = vunpack.c.l.b16 %v351
        %v2467 = vunpack.c.h.b16 %v351
        %v2468 = vunpack.c.l.b16 %v352
        %v2469 = vunpack.c.h.b16 %v352
        %v2470 = vunpack.c.l.b16 %v353
        %v2471 = vunpack.c.h.b16 %v353
        %v2472 = vunpack.c.l.b16 %v354
        %v2473 = vunpack.c.h.b16 %v354
        %v2474 = vunpack.c.l.b16 %v355
        %v2475 = vunpack.c.h.b16 %v355
        %v2476 = vunpack.c.l.b16 %v356
        %v2477 = vunpack.c.h.b16 %v356
        %v2478 = vunpack.c.l.b16 %v357
        %v2479 = vunpack.c.h.b16 %v357
        %v2480 = vunpack.c.l.b16 %v358
        %v2481 = vunpack.c.h.b16 %v358
        %v2482 = vunpack.c.l.b16 %v359
        %v2483 = vunpack.c.h.b16 %v359
        %v2484 = vunpack.c.l.b16 %v360
        %v2485 = vunpack.c.h.b16 %v360
        %v2486 = vunpack.c.l.b16 %v361
        %v2487 = vunpack.c.h.b16 %v361
        %v2488 = vunpack.c.l.b16 %v362
        %v2489 = vunpack.c.h.b16 %v362
        %v2490 = vunpack.c.l.b16 %v363
        %v2491 = vunpack.c.h.b16 %v363
        %v2492 = vunpack.c.l.b16 %v364
        %v2493 = vunpack.c.h.b16 %v364
        %v2494 = vunpack.c.l.b16 %v365
        %v2495 = vunpack.c.h.b16 %v365
        %v2496 = vunpack.c.l.b16 %v366
        %v2497 = vunpack.c.h.b16 %v366
        %v2498 = vunpack.c.l.b16 %v367
        %v2499 = vunpack.c.h.b16 %v367
        %v2500 = vunpack.c.l.b16 %v368
        %v2501 = vunpack.c.h.b16 %v368
        %v2502 = vunpack.c.l.b16 %v369
        %v2503 = vunpack.c.h.b16 %v369
        %v2504 = vunpack.c.l.b16 %v370
        %v2505 = vunpack.c.h.b16 %v370
        %v2506 = vunpack.c.l.b16 %v371
        %v2507 = vunpack.c.h.b16 %v371
        %v2508 = vunpack.c.l.b16 %v372
        %v2509 = vunpack.c.h.b16 %v372
        %v2510 = vunpack.c.l.b16 %v373
        %v2511 = vunpack.c.h.b16 %v373
        %v2512 = vunpack.c.l.b16 %v374
        %v2513 = vunpack.c.h.b16 %v374
        %v2514 = vunpack.c.l.b16 %v375
        %v2515 = vunpack.c.h.b16 %v375
        %v2516 = vunpack.c.l.b16 %v376
        %v2517 = vunpack.c.h.b16 %v376
        %v2518 = vunpack.c.l.b16 %v377
        %v2519 = vunpack.c.h.b16 %v377
        %v2520 = vunpack.c.l.b16 %v378
        %v2521 = vunpack.c.h.b16 %v378
        %v2522 = vunpack.c.l.b16 %v379
        %v2523 = vunpack.c.h.b16 %v379
        %v2524 = vunpack.c.l.b16 %v380
        %v2525 = vunpack.c.h.b16 %v380
        %v2526 = vunpack.c.l.b16 %v381
        %v2527 = vunpack.c.h.b16 %v381
        %v2528 = vunpack.c.l.b16 %v382
        %v2529 = vunpack.c.h.b16 %v382
        %v2530 = vunpack.c.l.b16 %v383
        %v2531 = vunpack.c.h.b16 %v383
        %v2532 = vunpack.c.l.b16 %v384
        %v2533 = vunpack.c.h.b16 %v384
        %v2534 = vunpack.c.l.b16 %v385
        %v2535 = vunpack.c.h.b16 %v385
        %v2536 = vunpack.c.l.b16 %v386
        %v2537 = vunpack.c.h.b16 %v386
        %v2538 = vunpack.c.l.b16 %v387
        %v2539 = vunpack.c.h.b16 %v387
        %v2540 = vunpack.c.l.b16 %v388
        %v2541 = vunpack.c.h.b16 %v388
        %v2542 = vunpack.c.l.b16 %v389
        %v2543 = vunpack.c.h.b16 %v389
        %v2544 = vunpack.c.l.b16 %v390
        %v2545 = vunpack.c.h.b16 %v390
        %v2546 = vunpack.c.l.b16 %v391
        %v2547 = vunpack.c.h.b16 %v391
        %v2548 = vunpack.c.l.b16 %v392
        %v2549 = vunpack.c.h.b16 %v392
        %v2550 = vunpack.c.l.b16 %v393
        %v2551 = vunpack.c.h.b16 %v393
        %v2552 = vunpack.c.l.b16 %v394
        %v2553 = vunpack.c.h.b16 %v394
        %v2554 = vunpack.c.l.b16 %v395
        %v2555 = vunpack.c.h.b16 %v395
        %v2556 = vunpack.c.l.b16 %v396
        %v2557 = vunpack.c.h.b16 %v396
        %v2558 = vunpack.c.l.b16 %v397
        %v2559 = vunpack.c.h.b16 %v397
        %v2560 = vunpack.c.l.b16 %v398
        %v2561 = vunpack.c.h.b16 %v398
        %v2562 = vunpack.c.l.b16 %v399
        %v2563 = vunpack.c.h.b16 %v399
        %v2564 = vunpack.c.l.b16 %v400
        %v2565 = vunpack.c.h.b16 %v400
        %v2566 = vunpack.c.l.b16 %v401
        %v2567 = vunpack.c.h.b16 %v401
        %v2568 = vunpack.c.l.b16 %v402
        %v2569 = vunpack.c.h.b16 %v402
        %v2570 = vunpack.c.l.b16 %v403
        %v2571 = vunpack.c.h.b16 %v403
        %v2572 = vunpack.c.l.b16 %v404
        %v2573 = vunpack.c.h.b16 %v404
        %v2574 = vunpack.c.l.b16 %v405
        %v2575 = vunpack.c.h.b16 %v405
        %v2576 = vunpack.c.l.b16 %v406
        %v2577 = vunpack.c.h.b16 %v406
        %v2578 = vunpack.c.l.b16 %v407
        %v2579 = vunpack.c.h.b16 %v407
        %v2580 = vunpack.c.l.b16 %v408
        %v2581 = vunpack.c.h.b16 %v408
        %v2582 = vunpack.c.l.b16 %v409
        %v2583 = vunpack.c.h.b16 %v409
        %v2584 = vunpack.c.l.b16 %v410
        %v2585 = vunpack.c.h.b16 %v410
        %v2586 = vunpack.c.l.b16 %v411
        %v2587 = vunpack.c.h.b16 %v411
        %v2588 = vunpack.c.l.b16 %v412
        %v2589 = vunpack.c.h.b16 %v412
        %v2590 = vunpack.c.l.b16 %v413
        %v2591 = vunpack.c.h.b16 %v413
        %v2592 = vunpack.c.l.b16 %v414
        %v2593 = vunpack.c.h.b16 %v414
        %v2594 = vunpack.c.l.b16 %v415
        %v2595 = vunpack.c.h.b16 %v415
        %v2596 = vunpack.c.l.b16 %v416
        %v2597 = vunpack.c.h.b16 %v416
        %v2598 = vunpack.c.l.b16 %v417
        %v2599 = vunpack.c.h.b16 %v417
        %v2600 = vunpack.c.l.b16 %v418
        %v2601 = vunpack.c.h.b16 %v418
        %v2602 = vunpack.c.l.b16 %v419
        %v2603 = vunpack.c.h.b16 %v419
        %v2604 = vunpack.c.l.b16 %v420
        %v2605 = vunpack.c.h.b16 %v420
        %v2606 = vunpack.c.l.b16 %v421
        %v2607 = vunpack.c.h.b16 %v421
        %v2608 = vunpack.c.l.b16 %v422
        %v2609 = vunpack.c.h.b16 %v422
        %v2610 = vunpack.c.l.b16 %v423
        %v2611 = vunpack.c.h.b16 %v423
        %v2612 = vunpack.c.l.b16 %v424
        %v2613 = vunpack.c.h.b16 %v424
        %v2614 = vunpack.c.l.b16 %v425
        %v2615 = vunpack.c.h.b16 %v425
        %v2616 = vunpack.c.l.b16 %v426
        %v2617 = vunpack.c.h.b16 %v426
        %v2618 = vunpack.c.l.b16 %v427
        %v2619 = vunpack.c.h.b16 %v427
        %v2620 = vunpack.c.l.b16 %v428
        %v2621 = vunpack.c.h.b16 %v428
        %v2622 = vunpack.c.l.b16 %v429
        %v2623 = vunpack.c.h.b16 %v429
        %v2624 = vunpack.c.l.b16 %v430
        %v2625 = vunpack.c.h.b16 %v430
        %v2626 = vunpack.c.l.b16 %v431
        %v2627 = vunpack.c.h.b16 %v431
        %v2628 = vunpack.c.l.b16 %v432
        %v2629 = vunpack.c.h.b16 %v432
        %v2630 = vunpack.c.l.b16 %v433
        %v2631 = vunpack.c.h.b16 %v433
        %v2632 = vunpack.c.l.b16 %v434
        %v2633 = vunpack.c.h.b16 %v434
        %v2634 = vunpack.c.l.b16 %v435
        %v2635 = vunpack.c.h.b16 %v435
        %v2636 = vunpack.c.l.b16 %v436
        %v2637 = vunpack.c.h.b16 %v436
        %v2638 = vunpack.c.l.b16 %v437
        %v2639 = vunpack.c.h.b16 %v437
        %v2640 = vunpack.c.l.b16 %v438
        %v2641 = vunpack.c.h.b16 %v438
        %v2642 = vunpack.c.l.b16 %v439
        %v2643 = vunpack.c.h.b16 %v439
        %v2644 = vunpack.c.l.b16 %v440
        %v2645 = vunpack.c.h.b16 %v440
        %v2646 = vunpack.c.l.b16 %v441
        %v2647 = vunpack.c.h.b16 %v441
        %v2648 = vunpack.c.l.b16 %v442
        %v2649 = vunpack.c.h.b16 %v442
        %v2650 = vunpack.c.l.b16 %v443
        %v2651 = vunpack.c.h.b16 %v443
        %v2652 = vunpack.c.l.b16 %v444
        %v2653 = vunpack.c.h.b16 %v444
        %v2654 = vunpack.c.l.b16 %v445
        %v2655 = vunpack.c.h.b16 %v445
        %v2656 = vunpack.c.l.b16 %v446
        %v2657 = vunpack.c.h.b16 %v446
        %v2658 = vunpack.c.l.b16 %v447
        %v2659 = vunpack.c.h.b16 %v447
        %v2660 = vunpack.c.l.b16 %v448
        %v2661 = vunpack.c.h.b16 %v448
        %v2662 = vunpack.c.l.b16 %v449
        %v2663 = vunpack.c.h.b16 %v449
        %v2664 = vunpack.c.l.b16 %v450
        %v2665 = vunpack.c.h.b16 %v450
        %v2666 = vunpack.c.l.b16 %v451
        %v2667 = vunpack.c.h.b16 %v451
        %v2668 = vunpack.c.l.b16 %v452
        %v2669 = vunpack.c.h.b16 %v452
        %v2670 = vunpack.c.l.b16 %v453
        %v2671 = vunpack.c.h.b16 %v453
        %v2672 = vunpack.c.l.b16 %v454
        %v2673 = vunpack.c.h.b16 %v454
        %v2674 = vunpack.c.l.b16 %v455
        %v2675 = vunpack.c.h.b16 %v455
        %v2676 = vunpack.c.l.b16 %v456
        %v2677 = vunpack.c.h.b16 %v456
        %v2678 = vunpack.c.l.b16 %v457
        %v2679 = vunpack.c.h.b16 %v457
        %v2680 = vunpack.c.l.b16 %v458
        %v2681 = vunpack.c.h.b16 %v458
        %v2682 = vunpack.c.l.b16 %v459
        %v2683 = vunpack.c.h.b16 %v459
        %v2684 = vunpack.c.l.b16 %v460
        %v2685 = vunpack.c.h.b16 %v460
        %v2686 = vunpack.c.l.b16 %v461
        %v2687 = vunpack.c.h.b16 %v461
        %v2688 = vunpack.c.l.b16 %v462
        %v2689 = vunpack.c.h.b16 %v462
        %v2690 = vunpack.c.l.b16 %v463
        %v2691 = vunpack.c.h.b16 %v463
        %v2692 = vunpack.c.l.b16 %v464
        %v2693 = vunpack.c.h.b16 %v464
        %v2694 = vunpack.c.l.b16 %v465
        %v2695 = vunpack.c.h.b16 %v465
        %v2696 = vunpack.c.l.b16 %v466
        %v2697 = vunpack.c.h.b16 %v466
        %v2698 = vunpack.c.l.b16 %v467
        %v2699 = vunpack.c.h.b16 %v467
        %v2700 = vunpack.c.l.b16 %v468
        %v2701 = vunpack.c.h.b16 %v468
        %v2702 = vunpack.c.l.b16 %v469
        %v2703 = vunpack.c.h.b16 %v469
        %v2704 = vunpack.c.l.b16 %v470
        %v2705 = vunpack.c.h.b16 %v470
        %v2706 = vunpack.c.l.b16 %v471
        %v2707 = vunpack.c.h.b16 %v471
        %v2708 = vunpack.c.l.b16 %v472
        %v2709 = vunpack.c.h.b16 %v472
        %v2710 = vunpack.c.l.b16 %v473
        %v2711 = vunpack.c.h.b16 %v473
        %v2712 = vunpack.c.l.b16 %v474
        %v2713 = vunpack.c.h.b16 %v474
        %v2714 = vunpack.c.l.b16 %v475
        %v2715 = vunpack.c.h.b16 %v475
        %v2716 = vunpack.c.l.b16 %v476
        %v2717 = vunpack.c.h.b16 %v476
        %v2718 = vunpack.c.l.b16 %v477
        %v2719 = vunpack.c.h.b16 %v477
        %v2720 = vunpack.c.l.b16 %v478
        %v2721 = vunpack.c.h.b16 %v478
        %v2722 = vunpack.c.l.b16 %v479
        %v2723 = vunpack.c.h.b16 %v479
        %v2724 = vunpack.c.l.b16 %v480
        %v2725 = vunpack.c.h.b16 %v480
        %v2726 = vunpack.c.l.b16 %v481
        %v2727 = vunpack.c.h.b16 %v481
        %v2728 = vunpack.c.l.b16 %v482
        %v2729 = vunpack.c.h.b16 %v482
        %v2730 = vunpack.c.l.b16 %v483
        %v2731 = vunpack.c.h.b16 %v483
        %v2732 = vunpack.c.l.b16 %v484
        %v2733 = vunpack.c.h.b16 %v484
        %v2734 = vunpack.c.l.b16 %v485
        %v2735 = vunpack.c.h.b16 %v485
        %v2736 = vunpack.c.l.b16 %v486
        %v2737 = vunpack.c.h.b16 %v486
        %v2738 = vunpack.c.l.b16 %v487
        %v2739 = vunpack.c.h.b16 %v487
        %v2740 = vunpack.c.l.b16 %v488
        %v2741 = vunpack.c.h.b16 %v488
        %v2742 = vunpack.c.l.b16 %v489
        %v2743 = vunpack.c.h.b16 %v489
        %v2744 = vunpack.c.l.b16 %v490
        %v2745 = vunpack.c.h.b16 %v490
        %v2746 = vunpack.c.l.b16 %v491
        %v2747 = vunpack.c.h.b16 %v491
        %v2748 = vunpack.c.l.b16 %v492
        %v2749 = vunpack.c.h.b16 %v492
        %v2750 = vunpack.c.l.b16 %v493
        %v2751 = vunpack.c.h.b16 %v493
        %v2752 = vunpack.c.l.b16 %v494
        %v2753 = vunpack.c.h.b16 %v494
        %v2754 = vunpack.c.l.b16 %v495
        %v2755 = vunpack.c.h.b16 %v495
        %v2756 = vunpack.c.l.b16 %v496
        %v2757 = vunpack.c.h.b16 %v496
        %v2758 = vunpack.c.l.b16 %v497
        %v2759 = vunpack.c.h.b16 %v497
        %v2760 = vunpack.c.l.b16 %v498
        %v2761 = vunpack.c.h.b16 %v498
        %v2762 = vunpack.c.l.b16 %v499
        %v2763 = vunpack.c.h.b16 %v499
        %v2764 = vunpack.c.l.b16 %v500
        %v2765 = vunpack.c.h.b16 %v500
        %v2766 = vunpack.c.l.b16 %v501
        %v2767 = vunpack.c.h.b16 %v501
        %v2768 = vunpack.c.l.b16 %v502
        %v2769 = vunpack.c.h.b16 %v502
        %v2770 = vunpack.c.l.b16 %v503
        %v2771 = vunpack.c.h.b16 %v503
        %v2772 = vunpack.c.l.b16 %v504
        %v2773 = vunpack.c.h.b16 %v504
        %v2774 = vunpack.c.l.b16 %v505
        %v2775 = vunpack.c.h.b16 %v505
        %v2776 = vunpack.c.l.b16 %v506
        %v2777 = vunpack.c.h.b16 %v506
        %v2778 = vunpack.c.l.b16 %v507
        %v2779 = vunpack.c.h.b16 %v507
        %v2780 = vunpack.c.l.b16 %v508
        %v2781 = vunpack.c.h.b16 %v508
        %v2782 = vunpack.c.l.b16 %v509
        %v2783 = vunpack.c.h.b16 %v509
        %v2784 = vunpack.c.l.b16 %v510
        %v2785 = vunpack.c.h.b16 %v510
        %v2786 = vunpack.c.l.b16 %v511
        %v2787 = vunpack.c.h.b16 %v511
        %v2788 = vunpack.c.l.b16 %v512
        %v2789 = vunpack.c.h.b16 %v512
        %v2790 = vunpack.c.l.b16 %v513
        %v2791 = vunpack.c.h.b16 %v513
        %v2792 = vunpack.c.l.b16 %v514
        %v2793 = vunpack.c.h.b16 %v514
        %v2794 = vunpack.c.l.b16 %v515
        %v2795 = vunpack.c.h.b16 %v515
        %v2796 = vunpack.c.l.b16 %v516
        %v2797 = vunpack.c.h.b16 %v516
        %v2798 = vunpack.c.l.b16 %v517
        %v2799 = vunpack.c.h.b16 %v517
        %v2800 = vunpack.c.l.b16 %v518
        %v2801 = vunpack.c.h.b16 %v518
        %v2802 = vunpack.c.l.b16 %v519
        %v2803 = vunpack.c.h.b16 %v519
        %v2804 = vunpack.c.l.b16 %v520
        %v2805 = vunpack.c.h.b16 %v520
        %v2806 = vunpack.c.l.b16 %v521
        %v2807 = vunpack.c.h.b16 %v521
        %v2808 = vunpack.c.l.b16 %v522
        %v2809 = vunpack.c.h.b16 %v522
        %v2810 = vunpack.c.l.b16 %v523
        %v2811 = vunpack.c.h.b16 %v523
        %v2812 = vunpack.c.l.b16 %v524
        %v2813 = vunpack.c.h.b16 %v524
        %v2814 = vunpack.c.l.b16 %v525
        %v2815 = vunpack.c.h.b16 %v525
        %v2816 = vunpack.c.l.b16 %v526
        %v2817 = vunpack.c.h.b16 %v526
        %v2818 = vunpack.c.l.b16 %v527
        %v2819 = vunpack.c.h.b16 %v527
        %v2820 = vunpack.c.l.b16 %v528
        %v2821 = vunpack.c.h.b16 %v528
        %v2822 = vunpack.c.l.b16 %v529
        %v2823 = vunpack.c.h.b16 %v529
        %v2824 = vunpack.c.l.b16 %v530
        %v2825 = vunpack.c.h.b16 %v530
        %v2826 = vunpack.c.l.b16 %v531
        %v2827 = vunpack.c.h.b16 %v531
        %v2828 = vunpack.c.l.b16 %v532
        %v2829 = vunpack.c.h.b16 %v532
        %v2830 = vunpack.c.l.b16 %v533
        %v2831 = vunpack.c.h.b16 %v533
        %v2832 = vunpack.c.l.b16 %v534
        %v2833 = vunpack.c.h.b16 %v534
        %v2834 = vunpack.c.l.b16 %v535
        %v2835 = vunpack.c.h.b16 %v535
        %v2836 = vunpack.c.l.b16 %v536
        %v2837 = vunpack.c.h.b16 %v536
        %v2838 = vunpack.c.l.b16 %v537
        %v2839 = vunpack.c.h.b16 %v537
        %v2840 = vunpack.c.l.b16 %v538
        %v2841 = vunpack.c.h.b16 %v538
        %v2842 = vunpack.c.l.b16 %v539
        %v2843 = vunpack.c.h.b16 %v539
        %v2844 = vunpack.c.l.b16 %v540
        %v2845 = vunpack.c.h.b16 %v540
        %v2846 = vunpack.c.l.b16 %v541
        %v2847 = vunpack.c.h.b16 %v541
        %v2848 = vunpack.c.l.b16 %v542
        %v2849 = vunpack.c.h.b16 %v542
        %v2850 = vunpack.c.l.b16 %v543
        %v2851 = vunpack.c.h.b16 %v543
        %v2852 = vunpack.c.l.b16 %v544
        %v2853 = vunpack.c.h.b16 %v544
        %v2854 = vunpack.c.l.b16 %v545
        %v2855 = vunpack.c.h.b16 %v545
        %v2856 = vunpack.c.l.b16 %v546
        %v2857 = vunpack.c.h.b16 %v546
        %v2858 = vunpack.c.l.b16 %v547
        %v2859 = vunpack.c.h.b16 %v547
        %v2860 = vunpack.c.l.b16 %v548
        %v2861 = vunpack.c.h.b16 %v548
        %v2862 = vunpack.c.l.b16 %v549
        %v2863 = vunpack.c.h.b16 %v549
        %v2864 = vunpack.c.l.b16 %v550
        %v2865 = vunpack.c.h.b16 %v550
        %v2866 = vunpack.c.l.b16 %v551
        %v2867 = vunpack.c.h.b16 %v551
        %v2868 = vunpack.c.l.b16 %v552
        %v2869 = vunpack.c.h.b16 %v552
        %v2870 = vunpack.c.l.b16 %v553
        %v2871 = vunpack.c.h.b16 %v553
        %v2872 = vunpack.c.l.b16 %v554
        %v2873 = vunpack.c.h.b16 %v554
        %v2874 = vunpack.c.l.b16 %v555
        %v2875 = vunpack.c.h.b16 %v555
        %v2876 = vunpack.c.l.b16 %v556
        %v2877 = vunpack.c.h.b16 %v556
        %v2878 = vunpack.c.l.b16 %v557
        %v2879 = vunpack.c.h.b16 %v557
        %v2880 = vunpack.c.l.b16 %v558
        %v2881 = vunpack.c.h.b16 %v558
        %v2882 = vunpack.c.l.b16 %v559
        %v2883 = vunpack.c.h.b16 %v559
        %v2884 = vunpack.c.l.b16 %v560
        %v2885 = vunpack.c.h.b16 %v560
        %v2886 = vunpack.c.l.b16 %v561
        %v2887 = vunpack.c.h.b16 %v561
        %v2888 = vunpack.c.l.b16 %v562
        %v2889 = vunpack.c.h.b16 %v562
        %v2890 = vunpack.c.l.b16 %v563
        %v2891 = vunpack.c.h.b16 %v563
        %v2892 = vunpack.c.l.b16 %v564
        %v2893 = vunpack.c.h.b16 %v564
        %v2894 = vunpack.c.l.b16 %v565
        %v2895 = vunpack.c.h.b16 %v565
        %v2896 = vunpack.c.l.b16 %v566
        %v2897 = vunpack.c.h.b16 %v566
        %v2898 = vunpack.c.l.b16 %v567
        %v2899 = vunpack.c.h.b16 %v567
        %v2900 = vunpack.c.l.b16 %v568
        %v2901 = vunpack.c.h.b16 %v568
        %v2902 = vunpack.c.l.b16 %v569
        %v2903 = vunpack.c.h.b16 %v569
        %v2904 = vunpack.c.l.b16 %v570
        %v2905 = vunpack.c.h.b16 %v570
        %v2906 = vunpack.c.l.b16 %v571
        %v2907 = vunpack.c.h.b16 %v571
        %v2908 = vunpack.c.l.b16 %v572
        %v2909 = vunpack.c.h.b16 %v572
        %v2910 = vunpack.c.l.b16 %v573
        %v2911 = vunpack.c.h.b16 %v573
        %v2912 = vunpack.c.l.b16 %v574
        %v2913 = vunpack.c.h.b16 %v574
        %v2914 = vunpack.c.l.b16 %v575
        %v2915 = vunpack.c.h.b16 %v575
        %v2916 = vunpack.c.l.b16 %v576
        %v2917 = vunpack.c.h.b16 %v576
        %v2918 = vunpack.c.l.b16 %v577
        %v2919 = vunpack.c.h.b16 %v577
        %v2920 = vunpack.c.l.b16 %v578
        %v2921 = vunpack.c.h.b16 %v578
        %v2922 = vunpack.c.l.b16 %v579
        %v2923 = vunpack.c.h.b16 %v579
        %v2924 = vunpack.c.l.b16 %v580
        %v2925 = vunpack.c.h.b16 %v580
        %v2926 = vunpack.c.l.b16 %v581
        %v2927 = vunpack.c.h.b16 %v581
        %v2928 = vunpack.c.l.b16 %v582
        %v2929 = vunpack.c.h.b16 %v582
        %v2930 = vunpack.c.l.b16 %v583
        %v2931 = vunpack.c.h.b16 %v583
        %v2932 = vunpack.c.l.b16 %v584
        %v2933 = vunpack.c.h.b16 %v584
        %v2934 = vunpack.c.l.b16 %v585
        %v2935 = vunpack.c.h.b16 %v585
        %v2936 = vunpack.c.l.b16 %v586
        %v2937 = vunpack.c.h.b16 %v586
        %v2938 = vunpack.c.l.b16 %v587
        %v2939 = vunpack.c.h.b16 %v587
        %v2940 = vunpack.c.l.b16 %v588
        %v2941 = vunpack.c.h.b16 %v588
        %v2942 = vunpack.c.l.b16 %v589
        %v2943 = vunpack.c.h.b16 %v589
        %v2944 = vunpack.c.l.b16 %v590
        %v2945 = vunpack.c.h.b16 %v590
        %v2946 = vunpack.c.l.b16 %v591
        %v2947 = vunpack.c.h.b16 %v591
        %v2948 = vunpack.c.l.b16 %v592
        %v2949 = vunpack.c.h.b16 %v592
        %v2950 = vunpack.c.l.b16 %v593
        %v2951 = vunpack.c.h.b16 %v593
        %v2952 = vunpack.c.l.b16 %v594
        %v2953 = vunpack.c.h.b16 %v594
        %v2954 = vunpack.c.l.b16 %v595
        %v2955 = vunpack.c.h.b16 %v595
        %v2956 = vunpack.c.l.b16 %v596
        %v2957 = vunpack.c.h.b16 %v596
        %v2958 = vunpack.c.l.b16 %v597
        %v2959 = vunpack.c.h.b16 %v597
        %v2960 = vunpack.c.l.b16 %v598
        %v2961 = vunpack.c.h.b16 %v598
        %v2962 = vunpack.c.l.b16 %v599
        %v2963 = vunpack.c.h.b16 %v599
        %v2964 = vunpack.c.l.b16 %v600
        %v2965 = vunpack.c.h.b16 %v600
        %v2966 = vunpack.c.l.b16 %v601
        %v2967 = vunpack.c.h.b16 %v601
        %v2968 = vunpack.c.l.b16 %v602
        %v2969 = vunpack.c.h.b16 %v602
        %v2970 = vunpack.c.l.b16 %v603
        %v2971 = vunpack.c.h.b16 %v603
        %v2972 = vunpack.c.l.b16 %v604
        %v2973 = vunpack.c.h.b16 %v604
        %v2974 = vunpack.c.l.b16 %v605
        %v2975 = vunpack.c.h.b16 %v605
        %v2976 = vunpack.c.l.b16 %v606
        %v2977 = vunpack.c.h.b16 %v606
        %v2978 = vunpack.c.l.b16 %v607
        %v2979 = vunpack.c.h.b16 %v607
        %v2980 = vunpack.c.l.b16 %v608
        %v2981 = vunpack.c.h.b16 %v608
        %v2982 = vunpack.c.l.b16 %v609
        %v2983 = vunpack.c.h.b16 %v609
        %v2984 = vunpack.c.l.b16 %v610
        %v2985 = vunpack.c.h.b16 %v610
        %v2986 = vunpack.c.l.b16 %v611
        %v2987 = vunpack.c.h.b16 %v611
        %v2988 = vunpack.c.l.b16 %v612
        %v2989 = vunpack.c.h.b16 %v612
        %v2990 = vunpack.c.l.b16 %v613
        %v2991 = vunpack.c.h.b16 %v613
        %v2992 = vunpack.c.l.b16 %v614
        %v2993 = vunpack.c.h.b16 %v614
        %v2994 = vunpack.c.l.b16 %v615
        %v2995 = vunpack.c.h.b16 %v615
        %v2996 = vunpack.c.l.b16 %v616
        %v2997 = vunpack.c.h.b16 %v616
        %v2998 = vunpack.c.l.b16 %v617
        %v2999 = vunpack.c.h.b16 %v617
        %v3000 = vunpack.c.l.b16 %v618
        %v3001 = vunpack.c.h.b16 %v618
        %v3002 = vunpack.c.l.b16 %v619
        %v3003 = vunpack.c.h.b16 %v619
        %v3004 = vunpack.c.l.b16 %v620
        %v3005 = vunpack.c.h.b16 %v620
        %v3006 = vunpack.c.l.b16 %v621
        %v3007 = vunpack.c.h.b16 %v621
        %v3008 = vunpack.c.l.b16 %v622
        %v3009 = vunpack.c.h.b16 %v622
        %v3010 = vunpack.c.l.b16 %v623
        %v3011 = vunpack.c.h.b16 %v623
        %v3012 = vunpack.c.l.b16 %v624
        %v3013 = vunpack.c.h.b16 %v624
        %v3014 = vunpack.c.l.b16 %v625
        %v3015 = vunpack.c.h.b16 %v625
        %v3016 = vunpack.c.l.b16 %v626
        %v3017 = vunpack.c.h.b16 %v626
        %v3018 = vunpack.c.l.b16 %v627
        %v3019 = vunpack.c.h.b16 %v627
        %v3020 = vunpack.c.l.b16 %v628
        %v3021 = vunpack.c.h.b16 %v628
        %v3022 = vunpack.c.l.b16 %v629
        %v3023 = vunpack.c.h.b16 %v629
        %v3024 = vunpack.c.l.b16 %v630
        %v3025 = vunpack.c.h.b16 %v630
        %v3026 = vunpack.c.l.b16 %v631
        %v3027 = vunpack.c.h.b16 %v631
        %v3028 = vunpack.c.l.b16 %v632
        %v3029 = vunpack.c.h.b16 %v632
        %v3030 = vunpack.c.l.b16 %v633
        %v3031 = vunpack.c.h.b16 %v633
        %v3032 = vunpack.c.l.b16 %v634
        %v3033 = vunpack.c.h.b16 %v634
        %v3034 = vunpack.c.l.b16 %v635
        %v3035 = vunpack.c.h.b16 %v635
        %v3036 = vunpack.c.l.b16 %v636
        %v3037 = vunpack.c.h.b16 %v636
        %v3038 = vunpack.c.l.b16 %v637
        %v3039 = vunpack.c.h.b16 %v637
        %v3040 = vunpack.c.l.b16 %v638
        %v3041 = vunpack.c.h.b16 %v638
        %v3042 = vunpack.c.l.b16 %v639
        %v3043 = vunpack.c.h.b16 %v639
        %v3044 = vunpack.c.l.b16 %v640
        %v3045 = vunpack.c.h.b16 %v640
        %v3046 = vunpack.c.l.b16 %v641
        %v3047 = vunpack.c.h.b16 %v641
        %v3048 = vunpack.c.l.b16 %v642
        %v3049 = vunpack.c.h.b16 %v642
        %v3050 = vunpack.c.l.b16 %v643
        %v3051 = vunpack.c.h.b16 %v643
        %v3052 = vunpack.c.l.b16 %v644
        %v3053 = vunpack.c.h.b16 %v644
        %v3054 = vunpack.c.l.b16 %v645
        %v3055 = vunpack.c.h.b16 %v645
        %v3056 = vunpack.c.l.b16 %v646
        %v3057 = vunpack.c.h.b16 %v646
        %v3058 = vunpack.c.l.b16 %v647
        %v3059 = vunpack.c.h.b16 %v647
        %v3060 = vunpack.c.l.b16 %v648
        %v3061 = vunpack.c.h.b16 %v648
        %v3062 = vunpack.c.l.b16 %v649
        %v3063 = vunpack.c.h.b16 %v649
        %v3064 = vunpack.c.l.b16 %v650
        %v3065 = vunpack.c.h.b16 %v650
        %v3066 = vunpack.c.l.b16 %v651
        %v3067 = vunpack.c.h.b16 %v651
        %v3068 = vunpack.c.l.b16 %v652
        %v3069 = vunpack.c.h.b16 %v652
        %v3070 = vunpack.c.l.b16 %v653
        %v3071 = vunpack.c.h.b16 %v653
        %v3072 = vunpack.c.l.b16 %v654
        %v3073 = vunpack.c.h.b16 %v654
        %v3074 = vunpack.c.l.b16 %v655
        %v3075 = vunpack.c.h.b16 %v655
        %v3076 = vunpack.c.l.b16 %v656
        %v3077 = vunpack.c.h.b16 %v656
        %v3078 = vunpack.c.l.b16 %v657
        %v3079 = vunpack.c.h.b16 %v657
        %v3080 = vunpack.c.l.b16 %v658
        %v3081 = vunpack.c.h.b16 %v658
        %v3082 = vunpack.c.l.b16 %v659
        %v3083 = vunpack.c.h.b16 %v659
        %v3084 = vunpack.c.l.b16 %v660
        %v3085 = vunpack.c.h.b16 %v660
        %v3086 = vunpack.c.l.b16 %v661
        %v3087 = vunpack.c.h.b16 %v661
        %v3088 = vunpack.c.l.b16 %v662
        %v3089 = vunpack.c.h.b16 %v662
        %v3090 = vunpack.c.l.b16 %v663
        %v3091 = vunpack.c.h.b16 %v663
        %v3092 = vunpack.c.l.b16 %v664
        %v3093 = vunpack.c.h.b16 %v664
        %v3094 = vunpack.c.l.b16 %v665
        %v3095 = vunpack.c.h.b16 %v665
        %v3096 = vunpack.c.l.b16 %v666
        %v3097 = vunpack.c.h.b16 %v666
        %v3098 = vunpack.c.l.b16 %v667
        %v3099 = vunpack.c.h.b16 %v667
        %v3100 = vunpack.c.l.b16 %v668
        %v3101 = vunpack.c.h.b16 %v668
        %v3102 = vunpack.c.l.b16 %v669
        %v3103 = vunpack.c.h.b16 %v669
        %v3104 = vunpack.c.l.b16 %v670
        %v3105 = vunpack.c.h.b16 %v670
        %v3106 = vunpack.c.l.b16 %v671
        %v3107 = vunpack.c.h.b16 %v671
        %v3108 = vunpack.c.l.b16 %v672
        %v3109 = vunpack.c.h.b16 %v672
        %v3110 = vunpack.c.l.b16 %v673
        %v3111 = vunpack.c.h.b16 %v673
        %v3112 = vunpack.c.l.b16 %v674
        %v3113 = vunpack.c.h.b16 %v674
        %v3114 = vunpack.c.l.b16 %v675
        %v3115 = vunpack.c.h.b16 %v675
        %v3116 = vunpack.c.l.b16 %v676
        %v3117 = vunpack.c.h.b16 %v676
        %v3118 = vunpack.c.l.b16 %v677
        %v3119 = vunpack.c.h.b16 %v677
        %v3120 = vunpack.c.l.b16 %v678
        %v3121 = vunpack.c.h.b16 %v678
        %v3122 = vunpack.c.l.b16 %v679
        %v3123 = vunpack.c.h.b16 %v679
        %v3124 = vunpack.c.l.b16 %v680
        %v3125 = vunpack.c.h.b16 %v680
        %v3126 = vunpack.c.l.b16 %v681
        %v3127 = vunpack.c.h.b16 %v681
        %v3128 = vunpack.c.l.b16 %v682
        %v3129 = vunpack.c.h.b16 %v682
        %v3130 = vunpack.c.l.b16 %v683
        %v3131 = vunpack.c.h.b16 %v683
        %v3132 = vunpack.c.l.b16 %v684
        %v3133 = vunpack.c.h.b16 %v684
        %v3134 = vunpack.c.l.b16 %v685
        %v3135 = vunpack.c.h.b16 %v685
        %v3136 = vunpack.c.l.b16 %v686
        %v3137 = vunpack.c.h.b16 %v686
        %v3138 = vunpack.c.l.b16 %v687
        %v3139 = vunpack.c.h.b16 %v687
        %v3140 = vunpack.c.l.b16 %v688
        %v3141 = vunpack.c.h.b16 %v688
        %v3142 = vunpack.c.l.b16 %v689
        %v3143 = vunpack.c.h.b16 %v689
        %v3144 = vunpack.c.l.b16 %v690
        %v3145 = vunpack.c.h.b16 %v690
        %v3146 = vunpack.c.l.b16 %v691
        %v3147 = vunpack.c.h.b16 %v691
        %v3148 = vunpack.c.l.b16 %v692
        %v3149 = vunpack.c.h.b16 %v692
        %v3150 = vunpack.c.l.b16 %v693
        %v3151 = vunpack.c.h.b16 %v693
        %v3152 = vunpack.c.l.b16 %v694
        %v3153 = vunpack.c.h.b16 %v694
        %v3154 = vunpack.c.l.b16 %v695
        %v3155 = vunpack.c.h.b16 %v695
        %v3156 = vunpack.c.l.b16 %v696
        %v3157 = vunpack.c.h.b16 %v696
        %v3158 = vunpack.c.l.b16 %v697
        %v3159 = vunpack.c.h.b16 %v697
        %v3160 = vunpack.c.l.b16 %v698
        %v3161 = vunpack.c.h.b16 %v698
        %v3162 = vunpack.c.l.b16 %v699
        %v3163 = vunpack.c.h.b16 %v699
        %v3164 = vunpack.c.l.b16 %v700
        %v3165 = vunpack.c.h.b16 %v700
        %v3166 = vunpack.c.l.b16 %v701
        %v3167 = vunpack.c.h.b16 %v701
        %v3168 = vunpack.c.l.b16 %v702
        %v3169 = vunpack.c.h.b16 %v702
        %v3170 = vunpack.c.l.b16 %v703
        %v3171 = vunpack.c.h.b16 %v703
        %v3172 = vunpack.c.l.b16 %v704
        %v3173 = vunpack.c.h.b16 %v704
        %v3174 = vunpack.c.l.b16 %v705
        %v3175 = vunpack.c.h.b16 %v705
        %v3176 = vunpack.c.l.b16 %v706
        %v3177 = vunpack.c.h.b16 %v706
        %v3178 = vunpack.c.l.b16 %v707
        %v3179 = vunpack.c.h.b16 %v707
        %v3180 = vunpack.c.l.b16 %v708
        %v3181 = vunpack.c.h.b16 %v708
        %v3182 = vunpack.c.l.b16 %v709
        %v3183 = vunpack.c.h.b16 %v709
        %v3184 = vunpack.c.l.b16 %v710
        %v3185 = vunpack.c.h.b16 %v710
        %v3186 = vunpack.c.l.b16 %v711
        %v3187 = vunpack.c.h.b16 %v711
        %v3188 = vunpack.c.l.b16 %v712
        %v3189 = vunpack.c.h.b16 %v712
        %v3190 = vunpack.c.l.b16 %v713
        %v3191 = vunpack.c.h.b16 %v713
        %v3192 = vunpack.c.l.b16 %v714
        %v3193 = vunpack.c.h.b16 %v714
        %v3194 = vunpack.c.l.b16 %v715
        %v3195 = vunpack.c.h.b16 %v715
        %v3196 = vunpack.c.l.b16 %v716
        %v3197 = vunpack.c.h.b16 %v716
        %v3198 = vunpack.c.l.b16 %v717
        %v3199 = vunpack.c.h.b16 %v717
        %v3200 = vunpack.c.l.b16 %v718
        %v3201 = vunpack.c.h.b16 %v718
        %v3202 = vunpack.c.l.b16 %v719
        %v3203 = vunpack.c.h.b16 %v719
        %v3204 = vunpack.c.l.b16 %v720
        %v3205 = vunpack.c.h.b16 %v720
        %v3206 = vunpack.c.l.b16 %v721
        %v3207 = vunpack.c.h.b16 %v721
        %v3208 = vunpack.c.l.b16 %v722
        %v3209 = vunpack.c.h.b16 %v722
        %v3210 = vunpack.c.l.b16 %v723
        %v3211 = vunpack.c.h.b16 %v723
        %v3212 = vunpack.c.l.b16 %v724
        %v3213 = vunpack.c.h.b16 %v724
        %v3214 = vunpack.c.l.b16 %v725
        %v3215 = vunpack.c.h.b16 %v725
        %v3216 = vunpack.c.l.b16 %v726
        %v3217 = vunpack.c.h.b16 %v726
        %v3218 = vunpack.c.l.b16 %v727
        %v3219 = vunpack.c.h.b16 %v727
        %v3220 = vunpack.c.l.b16 %v728
        %v3221 = vunpack.c.h.b16 %v728
        %v3222 = vunpack.c.l.b16 %v729
        %v3223 = vunpack.c.h.b16 %v729
        %v3224 = vunpack.c.l.b16 %v730
        %v3225 = vunpack.c.h.b16 %v730
        %v3226 = vunpack.c.l.b16 %v731
        %v3227 = vunpack.c.h.b16 %v731
        %v3228 = vunpack.c.l.b16 %v732
        %v3229 = vunpack.c.h.b16 %v732
        %v3230 = vunpack.c.l.b16 %v733
        %v3231 = vunpack.c.h.b16 %v733
        %v3232 = vunpack.c.l.b16 %v734
        %v3233 = vunpack.c.h.b16 %v734
        %v3234 = vunpack.c.l.b16 %v735
        %v3235 = vunpack.c.h.b16 %v735
        %v3236 = vunpack.c.l.b16 %v736
        %v3237 = vunpack.c.h.b16 %v736
        %v3238 = vunpack.c.l.b16 %v737
        %v3239 = vunpack.c.h.b16 %v737
        %v3240 = vunpack.c.l.b16 %v738
        %v3241 = vunpack.c.h.b16 %v738
        %v3242 = vunpack.c.l.b16 %v739
        %v3243 = vunpack.c.h.b16 %v739
        %v3244 = vunpack.c.l.b16 %v740
        %v3245 = vunpack.c.h.b16 %v740
        %v3246 = vunpack.c.l.b16 %v741
        %v3247 = vunpack.c.h.b16 %v741
        %v3248 = vunpack.c.l.b16 %v742
        %v3249 = vunpack.c.h.b16 %v742
        %v3250 = vunpack.c.l.b16 %v743
        %v3251 = vunpack.c.h.b16 %v743
        %v3252 = vunpack.c.l.b16 %v744
        %v3253 = vunpack.c.h.b16 %v744
        %v3254 = vunpack.c.l.b16 %v745
        %v3255 = vunpack.c.h.b16 %v745
        %v3256 = vunpack.c.l.b16 %v746
        %v3257 = vunpack.c.h.b16 %v746
        %v3258 = vunpack.c.l.b16 %v747
        %v3259 = vunpack.c.h.b16 %v747
        %v3260 = vunpack.c.l.b16 %v748
        %v3261 = vunpack.c.h.b16 %v748
        %v3262 = vunpack.c.l.b16 %v749
        %v3263 = vunpack.c.h.b16 %v749
        %v3264 = vunpack.c.l.b16 %v750
        %v3265 = vunpack.c.h.b16 %v750
        %v3266 = vunpack.c.l.b16 %v751
        %v3267 = vunpack.c.h.b16 %v751
        %v3268 = vunpack.c.l.b16 %v752
        %v3269 = vunpack.c.h.b16 %v752
        %v3270 = vunpack.c.l.b16 %v753
        %v3271 = vunpack.c.h.b16 %v753
        %v3272 = vunpack.c.l.b16 %v754
        %v3273 = vunpack.c.h.b16 %v754
        %v3274 = vunpack.c.l.b16 %v755
        %v3275 = vunpack.c.h.b16 %v755
        %v3276 = vunpack.c.l.b16 %v756
        %v3277 = vunpack.c.h.b16 %v756
        %v3278 = vunpack.c.l.b16 %v757
        %v3279 = vunpack.c.h.b16 %v757
        %v3280 = vunpack.c.l.b16 %v758
        %v3281 = vunpack.c.h.b16 %v758
        %v3282 = vunpack.c.l.b16 %v759
        %v3283 = vunpack.c.h.b16 %v759
        %v3284 = vunpack.c.l.b16 %v760
        %v3285 = vunpack.c.h.b16 %v760
        %v3286 = vunpack.c.l.b16 %v761
        %v3287 = vunpack.c.h.b16 %v761
        %v3288 = vunpack.c.l.b16 %v762
        %v3289 = vunpack.c.h.b16 %v762
        %v3290 = vunpack.c.l.b16 %v763
        %v3291 = vunpack.c.h.b16 %v763
        %v3292 = vunpack.c.l.b16 %v764
        %v3293 = vunpack.c.h.b16 %v764
        %v3294 = vunpack.c.l.b16 %v765
        %v3295 = vunpack.c.h.b16 %v765
        %v3296 = vunpack.c.l.b16 %v766
        %v3297 = vunpack.c.h.b16 %v766
        %v3298 = vunpack.c.l.b16 %v767
        %v3299 = vunpack.c.h.b16 %v767
        %v3300 = vunpack.c.l.b16 %v768
        %v3301 = vunpack.c.h.b16 %v768
        %v3302 = vunpack.c.l.b16 %v769
        %v3303 = vunpack.c.h.b16 %v769
        %v3304 = vunpack.c.l.b16 %v770
        %v3305 = vunpack.c.h.b16 %v770
        %v3306 = vunpack.c.l.b16 %v771
        %v3307 = vunpack.c.h.b16 %v771
        %v3308 = vunpack.c.l.b16 %v772
        %v3309 = vunpack.c.h.b16 %v772
        %v3310 = vunpack.c.l.b16 %v773
        %v3311 = vunpack.c.h.b16 %v773
        %v3312 = vunpack.c.l.b16 %v774
        %v3313 = vunpack.c.h.b16 %v774
        %v3314 = vunpack.c.l.b16 %v775
        %v3315 = vunpack.c.h.b16 %v775
        %v3316 = vunpack.c.l.b16 %v776
        %v3317 = vunpack.c.h.b16 %v776
        %v3318 = vunpack.c.l.b16 %v777
        %v3319 = vunpack.c.h.b16 %v777
        %v3320 = vunpack.c.l.b16 %v778
        %v3321 = vunpack.c.h.b16 %v778
        %v3322 = vunpack.c.l.b16 %v779
        %v3323 = vunpack.c.h.b16 %v779
        %v3324 = vunpack.c.l.b16 %v780
        %v3325 = vunpack.c.h.b16 %v780
        %v3326 = vunpack.c.l.b16 %v781
        %v3327 = vunpack.c.h.b16 %v781
        %v3328 = vunpack.c.l.b16 %v782
        %v3329 = vunpack.c.h.b16 %v782
        %v3330 = vunpack.c.l.b16 %v783
        %v3331 = vunpack.c.h.b16 %v783
        %v3332 = vunpack.c.l.b16 %v784
        %v3333 = vunpack.c.h.b16 %v784
        %v3334 = vunpack.c.l.b16 %v785
        %v3335 = vunpack.c.h.b16 %v785
        %v3336 = vunpack.c.l.b16 %v786
        %v3337 = vunpack.c.h.b16 %v786
        %v3338 = vunpack.c.l.b16 %v787
        %v3339 = vunpack.c.h.b16 %v787
        %v3340 = vunpack.c.l.b16 %v788
        %v3341 = vunpack.c.h.b16 %v788
        %v3342 = vunpack.c.l.b16 %v789
        %v3343 = vunpack.c.h.b16 %v789
        %v3344 = vunpack.c.l.b16 %v790
        %v3345 = vunpack.c.h.b16 %v790
        %v3346 = vunpack.c.l.b16 %v791
        %v3347 = vunpack.c.h.b16 %v791
        %v3348 = vunpack.c.l.b16 %v792
        %v3349 = vunpack.c.h.b16 %v792
        %v3350 = vunpack.c.l.b16 %v793
        %v3351 = vunpack.c.h.b16 %v793
        %v3352 = vunpack.c.l.b16 %v794
        %v3353 = vunpack.c.h.b16 %v794
        %v3354 = vunpack.c.l.b16 %v795
        %v3355 = vunpack.c.h.b16 %v795
        %v3356 = vunpack.c.l.b16 %v796
        %v3357 = vunpack.c.h.b16 %v796
        %v3358 = vunpack.c.l.b16 %v797
        %v3359 = vunpack.c.h.b16 %v797
        %v3360 = vunpack.c.l.b16 %v798
        %v3361 = vunpack.c.h.b16 %v798
        %v3362 = vunpack.c.l.b16 %v799
        %v3363 = vunpack.c.h.b16 %v799
        %v3364 = vunpack.c.l.b16 %v800
        %v3365 = vunpack.c.h.b16 %v800
        %v3366 = vunpack.c.l.b16 %v801
        %v3367 = vunpack.c.h.b16 %v801
        %v3368 = vunpack.c.l.b16 %v802
        %v3369 = vunpack.c.h.b16 %v802
        %v3370 = vunpack.c.l.b16 %v803
        %v3371 = vunpack.c.h.b16 %v803
        %v3372 = vunpack.c.l.b16 %v804
        %v3373 = vunpack.c.h.b16 %v804
        %v3374 = vunpack.c.l.b16 %v805
        %v3375 = vunpack.c.h.b16 %v805
        %v3376 = vunpack.c.l.b16 %v806
        %v3377 = vunpack.c.h.b16 %v806
        %v3378 = vunpack.c.l.b16 %v807
        %v3379 = vunpack.c.h.b16 %v807
        %v3380 = vunpack.c.l.b16 %v808
        %v3381 = vunpack.c.h.b16 %v808
        %v3382 = vunpack.c.l.b16 %v809
        %v3383 = vunpack.c.h.b16 %v809
        %v3384 = vunpack.c.l.b16 %v810
        %v3385 = vunpack.c.h.b16 %v810
        %v3386 = vunpack.c.l.b16 %v811
        %v3387 = vunpack.c.h.b16 %v811
        %v3388 = vunpack.c.l.b16 %v812
        %v3389 = vunpack.c.h.b16 %v812
        %v3390 = vunpack.c.l.b16 %v813
        %v3391 = vunpack.c.h.b16 %v813
        %v3392 = vunpack.c.l.b16 %v814
        %v3393 = vunpack.c.h.b16 %v814
        %v3394 = vunpack.c.l.b16 %v815
        %v3395 = vunpack.c.h.b16 %v815
        %v3396 = vunpack.c.l.b16 %v816
        %v3397 = vunpack.c.h.b16 %v816
        %v3398 = vunpack.c.l.b16 %v817
        %v3399 = vunpack.c.h.b16 %v817
        %v3400 = vunpack.c.l.b16 %v818
        %v3401 = vunpack.c.h.b16 %v818
        %v3402 = vunpack.c.l.b16 %v819
        %v3403 = vunpack.c.h.b16 %v819
        %v3404 = vunpack.c.l.b16 %v820
        %v3405 = vunpack.c.h.b16 %v820
        %v3406 = vunpack.c.l.b16 %v821
        %v3407 = vunpack.c.h.b16 %v821
        %v3408 = vunpack.c.l.b16 %v822
        %v3409 = vunpack.c.h.b16 %v822
        %v3410 = vunpack.c.l.b16 %v823
        %v3411 = vunpack.c.h.b16 %v823
        %v3412 = vunpack.c.l.b16 %v824
        %v3413 = vunpack.c.h.b16 %v824
        %v3414 = vunpack.c.l.b16 %v825
        %v3415 = vunpack.c.h.b16 %v825
        %v3416 = vunpack.c.l.b16 %v826
        %v3417 = vunpack.c.h.b16 %v826
        %v3418 = vunpack.c.l.b16 %v827
        %v3419 = vunpack.c.h.b16 %v827
        %v3420 = vunpack.c.l.b16 %v828
        %v3421 = vunpack.c.h.b16 %v828
        %v3422 = vunpack.c.l.b16 %v829
        %v3423 = vunpack.c.h.b16 %v829
        %v3424 = vunpack.c.l.b16 %v830
        %v3425 = vunpack.c.h.b16 %v830
        %v3426 = vunpack.c.l.b16 %v831
        %v3427 = vunpack.c.h.b16 %v831
        %v3428 = vunpack.c.l.b16 %v832
        %v3429 = vunpack.c.h.b16 %v832
        %v3430 = vunpack.c.l.b16 %v833
        %v3431 = vunpack.c.h.b16 %v833
        %v3432 = vunpack.c.l.b16 %v834
        %v3433 = vunpack.c.h.b16 %v834
        %v3434 = vunpack.c.l.b16 %v835
        %v3435 = vunpack.c.h.b16 %v835
        %v3436 = vunpack.c.l.b16 %v836
        %v3437 = vunpack.c.h.b16 %v836
        %v3438 = vunpack.c.l.b16 %v837
        %v3439 = vunpack.c.h.b16 %v837
        %v3440 = vunpack.c.l.b16 %v838
        %v3441 = vunpack.c.h.b16 %v838
        %v3442 = vunpack.c.l.b16 %v839
        %v3443 = vunpack.c.h.b16 %v839
        %v3444 = vunpack.c.l.b16 %v840
        %v3445 = vunpack.c.h.b16 %v840
        %v3446 = vunpack.c.l.b16 %v841
        %v3447 = vunpack.c.h.b16 %v841
        %v3448 = vunpack.c.l.b16 %v842
        %v3449 = vunpack.c.h.b16 %v842
        %v3450 = vunpack.c.l.b16 %v843
        %v3451 = vunpack.c.h.b16 %v843
        %v3452 = vunpack.c.l.b16 %v844
        %v3453 = vunpack.c.h.b16 %v844
        %v3454 = vunpack.c.l.b16 %v845
        %v3455 = vunpack.c.h.b16 %v845
        %v3456 = vunpack.c.l.b16 %v846
        %v3457 = vunpack.c.h.b16 %v846
        %v3458 = vunpack.c.l.b16 %v847
        %v3459 = vunpack.c.h.b16 %v847
        %v3460 = vunpack.c.l.b16 %v848
        %v3461 = vunpack.c.h.b16 %v848
        %v3462 = vunpack.c.l.b16 %v849
        %v3463 = vunpack.c.h.b16 %v849
        %v3464 = vunpack.c.l.b16 %v850
        %v3465 = vunpack.c.h.b16 %v850
        %v3466 = vunpack.c.l.b16 %v851
        %v3467 = vunpack.c.h.b16 %v851
        %v3468 = vunpack.c.l.b16 %v852
        %v3469 = vunpack.c.h.b16 %v852
        %v3470 = vunpack.c.l.b16 %v853
        %v3471 = vunpack.c.h.b16 %v853
        %v3472 = vunpack.c.l.b16 %v854
        %v3473 = vunpack.c.h.b16 %v854
        %v3474 = vunpack.c.l.b16 %v855
        %v3475 = vunpack.c.h.b16 %v855
        %v3476 = vunpack.c.l.b16 %v856
        %v3477 = vunpack.c.h.b16 %v856
        %v3478 = vunpack.c.l.b16 %v857
        %v3479 = vunpack.c.h.b16 %v857
        %v3480 = vunpack.c.l.b16 %v858
        %v3481 = vunpack.c.h.b16 %v858
        %v3482 = vunpack.c.l.b16 %v859
        %v3483 = vunpack.c.h.b16 %v859
        %v3484 = vunpack.c.l.b16 %v860
        %v3485 = vunpack.c.h.b16 %v860
        %v3486 = vunpack.c.l.b16 %v861
        %v3487 = vunpack.c.h.b16 %v861
        %v3488 = vunpack.c.l.b16 %v862
        %v3489 = vunpack.c.h.b16 %v862
        %v3490 = vunpack.c.l.b16 %v863
        %v3491 = vunpack.c.h.b16 %v863
        %v3492 = vunpack.c.l.b16 %v864
        %v3493 = vunpack.c.h.b16 %v864
        %v3494 = vunpack.c.l.b16 %v865
        %v3495 = vunpack.c.h.b16 %v865
        %v3496 = vunpack.c.l.b16 %v866
        %v3497 = vunpack.c.h.b16 %v866
        %v3498 = vunpack.c.l.b16 %v867
        %v3499 = vunpack.c.h.b16 %v867
        %v3500 = vunpack.c.l.b16 %v868
        %v3501 = vunpack.c.h.b16 %v868
        %v3502 = vunpack.c.l.b16 %v869
        %v3503 = vunpack.c.h.b16 %v869
        %v3504 = vunpack.c.l.b16 %v870
        %v3505 = vunpack.c.h.b16 %v870
        %v3506 = vunpack.c.l.b16 %v871
        %v3507 = vunpack.c.h.b16 %v871
        %v3508 = vunpack.c.l.b16 %v872
        %v3509 = vunpack.c.h.b16 %v872
        %v3510 = vunpack.c.l.b16 %v873
        %v3511 = vunpack.c.h.b16 %v873
        %v3512 = vunpack.c.l.b16 %v874
        %v3513 = vunpack.c.h.b16 %v874
        %v3514 = vunpack.c.l.b16 %v875
        %v3515 = vunpack.c.h.b16 %v875
        %v3516 = vunpack.c.l.b16 %v876
        %v3517 = vunpack.c.h.b16 %v876
        %v3518 = vunpack.c.l.b16 %v877
        %v3519 = vunpack.c.h.b16 %v877
        %v3520 = vunpack.c.l.b16 %v878
        %v3521 = vunpack.c.h.b16 %v878
        %v3522 = vunpack.c.l.b16 %v879
        %v3523 = vunpack.c.h.b16 %v879
        %v3524 = vunpack.c.l.b16 %v880
        %v3525 = vunpack.c.h.b16 %v880
        %v3526 = vunpack.c.l.b16 %v881
        %v3527 = vunpack.c.h.b16 %v881
        %v3528 = vunpack.c.l.b16 %v882
        %v3529 = vunpack.c.h.b16 %v882
        %v3530 = vunpack.c.l.b16 %v883
        %v3531 = vunpack.c.h.b16 %v883
        %v3532 = vunpack.c.l.b16 %v884
        %v3533 = vunpack.c.h.b16 %v884
        %v3534 = vunpack.c.l.b16 %v885
        %v3535 = vunpack.c.h.b16 %v885
        %v3536 = vunpack.c.l.b16 %v886
        %v3537 = vunpack.c.h.b16 %v886
        %v3538 = vunpack.c.l.b16 %v887
        %v3539 = vunpack.c.h.b16 %v887
        %v3540 = vunpack.c.l.b16 %v888
        %v3541 = vunpack.c.h.b16 %v888
        %v3542 = vunpack.c.l.b16 %v889
        %v3543 = vunpack.c.h.b16 %v889
        %v3544 = vunpack.c.l.b16 %v890
        %v3545 = vunpack.c.h.b16 %v890
        %v3546 = vunpack.c.l.b16 %v891
        %v3547 = vunpack.c.h.b16 %v891
        %v3548 = vunpack.c.l.b16 %v892
        %v3549 = vunpack.c.h.b16 %v892
        %v3550 = vunpack.c.l.b16 %v893
        %v3551 = vunpack.c.h.b16 %v893
        %v3552 = vunpack.c.l.b16 %v894
        %v3553 = vunpack.c.h.b16 %v894
        %v3554 = vunpack.c.l.b16 %v895
        %v3555 = vunpack.c.h.b16 %v895
        %v3556 = vunpack.c.l.b16 %v896
        %v3557 = vunpack.c.h.b16 %v896
        %v3558 = vunpack.c.l.b16 %v897
        %v3559 = vunpack.c.h.b16 %v897
        %v3560 = vunpack.c.l.b16 %v898
        %v3561 = vunpack.c.h.b16 %v898
        %v3562 = vunpack.c.l.b16 %v899
        %v3563 = vunpack.c.h.b16 %v899
        %v3564 = vunpack.c.l.b16 %v900
        %v3565 = vunpack.c.h.b16 %v900
        %v3566 = vunpack.c.l.b16 %v901
        %v3567 = vunpack.c.h.b16 %v901
        %v3568 = vunpack.c.l.b16 %v902
        %v3569 = vunpack.c.h.b16 %v902
        %v3570 = vunpack.c.l.b16 %v903
        %v3571 = vunpack.c.h.b16 %v903
        %v3572 = vunpack.c.l.b16 %v904
        %v3573 = vunpack.c.h.b16 %v904
        %v3574 = vunpack.c.l.b16 %v905
        %v3575 = vunpack.c.h.b16 %v905
        %v3576 = vunpack.c.l.b16 %v906
        %v3577 = vunpack.c.h.b16 %v906
        %v3578 = vunpack.c.l.b16 %v907
        %v3579 = vunpack.c.h.b16 %v907
        %v3580 = vunpack.c.l.b16 %v908
        %v3581 = vunpack.c.h.b16 %v908
        %v3582 = vunpack.c.l.b16 %v909
        %v3583 = vunpack.c.h.b16 %v909
        %v3584 = vunpack.c.l.b16 %v910
        %v3585 = vunpack.c.h.b16 %v910
        %v3586 = vunpack.c.l.b16 %v911
        %v3587 = vunpack.c.h.b16 %v911
        %v3588 = vunpack.c.l.b16 %v912
        %v3589 = vunpack.c.h.b16 %v912
        %v3590 = vunpack.c.l.b16 %v913
        %v3591 = vunpack.c.h.b16 %v913
        %v3592 = vunpack.c.l.b16 %v914
        %v3593 = vunpack.c.h.b16 %v914
        %v3594 = vunpack.c.l.b16 %v915
        %v3595 = vunpack.c.h.b16 %v915
        %v3596 = vunpack.c.l.b16 %v916
        %v3597 = vunpack.c.h.b16 %v916
        %v3598 = vunpack.c.l.b16 %v917
        %v3599 = vunpack.c.h.b16 %v917
        %v3600 = vunpack.c.l.b16 %v918
        %v3601 = vunpack.c.h.b16 %v918
        %v3602 = vunpack.c.l.b16 %v919
        %v3603 = vunpack.c.h.b16 %v919
        %v3604 = vunpack.c.l.b16 %v920
        %v3605 = vunpack.c.h.b16 %v920
        %v3606 = vunpack.c.l.b16 %v921
        %v3607 = vunpack.c.h.b16 %v921
        %v3608 = vunpack.c.l.b16 %v922
        %v3609 = vunpack.c.h.b16 %v922
        %v3610 = vunpack.c.l.b16 %v923
        %v3611 = vunpack.c.h.b16 %v923
        %v3612 = vunpack.c.l.b16 %v924
        %v3613 = vunpack.c.h.b16 %v924
        %v3614 = vunpack.c.l.b16 %v925
        %v3615 = vunpack.c.h.b16 %v925
        %v3616 = vunpack.c.l.b16 %v926
        %v3617 = vunpack.c.h.b16 %v926
        %v3618 = vunpack.c.l.b16 %v927
        %v3619 = vunpack.c.h.b16 %v927
        %v3620 = vunpack.c.l.b16 %v928
        %v3621 = vunpack.c.h.b16 %v928
        %v3622 = vunpack.c.l.b16 %v929
        %v3623 = vunpack.c.h.b16 %v929
        %v3624 = vunpack.c.l.b16 %v930
        %v3625 = vunpack.c.h.b16 %v930
        %v3626 = vunpack.c.l.b16 %v931
        %v3627 = vunpack.c.h.b16 %v931
        %v3628 = vunpack.c.l.b16 %v932
        %v3629 = vunpack.c.h.b16 %v932
        %v3630 = vunpack.c.l.b16 %v933
        %v3631 = vunpack.c.h.b16 %v933
        %v3632 = vunpack.c.l.b16 %v934
        %v3633 = vunpack.c.h.b16 %v934
        %v3634 = vunpack.c.l.b16 %v935
        %v3635 = vunpack.c.h.b16 %v935
        %v3636 = vunpack.c.l.b16 %v936
        %v3637 = vunpack.c.h.b16 %v936
        %v3638 = vunpack.c.l.b16 %v937
        %v3639 = vunpack.c.h.b16 %v937
        %v3640 = vunpack.c.l.b16 %v938
        %v3641 = vunpack.c.h.b16 %v938
        %v3642 = vunpack.c.l.b16 %v939
        %v3643 = vunpack.c.h.b16 %v939
        %v3644 = vunpack.c.l.b16 %v940
        %v3645 = vunpack.c.h.b16 %v940
        %v3646 = vunpack.c.l.b16 %v941
        %v3647 = vunpack.c.h.b16 %v941
        %v3648 = vunpack.c.l.b16 %v942
        %v3649 = vunpack.c.h.b16 %v942
        %v3650 = vunpack.c.l.b16 %v943
        %v3651 = vunpack.c.h.b16 %v943
        %v3652 = vunpack.c.l.b16 %v944
        %v3653 = vunpack.c.h.b16 %v944
        %v3654 = vunpack.c.l.b16 %v945
        %v3655 = vunpack.c.h.b16 %v945
        %v3656 = vunpack.c.l.b16 %v946
        %v3657 = vunpack.c.h.b16 %v946
        %v3658 = vunpack.c.l.b16 %v947
        %v3659 = vunpack.c.h.b16 %v947
        %v3660 = vunpack.c.l.b16 %v948
        %v3661 = vunpack.c.h.b16 %v948
        %v3662 = vunpack.c.l.b16 %v949
        %v3663 = vunpack.c.h.b16 %v949
        %v3664 = vunpack.c.l.b16 %v950
        %v3665 = vunpack.c.h.b16 %v950
        %v3666 = vunpack.c.l.b16 %v951
        %v3667 = vunpack.c.h.b16 %v951
        %v3668 = vunpack.c.l.b16 %v952
        %v3669 = vunpack.c.h.b16 %v952
        %v3670 = vunpack.c.l.b16 %v953
        %v3671 = vunpack.c.h.b16 %v953
        %v3672 = vunpack.c.l.b16 %v954
        %v3673 = vunpack.c.h.b16 %v954
        %v3674 = vunpack.c.l.b16 %v955
        %v3675 = vunpack.c.h.b16 %v955
        %v3676 = vunpack.c.l.b16 %v956
        %v3677 = vunpack.c.h.b16 %v956
        %v3678 = vunpack.c.l.b16 %v957
        %v3679 = vunpack.c.h.b16 %v957
        %v3680 = vunpack.c.l.b16 %v958
        %v3681 = vunpack.c.h.b16 %v958
        %v3682 = vunpack.c.l.b16 %v959
        %v3683 = vunpack.c.h.b16 %v959
        %v3684 = vunpack.c.l.b16 %v960
        %v3685 = vunpack.c.h.b16 %v960
        %v3686 = vunpack.c.l.b16 %v961
        %v3687 = vunpack.c.h.b16 %v961
        %v3688 = vunpack.c.l.b16 %v962
        %v3689 = vunpack.c.h.b16 %v962
        %v3690 = vunpack.c.l.b16 %v963
        %v3691 = vunpack.c.h.b16 %v963
        %v3692 = vunpack.c.l.b16 %v964
        %v3693 = vunpack.c.h.b16 %v964
        %v3694 = vunpack.c.l.b16 %v965
        %v3695 = vunpack.c.h.b16 %v965
        %v3696 = vunpack.c.l.b16 %v966
        %v3697 = vunpack.c.h.b16 %v966
        %v3698 = vunpack.c.l.b16 %v967
        %v3699 = vunpack.c.h.b16 %v967
        %v3700 = vunpack.c.l.b16 %v968
        %v3701 = vunpack.c.h.b16 %v968
        %v3702 = vunpack.c.l.b16 %v969
        %v3703 = vunpack.c.h.b16 %v969
        %v3704 = vunpack.c.l.b16 %v970
        %v3705 = vunpack.c.h.b16 %v970
        %v3706 = vunpack.c.l.b16 %v971
        %v3707 = vunpack.c.h.b16 %v971
        %v3708 = vunpack.c.l.b16 %v972
        %v3709 = vunpack.c.h.b16 %v972
        %v3710 = vunpack.c.l.b16 %v973
        %v3711 = vunpack.c.h.b16 %v973
        %v3712 = vunpack.c.l.b16 %v974
        %v3713 = vunpack.c.h.b16 %v974
        %v3714 = vunpack.c.l.b16 %v975
        %v3715 = vunpack.c.h.b16 %v975
        %v3716 = vunpack.c.l.b16 %v976
        %v3717 = vunpack.c.h.b16 %v976
        %v3718 = vunpack.c.l.b16 %v977
        %v3719 = vunpack.c.h.b16 %v977
        %v3720 = vunpack.c.l.b16 %v978
        %v3721 = vunpack.c.h.b16 %v978
        %v3722 = vunpack.c.l.b16 %v979
        %v3723 = vunpack.c.h.b16 %v979
        %v3724 = vunpack.c.l.b16 %v980
        %v3725 = vunpack.c.h.b16 %v980
        %v3726 = vunpack.c.l.b16 %v981
        %v3727 = vunpack.c.h.b16 %v981
        %v3728 = vunpack.c.l.b16 %v982
        %v3729 = vunpack.c.h.b16 %v982
        %v3730 = vunpack.c.l.b16 %v983
        %v3731 = vunpack.c.h.b16 %v983
        %v3732 = vunpack.c.l.b16 %v984
        %v3733 = vunpack.c.h.b16 %v984
        %v3734 = vunpack.c.l.b16 %v985
        %v3735 = vunpack.c.h.b16 %v985
        %v3736 = vunpack.c.l.b16 %v986
        %v3737 = vunpack.c.h.b16 %v986
        %v3738 = vunpack.c.l.b16 %v987
        %v3739 = vunpack.c.h.b16 %v987
        %v3740 = vunpack.c.l.b16 %v988
        %v3741 = vunpack.c.h.b16 %v988
        %v3742 = vunpack.c.l.b16 %v989
        %v3743 = vunpack.c.h.b16 %v989
        %v3744 = vunpack.c.l.b16 %v990
        %v3745 = vunpack.c.h.b16 %v990
        %v3746 = vunpack.c.l.b16 %v991
        %v3747 = vunpack.c.h.b16 %v991
        %v3748 = vunpack.c.l.b16 %v992
        %v3749 = vunpack.c.h.b16 %v992
        %v3750 = vunpack.c.l.b16 %v993
        %v3751 = vunpack.c.h.b16 %v993
        %v3752 = vunpack.c.l.b16 %v994
        %v3753 = vunpack.c.h.b16 %v994
        %v3754 = vunpack.c.l.b16 %v995
        %v3755 = vunpack.c.h.b16 %v995
        %v3756 = vunpack.c.l.b16 %v996
        %v3757 = vunpack.c.h.b16 %v996
        %v3758 = vunpack.c.l.b16 %v997
        %v3759 = vunpack.c.h.b16 %v997
        %v3760 = vunpack.c.l.b16 %v998
        %v3761 = vunpack.c.h.b16 %v998
        %v3762 = vunpack.c.l.b16 %v999
        %v3763 = vunpack.c.h.b16 %v999
        %v3764 = vunpack.c.l.b16 %v1000
        %v3765 = vunpack.c.h.b16 %v1000
        %v3766 = vunpack.c.l.b16 %v1001
        %v3767 = vunpack.c.h.b16 %v1001
        %v3768 = vunpack.c.l.b16 %v1002
        %v3769 = vunpack.c.h.b16 %v1002
        %v3770 = vunpack.c.l.b16 %v1003
        %v3771 = vunpack.c.h.b16 %v1003
        %v3772 = vunpack.c.l.b16 %v1004
        %v3773 = vunpack.c.h.b16 %v1004
        %v3774 = vunpack.c.l.b16 %v1005
        %v3775 = vunpack.c.h.b16 %v1005
        %v3776 = vunpack.c.l.b16 %v1006
        %v3777 = vunpack.c.h.b16 %v1006
        %v3778 = vunpack.c.l.b16 %v1007
        %v3779 = vunpack.c.h.b16 %v1007
        %v3780 = vunpack.c.l.b16 %v1008
        %v3781 = vunpack.c.h.b16 %v1008
        %v3782 = vunpack.c.l.b16 %v1009
        %v3783 = vunpack.c.h.b16 %v1009
        %v3784 = vunpack.c.l.b16 %v1010
        %v3785 = vunpack.c.h.b16 %v1010
        %v3786 = vunpack.c.l.b16 %v1011
        %v3787 = vunpack.c.h.b16 %v1011
        %v3788 = vunpack.c.l.b16 %v1012
        %v3789 = vunpack.c.h.b16 %v1012
        %v3790 = vunpack.c.l.b16 %v1013
        %v3791 = vunpack.c.h.b16 %v1013
        %v3792 = vunpack.c.l.b16 %v1014
        %v3793 = vunpack.c.h.b16 %v1014
        %v3794 = vunpack.c.l.b16 %v1015
        %v3795 = vunpack.c.h.b16 %v1015
        %v3796 = vunpack.c.l.b16 %v1016
        %v3797 = vunpack.c.h.b16 %v1016
        %v3798 = vunpack.c.l.b16 %v1017
        %v3799 = vunpack.c.h.b16 %v1017
        %v3800 = vunpack.c.l.b16 %v1018
        %v3801 = vunpack.c.h.b16 %v1018
        %v3802 = vunpack.c.l.b16 %v1019
        %v3803 = vunpack.c.h.b16 %v1019
        %v3804 = vunpack.c.l.b16 %v1020
        %v3805 = vunpack.c.h.b16 %v1020
        %v3806 = vunpack.c.l.b16 %v1021
        %v3807 = vunpack.c.h.b16 %v1021
        %v3808 = vunpack.c.l.b16 %v1022
        %v3809 = vunpack.c.h.b16 %v1022
        %v3810 = vunpack.c.l.b16 %v1023
        %v3811 = vunpack.c.h.b16 %v1023
        %v3812 = vunpack.c.l.b16 %v1024
        %v3813 = vunpack.c.h.b16 %v1024
        %v3814 = vunpack.c.l.b16 %v1025
        %v3815 = vunpack.c.h.b16 %v1025
        %v3816 = vunpack.c.l.b16 %v1026
        %v3817 = vunpack.c.h.b16 %v1026
        %v3818 = vunpack.c.l.b16 %v1027
        %v3819 = vunpack.c.h.b16 %v1027
        %v3820 = vunpack.c.l.b16 %v1028
        %v3821 = vunpack.c.h.b16 %v1028
        %v3822 = vunpack.c.l.b16 %v1029
        %v3823 = vunpack.c.h.b16 %v1029
        %v3824 = vunpack.c.l.b16 %v1030
        %v3825 = vunpack.c.h.b16 %v1030
        %v3826 = vunpack.c.l.b16 %v1031
        %v3827 = vunpack.c.h.b16 %v1031
        %v3828 = vunpack.c.l.b16 %v1032
        %v3829 = vunpack.c.h.b16 %v1032
        %v3830 = vunpack.c.l.b16 %v1033
        %v3831 = vunpack.c.h.b16 %v1033
        %v3832 = vunpack.c.l.b16 %v1034
        %v3833 = vunpack.c.h.b16 %v1034
        %v3834 = vunpack.c.l.b16 %v1035
        %v3835 = vunpack.c.h.b16 %v1035
        %v3836 = vunpack.c.l.b16 %v1036
        %v3837 = vunpack.c.h.b16 %v1036
        %v3838 = vunpack.c.l.b16 %v1037
        %v3839 = vunpack.c.h.b16 %v1037
        %v3840 = vunpack.c.l.b16 %v1038
        %v3841 = vunpack.c.h.b16 %v1038
        %v3842 = vunpack.c.l.b16 %v1039
        %v3843 = vunpack.c.h.b16 %v1039
        %v3844 = vunpack.c.l.b16 %v1040
        %v3845 = vunpack.c.h.b16 %v1040
        %v3846 = vunpack.c.l.b16 %v1041
        %v3847 = vunpack.c.h.b16 %v1041
        %v3848 = vunpack.c.l.b16 %v1042
        %v3849 = vunpack.c.h.b16 %v1042
        %v3850 = vunpack.c.l.b16 %v1043
        %v3851 = vunpack.c.h.b16 %v1043
        %v3852 = vunpack.c.l.b16 %v1044
        %v3853 = vunpack.c.h.b16 %v1044
        %v3854 = vunpack.c.l.b16 %v1045
        %v3855 = vunpack.c.h.b16 %v1045
        %v3856 = vunpack.c.l.b16 %v1046
        %v3857 = vunpack.c.h.b16 %v1046
        %v3858 = vunpack.c.l.b16 %v1047
        %v3859 = vunpack.c.h.b16 %v1047
        %v3860 = vunpack.c.l.b16 %v1048
        %v3861 = vunpack.c.h.b16 %v1048
        %v3862 = vunpack.c.l.b16 %v1049
        %v3863 = vunpack.c.h.b16 %v1049
        %v3864 = vunpack.c.l.b16 %v1050
        %v3865 = vunpack.c.h.b16 %v1050
        %v3866 = vunpack.c.l.b16 %v1051
        %v3867 = vunpack.c.h.b16 %v1051
        %v3868 = vunpack.c.l.b16 %v1052
        %v3869 = vunpack.c.h.b16 %v1052
        %v3870 = vunpack.c.l.b16 %v1053
        %v3871 = vunpack.c.h.b16 %v1053
        %v3872 = vunpack.c.l.b16 %v1054
        %v3873 = vunpack.c.h.b16 %v1054
        %v3874 = vunpack.c.l.b16 %v1055
        %v3875 = vunpack.c.h.b16 %v1055
        %v3876 = vunpack.c.l.b16 %v1056
        %v3877 = vunpack.c.h.b16 %v1056
        %v3878 = vunpack.c.l.b16 %v1057
        %v3879 = vunpack.c.h.b16 %v1057
        %v3880 = vunpack.c.l.b16 %v1058
        %v3881 = vunpack.c.h.b16 %v1058
        %v3882 = vunpack.c.l.b16 %v1059
        %v3883 = vunpack.c.h.b16 %v1059
        %v3884 = vunpack.c.l.b16 %v1060
        %v3885 = vunpack.c.h.b16 %v1060
        %v3886 = vunpack.c.l.b16 %v1061
        %v3887 = vunpack.c.h.b16 %v1061
        %v3888 = vunpack.c.l.b16 %v1062
        %v3889 = vunpack.c.h.b16 %v1062
        %v3890 = vunpack.c.l.b16 %v1063
        %v3891 = vunpack.c.h.b16 %v1063
        %v3892 = vunpack.c.l.b16 %v1064
        %v3893 = vunpack.c.h.b16 %v1064
        %v3894 = vunpack.c.l.b16 %v1065
        %v3895 = vunpack.c.h.b16 %v1065
        %v3896 = vunpack.c.l.b16 %v1066
        %v3897 = vunpack.c.h.b16 %v1066
        %v3898 = vunpack.c.l.b16 %v1067
        %v3899 = vunpack.c.h.b16 %v1067
        %v3900 = vunpack.c.l.b16 %v1068
        %v3901 = vunpack.c.h.b16 %v1068
        %v3902 = vunpack.c.l.b16 %v1069
        %v3903 = vunpack.c.h.b16 %v1069
        %v3904 = vunpack.c.l.b16 %v1070
        %v3905 = vunpack.c.h.b16 %v1070
        %v3906 = vunpack.c.l.b16 %v1071
        %v3907 = vunpack.c.h.b16 %v1071
        %v3908 = vunpack.c.l.b16 %v1072
        %v3909 = vunpack.c.h.b16 %v1072
        %v3910 = vunpack.c.l.b16 %v1073
        %v3911 = vunpack.c.h.b16 %v1073
        %v3912 = vunpack.c.l.b16 %v1074
        %v3913 = vunpack.c.h.b16 %v1074
        %v3914 = vunpack.c.l.b16 %v1075
        %v3915 = vunpack.c.h.b16 %v1075
        %v3916 = vunpack.c.l.b16 %v1076
        %v3917 = vunpack.c.h.b16 %v1076
        %v3918 = vunpack.c.l.b16 %v1077
        %v3919 = vunpack.c.h.b16 %v1077
        %v3920 = vunpack.c.l.b16 %v1078
        %v3921 = vunpack.c.h.b16 %v1078
        %v3922 = vunpack.c.l.b16 %v1079
        %v3923 = vunpack.c.h.b16 %v1079
        %v3924 = vunpack.c.l.b16 %v1080
        %v3925 = vunpack.c.h.b16 %v1080
        %v3926 = vunpack.c.l.b16 %v1081
        %v3927 = vunpack.c.h.b16 %v1081
        %v3928 = vunpack.c.l.b16 %v1082
        %v3929 = vunpack.c.h.b16 %v1082
        %v3930 = vunpack.c.l.b16 %v1083
        %v3931 = vunpack.c.h.b16 %v1083
        %v3932 = vunpack.c.l.b16 %v1084
        %v3933 = vunpack.c.h.b16 %v1084
        %v3934 = vunpack.c.l.b16 %v1085
        %v3935 = vunpack.c.h.b16 %v1085
        %v3936 = vunpack.c.l.b16 %v1086
        %v3937 = vunpack.c.h.b16 %v1086
        %v3938 = vunpack.c.l.b16 %v1087
        %v3939 = vunpack.c.h.b16 %v1087
        %v3940 = vunpack.c.l.b16 %v1088
        %v3941 = vunpack.c.h.b16 %v1088
        %v3942 = vunpack.c.l.b16 %v1089
        %v3943 = vunpack.c.h.b16 %v1089
        %v3944 = vunpack.c.l.b16 %v1090
        %v3945 = vunpack.c.h.b16 %v1090
        %v3946 = vunpack.c.l.b16 %v1091
        %v3947 = vunpack.c.h.b16 %v1091
        %v3948 = vunpack.c.l.b16 %v1092
        %v3949 = vunpack.c.h.b16 %v1092
        %v3950 = vunpack.c.l.b16 %v1093
        %v3951 = vunpack.c.h.b16 %v1093
        %v3952 = vunpack.c.l.b16 %v1094
        %v3953 = vunpack.c.h.b16 %v1094
        %v3954 = vunpack.c.l.b16 %v1095
        %v3955 = vunpack.c.h.b16 %v1095
        %v3956 = vunpack.c.l.b16 %v1096
        %v3957 = vunpack.c.h.b16 %v1096
        %v3958 = vunpack.c.l.b16 %v1097
        %v3959 = vunpack.c.h.b16 %v1097
        %v3960 = vunpack.c.l.b16 %v1098
        %v3961 = vunpack.c.h.b16 %v1098
        %v3962 = vunpack.c.l.b16 %v1099
        %v3963 = vunpack.c.h.b16 %v1099
        %v3964 = vunpack.c.l.b16 %v1100
        %v3965 = vunpack.c.h.b16 %v1100
        %v3966 = vunpack.c.l.b16 %v1101
        %v3967 = vunpack.c.h.b16 %v1101
        %v3968 = vunpack.c.l.b16 %v1102
        %v3969 = vunpack.c.h.b16 %v1102
        %v3970 = vunpack.c.l.b16 %v1103
        %v3971 = vunpack.c.h.b16 %v1103
        %v3972 = vunpack.c.l.b16 %v1104
        %v3973 = vunpack.c.h.b16 %v1104
        %v3974 = vunpack.c.l.b16 %v1105
        %v3975 = vunpack.c.h.b16 %v1105
        %v3976 = vunpack.c.l.b16 %v1106
        %v3977 = vunpack.c.h.b16 %v1106
        %v3978 = vunpack.c.l.b16 %v1107
        %v3979 = vunpack.c.h.b16 %v1107
        %v3980 = vunpack.c.l.b16 %v1108
        %v3981 = vunpack.c.h.b16 %v1108
        %v3982 = vunpack.c.l.b16 %v1109
        %v3983 = vunpack.c.h.b16 %v1109
        %v3984 = vunpack.c.l.b16 %v1110
        %v3985 = vunpack.c.h.b16 %v1110
        %v3986 = vunpack.c.l.b16 %v1111
        %v3987 = vunpack.c.h.b16 %v1111
        %v3988 = vunpack.c.l.b16 %v1112
        %v3989 = vunpack.c.h.b16 %v1112
        %v3990 = vunpack.c.l.b16 %v1113
        %v3991 = vunpack.c.h.b16 %v1113
        %v3992 = vunpack.c.l.b16 %v1114
        %v3993 = vunpack.c.h.b16 %v1114
        %v3994 = vunpack.c.l.b16 %v1115
        %v3995 = vunpack.c.h.b16 %v1115
        %v3996 = vunpack.c.l.b16 %v1116
        %v3997 = vunpack.c.h.b16 %v1116
        %v3998 = vunpack.c.l.b16 %v1117
        %v3999 = vunpack.c.h.b16 %v1117
        %v4000 = vunpack.c.l.b16 %v1118
        %v4001 = vunpack.c.h.b16 %v1118
        %v4002 = vunpack.c.l.b16 %v1119
        %v4003 = vunpack.c.h.b16 %v1119
        %v4004 = vunpack.c.l.b16 %v1120
        %v4005 = vunpack.c.h.b16 %v1120
        %v4006 = vunpack.c.l.b16 %v1121
        %v4007 = vunpack.c.h.b16 %v1121
        %v4008 = vunpack.c.l.b16 %v1122
        %v4009 = vunpack.c.h.b16 %v1122
        %v4010 = vunpack.c.l.b16 %v1123
        %v4011 = vunpack.c.h.b16 %v1123
        %v4012 = vunpack.c.l.b16 %v1124
        %v4013 = vunpack.c.h.b16 %v1124
        %v4014 = vunpack.c.l.b16 %v1125
        %v4015 = vunpack.c.h.b16 %v1125
        %v4016 = vunpack.c.l.b16 %v1126
        %v4017 = vunpack.c.h.b16 %v1126
        %v4018 = vunpack.c.l.b16 %v1127
        %v4019 = vunpack.c.h.b16 %v1127
        %v4020 = vunpack.c.l.b16 %v1128
        %v4021 = vunpack.c.h.b16 %v1128
        %v4022 = vunpack.c.l.b16 %v1129
        %v4023 = vunpack.c.h.b16 %v1129
        %v4024 = vunpack.c.l.b16 %v1130
        %v4025 = vunpack.c.h.b16 %v1130
        %v4026 = vunpack.c.l.b16 %v1131
        %v4027 = vunpack.c.h.b16 %v1131
        %v4028 = vunpack.c.l.b16 %v1132
        %v4029 = vunpack.c.h.b16 %v1132
        %v4030 = vunpack.c.l.b16 %v1133
        %v4031 = vunpack.c.h.b16 %v1133
        %v4032 = vunpack.c.l.b16 %v1134
        %v4033 = vunpack.c.h.b16 %v1134
        %v4034 = vunpack.c.l.b16 %v1135
        %v4035 = vunpack.c.h.b16 %v1135
        %v4036 = vunpack.c.l.b16 %v1136
        %v4037 = vunpack.c.h.b16 %v1136
        %v4038 = vunpack.c.l.b16 %v1137
        %v4039 = vunpack.c.h.b16 %v1137
        %v4040 = vunpack.c.l.b16 %v1138
        %v4041 = vunpack.c.h.b16 %v1138
        %v4042 = vunpack.c.l.b16 %v1139
        %v4043 = vunpack.c.h.b16 %v1139
        %v4044 = vunpack.c.l.b16 %v1140
        %v4045 = vunpack.c.h.b16 %v1140
        %v4046 = vunpack.c.l.b16 %v1141
        %v4047 = vunpack.c.h.b16 %v1141
        %v4048 = vunpack.c.l.b16 %v1142
        %v4049 = vunpack.c.h.b16 %v1142
        %v4050 = vunpack.c.l.b16 %v1143
        %v4051 = vunpack.c.h.b16 %v1143
        %v4052 = vunpack.c.l.b16 %v1144
        %v4053 = vunpack.c.h.b16 %v1144
        %v4054 = vunpack.c.l.b16 %v1145
        %v4055 = vunpack.c.h.b16 %v1145
        %v4056 = vunpack.c.l.b16 %v1146
        %v4057 = vunpack.c.h.b16 %v1146
        %v4058 = vunpack.c.l.b16 %v1147
        %v4059 = vunpack.c.h.b16 %v1147
        %v4060 = vunpack.c.l.b16 %v1148
        %v4061 = vunpack.c.h.b16 %v1148
        %v4062 = vunpack.c.l.b16 %v1149
        %v4063 = vunpack.c.h.b16 %v1149
        %v4064 = vunpack.c.l.b16 %v1150
        %v4065 = vunpack.c.h.b16 %v1150
        %v4066 = vunpack.c.l.b16 %v1151
        %v4067 = vunpack.c.h.b16 %v1151
        %v4068 = vunpack.c.l.b16 %v1152
        %v4069 = vunpack.c.h.b16 %v1152
        %v4070 = vunpack.c.l.b16 %v1153
        %v4071 = vunpack.c.h.b16 %v1153
        %v4072 = vunpack.c.l.b16 %v1154
        %v4073 = vunpack.c.h.b16 %v1154
        %v4074 = vunpack.c.l.b16 %v1155
        %v4075 = vunpack.c.h.b16 %v1155
        %v4076 = vunpack.c.l.b16 %v1156
        %v4077 = vunpack.c.h.b16 %v1156
        %v4078 = vunpack.c.l.b16 %v1157
        %v4079 = vunpack.c.h.b16 %v1157
        %v4080 = vunpack.c.l.b16 %v1158
        %v4081 = vunpack.c.h.b16 %v1158
        %v4082 = vunpack.c.l.b16 %v1159
        %v4083 = vunpack.c.h.b16 %v1159
        %v4084 = vunpack.c.l.b16 %v1160
        %v4085 = vunpack.c.h.b16 %v1160
        %v4086 = vunpack.c.l.b16 %v1161
        %v4087 = vunpack.c.h.b16 %v1161
        %v4088 = vunpack.c.l.b16 %v1162
        %v4089 = vunpack.c.h.b16 %v1162
        %v4090 = vunpack.c.l.b16 %v1163
        %v4091 = vunpack.c.h.b16 %v1163
        %v4092 = vunpack.c.l.b16 %v1164
        %v4093 = vunpack.c.h.b16 %v1164
        %v4094 = vunpack.c.l.b16 %v1165
        %v4095 = vunpack.c.h.b16 %v1165
        %v4096 = vunpack.c.l.b16 %v1166
        %v4097 = vunpack.c.h.b16 %v1166
        %v4098 = vunpack.c.l.b16 %v1167
        %v4099 = vunpack.c.h.b16 %v1167
        %v4100 = vunpack.c.l.b16 %v1168
        %v4101 = vunpack.c.h.b16 %v1168
        %v4102 = vunpack.c.l.b16 %v1169
        %v4103 = vunpack.c.h.b16 %v1169
        %v4104 = vunpack.c.l.b16 %v1170
        %v4105 = vunpack.c.h.b16 %v1170
        %v4106 = vunpack.c.l.b16 %v1171
        %v4107 = vunpack.c.h.b16 %v1171
        %v4108 = vunpack.c.l.b16 %v1172
        %v4109 = vunpack.c.h.b16 %v1172
        %v4110 = vunpack.c.l.b16 %v1173
        %v4111 = vunpack.c.h.b16 %v1173
        %v4112 = vunpack.c.l.b16 %v1174
        %v4113 = vunpack.c.h.b16 %v1174
        %v4114 = vunpack.c.l.b16 %v1175
        %v4115 = vunpack.c.h.b16 %v1175
        %v4116 = vunpack.c.l.b16 %v1176
        %v4117 = vunpack.c.h.b16 %v1176
        %v4118 = vunpack.c.l.b16 %v1177
        %v4119 = vunpack.c.h.b16 %v1177
        %v4120 = vunpack.c.l.b16 %v1178
        %v4121 = vunpack.c.h.b16 %v1178
        %v4122 = vunpack.c.l.b16 %v1179
        %v4123 = vunpack.c.h.b16 %v1179
        %v4124 = vunpack.c.l.b16 %v1180
        %v4125 = vunpack.c.h.b16 %v1180
        %v4126 = vunpack.c.l.b16 %v1181
        %v4127 = vunpack.c.h.b16 %v1181
        %v4128 = vunpack.c.l.b16 %v1182
        %v4129 = vunpack.c.h.b16 %v1182
        %v4130 = vunpack.c.l.b16 %v1183
        %v4131 = vunpack.c.h.b16 %v1183
        %v4132 = vunpack.c.l.b16 %v1184
        %v4133 = vunpack.c.h.b16 %v1184
        %v4134 = vunpack.c.l.b16 %v1185
        %v4135 = vunpack.c.h.b16 %v1185
        %v4136 = vunpack.c.l.b16 %v1186
        %v4137 = vunpack.c.h.b16 %v1186
        %v4138 = vunpack.c.l.b16 %v1187
        %v4139 = vunpack.c.h.b16 %v1187
        %v4140 = vunpack.c.l.b16 %v1188
        %v4141 = vunpack.c.h.b16 %v1188
        %v4142 = vunpack.c.l.b16 %v1189
        %v4143 = vunpack.c.h.b16 %v1189
        %v4144 = vunpack.c.l.b16 %v1190
        %v4145 = vunpack.c.h.b16 %v1190
        %v4146 = vunpack.c.l.b16 %v1191
        %v4147 = vunpack.c.h.b16 %v1191
        %v4148 = vunpack.c.l.b16 %v1192
        %v4149 = vunpack.c.h.b16 %v1192
        %v4150 = vunpack.c.l.b16 %v1193
        %v4151 = vunpack.c.h.b16 %v1193
        %v4152 = vunpack.c.l.b16 %v1194
        %v4153 = vunpack.c.h.b16 %v1194
        %v4154 = vunpack.c.l.b16 %v1195
        %v4155 = vunpack.c.h.b16 %v1195
        %v4156 = vunpack.c.l.b16 %v1196
        %v4157 = vunpack.c.h.b16 %v1196
        %v4158 = vunpack.c.l.b16 %v1197
        %v4159 = vunpack.c.h.b16 %v1197
        %v4160 = vunpack.c.l.b16 %v1198
        %v4161 = vunpack.c.h.b16 %v1198
        %v4162 = vunpack.c.l.b16 %v1199
        %v4163 = vunpack.c.h.b16 %v1199
        %v4164 = vunpack.c.l.b16 %v1200
        %v4165 = vunpack.c.h.b16 %v1200
        %v4166 = vunpack.c.l.b16 %v1201
        %v4167 = vunpack.c.h.b16 %v1201
        %v4168 = vunpack.c.l.b16 %v1202
        %v4169 = vunpack.c.h.b16 %v1202
        %v4170 = vunpack.c.l.b16 %v1203
        %v4171 = vunpack.c.h.b16 %v1203
        %v4172 = vunpack.c.l.b16 %v1204
        %v4173 = vunpack.c.h.b16 %v1204
        %v4174 = vunpack.c.l.b16 %v1205
        %v4175 = vunpack.c.h.b16 %v1205
        %v4176 = vunpack.c.l.b16 %v1206
        %v4177 = vunpack.c.h.b16 %v1206
        %v4178 = vunpack.c.l.b16 %v1207
        %v4179 = vunpack.c.h.b16 %v1207
        %v4180 = vunpack.c.l.b16 %v1208
        %v4181 = vunpack.c.h.b16 %v1208
        %v4182 = vunpack.c.l.b16 %v1209
        %v4183 = vunpack.c.h.b16 %v1209
        %v4184 = vunpack.c.l.b16 %v1210
        %v4185 = vunpack.c.h.b16 %v1210
        %v4186 = vunpack.c.l.b16 %v1211
        %v4187 = vunpack.c.h.b16 %v1211
        %v4188 = vunpack.c.l.b16 %v1212
        %v4189 = vunpack.c.h.b16 %v1212
        %v4190 = vunpack.c.l.b16 %v1213
        %v4191 = vunpack.c.h.b16 %v1213
        %v4192 = vunpack.c.l.b16 %v1214
        %v4193 = vunpack.c.h.b16 %v1214
        %v4194 = vunpack.c.l.b16 %v1215
        %v4195 = vunpack.c.h.b16 %v1215
        %v4196 = vunpack.c.l.b16 %v1216
        %v4197 = vunpack.c.h.b16 %v1216
        %v4198 = vunpack.c.l.b16 %v1217
        %v4199 = vunpack.c.h.b16 %v1217
        %v4200 = vunpack.c.l.b16 %v1218
        %v4201 = vunpack.c.h.b16 %v1218
        %v4202 = vunpack.c.l.b16 %v1219
        %v4203 = vunpack.c.h.b16 %v1219
        %v4204 = vunpack.c.l.b16 %v1220
        %v4205 = vunpack.c.h.b16 %v1220
        %v4206 = vunpack.c.l.b16 %v1221
        %v4207 = vunpack.c.h.b16 %v1221
        %v4208 = vunpack.c.l.b16 %v1222
        %v4209 = vunpack.c.h.b16 %v1222
        %v4210 = vunpack.c.l.b16 %v1223
        %v4211 = vunpack.c.h.b16 %v1223
        %v4212 = vunpack.c.l.b16 %v1224
        %v4213 = vunpack.c.h.b16 %v1224
        %v4214 = vunpack.c.l.b16 %v1225
        %v4215 = vunpack.c.h.b16 %v1225
        %v4216 = vunpack.c.l.b16 %v1226
        %v4217 = vunpack.c.h.b16 %v1226
        %v4218 = vunpack.c.l.b16 %v1227
        %v4219 = vunpack.c.h.b16 %v1227
        %v4220 = vunpack.c.l.b16 %v1228
        %v4221 = vunpack.c.h.b16 %v1228
        %v4222 = vunpack.c.l.b16 %v1229
        %v4223 = vunpack.c.h.b16 %v1229
        %v4224 = vunpack.c.l.b16 %v1230
        %v4225 = vunpack.c.h.b16 %v1230
        %v4226 = vunpack.c.l.b16 %v1231
        %v4227 = vunpack.c.h.b16 %v1231
        %v4228 = vunpack.c.l.b16 %v1232
        %v4229 = vunpack.c.h.b16 %v1232
        %v4230 = vunpack.c.l.b16 %v1233
        %v4231 = vunpack.c.h.b16 %v1233
        %v4232 = vunpack.c.l.b16 %v1234
        %v4233 = vunpack.c.h.b16 %v1234
        %v4234 = vunpack.c.l.b16 %v1235
        %v4235 = vunpack.c.h.b16 %v1235
        %v4236 = vunpack.c.l.b16 %v1236
        %v4237 = vunpack.c.h.b16 %v1236
        %v4238 = vunpack.c.l.b16 %v1237
        %v4239 = vunpack.c.h.b16 %v1237
        %v4240 = vunpack.c.l.b16 %v1238
        %v4241 = vunpack.c.h.b16 %v1238
        %v4242 = vunpack.c.l.b16 %v1239
        %v4243 = vunpack.c.h.b16 %v1239
        %v4244 = vunpack.c.l.b16 %v1240
        %v4245 = vunpack.c.h.b16 %v1240
        %v4246 = vunpack.c.l.b16 %v1241
        %v4247 = vunpack.c.h.b16 %v1241
        %v4248 = vunpack.c.l.b16 %v1242
        %v4249 = vunpack.c.h.b16 %v1242
        %v4250 = vunpack.c.l.b16 %v1243
        %v4251 = vunpack.c.h.b16 %v1243
        %v4252 = vunpack.c.l.b16 %v1244
        %v4253 = vunpack.c.h.b16 %v1244
        %v4254 = vunpack.c.l.b16 %v1245
        %v4255 = vunpack.c.h.b16 %v1245
        %v4256 = vunpack.c.l.b16 %v1246
        %v4257 = vunpack.c.h.b16 %v1246
        %v4258 = vunpack.c.l.b16 %v1247
        %v4259 = vunpack.c.h.b16 %v1247
        %v4260 = vunpack.c.l.b16 %v1248
        %v4261 = vunpack.c.h.b16 %v1248
        %v4262 = vunpack.c.l.b16 %v1249
        %v4263 = vunpack.c.h.b16 %v1249
        %v4264 = vunpack.c.l.b16 %v1250
        %v4265 = vunpack.c.h.b16 %v1250
        %v4266 = vunpack.c.l.b16 %v1251
        %v4267 = vunpack.c.h.b16 %v1251
        %v4268 = vunpack.c.l.b16 %v1252
        %v4269 = vunpack.c.h.b16 %v1252
        %v4270 = vunpack.c.l.b16 %v1253
        %v4271 = vunpack.c.h.b16 %v1253
        %v4272 = vunpack.c.l.b16 %v1254
        %v4273 = vunpack.c.h.b16 %v1254
        %v4274 = vunpack.c.l.b16 %v1255
        %v4275 = vunpack.c.h.b16 %v1255
        %v4276 = vunpack.c.l.b16 %v1256
        %v4277 = vunpack.c.h.b16 %v1256
        %v4278 = vunpack.c.l.b16 %v1257
        %v4279 = vunpack.c.h.b16 %v1257
        %v4280 = vunpack.c.l.b16 %v1258
        %v4281 = vunpack.c.h.b16 %v1258
        %v4282 = vunpack.c.l.b16 %v1259
        %v4283 = vunpack.c.h.b16 %v1259
        %v4284 = vunpack.c.l.b16 %v1260
        %v4285 = vunpack.c.h.b16 %v1260
        %v4286 = vunpack.c.l.b16 %v1261
        %v4287 = vunpack.c.h.b16 %v1261
        %v4288 = vunpack.c.l.b16 %v1262
        %v4289 = vunpack.c.h.b16 %v1262
        %v4290 = vunpack.c.l.b16 %v1263
        %v4291 = vunpack.c.h.b16 %v1263
        %v4292 = vunpack.c.l.b16 %v1264
        %v4293 = vunpack.c.h.b16 %v1264
        %v4294 = vunpack.c.l.b16 %v1265
        %v4295 = vunpack.c.h.b16 %v1265
        %v4296 = vunpack.c.l.b16 %v1266
        %v4297 = vunpack.c.h.b16 %v1266
        %v4298 = vunpack.c.l.b16 %v1267
        %v4299 = vunpack.c.h.b16 %v1267
        %v4300 = vunpack.c.l.b16 %v1268
        %v4301 = vunpack.c.h.b16 %v1268
        %v4302 = vunpack.c.l.b16 %v1269
        %v4303 = vunpack.c.h.b16 %v1269
        %v4304 = vunpack.c.l.b16 %v1270
        %v4305 = vunpack.c.h.b16 %v1270
        %v4306 = vunpack.c.l.b16 %v1271
        %v4307 = vunpack.c.h.b16 %v1271
        %v4308 = vunpack.c.l.b16 %v1272
        %v4309 = vunpack.c.h.b16 %v1272
        %v4310 = vunpack.c.l.b16 %v1273
        %v4311 = vunpack.c.h.b16 %v1273
        %v4312 = vunpack.c.l.b16 %v1274
        %v4313 = vunpack.c.h.b16 %v1274
        %v4314 = vunpack.c.l.b16 %v1275
        %v4315 = vunpack.c.h.b16 %v1275
        %v4316 = vunpack.c.l.b16 %v1276
        %v4317 = vunpack.c.h.b16 %v1276
        %v4318 = vunpack.c.l.b16 %v1277
        %v4319 = vunpack.c.h.b16 %v1277
        %v4320 = vunpack.c.l.b16 %v1278
        %v4321 = vunpack.c.h.b16 %v1278
        %v4322 = vunpack.c.l.b16 %v1279
        %v4323 = vunpack.c.h.b16 %v1279
        %v4324 = vunpack.c.l.b16 %v1280
        %v4325 = vunpack.c.h.b16 %v1280
        %v4326 = vunpack.c.l.b16 %v1281
        %v4327 = vunpack.c.h.b16 %v1281
        %v4328 = vunpack.c.l.b16 %v1282
        %v4329 = vunpack.c.h.b16 %v1282
        %v4330 = vunpack.c.l.b16 %v1283
        %v4331 = vunpack.c.h.b16 %v1283
        %v4332 = vunpack.c.l.b16 %v1284
        %v4333 = vunpack.c.h.b16 %v1284
        %v4334 = vunpack.c.l.b16 %v1285
        %v4335 = vunpack.c.h.b16 %v1285
        %v4336 = vunpack.c.l.b16 %v1286
        %v4337 = vunpack.c.h.b16 %v1286
        %v4338 = vunpack.c.l.b16 %v1287
        %v4339 = vunpack.c.h.b16 %v1287
        %v4340 = vunpack.c.l.b16 %v1288
        %v4341 = vunpack.c.h.b16 %v1288
        %v4342 = vunpack.c.l.b16 %v1289
        %v4343 = vunpack.c.h.b16 %v1289
        %v4344 = vunpack.c.l.b16 %v1290
        %v4345 = vunpack.c.h.b16 %v1290
        %v4346 = vunpack.c.l.b16 %v1291
        %v4347 = vunpack.c.h.b16 %v1291
        %v4348 = vunpack.c.l.b16 %v1292
        %v4349 = vunpack.c.h.b16 %v1292
        %v4350 = vunpack.c.l.b16 %v1293
        %v4351 = vunpack.c.h.b16 %v1293
        %v4352 = vunpack.c.l.b16 %v1294
        %v4353 = vunpack.c.h.b16 %v1294
        %v4354 = vunpack.c.l.b16 %v1295
        %v4355 = vunpack.c.h.b16 %v1295
        %v4356 = vunpack.c.l.b16 %v1296
        %v4357 = vunpack.c.h.b16 %v1296
        %v4358 = vunpack.c.l.b16 %v1297
        %v4359 = vunpack.c.h.b16 %v1297
        %v4360 = vunpack.c.l.b16 %v1298
        %v4361 = vunpack.c.h.b16 %v1298
        %v4362 = vunpack.c.l.b16 %v1299
        %v4363 = vunpack.c.h.b16 %v1299
        %v4364 = vunpack.c.l.b16 %v1300
        %v4365 = vunpack.c.h.b16 %v1300
        %v4366 = vunpack.c.l.b16 %v1301
        %v4367 = vunpack.c.h.b16 %v1301
        %v4368 = vunpack.c.l.b16 %v1302
        %v4369 = vunpack.c.h.b16 %v1302
        %v4370 = vunpack.c.l.b16 %v1303
        %v4371 = vunpack.c.h.b16 %v1303
        %v4372 = vunpack.c.l.b16 %v1304
        %v4373 = vunpack.c.h.b16 %v1304
        %v4374 = vunpack.c.l.b16 %v1305
        %v4375 = vunpack.c.h.b16 %v1305
        %v4376 = vunpack.c.l.b16 %v1306
        %v4377 = vunpack.c.h.b16 %v1306
        %v4378 = vunpack.c.l.b16 %v1307
        %v4379 = vunpack.c.h.b16 %v1307
        %v4380 = vunpack.c.l.b16 %v1308
        %v4381 = vunpack.c.h.b16 %v1308
        %v4382 = vunpack.c.l.b16 %v1309
        %v4383 = vunpack.c.h.b16 %v1309
        %v4384 = vunpack.c.l.b16 %v1310
        %v4385 = vunpack.c.h.b16 %v1310
        %v4386 = vunpack.c.l.b16 %v1311
        %v4387 = vunpack.c.h.b16 %v1311
        %v4388 = vunpack.c.l.b16 %v1312
        %v4389 = vunpack.c.h.b16 %v1312
        %v4390 = vunpack.c.l.b16 %v1313
        %v4391 = vunpack.c.h.b16 %v1313
        %v4392 = vunpack.c.l.b16 %v1314
        %v4393 = vunpack.c.h.b16 %v1314
        %v4394 = vunpack.c.l.b16 %v1315
        %v4395 = vunpack.c.h.b16 %v1315
        %v4396 = vunpack.c.l.b16 %v1316
        %v4397 = vunpack.c.h.b16 %v1316
        %v4398 = vunpack.c.l.b16 %v1317
        %v4399 = vunpack.c.h.b16 %v1317
        %v4400 = vunpack.c.l.b16 %v1318
        %v4401 = vunpack.c.h.b16 %v1318
        %v4402 = vunpack.c.l.b16 %v1319
        %v4403 = vunpack.c.h.b16 %v1319
        %v4404 = vunpack.c.l.b16 %v1320
        %v4405 = vunpack.c.h.b16 %v1320
        %v4406 = vunpack.c.l.b16 %v1321
        %v4407 = vunpack.c.h.b16 %v1321
        %v4408 = vpack.c.b16 %v2392, %v2360
        %v4409 = vpack.c.b16 %v2393, %v2361
        %v4410 = vpack.c.b16 %v2394, %v2362
        %v4411 = vpack.c.b16 %v2395, %v2363
        %v4412 = vpack.c.b16 %v2396, %v2364
        %v4413 = vpack.c.b16 %v2397, %v2365
        %v4414 = vpack.c.b16 %v2398, %v2366
        %v4415 = vpack.c.b16 %v2399, %v2367
        %v4416 = vpack.c.b16 %v2400, %v2368
        %v4417 = vpack.c.b16 %v2401, %v2369
        %v4418 = vpack.c.b16 %v2402, %v2370
        %v4419 = vpack.c.b16 %v2403, %v2371
        %v4420 = vpack.c.b16 %v2404, %v2372
        %v4421 = vpack.c.b16 %v2405, %v2373
        %v4422 = vpack.c.b16 %v2406, %v2374
        %v4423 = vpack.c.b16 %v2407, %v2375
        %v4424 = vpack.c.b16 %v2408, %v2376
        %v4425 = vpack.c.b16 %v2409, %v2377
        %v4426 = vpack.c.b16 %v2410, %v2378
        %v4427 = vpack.c.b16 %v2411, %v2379
        %v4428 = vpack.c.b16 %v2412, %v2380
        %v4429 = vpack.c.b16 %v2413, %v2381
        %v4430 = vpack.c.b16 %v2414, %v2382
        %v4431 = vpack.c.b16 %v2415, %v2383
        %v4432 = vpack.c.b16 %v2416, %v2384
        %v4433 = vpack.c.b16 %v2417, %v2385
        %v4434 = vpack.c.b16 %v2418, %v2386
        %v4435 = vpack.c.b16 %v2419, %v2387
        %v4436 = vpack.c.b16 %v2420, %v2388
        %v4437 = vpack.c.b16 %v2421, %v2389
        %v4438 = vpack.c.b16 %v2422, %v2390
        %v4439 = vpack.c.b16 %v2423, %v2391
        %v4440 = vpack.c.b16 %v2456, %v2424
        %v4441 = vpack.c.b16 %v2457, %v2425
        %v4442 = vpack.c.b16 %v2458, %v2426
        %v4443 = vpack.c.b16 %v2459, %v2427
        %v4444 = vpack.c.b16 %v2460, %v2428
        %v4445 = vpack.c.b16 %v2461, %v2429
        %v4446 = vpack.c.b16 %v2462, %v2430
        %v4447 = vpack.c.b16 %v2463, %v2431
        %v4448 = vpack.c.b16 %v2464, %v2432
        %v4449 = vpack.c.b16 %v2465, %v2433
        %v4450 = vpack.c.b16 %v2466, %v2434
        %v4451 = vpack.c.b16 %v2467, %v2435
        %v4452 = vpack.c.b16 %v2468, %v2436
        %v4453 = vpack.c.b16 %v2469, %v2437
        %v4454 = vpack.c.b16 %v2470, %v2438
        %v4455 = vpack.c.b16 %v2471, %v2439
        %v4456 = vpack.c.b16 %v2472, %v2440
        %v4457 = vpack.c.b16 %v2473, %v2441
        %v4458 = vpack.c.b16 %v2474, %v2442
        %v4459 = vpack.c.b16 %v2475, %v2443
        %v4460 = vpack.c.b16 %v2476, %v2444
        %v4461 = vpack.c.b16 %v2477, %v2445
        %v4462 = vpack.c.b16 %v2478, %v2446
        %v4463 = vpack.c.b16 %v2479, %v2447
        %v4464 = vpack.c.b16 %v2480, %v2448
        %v4465 = vpack.c.b16 %v2481, %v2449
        %v4466 = vpack.c.b16 %v2482, %v2450
        %v4467 = vpack.c.b16 %v2483, %v2451
        %v4468 = vpack.c.b16 %v2484, %v2452
        %v4469 = vpack.c.b16 %v2485, %v2453
        %v4470 = vpack.c.b16 %v2486, %v2454
        %v4471 = vpack.c.b16 %v2487, %v2455
        %v4472 = vpack.c.b16 %v2520, %v2488
        %v4473 = vpack.c.b16 %v2521, %v2489
        %v4474 = vpack.c.b16 %v2522, %v2490
        %v4475 = vpack.c.b16 %v2523, %v2491
        %v4476 = vpack.c.b16 %v2524, %v2492
        %v4477 = vpack.c.b16 %v2525, %v2493
        %v4478 = vpack.c.b16 %v2526, %v2494
        %v4479 = vpack.c.b16 %v2527, %v2495
        %v4480 = vpack.c.b16 %v2528, %v2496
        %v4481 = vpack.c.b16 %v2529, %v2497
        %v4482 = vpack.c.b16 %v2530, %v2498
        %v4483 = vpack.c.b16 %v2531, %v2499
        %v4484 = vpack.c.b16 %v2532, %v2500
        %v4485 = vpack.c.b16 %v2533, %v2501
        %v4486 = vpack.c.b16 %v2534, %v2502
        %v4487 = vpack.c.b16 %v2535, %v2503
        %v4488 = vpack.c.b16 %v2536, %v2504
        %v4489 = vpack.c.b16 %v2537, %v2505
        %v4490 = vpack.c.b16 %v2538, %v2506
        %v4491 = vpack.c.b16 %v2539, %v2507
        %v4492 = vpack.c.b16 %v2540, %v2508
        %v4493 = vpack.c.b16 %v2541, %v2509
        %v4494 = vpack.c.b16 %v2542, %v2510
        %v4495 = vpack.c.b16 %v2543, %v2511
        %v4496 = vpack.c.b16 %v2544, %v2512
        %v4497 = vpack.c.b16 %v2545, %v2513
        %v4498 = vpack.c.b16 %v2546, %v2514
        %v4499 = vpack.c.b16 %v2547, %v2515
        %v4500 = vpack.c.b16 %v2548, %v2516
        %v4501 = vpack.c.b16 %v2549, %v2517
        %v4502 = vpack.c.b16 %v2550, %v2518
        %v4503 = vpack.c.b16 %v2551, %v2519
        %v4504 = vpack.c.b16 %v2584, %v2552
        %v4505 = vpack.c.b16 %v2585, %v2553
        %v4506 = vpack.c.b16 %v2586, %v2554
        %v4507 = vpack.c.b16 %v2587, %v2555
        %v4508 = vpack.c.b16 %v2588, %v2556
        %v4509 = vpack.c.b16 %v2589, %v2557
        %v4510 = vpack.c.b16 %v2590, %v2558
        %v4511 = vpack.c.b16 %v2591, %v2559
        %v4512 = vpack.c.b16 %v2592, %v2560
        %v4513 = vpack.c.b16 %v2593, %v2561
        %v4514 = vpack.c.b16 %v2594, %v2562
        %v4515 = vpack.c.b16 %v2595, %v2563
        %v4516 = vpack.c.b16 %v2596, %v2564
        %v4517 = vpack.c.b16 %v2597, %v2565
        %v4518 = vpack.c.b16 %v2598, %v2566
        %v4519 = vpack.c.b16 %v2599, %v2567
        %v4520 = vpack.c.b16 %v2600, %v2568
        %v4521 = vpack.c.b16 %v2601, %v2569
        %v4522 = vpack.c.b16 %v2602, %v2570
        %v4523 = vpack.c.b16 %v2603, %v2571
        %v4524 = vpack.c.b16 %v2604, %v2572
        %v4525 = vpack.c.b16 %v2605, %v2573
        %v4526 = vpack.c.b16 %v2606, %v2574
        %v4527 = vpack.c.b16 %v2607, %v2575
        %v4528 = vpack.c.b16 %v2608, %v2576
        %v4529 = vpack.c.b16 %v2609, %v2577
        %v4530 = vpack.c.b16 %v2610, %v2578
        %v4531 = vpack.c.b16 %v2611, %v2579
        %v4532 = vpack.c.b16 %v2612, %v2580
        %v4533 = vpack.c.b16 %v2613, %v2581
        %v4534 = vpack.c.b16 %v2614, %v2582
        %v4535 = vpack.c.b16 %v2615, %v2583
        %v4536 = vpack.c.b16 %v2648, %v2616
        %v4537 = vpack.c.b16 %v2649, %v2617
        %v4538 = vpack.c.b16 %v2650, %v2618
        %v4539 = vpack.c.b16 %v2651, %v2619
        %v4540 = vpack.c.b16 %v2652, %v2620
        %v4541 = vpack.c.b16 %v2653, %v2621
        %v4542 = vpack.c.b16 %v2654, %v2622
        %v4543 = vpack.c.b16 %v2655, %v2623
        %v4544 = vpack.c.b16 %v2656, %v2624
        %v4545 = vpack.c.b16 %v2657, %v2625
        %v4546 = vpack.c.b16 %v2658, %v2626
        %v4547 = vpack.c.b16 %v2659, %v2627
        %v4548 = vpack.c.b16 %v2660, %v2628
        %v4549 = vpack.c.b16 %v2661, %v2629
        %v4550 = vpack.c.b16 %v2662, %v2630
        %v4551 = vpack.c.b16 %v2663, %v2631
        %v4552 = vpack.c.b16 %v2664, %v2632
        %v4553 = vpack.c.b16 %v2665, %v2633
        %v4554 = vpack.c.b16 %v2666, %v2634
        %v4555 = vpack.c.b16 %v2667, %v2635
        %v4556 = vpack.c.b16 %v2668, %v2636
        %v4557 = vpack.c.b16 %v2669, %v2637
        %v4558 = vpack.c.b16 %v2670, %v2638
        %v4559 = vpack.c.b16 %v2671, %v2639
        %v4560 = vpack.c.b16 %v2672, %v2640
        %v4561 = vpack.c.b16 %v2673, %v2641
        %v4562 = vpack.c.b16 %v2674, %v2642
        %v4563 = vpack.c.b16 %v2675, %v2643
        %v4564 = vpack.c.b16 %v2676, %v2644
        %v4565 = vpack.c.b16 %v2677, %v2645
        %v4566 = vpack.c.b16 %v2678, %v2646
        %v4567 = vpack.c.b16 %v2679, %v2647
        %v4568 = vpack.c.b16 %v2712, %v2680
        %v4569 = vpack.c.b16 %v2713, %v2681
        %v4570 = vpack.c.b16 %v2714, %v2682
        %v4571 = vpack.c.b16 %v2715, %v2683
        %v4572 = vpack.c.b16 %v2716, %v2684
        %v4573 = vpack.c.b16 %v2717, %v2685
        %v4574 = vpack.c.b16 %v2718, %v2686
        %v4575 = vpack.c.b16 %v2719, %v2687
        %v4576 = vpack.c.b16 %v2720, %v2688
        %v4577 = vpack.c.b16 %v2721, %v2689
        %v4578 = vpack.c.b16 %v2722, %v2690
        %v4579 = vpack.c.b16 %v2723, %v2691
        %v4580 = vpack.c.b16 %v2724, %v2692
        %v4581 = vpack.c.b16 %v2725, %v2693
        %v4582 = vpack.c.b16 %v2726, %v2694
        %v4583 = vpack.c.b16 %v2727, %v2695
        %v4584 = vpack.c.b16 %v2728, %v2696
        %v4585 = vpack.c.b16 %v2729, %v2697
        %v4586 = vpack.c.b16 %v2730, %v2698
        %v4587 = vpack.c.b16 %v2731, %v2699
        %v4588 = vpack.c.b16 %v2732, %v2700
        %v4589 = vpack.c.b16 %v2733, %v2701
        %v4590 = vpack.c.b16 %v2734, %v2702
        %v4591 = vpack.c.b16 %v2735, %v2703
        %v4592 = vpack.c.b16 %v2736, %v2704
        %v4593 = vpack.c.b16 %v2737, %v2705
        %v4594 = vpack.c.b16 %v2738, %v2706
        %v4595 = vpack.c.b16 %v2739, %v2707
        %v4596 = vpack.c.b16 %v2740, %v2708
        %v4597 = vpack.c.b16 %v2741, %v2709
        %v4598 = vpack.c.b16 %v2742, %v2710
        %v4599 = vpack.c.b16 %v2743, %v2711
        %v4600 = vpack.c.b16 %v2776, %v2744
        %v4601 = vpack.c.b16 %v2777, %v2745
        %v4602 = vpack.c.b16 %v2778, %v2746
        %v4603 = vpack.c.b16 %v2779, %v2747
        %v4604 = vpack.c.b16 %v2780, %v2748
        %v4605 = vpack.c.b16 %v2781, %v2749
        %v4606 = vpack.c.b16 %v2782, %v2750
        %v4607 = vpack.c.b16 %v2783, %v2751
        %v4608 = vpack.c.b16 %v2784, %v2752
        %v4609 = vpack.c.b16 %v2785, %v2753
        %v4610 = vpack.c.b16 %v2786, %v2754
        %v4611 = vpack.c.b16 %v2787, %v2755
        %v4612 = vpack.c.b16 %v2788, %v2756
        %v4613 = vpack.c.b16 %v2789, %v2757
        %v4614 = vpack.c.b16 %v2790, %v2758
        %v4615 = vpack.c.b16 %v2791, %v2759
        %v4616 = vpack.c.b16 %v2792, %v2760
        %v4617 = vpack.c.b16 %v2793, %v2761
        %v4618 = vpack.c.b16 %v2794, %v2762
        %v4619 = vpack.c.b16 %v2795, %v2763
        %v4620 = vpack.c.b16 %v2796, %v2764
        %v4621 = vpack.c.b16 %v2797, %v2765
        %v4622 = vpack.c.b16 %v2798, %v2766
        %v4623 = vpack.c.b16 %v2799, %v2767
        %v4624 = vpack.c.b16 %v2800, %v2768
        %v4625 = vpack.c.b16 %v2801, %v2769
        %v4626 = vpack.c.b16 %v2802, %v2770
        %v4627 = vpack.c.b16 %v2803, %v2771
        %v4628 = vpack.c.b16 %v2804, %v2772
        %v4629 = vpack.c.b16 %v2805, %v2773
        %v4630 = vpack.c.b16 %v2806, %v2774
        %v4631 = vpack.c.b16 %v2807, %v2775
        %v4632 = vpack.c.b16 %v2840, %v2808
        %v4633 = vpack.c.b16 %v2841, %v2809
        %v4634 = vpack.c.b16 %v2842, %v2810
        %v4635 = vpack.c.b16 %v2843, %v2811
        %v4636 = vpack.c.b16 %v2844, %v2812
        %v4637 = vpack.c.b16 %v2845, %v2813
        %v4638 = vpack.c.b16 %v2846, %v2814
        %v4639 = vpack.c.b16 %v2847, %v2815
        %v4640 = vpack.c.b16 %v2848, %v2816
        %v4641 = vpack.c.b16 %v2849, %v2817
        %v4642 = vpack.c.b16 %v2850, %v2818
        %v4643 = vpack.c.b16 %v2851, %v2819
        %v4644 = vpack.c.b16 %v2852, %v2820
        %v4645 = vpack.c.b16 %v2853, %v2821
        %v4646 = vpack.c.b16 %v2854, %v2822
        %v4647 = vpack.c.b16 %v2855, %v2823
        %v4648 = vpack.c.b16 %v2856, %v2824
        %v4649 = vpack.c.b16 %v2857, %v2825
        %v4650 = vpack.c.b16 %v2858, %v2826
        %v4651 = vpack.c.b16 %v2859, %v2827
        %v4652 = vpack.c.b16 %v2860, %v2828
        %v4653 = vpack.c.b16 %v2861, %v2829
        %v4654 = vpack.c.b16 %v2862, %v2830
        %v4655 = vpack.c.b16 %v2863, %v2831
        %v4656 = vpack.c.b16 %v2864, %v2832
        %v4657 = vpack.c.b16 %v2865, %v2833
        %v4658 = vpack.c.b16 %v2866, %v2834
        %v4659 = vpack.c.b16 %v2867, %v2835
        %v4660 = vpack.c.b16 %v2868, %v2836
        %v4661 = vpack.c.b16 %v2869, %v2837
        %v4662 = vpack.c.b16 %v2870, %v2838
        %v4663 = vpack.c.b16 %v2871, %v2839
        %v4664 = vpack.c.b16 %v2904, %v2872
        %v4665 = vpack.c.b16 %v2905, %v2873
        %v4666 = vpack.c.b16 %v2906, %v2874
        %v4667 = vpack.c.b16 %v2907, %v2875
        %v4668 = vpack.c.b16 %v2908, %v2876
        %v4669 = vpack.c.b16 %v2909, %v2877
        %v4670 = vpack.c.b16 %v2910, %v2878
        %v4671 = vpack.c.b16 %v2911, %v2879
        %v4672 = vpack.c.b16 %v2912, %v2880
        %v4673 = vpack.c.b16 %v2913, %v2881
        %v4674 = vpack.c.b16 %v2914, %v2882
        %v4675 = vpack.c.b16 %v2915, %v2883
        %v4676 = vpack.c.b16 %v2916, %v2884
        %v4677 = vpack.c.b16 %v2917, %v2885
        %v4678 = vpack.c.b16 %v2918, %v2886
        %v4679 = vpack.c.b16 %v2919, %v2887
        %v4680 = vpack.c.b16 %v2920, %v2888
        %v4681 = vpack.c.b16 %v2921, %v2889
        %v4682 = vpack.c.b16 %v2922, %v2890
        %v4683 = vpack.c.b16 %v2923, %v2891
        %v4684 = vpack.c.b16 %v2924, %v2892
        %v4685 = vpack.c.b16 %v2925, %v2893
        %v4686 = vpack.c.b16 %v2926, %v2894
        %v4687 = vpack.c.b16 %v2927, %v2895
        %v4688 = vpack.c.b16 %v2928, %v2896
        %v4689 = vpack.c.b16 %v2929, %v2897
        %v4690 = vpack.c.b16 %v2930, %v2898
        %v4691 = vpack.c.b16 %v2931, %v2899
        %v4692 = vpack.c.b16 %v2932, %v2900
        %v4693 = vpack.c.b16 %v2933, %v2901
        %v4694 = vpack.c.b16 %v2934, %v2902
        %v4695 = vpack.c.b16 %v2935, %v2903
        %v4696 = vpack.c.b16 %v2968, %v2936
        %v4697 = vpack.c.b16 %v2969, %v2937
        %v4698 = vpack.c.b16 %v2970, %v2938
        %v4699 = vpack.c.b16 %v2971, %v2939
        %v4700 = vpack.c.b16 %v2972, %v2940
        %v4701 = vpack.c.b16 %v2973, %v2941
        %v4702 = vpack.c.b16 %v2974, %v2942
        %v4703 = vpack.c.b16 %v2975, %v2943
        %v4704 = vpack.c.b16 %v2976, %v2944
        %v4705 = vpack.c.b16 %v2977, %v2945
        %v4706 = vpack.c.b16 %v2978, %v2946
        %v4707 = vpack.c.b16 %v2979, %v2947
        %v4708 = vpack.c.b16 %v2980, %v2948
        %v4709 = vpack.c.b16 %v2981, %v2949
        %v4710 = vpack.c.b16 %v2982, %v2950
        %v4711 = vpack.c.b16 %v2983, %v2951
        %v4712 = vpack.c.b16 %v2984, %v2952
        %v4713 = vpack.c.b16 %v2985, %v2953
        %v4714 = vpack.c.b16 %v2986, %v2954
        %v4715 = vpack.c.b16 %v2987, %v2955
        %v4716 = vpack.c.b16 %v2988, %v2956
        %v4717 = vpack.c.b16 %v2989, %v2957
        %v4718 = vpack.c.b16 %v2990, %v2958
        %v4719 = vpack.c.b16 %v2991, %v2959
        %v4720 = vpack.c.b16 %v2992, %v2960
        %v4721 = vpack.c.b16 %v2993, %v2961
        %v4722 = vpack.c.b16 %v2994, %v2962
        %v4723 = vpack.c.b16 %v2995, %v2963
        %v4724 = vpack.c.b16 %v2996, %v2964
        %v4725 = vpack.c.b16 %v2997, %v2965
        %v4726 = vpack.c.b16 %v2998, %v2966
        %v4727 = vpack.c.b16 %v2999, %v2967
        %v4728 = vpack.c.b16 %v3032, %v3000
        %v4729 = vpack.c.b16 %v3033, %v3001
        %v4730 = vpack.c.b16 %v3034, %v3002
        %v4731 = vpack.c.b16 %v3035, %v3003
        %v4732 = vpack.c.b16 %v3036, %v3004
        %v4733 = vpack.c.b16 %v3037, %v3005
        %v4734 = vpack.c.b16 %v3038, %v3006
        %v4735 = vpack.c.b16 %v3039, %v3007
        %v4736 = vpack.c.b16 %v3040, %v3008
        %v4737 = vpack.c.b16 %v3041, %v3009
        %v4738 = vpack.c.b16 %v3042, %v3010
        %v4739 = vpack.c.b16 %v3043, %v3011
        %v4740 = vpack.c.b16 %v3044, %v3012
        %v4741 = vpack.c.b16 %v3045, %v3013
        %v4742 = vpack.c.b16 %v3046, %v3014
        %v4743 = vpack.c.b16 %v3047, %v3015
        %v4744 = vpack.c.b16 %v3048, %v3016
        %v4745 = vpack.c.b16 %v3049, %v3017
        %v4746 = vpack.c.b16 %v3050, %v3018
        %v4747 = vpack.c.b16 %v3051, %v3019
        %v4748 = vpack.c.b16 %v3052, %v3020
        %v4749 = vpack.c.b16 %v3053, %v3021
        %v4750 = vpack.c.b16 %v3054, %v3022
        %v4751 = vpack.c.b16 %v3055, %v3023
        %v4752 = vpack.c.b16 %v3056, %v3024
        %v4753 = vpack.c.b16 %v3057, %v3025
        %v4754 = vpack.c.b16 %v3058, %v3026
        %v4755 = vpack.c.b16 %v3059, %v3027
        %v4756 = vpack.c.b16 %v3060, %v3028
        %v4757 = vpack.c.b16 %v3061, %v3029
        %v4758 = vpack.c.b16 %v3062, %v3030
        %v4759 = vpack.c.b16 %v3063, %v3031
        %v4760 = vpack.c.b16 %v3096, %v3064
        %v4761 = vpack.c.b16 %v3097, %v3065
        %v4762 = vpack.c.b16 %v3098, %v3066
        %v4763 = vpack.c.b16 %v3099, %v3067
        %v4764 = vpack.c.b16 %v3100, %v3068
        %v4765 = vpack.c.b16 %v3101, %v3069
        %v4766 = vpack.c.b16 %v3102, %v3070
        %v4767 = vpack.c.b16 %v3103, %v3071
        %v4768 = vpack.c.b16 %v3104, %v3072
        %v4769 = vpack.c.b16 %v3105, %v3073
        %v4770 = vpack.c.b16 %v3106, %v3074
        %v4771 = vpack.c.b16 %v3107, %v3075
        %v4772 = vpack.c.b16 %v3108, %v3076
        %v4773 = vpack.c.b16 %v3109, %v3077
        %v4774 = vpack.c.b16 %v3110, %v3078
        %v4775 = vpack.c.b16 %v3111, %v3079
        %v4776 = vpack.c.b16 %v3112, %v3080
        %v4777 = vpack.c.b16 %v3113, %v3081
        %v4778 = vpack.c.b16 %v3114, %v3082
        %v4779 = vpack.c.b16 %v3115, %v3083
        %v4780 = vpack.c.b16 %v3116, %v3084
        %v4781 = vpack.c.b16 %v3117, %v3085
        %v4782 = vpack.c.b16 %v3118, %v3086
        %v4783 = vpack.c.b16 %v3119, %v3087
        %v4784 = vpack.c.b16 %v3120, %v3088
        %v4785 = vpack.c.b16 %v3121, %v3089
        %v4786 = vpack.c.b16 %v3122, %v3090
        %v4787 = vpack.c.b16 %v3123, %v3091
        %v4788 = vpack.c.b16 %v3124, %v3092
        %v4789 = vpack.c.b16 %v3125, %v3093
        %v4790 = vpack.c.b16 %v3126, %v3094
        %v4791 = vpack.c.b16 %v3127, %v3095
        %v4792 = vpack.c.b16 %v3160, %v3128
        %v4793 = vpack.c.b16 %v3161, %v3129
        %v4794 = vpack.c.b16 %v3162, %v3130
        %v4795 = vpack.c.b16 %v3163, %v3131
        %v4796 = vpack.c.b16 %v3164, %v3132
        %v4797 = vpack.c.b16 %v3165, %v3133
        %v4798 = vpack.c.b16 %v3166, %v3134
        %v4799 = vpack.c.b16 %v3167, %v3135
        %v4800 = vpack.c.b16 %v3168, %v3136
        %v4801 = vpack.c.b16 %v3169, %v3137
        %v4802 = vpack.c.b16 %v3170, %v3138
        %v4803 = vpack.c.b16 %v3171, %v3139
        %v4804 = vpack.c.b16 %v3172, %v3140
        %v4805 = vpack.c.b16 %v3173, %v3141
        %v4806 = vpack.c.b16 %v3174, %v3142
        %v4807 = vpack.c.b16 %v3175, %v3143
        %v4808 = vpack.c.b16 %v3176, %v3144
        %v4809 = vpack.c.b16 %v3177, %v3145
        %v4810 = vpack.c.b16 %v3178, %v3146
        %v4811 = vpack.c.b16 %v3179, %v3147
        %v4812 = vpack.c.b16 %v3180, %v3148
        %v4813 = vpack.c.b16 %v3181, %v3149
        %v4814 = vpack.c.b16 %v3182, %v3150
        %v4815 = vpack.c.b16 %v3183, %v3151
        %v4816 = vpack.c.b16 %v3184, %v3152
        %v4817 = vpack.c.b16 %v3185, %v3153
        %v4818 = vpack.c.b16 %v3186, %v3154
        %v4819 = vpack.c.b16 %v3187, %v3155
        %v4820 = vpack.c.b16 %v3188, %v3156
        %v4821 = vpack.c.b16 %v3189, %v3157
        %v4822 = vpack.c.b16 %v3190, %v3158
        %v4823 = vpack.c.b16 %v3191, %v3159
        %v4824 = vpack.c.b16 %v3224, %v3192
        %v4825 = vpack.c.b16 %v3225, %v3193
        %v4826 = vpack.c.b16 %v3226, %v3194
        %v4827 = vpack.c.b16 %v3227, %v3195
        %v4828 = vpack.c.b16 %v3228, %v3196
        %v4829 = vpack.c.b16 %v3229, %v3197
        %v4830 = vpack.c.b16 %v3230, %v3198
        %v4831 = vpack.c.b16 %v3231, %v3199
        %v4832 = vpack.c.b16 %v3232, %v3200
        %v4833 = vpack.c.b16 %v3233, %v3201
        %v4834 = vpack.c.b16 %v3234, %v3202
        %v4835 = vpack.c.b16 %v3235, %v3203
        %v4836 = vpack.c.b16 %v3236, %v3204
        %v4837 = vpack.c.b16 %v3237, %v3205
        %v4838 = vpack.c.b16 %v3238, %v3206
        %v4839 = vpack.c.b16 %v3239, %v3207
        %v4840 = vpack.c.b16 %v3240, %v3208
        %v4841 = vpack.c.b16 %v3241, %v3209
        %v4842 = vpack.c.b16 %v3242, %v3210
        %v4843 = vpack.c.b16 %v3243, %v3211
        %v4844 = vpack.c.b16 %v3244, %v3212
        %v4845 = vpack.c.b16 %v3245, %v3213
        %v4846 = vpack.c.b16 %v3246, %v3214
        %v4847 = vpack.c.b16 %v3247, %v3215
        %v4848 = vpack.c.b16 %v3248, %v3216
        %v4849 = vpack.c.b16 %v3249, %v3217
        %v4850 = vpack.c.b16 %v3250, %v3218
        %v4851 = vpack.c.b16 %v3251, %v3219
        %v4852 = vpack.c.b16 %v3252, %v3220
        %v4853 = vpack.c.b16 %v3253, %v3221
        %v4854 = vpack.c.b16 %v3254, %v3222
        %v4855 = vpack.c.b16 %v3255, %v3223
        %v4856 = vpack.c.b16 %v3288, %v3256
        %v4857 = vpack.c.b16 %v3289, %v3257
        %v4858 = vpack.c.b16 %v3290, %v3258
        %v4859 = vpack.c.b16 %v3291, %v3259
        %v4860 = vpack.c.b16 %v3292, %v3260
        %v4861 = vpack.c.b16 %v3293, %v3261
        %v4862 = vpack.c.b16 %v3294, %v3262
        %v4863 = vpack.c.b16 %v3295, %v3263
        %v4864 = vpack.c.b16 %v3296, %v3264
        %v4865 = vpack.c.b16 %v3297, %v3265
        %v4866 = vpack.c.b16 %v3298, %v3266
        %v4867 = vpack.c.b16 %v3299, %v3267
        %v4868 = vpack.c.b16 %v3300, %v3268
        %v4869 = vpack.c.b16 %v3301, %v3269
        %v4870 = vpack.c.b16 %v3302, %v3270
        %v4871 = vpack.c.b16 %v3303, %v3271
        %v4872 = vpack.c.b16 %v3304, %v3272
        %v4873 = vpack.c.b16 %v3305, %v3273
        %v4874 = vpack.c.b16 %v3306, %v3274
        %v4875 = vpack.c.b16 %v3307, %v3275
        %v4876 = vpack.c.b16 %v3308, %v3276
        %v4877 = vpack.c.b16 %v3309, %v3277
        %v4878 = vpack.c.b16 %v3310, %v3278
        %v4879 = vpack.c.b16 %v3311, %v3279
        %v4880 = vpack.c.b16 %v3312, %v3280
        %v4881 = vpack.c.b16 %v3313, %v3281
        %v4882 = vpack.c.b16 %v3314, %v3282
        %v4883 = vpack.c.b16 %v3315, %v3283
        %v4884 = vpack.c.b16 %v3316, %v3284
        %v4885 = vpack.c.b16 %v3317, %v3285
        %v4886 = vpack.c.b16 %v3318, %v3286
        %v4887 = vpack.c.b16 %v3319, %v3287
        %v4888 = vpack.c.b16 %v3352, %v3320
        %v4889 = vpack.c.b16 %v3353, %v3321
        %v4890 = vpack.c.b16 %v3354, %v3322
        %v4891 = vpack.c.b16 %v3355, %v3323
        %v4892 = vpack.c.b16 %v3356, %v3324
        %v4893 = vpack.c.b16 %v3357, %v3325
        %v4894 = vpack.c.b16 %v3358, %v3326
        %v4895 = vpack.c.b16 %v3359, %v3327
        %v4896 = vpack.c.b16 %v3360, %v3328
        %v4897 = vpack.c.b16 %v3361, %v3329
        %v4898 = vpack.c.b16 %v3362, %v3330
        %v4899 = vpack.c.b16 %v3363, %v3331
        %v4900 = vpack.c.b16 %v3364, %v3332
        %v4901 = vpack.c.b16 %v3365, %v3333
        %v4902 = vpack.c.b16 %v3366, %v3334
        %v4903 = vpack.c.b16 %v3367, %v3335
        %v4904 = vpack.c.b16 %v3368, %v3336
        %v4905 = vpack.c.b16 %v3369, %v3337
        %v4906 = vpack.c.b16 %v3370, %v3338
        %v4907 = vpack.c.b16 %v3371, %v3339
        %v4908 = vpack.c.b16 %v3372, %v3340
        %v4909 = vpack.c.b16 %v3373, %v3341
        %v4910 = vpack.c.b16 %v3374, %v3342
        %v4911 = vpack.c.b16 %v3375, %v3343
        %v4912 = vpack.c.b16 %v3376, %v3344
        %v4913 = vpack.c.b16 %v3377, %v3345
        %v4914 = vpack.c.b16 %v3378, %v3346
        %v4915 = vpack.c.b16 %v3379, %v3347
        %v4916 = vpack.c.b16 %v3380, %v3348
        %v4917 = vpack.c.b16 %v3381, %v3349
        %v4918 = vpack.c.b16 %v3382, %v3350
        %v4919 = vpack.c.b16 %v3383, %v3351
        %v4920 = vpack.c.b16 %v3416, %v3384
        %v4921 = vpack.c.b16 %v3417, %v3385
        %v4922 = vpack.c.b16 %v3418, %v3386
        %v4923 = vpack.c.b16 %v3419, %v3387
        %v4924 = vpack.c.b16 %v3420, %v3388
        %v4925 = vpack.c.b16 %v3421, %v3389
        %v4926 = vpack.c.b16 %v3422, %v3390
        %v4927 = vpack.c.b16 %v3423, %v3391
        %v4928 = vpack.c.b16 %v3424, %v3392
        %v4929 = vpack.c.b16 %v3425, %v3393
        %v4930 = vpack.c.b16 %v3426, %v3394
        %v4931 = vpack.c.b16 %v3427, %v3395
        %v4932 = vpack.c.b16 %v3428, %v3396
        %v4933 = vpack.c.b16 %v3429, %v3397
        %v4934 = vpack.c.b16 %v3430, %v3398
        %v4935 = vpack.c.b16 %v3431, %v3399
        %v4936 = vpack.c.b16 %v3432, %v3400
        %v4937 = vpack.c.b16 %v3433, %v3401
        %v4938 = vpack.c.b16 %v3434, %v3402
        %v4939 = vpack.c.b16 %v3435, %v3403
        %v4940 = vpack.c.b16 %v3436, %v3404
        %v4941 = vpack.c.b16 %v3437, %v3405
        %v4942 = vpack.c.b16 %v3438, %v3406
        %v4943 = vpack.c.b16 %v3439, %v3407
        %v4944 = vpack.c.b16 %v3440, %v3408
        %v4945 = vpack.c.b16 %v3441, %v3409
        %v4946 = vpack.c.b16 %v3442, %v3410
        %v4947 = vpack.c.b16 %v3443, %v3411
        %v4948 = vpack.c.b16 %v3444, %v3412
        %v4949 = vpack.c.b16 %v3445, %v3413
        %v4950 = vpack.c.b16 %v3446, %v3414
        %v4951 = vpack.c.b16 %v3447, %v3415
        %v4952 = vpack.c.b16 %v3480, %v3448
        %v4953 = vpack.c.b16 %v3481, %v3449
        %v4954 = vpack.c.b16 %v3482, %v3450
        %v4955 = vpack.c.b16 %v3483, %v3451
        %v4956 = vpack.c.b16 %v3484, %v3452
        %v4957 = vpack.c.b16 %v3485, %v3453
        %v4958 = vpack.c.b16 %v3486, %v3454
        %v4959 = vpack.c.b16 %v3487, %v3455
        %v4960 = vpack.c.b16 %v3488, %v3456
        %v4961 = vpack.c.b16 %v3489, %v3457
        %v4962 = vpack.c.b16 %v3490, %v3458
        %v4963 = vpack.c.b16 %v3491, %v3459
        %v4964 = vpack.c.b16 %v3492, %v3460
        %v4965 = vpack.c.b16 %v3493, %v3461
        %v4966 = vpack.c.b16 %v3494, %v3462
        %v4967 = vpack.c.b16 %v3495, %v3463
        %v4968 = vpack.c.b16 %v3496, %v3464
        %v4969 = vpack.c.b16 %v3497, %v3465
        %v4970 = vpack.c.b16 %v3498, %v3466
        %v4971 = vpack.c.b16 %v3499, %v3467
        %v4972 = vpack.c.b16 %v3500, %v3468
        %v4973 = vpack.c.b16 %v3501, %v3469
        %v4974 = vpack.c.b16 %v3502, %v3470
        %v4975 = vpack.c.b16 %v3503, %v3471
        %v4976 = vpack.c.b16 %v3504, %v3472
        %v4977 = vpack.c.b16 %v3505, %v3473
        %v4978 = vpack.c.b16 %v3506, %v3474
        %v4979 = vpack.c.b16 %v3507, %v3475
        %v4980 = vpack.c.b16 %v3508, %v3476
        %v4981 = vpack.c.b16 %v3509, %v3477
        %v4982 = vpack.c.b16 %v3510, %v3478
        %v4983 = vpack.c.b16 %v3511, %v3479
        %v4984 = vpack.c.b16 %v3544, %v3512
        %v4985 = vpack.c.b16 %v3545, %v3513
        %v4986 = vpack.c.b16 %v3546, %v3514
        %v4987 = vpack.c.b16 %v3547, %v3515
        %v4988 = vpack.c.b16 %v3548, %v3516
        %v4989 = vpack.c.b16 %v3549, %v3517
        %v4990 = vpack.c.b16 %v3550, %v3518
        %v4991 = vpack.c.b16 %v3551, %v3519
        %v4992 = vpack.c.b16 %v3552, %v3520
        %v4993 = vpack.c.b16 %v3553, %v3521
        %v4994 = vpack.c.b16 %v3554, %v3522
        %v4995 = vpack.c.b16 %v3555, %v3523
        %v4996 = vpack.c.b16 %v3556, %v3524
        %v4997 = vpack.c.b16 %v3557, %v3525
        %v4998 = vpack.c.b16 %v3558, %v3526
        %v4999 = vpack.c.b16 %v3559, %v3527
        %v5000 = vpack.c.b16 %v3560, %v3528
        %v5001 = vpack.c.b16 %v3561, %v3529
        %v5002 = vpack.c.b16 %v3562, %v3530
        %v5003 = vpack.c.b16 %v3563, %v3531
        %v5004 = vpack.c.b16 %v3564, %v3532
        %v5005 = vpack.c.b16 %v3565, %v3533
        %v5006 = vpack.c.b16 %v3566, %v3534
        %v5007 = vpack.c.b16 %v3567, %v3535
        %v5008 = vpack.c.b16 %v3568, %v3536
        %v5009 = vpack.c.b16 %v3569, %v3537
        %v5010 = vpack.c.b16 %v3570, %v3538
        %v5011 = vpack.c.b16 %v3571, %v3539
        %v5012 = vpack.c.b16 %v3572, %v3540
        %v5013 = vpack.c.b16 %v3573, %v3541
        %v5014 = vpack.c.b16 %v3574, %v3542
        %v5015 = vpack.c.b16 %v3575, %v3543
        %v5016 = vpack.c.b16 %v3608, %v3576
        %v5017 = vpack.c.b16 %v3609, %v3577
        %v5018 = vpack.c.b16 %v3610, %v3578
        %v5019 = vpack.c.b16 %v3611, %v3579
        %v5020 = vpack.c.b16 %v3612, %v3580
        %v5021 = vpack.c.b16 %v3613, %v3581
        %v5022 = vpack.c.b16 %v3614, %v3582
        %v5023 = vpack.c.b16 %v3615, %v3583
        %v5024 = vpack.c.b16 %v3616, %v3584
        %v5025 = vpack.c.b16 %v3617, %v3585
        %v5026 = vpack.c.b16 %v3618, %v3586
        %v5027 = vpack.c.b16 %v3619, %v3587
        %v5028 = vpack.c.b16 %v3620, %v3588
        %v5029 = vpack.c.b16 %v3621, %v3589
        %v5030 = vpack.c.b16 %v3622, %v3590
        %v5031 = vpack.c.b16 %v3623, %v3591
        %v5032 = vpack.c.b16 %v3624, %v3592
        %v5033 = vpack.c.b16 %v3625, %v3593
        %v5034 = vpack.c.b16 %v3626, %v3594
        %v5035 = vpack.c.b16 %v3627, %v3595
        %v5036 = vpack.c.b16 %v3628, %v3596
        %v5037 = vpack.c.b16 %v3629, %v3597
        %v5038 = vpack.c.b16 %v3630, %v3598
        %v5039 = vpack.c.b16 %v3631, %v3599
        %v5040 = vpack.c.b16 %v3632, %v3600
        %v5041 = vpack.c.b16 %v3633, %v3601
        %v5042 = vpack.c.b16 %v3634, %v3602
        %v5043 = vpack.c.b16 %v3635, %v3603
        %v5044 = vpack.c.b16 %v3636, %v3604
        %v5045 = vpack.c.b16 %v3637, %v3605
        %v5046 = vpack.c.b16 %v3638, %v3606
        %v5047 = vpack.c.b16 %v3639, %v3607
        %v5048 = vpack.c.b16 %v3672, %v3640
        %v5049 = vpack.c.b16 %v3673, %v3641
        %v5050 = vpack.c.b16 %v3674, %v3642
        %v5051 = vpack.c.b16 %v3675, %v3643
        %v5052 = vpack.c.b16 %v3676, %v3644
        %v5053 = vpack.c.b16 %v3677, %v3645
        %v5054 = vpack.c.b16 %v3678, %v3646
        %v5055 = vpack.c.b16 %v3679, %v3647
        %v5056 = vpack.c.b16 %v3680, %v3648
        %v5057 = vpack.c.b16 %v3681, %v3649
        %v5058 = vpack.c.b16 %v3682, %v3650
        %v5059 = vpack.c.b16 %v3683, %v3651
        %v5060 = vpack.c.b16 %v3684, %v3652
        %v5061 = vpack.c.b16 %v3685, %v3653
        %v5062 = vpack.c.b16 %v3686, %v3654
        %v5063 = vpack.c.b16 %v3687, %v3655
        %v5064 = vpack.c.b16 %v3688, %v3656
        %v5065 = vpack.c.b16 %v3689, %v3657
        %v5066 = vpack.c.b16 %v3690, %v3658
        %v5067 = vpack.c.b16 %v3691, %v3659
        %v5068 = vpack.c.b16 %v3692, %v3660
        %v5069 = vpack.c.b16 %v3693, %v3661
        %v5070 = vpack.c.b16 %v3694, %v3662
        %v5071 = vpack.c.b16 %v3695, %v3663
        %v5072 = vpack.c.b16 %v3696, %v3664
        %v5073 = vpack.c.b16 %v3697, %v3665
        %v5074 = vpack.c.b16 %v3698, %v3666
        %v5075 = vpack.c.b16 %v3699, %v3667
        %v5076 = vpack.c.b16 %v3700, %v3668
        %v5077 = vpack.c.b16 %v3701, %v3669
        %v5078 = vpack.c.b16 %v3702, %v3670
        %v5079 = vpack.c.b16 %v3703, %v3671
        %v5080 = vpack.c.b16 %v3736, %v3704
        %v5081 = vpack.c.b16 %v3737, %v3705
        %v5082 = vpack.c.b16 %v3738, %v3706
        %v5083 = vpack.c.b16 %v3739, %v3707
        %v5084 = vpack.c.b16 %v3740, %v3708
        %v5085 = vpack.c.b16 %v3741, %v3709
        %v5086 = vpack.c.b16 %v3742, %v3710
        %v5087 = vpack.c.b16 %v3743, %v3711
        %v5088 = vpack.c.b16 %v3744, %v3712
        %v5089 = vpack.c.b16 %v3745, %v3713
        %v5090 = vpack.c.b16 %v3746, %v3714
        %v5091 = vpack.c.b16 %v3747, %v3715
        %v5092 = vpack.c.b16 %v3748, %v3716
        %v5093 = vpack.c.b16 %v3749, %v3717
        %v5094 = vpack.c.b16 %v3750, %v3718
        %v5095 = vpack.c.b16 %v3751, %v3719
        %v5096 = vpack.c.b16 %v3752, %v3720
        %v5097 = vpack.c.b16 %v3753, %v3721
        %v5098 = vpack.c.b16 %v3754, %v3722
        %v5099 = vpack.c.b16 %v3755, %v3723
        %v5100 = vpack.c.b16 %v3756, %v3724
        %v5101 = vpack.c.b16 %v3757, %v3725
        %v5102 = vpack.c.b16 %v3758, %v3726
        %v5103 = vpack.c.b16 %v3759, %v3727
        %v5104 = vpack.c.b16 %v3760, %v3728
        %v5105 = vpack.c.b16 %v3761, %v3729
        %v5106 = vpack.c.b16 %v3762, %v3730
        %v5107 = vpack.c.b16 %v3763, %v3731
        %v5108 = vpack.c.b16 %v3764, %v3732
        %v5109 = vpack.c.b16 %v3765, %v3733
        %v5110 = vpack.c.b16 %v3766, %v3734
        %v5111 = vpack.c.b16 %v3767, %v3735
        %v5112 = vpack.c.b16 %v3800, %v3768
        %v5113 = vpack.c.b16 %v3801, %v3769
        %v5114 = vpack.c.b16 %v3802, %v3770
        %v5115 = vpack.c.b16 %v3803, %v3771
        %v5116 = vpack.c.b16 %v3804, %v3772
        %v5117 = vpack.c.b16 %v3805, %v3773
        %v5118 = vpack.c.b16 %v3806, %v3774
        %v5119 = vpack.c.b16 %v3807, %v3775
        %v5120 = vpack.c.b16 %v3808, %v3776
        %v5121 = vpack.c.b16 %v3809, %v3777
        %v5122 = vpack.c.b16 %v3810, %v3778
        %v5123 = vpack.c.b16 %v3811, %v3779
        %v5124 = vpack.c.b16 %v3812, %v3780
        %v5125 = vpack.c.b16 %v3813, %v3781
        %v5126 = vpack.c.b16 %v3814, %v3782
        %v5127 = vpack.c.b16 %v3815, %v3783
        %v5128 = vpack.c.b16 %v3816, %v3784
        %v5129 = vpack.c.b16 %v3817, %v3785
        %v5130 = vpack.c.b16 %v3818, %v3786
        %v5131 = vpack.c.b16 %v3819, %v3787
        %v5132 = vpack.c.b16 %v3820, %v3788
        %v5133 = vpack.c.b16 %v3821, %v3789
        %v5134 = vpack.c.b16 %v3822, %v3790
        %v5135 = vpack.c.b16 %v3823, %v3791
        %v5136 = vpack.c.b16 %v3824, %v3792
        %v5137 = vpack.c.b16 %v3825, %v3793
        %v5138 = vpack.c.b16 %v3826, %v3794
        %v5139 = vpack.c.b16 %v3827, %v3795
        %v5140 = vpack.c.b16 %v3828, %v3796
        %v5141 = vpack.c.b16 %v3829, %v3797
        %v5142 = vpack.c.b16 %v3830, %v3798
        %v5143 = vpack.c.b16 %v3831, %v3799
        %v5144 = vpack.c.b16 %v3864, %v3832
        %v5145 = vpack.c.b16 %v3865, %v3833
        %v5146 = vpack.c.b16 %v3866, %v3834
        %v5147 = vpack.c.b16 %v3867, %v3835
        %v5148 = vpack.c.b16 %v3868, %v3836
        %v5149 = vpack.c.b16 %v3869, %v3837
        %v5150 = vpack.c.b16 %v3870, %v3838
        %v5151 = vpack.c.b16 %v3871, %v3839
        %v5152 = vpack.c.b16 %v3872, %v3840
        %v5153 = vpack.c.b16 %v3873, %v3841
        %v5154 = vpack.c.b16 %v3874, %v3842
        %v5155 = vpack.c.b16 %v3875, %v3843
        %v5156 = vpack.c.b16 %v3876, %v3844
        %v5157 = vpack.c.b16 %v3877, %v3845
        %v5158 = vpack.c.b16 %v3878, %v3846
        %v5159 = vpack.c.b16 %v3879, %v3847
        %v5160 = vpack.c.b16 %v3880, %v3848
        %v5161 = vpack.c.b16 %v3881, %v3849
        %v5162 = vpack.c.b16 %v3882, %v3850
        %v5163 = vpack.c.b16 %v3883, %v3851
        %v5164 = vpack.c.b16 %v3884, %v3852
        %v5165 = vpack.c.b16 %v3885, %v3853
        %v5166 = vpack.c.b16 %v3886, %v3854
        %v5167 = vpack.c.b16 %v3887, %v3855
        %v5168 = vpack.c.b16 %v3888, %v3856
        %v5169 = vpack.c.b16 %v3889, %v3857
        %v5170 = vpack.c.b16 %v3890, %v3858
        %v5171 = vpack.c.b16 %v3891, %v3859
        %v5172 = vpack.c.b16 %v3892, %v3860
        %v5173 = vpack.c.b16 %v3893, %v3861
        %v5174 = vpack.c.b16 %v3894, %v3862
        %v5175 = vpack.c.b16 %v3895, %v3863
        %v5176 = vpack.c.b16 %v3928, %v3896
        %v5177 = vpack.c.b16 %v3929, %v3897
        %v5178 = vpack.c.b16 %v3930, %v3898
        %v5179 = vpack.c.b16 %v3931, %v3899
        %v5180 = vpack.c.b16 %v3932, %v3900
        %v5181 = vpack.c.b16 %v3933, %v3901
        %v5182 = vpack.c.b16 %v3934, %v3902
        %v5183 = vpack.c.b16 %v3935, %v3903
        %v5184 = vpack.c.b16 %v3936, %v3904
        %v5185 = vpack.c.b16 %v3937, %v3905
        %v5186 = vpack.c.b16 %v3938, %v3906
        %v5187 = vpack.c.b16 %v3939, %v3907
        %v5188 = vpack.c.b16 %v3940, %v3908
        %v5189 = vpack.c.b16 %v3941, %v3909
        %v5190 = vpack.c.b16 %v3942, %v3910
        %v5191 = vpack.c.b16 %v3943, %v3911
        %v5192 = vpack.c.b16 %v3944, %v3912
        %v5193 = vpack.c.b16 %v3945, %v3913
        %v5194 = vpack.c.b16 %v3946, %v3914
        %v5195 = vpack.c.b16 %v3947, %v3915
        %v5196 = vpack.c.b16 %v3948, %v3916
        %v5197 = vpack.c.b16 %v3949, %v3917
        %v5198 = vpack.c.b16 %v3950, %v3918
        %v5199 = vpack.c.b16 %v3951, %v3919
        %v5200 = vpack.c.b16 %v3952, %v3920
        %v5201 = vpack.c.b16 %v3953, %v3921
        %v5202 = vpack.c.b16 %v3954, %v3922
        %v5203 = vpack.c.b16 %v3955, %v3923
        %v5204 = vpack.c.b16 %v3956, %v3924
        %v5205 = vpack.c.b16 %v3957, %v3925
        %v5206 = vpack.c.b16 %v3958, %v3926
        %v5207 = vpack.c.b16 %v3959, %v3927
        %v5208 = vpack.c.b16 %v3992, %v3960
        %v5209 = vpack.c.b16 %v3993, %v3961
        %v5210 = vpack.c.b16 %v3994, %v3962
        %v5211 = vpack.c.b16 %v3995, %v3963
        %v5212 = vpack.c.b16 %v3996, %v3964
        %v5213 = vpack.c.b16 %v3997, %v3965
        %v5214 = vpack.c.b16 %v3998, %v3966
        %v5215 = vpack.c.b16 %v3999, %v3967
        %v5216 = vpack.c.b16 %v4000, %v3968
        %v5217 = vpack.c.b16 %v4001, %v3969
        %v5218 = vpack.c.b16 %v4002, %v3970
        %v5219 = vpack.c.b16 %v4003, %v3971
        %v5220 = vpack.c.b16 %v4004, %v3972
        %v5221 = vpack.c.b16 %v4005, %v3973
        %v5222 = vpack.c.b16 %v4006, %v3974
        %v5223 = vpack.c.b16 %v4007, %v3975
        %v5224 = vpack.c.b16 %v4008, %v3976
        %v5225 = vpack.c.b16 %v4009, %v3977
        %v5226 = vpack.c.b16 %v4010, %v3978
        %v5227 = vpack.c.b16 %v4011, %v3979
        %v5228 = vpack.c.b16 %v4012, %v3980
        %v5229 = vpack.c.b16 %v4013, %v3981
        %v5230 = vpack.c.b16 %v4014, %v3982
        %v5231 = vpack.c.b16 %v4015, %v3983
        %v5232 = vpack.c.b16 %v4016, %v3984
        %v5233 = vpack.c.b16 %v4017, %v3985
        %v5234 = vpack.c.b16 %v4018, %v3986
        %v5235 = vpack.c.b16 %v4019, %v3987
        %v5236 = vpack.c.b16 %v4020, %v3988
        %v5237 = vpack.c.b16 %v4021, %v3989
        %v5238 = vpack.c.b16 %v4022, %v3990
        %v5239 = vpack.c.b16 %v4023, %v3991
        %v5240 = vpack.c.b16 %v4056, %v4024
        %v5241 = vpack.c.b16 %v4057, %v4025
        %v5242 = vpack.c.b16 %v4058, %v4026
        %v5243 = vpack.c.b16 %v4059, %v4027
        %v5244 = vpack.c.b16 %v4060, %v4028
        %v5245 = vpack.c.b16 %v4061, %v4029
        %v5246 = vpack.c.b16 %v4062, %v4030
        %v5247 = vpack.c.b16 %v4063, %v4031
        %v5248 = vpack.c.b16 %v4064, %v4032
        %v5249 = vpack.c.b16 %v4065, %v4033
        %v5250 = vpack.c.b16 %v4066, %v4034
        %v5251 = vpack.c.b16 %v4067, %v4035
        %v5252 = vpack.c.b16 %v4068, %v4036
        %v5253 = vpack.c.b16 %v4069, %v4037
        %v5254 = vpack.c.b16 %v4070, %v4038
        %v5255 = vpack.c.b16 %v4071, %v4039
        %v5256 = vpack.c.b16 %v4072, %v4040
        %v5257 = vpack.c.b16 %v4073, %v4041
        %v5258 = vpack.c.b16 %v4074, %v4042
        %v5259 = vpack.c.b16 %v4075, %v4043
        %v5260 = vpack.c.b16 %v4076, %v4044
        %v5261 = vpack.c.b16 %v4077, %v4045
        %v5262 = vpack.c.b16 %v4078, %v4046
        %v5263 = vpack.c.b16 %v4079, %v4047
        %v5264 = vpack.c.b16 %v4080, %v4048
        %v5265 = vpack.c.b16 %v4081, %v4049
        %v5266 = vpack.c.b16 %v4082, %v4050
        %v5267 = vpack.c.b16 %v4083, %v4051
        %v5268 = vpack.c.b16 %v4084, %v4052
        %v5269 = vpack.c.b16 %v4085, %v4053
        %v5270 = vpack.c.b16 %v4086, %v4054
        %v5271 = vpack.c.b16 %v4087, %v4055
        %v5272 = vpack.c.b16 %v4120, %v4088
        %v5273 = vpack.c.b16 %v4121, %v4089
        %v5274 = vpack.c.b16 %v4122, %v4090
        %v5275 = vpack.c.b16 %v4123, %v4091
        %v5276 = vpack.c.b16 %v4124, %v4092
        %v5277 = vpack.c.b16 %v4125, %v4093
        %v5278 = vpack.c.b16 %v4126, %v4094
        %v5279 = vpack.c.b16 %v4127, %v4095
        %v5280 = vpack.c.b16 %v4128, %v4096
        %v5281 = vpack.c.b16 %v4129, %v4097
        %v5282 = vpack.c.b16 %v4130, %v4098
        %v5283 = vpack.c.b16 %v4131, %v4099
        %v5284 = vpack.c.b16 %v4132, %v4100
        %v5285 = vpack.c.b16 %v4133, %v4101
        %v5286 = vpack.c.b16 %v4134, %v4102
        %v5287 = vpack.c.b16 %v4135, %v4103
        %v5288 = vpack.c.b16 %v4136, %v4104
        %v5289 = vpack.c.b16 %v4137, %v4105
        %v5290 = vpack.c.b16 %v4138, %v4106
        %v5291 = vpack.c.b16 %v4139, %v4107
        %v5292 = vpack.c.b16 %v4140, %v4108
        %v5293 = vpack.c.b16 %v4141, %v4109
        %v5294 = vpack.c.b16 %v4142, %v4110
        %v5295 = vpack.c.b16 %v4143, %v4111
        %v5296 = vpack.c.b16 %v4144, %v4112
        %v5297 = vpack.c.b16 %v4145, %v4113
        %v5298 = vpack.c.b16 %v4146, %v4114
        %v5299 = vpack.c.b16 %v4147, %v4115
        %v5300 = vpack.c.b16 %v4148, %v4116
        %v5301 = vpack.c.b16 %v4149, %v4117
        %v5302 = vpack.c.b16 %v4150, %v4118
        %v5303 = vpack.c.b16 %v4151, %v4119
        %v5304 = vpack.c.b16 %v4184, %v4152
        %v5305 = vpack.c.b16 %v4185, %v4153
        %v5306 = vpack.c.b16 %v4186, %v4154
        %v5307 = vpack.c.b16 %v4187, %v4155
        %v5308 = vpack.c.b16 %v4188, %v4156
        %v5309 = vpack.c.b16 %v4189, %v4157
        %v5310 = vpack.c.b16 %v4190, %v4158
        %v5311 = vpack.c.b16 %v4191, %v4159
        %v5312 = vpack.c.b16 %v4192, %v4160
        %v5313 = vpack.c.b16 %v4193, %v4161
        %v5314 = vpack.c.b16 %v4194, %v4162
        %v5315 = vpack.c.b16 %v4195, %v4163
        %v5316 = vpack.c.b16 %v4196, %v4164
        %v5317 = vpack.c.b16 %v4197, %v4165
        %v5318 = vpack.c.b16 %v4198, %v4166
        %v5319 = vpack.c.b16 %v4199, %v4167
        %v5320 = vpack.c.b16 %v4200, %v4168
        %v5321 = vpack.c.b16 %v4201, %v4169
        %v5322 = vpack.c.b16 %v4202, %v4170
        %v5323 = vpack.c.b16 %v4203, %v4171
        %v5324 = vpack.c.b16 %v4204, %v4172
        %v5325 = vpack.c.b16 %v4205, %v4173
        %v5326 = vpack.c.b16 %v4206, %v4174
        %v5327 = vpack.c.b16 %v4207, %v4175
        %v5328 = vpack.c.b16 %v4208, %v4176
        %v5329 = vpack.c.b16 %v4209, %v4177
        %v5330 = vpack.c.b16 %v4210, %v4178
        %v5331 = vpack.c.b16 %v4211, %v4179
        %v5332 = vpack.c.b16 %v4212, %v4180
        %v5333 = vpack.c.b16 %v4213, %v4181
        %v5334 = vpack.c.b16 %v4214, %v4182
        %v5335 = vpack.c.b16 %v4215, %v4183
        %v5336 = vpack.c.b16 %v4248, %v4216
        %v5337 = vpack.c.b16 %v4249, %v4217
        %v5338 = vpack.c.b16 %v4250, %v4218
        %v5339 = vpack.c.b16 %v4251, %v4219
        %v5340 = vpack.c.b16 %v4252, %v4220
        %v5341 = vpack.c.b16 %v4253, %v4221
        %v5342 = vpack.c.b16 %v4254, %v4222
        %v5343 = vpack.c.b16 %v4255, %v4223
        %v5344 = vpack.c.b16 %v4256, %v4224
        %v5345 = vpack.c.b16 %v4257, %v4225
        %v5346 = vpack.c.b16 %v4258, %v4226
        %v5347 = vpack.c.b16 %v4259, %v4227
        %v5348 = vpack.c.b16 %v4260, %v4228
        %v5349 = vpack.c.b16 %v4261, %v4229
        %v5350 = vpack.c.b16 %v4262, %v4230
        %v5351 = vpack.c.b16 %v4263, %v4231
        %v5352 = vpack.c.b16 %v4264, %v4232
        %v5353 = vpack.c.b16 %v4265, %v4233
        %v5354 = vpack.c.b16 %v4266, %v4234
        %v5355 = vpack.c.b16 %v4267, %v4235
        %v5356 = vpack.c.b16 %v4268, %v4236
        %v5357 = vpack.c.b16 %v4269, %v4237
        %v5358 = vpack.c.b16 %v4270, %v4238
        %v5359 = vpack.c.b16 %v4271, %v4239
        %v5360 = vpack.c.b16 %v4272, %v4240
        %v5361 = vpack.c.b16 %v4273, %v4241
        %v5362 = vpack.c.b16 %v4274, %v4242
        %v5363 = vpack.c.b16 %v4275, %v4243
        %v5364 = vpack.c.b16 %v4276, %v4244
        %v5365 = vpack.c.b16 %v4277, %v4245
        %v5366 = vpack.c.b16 %v4278, %v4246
        %v5367 = vpack.c.b16 %v4279, %v4247
        %v5368 = vpack.c.b16 %v4312, %v4280
        %v5369 = vpack.c.b16 %v4313, %v4281
        %v5370 = vpack.c.b16 %v4314, %v4282
        %v5371 = vpack.c.b16 %v4315, %v4283
        %v5372 = vpack.c.b16 %v4316, %v4284
        %v5373 = vpack.c.b16 %v4317, %v4285
        %v5374 = vpack.c.b16 %v4318, %v4286
        %v5375 = vpack.c.b16 %v4319, %v4287
        %v5376 = vpack.c.b16 %v4320, %v4288
        %v5377 = vpack.c.b16 %v4321, %v4289
        %v5378 = vpack.c.b16 %v4322, %v4290
        %v5379 = vpack.c.b16 %v4323, %v4291
        %v5380 = vpack.c.b16 %v4324, %v4292
        %v5381 = vpack.c.b16 %v4325, %v4293
        %v5382 = vpack.c.b16 %v4326, %v4294
        %v5383 = vpack.c.b16 %v4327, %v4295
        %v5384 = vpack.c.b16 %v4328, %v4296
        %v5385 = vpack.c.b16 %v4329, %v4297
        %v5386 = vpack.c.b16 %v4330, %v4298
        %v5387 = vpack.c.b16 %v4331, %v4299
        %v5388 = vpack.c.b16 %v4332, %v4300
        %v5389 = vpack.c.b16 %v4333, %v4301
        %v5390 = vpack.c.b16 %v4334, %v4302
        %v5391 = vpack.c.b16 %v4335, %v4303
        %v5392 = vpack.c.b16 %v4336, %v4304
        %v5393 = vpack.c.b16 %v4337, %v4305
        %v5394 = vpack.c.b16 %v4338, %v4306
        %v5395 = vpack.c.b16 %v4339, %v4307
        %v5396 = vpack.c.b16 %v4340, %v4308
        %v5397 = vpack.c.b16 %v4341, %v4309
        %v5398 = vpack.c.b16 %v4342, %v4310
        %v5399 = vpack.c.b16 %v4343, %v4311
        %v5400 = vpack.c.b16 %v4376, %v4344
        %v5401 = vpack.c.b16 %v4377, %v4345
        %v5402 = vpack.c.b16 %v4378, %v4346
        %v5403 = vpack.c.b16 %v4379, %v4347
        %v5404 = vpack.c.b16 %v4380, %v4348
        %v5405 = vpack.c.b16 %v4381, %v4349
        %v5406 = vpack.c.b16 %v4382, %v4350
        %v5407 = vpack.c.b16 %v4383, %v4351
        %v5408 = vpack.c.b16 %v4384, %v4352
        %v5409 = vpack.c.b16 %v4385, %v4353
        %v5410 = vpack.c.b16 %v4386, %v4354
        %v5411 = vpack.c.b16 %v4387, %v4355
        %v5412 = vpack.c.b16 %v4388, %v4356
        %v5413 = vpack.c.b16 %v4389, %v4357
        %v5414 = vpack.c.b16 %v4390, %v4358
        %v5415 = vpack.c.b16 %v4391, %v4359
        %v5416 = vpack.c.b16 %v4392, %v4360
        %v5417 = vpack.c.b16 %v4393, %v4361
        %v5418 = vpack.c.b16 %v4394, %v4362
        %v5419 = vpack.c.b16 %v4395, %v4363
        %v5420 = vpack.c.b16 %v4396, %v4364
        %v5421 = vpack.c.b16 %v4397, %v4365
        %v5422 = vpack.c.b16 %v4398, %v4366
        %v5423 = vpack.c.b16 %v4399, %v4367
        %v5424 = vpack.c.b16 %v4400, %v4368
        %v5425 = vpack.c.b16 %v4401, %v4369
        %v5426 = vpack.c.b16 %v4402, %v4370
        %v5427 = vpack.c.b16 %v4403, %v4371
        %v5428 = vpack.c.b16 %v4404, %v4372
        %v5429 = vpack.c.b16 %v4405, %v4373
        %v5430 = vpack.c.b16 %v4406, %v4374
        %v5431 = vpack.c.b16 %v4407, %v4375
        %6456 = vmatprep.subr.bf16.mxu0 %v4633
        %6457 = vmatpush1.bf16.msra.mxu0 %v4632
        %6458 = vmatprep.subr.bf16.mxu0 %v4601
        %6459 = vmatpush1.bf16.msra.mxu0 %v4600
        %6460 = vmatprep.subr.bf16.mxu0 %v4569
        %6461 = vmatpush1.bf16.msra.mxu0 %v4568
        %6462 = vmatprep.subr.bf16.mxu0 %v4537
        %6463 = vmatpush1.bf16.msra.mxu0 %v4536
        %6464 = vmatprep.subr.bf16.mxu0 %v4505
        %6465 = vmatpush1.bf16.msra.mxu0 %v4504
        %6466 = vmatprep.subr.bf16.mxu0 %v4473
        %6467 = vmatpush1.bf16.msra.mxu0 %v4472
        %6468 = vmatprep.subr.bf16.mxu0 %v4441
        %6469 = vmatpush1.bf16.msra.mxu0 %v4440
        %6470 = vmatprep.subr.bf16.mxu0 %v4409
        %6471 = vmatpush1.bf16.msra.mxu0 %v4408
        %6472 = vmatprep.subr.bf16.mxu0 %v4889
        %6473 = vmatpush2.bf16.msra.mxu0 %v4888
        %6474 = vmatprep.subr.bf16.mxu0 %v4857
        %6475 = vmatpush2.bf16.msra.mxu0 %v4856
        %6476 = vmatprep.subr.bf16.mxu0 %v4825
        %6477 = vmatpush2.bf16.msra.mxu0 %v4824
        %6478 = vmatprep.subr.bf16.mxu0 %v4793
        %6479 = vmatpush2.bf16.msra.mxu0 %v4792
        %6480 = vmatprep.subr.bf16.mxu0 %v4761
        %6481 = vmatpush2.bf16.msra.mxu0 %v4760
        %6482 = vmatprep.subr.bf16.mxu0 %v4729
        %6483 = vmatpush2.bf16.msra.mxu0 %v4728
        %6484 = vmatprep.subr.bf16.mxu0 %v4697
        %6485 = vmatpush2.bf16.msra.mxu0 %v4696
        %6486 = vmatprep.subr.bf16.mxu0 %v4665
        %6487 = vmatpush2.bf16.msra.mxu0 %v4664
        %6488 = vmatprep.mubr.bf16.mxu0 %v1329
        %6489 = vmatmul.mubr.bf16.gmra.mxu0 %v1328
        %v6490 = vpop.f32.mrf.mxu0
        %v6491 = vadd.f32 0.0, %v6490
        %v6492 = vpop.f32.mrf.mxu0
        %v6493 = vadd.f32 0.0, %v6492
        %v6494 = vpop.f32.mrf.mxu0
        %v6495 = vpop.f32.mrf.mxu0
        %6496 = vdwg.mxu0
        %6497 = vmatprep.subr.bf16.mxu0 %v5145
        %6498 = vmatpush1.bf16.msra.mxu0 %v5144
        %6499 = vmatprep.subr.bf16.mxu0 %v5113
        %6500 = vmatpush1.bf16.msra.mxu0 %v5112
        %6501 = vmatprep.subr.bf16.mxu0 %v5081
        %6502 = vmatpush1.bf16.msra.mxu0 %v5080
        %6503 = vmatprep.subr.bf16.mxu0 %v5049
        %6504 = vmatpush1.bf16.msra.mxu0 %v5048
        %6505 = vmatprep.subr.bf16.mxu0 %v5017
        %6506 = vmatpush1.bf16.msra.mxu0 %v5016
        %6507 = vmatprep.subr.bf16.mxu0 %v4985
        %6508 = vmatpush1.bf16.msra.mxu0 %v4984
        %6509 = vmatprep.subr.bf16.mxu0 %v4953
        %6510 = vmatpush1.bf16.msra.mxu0 %v4952
        %6511 = vmatprep.subr.bf16.mxu0 %v4921
        %6512 = vmatpush1.bf16.msra.mxu0 %v4920
        %6513 = vmatprep.subr.bf16.mxu0 %v5401
        %6514 = vmatpush2.bf16.msra.mxu0 %v5400
        %6515 = vmatprep.subr.bf16.mxu0 %v5369
        %6516 = vmatpush2.bf16.msra.mxu0 %v5368
        %6517 = vmatprep.subr.bf16.mxu0 %v5337
        %6518 = vmatpush2.bf16.msra.mxu0 %v5336
        %6519 = vmatprep.subr.bf16.mxu0 %v5305
        %6520 = vmatpush2.bf16.msra.mxu0 %v5304
        %6521 = vmatprep.subr.bf16.mxu0 %v5273
        %6522 = vmatpush2.bf16.msra.mxu0 %v5272
        %6523 = vmatprep.subr.bf16.mxu0 %v5241
        %6524 = vmatpush2.bf16.msra.mxu0 %v5240
        %6525 = vmatprep.subr.bf16.mxu0 %v5209
        %6526 = vmatpush2.bf16.msra.mxu0 %v5208
        %6527 = vmatprep.subr.bf16.mxu0 %v5177
        %6528 = vmatpush2.bf16.msra.mxu0 %v5176
        %6529 = vmatprep.mubr.bf16.mxu0 %v1331
        %6530 = vmatmul.mubr.bf16.gmra.mxu0 %v1330
        %v6531 = vpop.f32.mrf.mxu0
        %v6532 = vadd.f32 %v6491, %v6531
        %v6533 = vpop.f32.mrf.mxu0
        %v6534 = vadd.f32 %v6493, %v6533
        %v6535 = vpop.f32.mrf.mxu0
        %v6536 = vpop.f32.mrf.mxu0
        %6537 = vdwg.mxu0
        %6538 = vmatprep.subr.bf16.mxu0 %v4635
        %6539 = vmatpush1.bf16.msra.mxu0 %v4634
        %6540 = vmatprep.subr.bf16.mxu0 %v4603
        %6541 = vmatpush1.bf16.msra.mxu0 %v4602
        %6542 = vmatprep.subr.bf16.mxu0 %v4571
        %6543 = vmatpush1.bf16.msra.mxu0 %v4570
        %6544 = vmatprep.subr.bf16.mxu0 %v4539
        %6545 = vmatpush1.bf16.msra.mxu0 %v4538
        %6546 = vmatprep.subr.bf16.mxu0 %v4507
        %6547 = vmatpush1.bf16.msra.mxu0 %v4506
        %6548 = vmatprep.subr.bf16.mxu0 %v4475
        %6549 = vmatpush1.bf16.msra.mxu0 %v4474
        %6550 = vmatprep.subr.bf16.mxu0 %v4443
        %6551 = vmatpush1.bf16.msra.mxu0 %v4442
        %6552 = vmatprep.subr.bf16.mxu0 %v4411
        %6553 = vmatpush1.bf16.msra.mxu0 %v4410
        %6554 = vmatprep.subr.bf16.mxu0 %v4891
        %6555 = vmatpush2.bf16.msra.mxu0 %v4890
        %6556 = vmatprep.subr.bf16.mxu0 %v4859
        %6557 = vmatpush2.bf16.msra.mxu0 %v4858
        %6558 = vmatprep.subr.bf16.mxu0 %v4827
        %6559 = vmatpush2.bf16.msra.mxu0 %v4826
        %6560 = vmatprep.subr.bf16.mxu0 %v4795
        %6561 = vmatpush2.bf16.msra.mxu0 %v4794
        %6562 = vmatprep.subr.bf16.mxu0 %v4763
        %6563 = vmatpush2.bf16.msra.mxu0 %v4762
        %6564 = vmatprep.subr.bf16.mxu0 %v4731
        %6565 = vmatpush2.bf16.msra.mxu0 %v4730
        %6566 = vmatprep.subr.bf16.mxu0 %v4699
        %6567 = vmatpush2.bf16.msra.mxu0 %v4698
        %6568 = vmatprep.subr.bf16.mxu0 %v4667
        %6569 = vmatpush2.bf16.msra.mxu0 %v4666
        %6570 = vmatprep.mubr.bf16.mxu0 %v1329
        %6571 = vmatmul.mubr.bf16.gmra.mxu0 %v1328
        %v6572 = vpop.f32.mrf.mxu0
        %v6573 = vadd.f32 0.0, %v6572
        %v6574 = vpop.f32.mrf.mxu0
        %v6575 = vadd.f32 0.0, %v6574
        %v6576 = vpop.f32.mrf.mxu0
        %v6577 = vpop.f32.mrf.mxu0
        %6578 = vdwg.mxu0
        %6579 = vmatprep.subr.bf16.mxu0 %v5147
        %6580 = vmatpush1.bf16.msra.mxu0 %v5146
        %6581 = vmatprep.subr.bf16.mxu0 %v5115
        %6582 = vmatpush1.bf16.msra.mxu0 %v5114
        %6583 = vmatprep.subr.bf16.mxu0 %v5083
        %6584 = vmatpush1.bf16.msra.mxu0 %v5082
        %6585 = vmatprep.subr.bf16.mxu0 %v5051
        %6586 = vmatpush1.bf16.msra.mxu0 %v5050
        %6587 = vmatprep.subr.bf16.mxu0 %v5019
        %6588 = vmatpush1.bf16.msra.mxu0 %v5018
        %6589 = vmatprep.subr.bf16.mxu0 %v4987
        %6590 = vmatpush1.bf16.msra.mxu0 %v4986
        %6591 = vmatprep.subr.bf16.mxu0 %v4955
        %6592 = vmatpush1.bf16.msra.mxu0 %v4954
        %6593 = vmatprep.subr.bf16.mxu0 %v4923
        %6594 = vmatpush1.bf16.msra.mxu0 %v4922
        %6595 = vmatprep.subr.bf16.mxu0 %v5403
        %6596 = vmatpush2.bf16.msra.mxu0 %v5402
        %6597 = vmatprep.subr.bf16.mxu0 %v5371
        %6598 = vmatpush2.bf16.msra.mxu0 %v5370
        %6599 = vmatprep.subr.bf16.mxu0 %v5339
        %6600 = vmatpush2.bf16.msra.mxu0 %v5338
        %6601 = vmatprep.subr.bf16.mxu0 %v5307
        %6602 = vmatpush2.bf16.msra.mxu0 %v5306
        %6603 = vmatprep.subr.bf16.mxu0 %v5275
        %6604 = vmatpush2.bf16.msra.mxu0 %v5274
        %6605 = vmatprep.subr.bf16.mxu0 %v5243
        %6606 = vmatpush2.bf16.msra.mxu0 %v5242
        %6607 = vmatprep.subr.bf16.mxu0 %v5211
        %6608 = vmatpush2.bf16.msra.mxu0 %v5210
        %6609 = vmatprep.subr.bf16.mxu0 %v5179
        %6610 = vmatpush2.bf16.msra.mxu0 %v5178
        %6611 = vmatprep.mubr.bf16.mxu0 %v1331
        %6612 = vmatmul.mubr.bf16.gmra.mxu0 %v1330
        %v6613 = vpop.f32.mrf.mxu0
        %v6614 = vadd.f32 %v6573, %v6613
        %v6615 = vpop.f32.mrf.mxu0
        %v6616 = vadd.f32 %v6575, %v6615
        %v6617 = vpop.f32.mrf.mxu0
        %v6618 = vpop.f32.mrf.mxu0
        %6619 = vdwg.mxu0
        %6620 = vmatprep.subr.bf16.mxu0 %v4637
        %6621 = vmatpush1.bf16.msra.mxu0 %v4636
        %6622 = vmatprep.subr.bf16.mxu0 %v4605
        %6623 = vmatpush1.bf16.msra.mxu0 %v4604
        %6624 = vmatprep.subr.bf16.mxu0 %v4573
        %6625 = vmatpush1.bf16.msra.mxu0 %v4572
        %6626 = vmatprep.subr.bf16.mxu0 %v4541
        %6627 = vmatpush1.bf16.msra.mxu0 %v4540
        %6628 = vmatprep.subr.bf16.mxu0 %v4509
        %6629 = vmatpush1.bf16.msra.mxu0 %v4508
        %6630 = vmatprep.subr.bf16.mxu0 %v4477
        %6631 = vmatpush1.bf16.msra.mxu0 %v4476
        %6632 = vmatprep.subr.bf16.mxu0 %v4445
        %6633 = vmatpush1.bf16.msra.mxu0 %v4444
        %6634 = vmatprep.subr.bf16.mxu0 %v4413
        %6635 = vmatpush1.bf16.msra.mxu0 %v4412
        %6636 = vmatprep.subr.bf16.mxu0 %v4893
        %6637 = vmatpush2.bf16.msra.mxu0 %v4892
        %6638 = vmatprep.subr.bf16.mxu0 %v4861
        %6639 = vmatpush2.bf16.msra.mxu0 %v4860
        %6640 = vmatprep.subr.bf16.mxu0 %v4829
        %6641 = vmatpush2.bf16.msra.mxu0 %v4828
        %6642 = vmatprep.subr.bf16.mxu0 %v4797
        %6643 = vmatpush2.bf16.msra.mxu0 %v4796
        %6644 = vmatprep.subr.bf16.mxu0 %v4765
        %6645 = vmatpush2.bf16.msra.mxu0 %v4764
        %6646 = vmatprep.subr.bf16.mxu0 %v4733
        %6647 = vmatpush2.bf16.msra.mxu0 %v4732
        %6648 = vmatprep.subr.bf16.mxu0 %v4701
        %6649 = vmatpush2.bf16.msra.mxu0 %v4700
        %6650 = vmatprep.subr.bf16.mxu0 %v4669
        %6651 = vmatpush2.bf16.msra.mxu0 %v4668
        %6652 = vmatprep.mubr.bf16.mxu0 %v1329
        %6653 = vmatmul.mubr.bf16.gmra.mxu0 %v1328
        %v6654 = vpop.f32.mrf.mxu0
        %v6655 = vadd.f32 0.0, %v6654
        %v6656 = vpop.f32.mrf.mxu0
        %v6657 = vadd.f32 0.0, %v6656
        %v6658 = vpop.f32.mrf.mxu0
        %v6659 = vpop.f32.mrf.mxu0
        %6660 = vdwg.mxu0
        %6661 = vmatprep.subr.bf16.mxu0 %v5149
        %6662 = vmatpush1.bf16.msra.mxu0 %v5148
        %6663 = vmatprep.subr.bf16.mxu0 %v5117
        %6664 = vmatpush1.bf16.msra.mxu0 %v5116
        %6665 = vmatprep.subr.bf16.mxu0 %v5085
        %6666 = vmatpush1.bf16.msra.mxu0 %v5084
        %6667 = vmatprep.subr.bf16.mxu0 %v5053
        %6668 = vmatpush1.bf16.msra.mxu0 %v5052
        %6669 = vmatprep.subr.bf16.mxu0 %v5021
        %6670 = vmatpush1.bf16.msra.mxu0 %v5020
        %6671 = vmatprep.subr.bf16.mxu0 %v4989
        %6672 = vmatpush1.bf16.msra.mxu0 %v4988
        %6673 = vmatprep.subr.bf16.mxu0 %v4957
        %6674 = vmatpush1.bf16.msra.mxu0 %v4956
        %6675 = vmatprep.subr.bf16.mxu0 %v4925
        %6676 = vmatpush1.bf16.msra.mxu0 %v4924
        %6677 = vmatprep.subr.bf16.mxu0 %v5405
        %6678 = vmatpush2.bf16.msra.mxu0 %v5404
        %6679 = vmatprep.subr.bf16.mxu0 %v5373
        %6680 = vmatpush2.bf16.msra.mxu0 %v5372
        %6681 = vmatprep.subr.bf16.mxu0 %v5341
        %6682 = vmatpush2.bf16.msra.mxu0 %v5340
        %6683 = vmatprep.subr.bf16.mxu0 %v5309
        %6684 = vmatpush2.bf16.msra.mxu0 %v5308
        %6685 = vmatprep.subr.bf16.mxu0 %v5277
        %6686 = vmatpush2.bf16.msra.mxu0 %v5276
        %6687 = vmatprep.subr.bf16.mxu0 %v5245
        %6688 = vmatpush2.bf16.msra.mxu0 %v5244
        %6689 = vmatprep.subr.bf16.mxu0 %v5213
        %6690 = vmatpush2.bf16.msra.mxu0 %v5212
        %6691 = vmatprep.subr.bf16.mxu0 %v5181
        %6692 = vmatpush2.bf16.msra.mxu0 %v5180
        %6693 = vmatprep.mubr.bf16.mxu0 %v1331
        %6694 = vmatmul.mubr.bf16.gmra.mxu0 %v1330
        %v6695 = vpop.f32.mrf.mxu0
        %v6696 = vadd.f32 %v6655, %v6695
        %v6697 = vpop.f32.mrf.mxu0
        %v6698 = vadd.f32 %v6657, %v6697
        %v6699 = vpop.f32.mrf.mxu0
        %v6700 = vpop.f32.mrf.mxu0
        %6701 = vdwg.mxu0
        %6702 = vmatprep.subr.bf16.mxu0 %v4639
        %6703 = vmatpush1.bf16.msra.mxu0 %v4638
        %6704 = vmatprep.subr.bf16.mxu0 %v4607
        %6705 = vmatpush1.bf16.msra.mxu0 %v4606
        %6706 = vmatprep.subr.bf16.mxu0 %v4575
        %6707 = vmatpush1.bf16.msra.mxu0 %v4574
        %6708 = vmatprep.subr.bf16.mxu0 %v4543
        %6709 = vmatpush1.bf16.msra.mxu0 %v4542
        %6710 = vmatprep.subr.bf16.mxu0 %v4511
        %6711 = vmatpush1.bf16.msra.mxu0 %v4510
        %6712 = vmatprep.subr.bf16.mxu0 %v4479
        %6713 = vmatpush1.bf16.msra.mxu0 %v4478
        %6714 = vmatprep.subr.bf16.mxu0 %v4447
        %6715 = vmatpush1.bf16.msra.mxu0 %v4446
        %6716 = vmatprep.subr.bf16.mxu0 %v4415
        %6717 = vmatpush1.bf16.msra.mxu0 %v4414
        %6718 = vmatprep.subr.bf16.mxu0 %v4895
        %6719 = vmatpush2.bf16.msra.mxu0 %v4894
        %6720 = vmatprep.subr.bf16.mxu0 %v4863
        %6721 = vmatpush2.bf16.msra.mxu0 %v4862
        %6722 = vmatprep.subr.bf16.mxu0 %v4831
        %6723 = vmatpush2.bf16.msra.mxu0 %v4830
        %6724 = vmatprep.subr.bf16.mxu0 %v4799
        %6725 = vmatpush2.bf16.msra.mxu0 %v4798
        %6726 = vmatprep.subr.bf16.mxu0 %v4767
        %6727 = vmatpush2.bf16.msra.mxu0 %v4766
        %6728 = vmatprep.subr.bf16.mxu0 %v4735
        %6729 = vmatpush2.bf16.msra.mxu0 %v4734
        %6730 = vmatprep.subr.bf16.mxu0 %v4703
        %6731 = vmatpush2.bf16.msra.mxu0 %v4702
        %6732 = vmatprep.subr.bf16.mxu0 %v4671
        %6733 = vmatpush2.bf16.msra.mxu0 %v4670
        %6734 = vmatprep.mubr.bf16.mxu0 %v1329
        %6735 = vmatmul.mubr.bf16.gmra.mxu0 %v1328
        %v6736 = vpop.f32.mrf.mxu0
        %v6737 = vadd.f32 0.0, %v6736
        %v6738 = vpop.f32.mrf.mxu0
        %v6739 = vadd.f32 0.0, %v6738
        %v6740 = vpop.f32.mrf.mxu0
        %v6741 = vpop.f32.mrf.mxu0
        %6742 = vdwg.mxu0
        %6743 = vmatprep.subr.bf16.mxu0 %v5151
        %6744 = vmatpush1.bf16.msra.mxu0 %v5150
        %6745 = vmatprep.subr.bf16.mxu0 %v5119
        %6746 = vmatpush1.bf16.msra.mxu0 %v5118
        %6747 = vmatprep.subr.bf16.mxu0 %v5087
        %6748 = vmatpush1.bf16.msra.mxu0 %v5086
        %6749 = vmatprep.subr.bf16.mxu0 %v5055
        %6750 = vmatpush1.bf16.msra.mxu0 %v5054
        %6751 = vmatprep.subr.bf16.mxu0 %v5023
        %6752 = vmatpush1.bf16.msra.mxu0 %v5022
        %6753 = vmatprep.subr.bf16.mxu0 %v4991
        %6754 = vmatpush1.bf16.msra.mxu0 %v4990
        %6755 = vmatprep.subr.bf16.mxu0 %v4959
        %6756 = vmatpush1.bf16.msra.mxu0 %v4958
        %6757 = vmatprep.subr.bf16.mxu0 %v4927
        %6758 = vmatpush1.bf16.msra.mxu0 %v4926
        %6759 = vmatprep.subr.bf16.mxu0 %v5407
        %6760 = vmatpush2.bf16.msra.mxu0 %v5406
        %6761 = vmatprep.subr.bf16.mxu0 %v5375
        %6762 = vmatpush2.bf16.msra.mxu0 %v5374
        %6763 = vmatprep.subr.bf16.mxu0 %v5343
        %6764 = vmatpush2.bf16.msra.mxu0 %v5342
        %6765 = vmatprep.subr.bf16.mxu0 %v5311
        %6766 = vmatpush2.bf16.msra.mxu0 %v5310
        %6767 = vmatprep.subr.bf16.mxu0 %v5279
        %6768 = vmatpush2.bf16.msra.mxu0 %v5278
        %6769 = vmatprep.subr.bf16.mxu0 %v5247
        %6770 = vmatpush2.bf16.msra.mxu0 %v5246
        %6771 = vmatprep.subr.bf16.mxu0 %v5215
        %6772 = vmatpush2.bf16.msra.mxu0 %v5214
        %6773 = vmatprep.subr.bf16.mxu0 %v5183
        %6774 = vmatpush2.bf16.msra.mxu0 %v5182
        %6775 = vmatprep.mubr.bf16.mxu0 %v1331
        %6776 = vmatmul.mubr.bf16.gmra.mxu0 %v1330
        %v6777 = vpop.f32.mrf.mxu0
        %v6778 = vadd.f32 %v6737, %v6777
        %v6779 = vpop.f32.mrf.mxu0
        %v6780 = vadd.f32 %v6739, %v6779
        %v6781 = vpop.f32.mrf.mxu0
        %v6782 = vpop.f32.mrf.mxu0
        %6783 = vdwg.mxu0
        %6784 = vmatprep.subr.bf16.mxu0 %v4641
        %6785 = vmatpush1.bf16.msra.mxu0 %v4640
        %6786 = vmatprep.subr.bf16.mxu0 %v4609
        %6787 = vmatpush1.bf16.msra.mxu0 %v4608
        %6788 = vmatprep.subr.bf16.mxu0 %v4577
        %6789 = vmatpush1.bf16.msra.mxu0 %v4576
        %6790 = vmatprep.subr.bf16.mxu0 %v4545
        %6791 = vmatpush1.bf16.msra.mxu0 %v4544
        %6792 = vmatprep.subr.bf16.mxu0 %v4513
        %6793 = vmatpush1.bf16.msra.mxu0 %v4512
        %6794 = vmatprep.subr.bf16.mxu0 %v4481
        %6795 = vmatpush1.bf16.msra.mxu0 %v4480
        %6796 = vmatprep.subr.bf16.mxu0 %v4449
        %6797 = vmatpush1.bf16.msra.mxu0 %v4448
        %6798 = vmatprep.subr.bf16.mxu0 %v4417
        %6799 = vmatpush1.bf16.msra.mxu0 %v4416
        %6800 = vmatprep.subr.bf16.mxu0 %v4897
        %6801 = vmatpush2.bf16.msra.mxu0 %v4896
        %6802 = vmatprep.subr.bf16.mxu0 %v4865
        %6803 = vmatpush2.bf16.msra.mxu0 %v4864
        %6804 = vmatprep.subr.bf16.mxu0 %v4833
        %6805 = vmatpush2.bf16.msra.mxu0 %v4832
        %6806 = vmatprep.subr.bf16.mxu0 %v4801
        %6807 = vmatpush2.bf16.msra.mxu0 %v4800
        %6808 = vmatprep.subr.bf16.mxu0 %v4769
        %6809 = vmatpush2.bf16.msra.mxu0 %v4768
        %6810 = vmatprep.subr.bf16.mxu0 %v4737
        %6811 = vmatpush2.bf16.msra.mxu0 %v4736
        %6812 = vmatprep.subr.bf16.mxu0 %v4705
        %6813 = vmatpush2.bf16.msra.mxu0 %v4704
        %6814 = vmatprep.subr.bf16.mxu0 %v4673
        %6815 = vmatpush2.bf16.msra.mxu0 %v4672
        %6816 = vmatprep.mubr.bf16.mxu0 %v1329
        %6817 = vmatmul.mubr.bf16.gmra.mxu0 %v1328
        %v6818 = vpop.f32.mrf.mxu0
        %v6819 = vadd.f32 0.0, %v6818
        %v6820 = vpop.f32.mrf.mxu0
        %v6821 = vadd.f32 0.0, %v6820
        %v6822 = vpop.f32.mrf.mxu0
        %v6823 = vpop.f32.mrf.mxu0
        %6824 = vdwg.mxu0
        %6825 = vmatprep.subr.bf16.mxu0 %v5153
        %6826 = vmatpush1.bf16.msra.mxu0 %v5152
        %6827 = vmatprep.subr.bf16.mxu0 %v5121
        %6828 = vmatpush1.bf16.msra.mxu0 %v5120
        %6829 = vmatprep.subr.bf16.mxu0 %v5089
        %6830 = vmatpush1.bf16.msra.mxu0 %v5088
        %6831 = vmatprep.subr.bf16.mxu0 %v5057
        %6832 = vmatpush1.bf16.msra.mxu0 %v5056
        %6833 = vmatprep.subr.bf16.mxu0 %v5025
        %6834 = vmatpush1.bf16.msra.mxu0 %v5024
        %6835 = vmatprep.subr.bf16.mxu0 %v4993
        %6836 = vmatpush1.bf16.msra.mxu0 %v4992
        %6837 = vmatprep.subr.bf16.mxu0 %v4961
        %6838 = vmatpush1.bf16.msra.mxu0 %v4960
        %6839 = vmatprep.subr.bf16.mxu0 %v4929
        %6840 = vmatpush1.bf16.msra.mxu0 %v4928
        %6841 = vmatprep.subr.bf16.mxu0 %v5409
        %6842 = vmatpush2.bf16.msra.mxu0 %v5408
        %6843 = vmatprep.subr.bf16.mxu0 %v5377
        %6844 = vmatpush2.bf16.msra.mxu0 %v5376
        %6845 = vmatprep.subr.bf16.mxu0 %v5345
        %6846 = vmatpush2.bf16.msra.mxu0 %v5344
        %6847 = vmatprep.subr.bf16.mxu0 %v5313
        %6848 = vmatpush2.bf16.msra.mxu0 %v5312
        %6849 = vmatprep.subr.bf16.mxu0 %v5281
        %6850 = vmatpush2.bf16.msra.mxu0 %v5280
        %6851 = vmatprep.subr.bf16.mxu0 %v5249
        %6852 = vmatpush2.bf16.msra.mxu0 %v5248
        %6853 = vmatprep.subr.bf16.mxu0 %v5217
        %6854 = vmatpush2.bf16.msra.mxu0 %v5216
        %6855 = vmatprep.subr.bf16.mxu0 %v5185
        %6856 = vmatpush2.bf16.msra.mxu0 %v5184
        %6857 = vmatprep.mubr.bf16.mxu0 %v1331
        %6858 = vmatmul.mubr.bf16.gmra.mxu0 %v1330
        %v6859 = vpop.f32.mrf.mxu0
        %v6860 = vadd.f32 %v6819, %v6859
        %v6861 = vpop.f32.mrf.mxu0
        %v6862 = vadd.f32 %v6821, %v6861
        %v6863 = vpop.f32.mrf.mxu0
        %v6864 = vpop.f32.mrf.mxu0
        %6865 = vdwg.mxu0
        %6866 = vmatprep.subr.bf16.mxu0 %v4643
        %6867 = vmatpush1.bf16.msra.mxu0 %v4642
        %6868 = vmatprep.subr.bf16.mxu0 %v4611
        %6869 = vmatpush1.bf16.msra.mxu0 %v4610
        %6870 = vmatprep.subr.bf16.mxu0 %v4579
        %6871 = vmatpush1.bf16.msra.mxu0 %v4578
        %6872 = vmatprep.subr.bf16.mxu0 %v4547
        %6873 = vmatpush1.bf16.msra.mxu0 %v4546
        %6874 = vmatprep.subr.bf16.mxu0 %v4515
        %6875 = vmatpush1.bf16.msra.mxu0 %v4514
        %6876 = vmatprep.subr.bf16.mxu0 %v4483
        %6877 = vmatpush1.bf16.msra.mxu0 %v4482
        %6878 = vmatprep.subr.bf16.mxu0 %v4451
        %6879 = vmatpush1.bf16.msra.mxu0 %v4450
        %6880 = vmatprep.subr.bf16.mxu0 %v4419
        %6881 = vmatpush1.bf16.msra.mxu0 %v4418
        %6882 = vmatprep.subr.bf16.mxu0 %v4899
        %6883 = vmatpush2.bf16.msra.mxu0 %v4898
        %6884 = vmatprep.subr.bf16.mxu0 %v4867
        %6885 = vmatpush2.bf16.msra.mxu0 %v4866
        %6886 = vmatprep.subr.bf16.mxu0 %v4835
        %6887 = vmatpush2.bf16.msra.mxu0 %v4834
        %6888 = vmatprep.subr.bf16.mxu0 %v4803
        %6889 = vmatpush2.bf16.msra.mxu0 %v4802
        %6890 = vmatprep.subr.bf16.mxu0 %v4771
        %6891 = vmatpush2.bf16.msra.mxu0 %v4770
        %6892 = vmatprep.subr.bf16.mxu0 %v4739
        %6893 = vmatpush2.bf16.msra.mxu0 %v4738
        %6894 = vmatprep.subr.bf16.mxu0 %v4707
        %6895 = vmatpush2.bf16.msra.mxu0 %v4706
        %6896 = vmatprep.subr.bf16.mxu0 %v4675
        %6897 = vmatpush2.bf16.msra.mxu0 %v4674
        %6898 = vmatprep.mubr.bf16.mxu0 %v1329
        %6899 = vmatmul.mubr.bf16.gmra.mxu0 %v1328
        %v6900 = vpop.f32.mrf.mxu0
        %v6901 = vadd.f32 0.0, %v6900
        %v6902 = vpop.f32.mrf.mxu0
        %v6903 = vadd.f32 0.0, %v6902
        %v6904 = vpop.f32.mrf.mxu0
        %v6905 = vpop.f32.mrf.mxu0
        %6906 = vdwg.mxu0
        %6907 = vmatprep.subr.bf16.mxu0 %v5155
        %6908 = vmatpush1.bf16.msra.mxu0 %v5154
        %6909 = vmatprep.subr.bf16.mxu0 %v5123
        %6910 = vmatpush1.bf16.msra.mxu0 %v5122
        %6911 = vmatprep.subr.bf16.mxu0 %v5091
        %6912 = vmatpush1.bf16.msra.mxu0 %v5090
        %6913 = vmatprep.subr.bf16.mxu0 %v5059
        %6914 = vmatpush1.bf16.msra.mxu0 %v5058
        %6915 = vmatprep.subr.bf16.mxu0 %v5027
        %6916 = vmatpush1.bf16.msra.mxu0 %v5026
        %6917 = vmatprep.subr.bf16.mxu0 %v4995
        %6918 = vmatpush1.bf16.msra.mxu0 %v4994
        %6919 = vmatprep.subr.bf16.mxu0 %v4963
        %6920 = vmatpush1.bf16.msra.mxu0 %v4962
        %6921 = vmatprep.subr.bf16.mxu0 %v4931
        %6922 = vmatpush1.bf16.msra.mxu0 %v4930
        %6923 = vmatprep.subr.bf16.mxu0 %v5411
        %6924 = vmatpush2.bf16.msra.mxu0 %v5410
        %6925 = vmatprep.subr.bf16.mxu0 %v5379
        %6926 = vmatpush2.bf16.msra.mxu0 %v5378
        %6927 = vmatprep.subr.bf16.mxu0 %v5347
        %6928 = vmatpush2.bf16.msra.mxu0 %v5346
        %6929 = vmatprep.subr.bf16.mxu0 %v5315
        %6930 = vmatpush2.bf16.msra.mxu0 %v5314
        %6931 = vmatprep.subr.bf16.mxu0 %v5283
        %6932 = vmatpush2.bf16.msra.mxu0 %v5282
        %6933 = vmatprep.subr.bf16.mxu0 %v5251
        %6934 = vmatpush2.bf16.msra.mxu0 %v5250
        %6935 = vmatprep.subr.bf16.mxu0 %v5219
        %6936 = vmatpush2.bf16.msra.mxu0 %v5218
        %6937 = vmatprep.subr.bf16.mxu0 %v5187
        %6938 = vmatpush2.bf16.msra.mxu0 %v5186
        %6939 = vmatprep.mubr.bf16.mxu0 %v1331
        %6940 = vmatmul.mubr.bf16.gmra.mxu0 %v1330
        %v6941 = vpop.f32.mrf.mxu0
        %v6942 = vadd.f32 %v6901, %v6941
        %v6943 = vpop.f32.mrf.mxu0
        %v6944 = vadd.f32 %v6903, %v6943
        %v6945 = vpop.f32.mrf.mxu0
        %v6946 = vpop.f32.mrf.mxu0
        %6947 = vdwg.mxu0
        %6948 = vmatprep.subr.bf16.mxu0 %v4645
        %6949 = vmatpush1.bf16.msra.mxu0 %v4644
        %6950 = vmatprep.subr.bf16.mxu0 %v4613
        %6951 = vmatpush1.bf16.msra.mxu0 %v4612
        %6952 = vmatprep.subr.bf16.mxu0 %v4581
        %6953 = vmatpush1.bf16.msra.mxu0 %v4580
        %6954 = vmatprep.subr.bf16.mxu0 %v4549
        %6955 = vmatpush1.bf16.msra.mxu0 %v4548
        %6956 = vmatprep.subr.bf16.mxu0 %v4517
        %6957 = vmatpush1.bf16.msra.mxu0 %v4516
        %6958 = vmatprep.subr.bf16.mxu0 %v4485
        %6959 = vmatpush1.bf16.msra.mxu0 %v4484
        %6960 = vmatprep.subr.bf16.mxu0 %v4453
        %6961 = vmatpush1.bf16.msra.mxu0 %v4452
        %6962 = vmatprep.subr.bf16.mxu0 %v4421
        %6963 = vmatpush1.bf16.msra.mxu0 %v4420
        %6964 = vmatprep.subr.bf16.mxu0 %v4901
        %6965 = vmatpush2.bf16.msra.mxu0 %v4900
        %6966 = vmatprep.subr.bf16.mxu0 %v4869
        %6967 = vmatpush2.bf16.msra.mxu0 %v4868
        %6968 = vmatprep.subr.bf16.mxu0 %v4837
        %6969 = vmatpush2.bf16.msra.mxu0 %v4836
        %6970 = vmatprep.subr.bf16.mxu0 %v4805
        %6971 = vmatpush2.bf16.msra.mxu0 %v4804
        %6972 = vmatprep.subr.bf16.mxu0 %v4773
        %6973 = vmatpush2.bf16.msra.mxu0 %v4772
        %6974 = vmatprep.subr.bf16.mxu0 %v4741
        %6975 = vmatpush2.bf16.msra.mxu0 %v4740
        %6976 = vmatprep.subr.bf16.mxu0 %v4709
        %6977 = vmatpush2.bf16.msra.mxu0 %v4708
        %6978 = vmatprep.subr.bf16.mxu0 %v4677
        %6979 = vmatpush2.bf16.msra.mxu0 %v4676
        %6980 = vmatprep.mubr.bf16.mxu0 %v1329
        %6981 = vmatmul.mubr.bf16.gmra.mxu0 %v1328
        %v6982 = vpop.f32.mrf.mxu0
        %v6983 = vadd.f32 0.0, %v6982
        %v6984 = vpop.f32.mrf.mxu0
        %v6985 = vadd.f32 0.0, %v6984
        %v6986 = vpop.f32.mrf.mxu0
        %v6987 = vpop.f32.mrf.mxu0
        %6988 = vdwg.mxu0
        %6989 = vmatprep.subr.bf16.mxu0 %v5157
        %6990 = vmatpush1.bf16.msra.mxu0 %v5156
        %6991 = vmatprep.subr.bf16.mxu0 %v5125
        %6992 = vmatpush1.bf16.msra.mxu0 %v5124
        %6993 = vmatprep.subr.bf16.mxu0 %v5093
        %6994 = vmatpush1.bf16.msra.mxu0 %v5092
        %6995 = vmatprep.subr.bf16.mxu0 %v5061
        %6996 = vmatpush1.bf16.msra.mxu0 %v5060
        %6997 = vmatprep.subr.bf16.mxu0 %v5029
        %6998 = vmatpush1.bf16.msra.mxu0 %v5028
        %6999 = vmatprep.subr.bf16.mxu0 %v4997
        %7000 = vmatpush1.bf16.msra.mxu0 %v4996
        %7001 = vmatprep.subr.bf16.mxu0 %v4965
        %7002 = vmatpush1.bf16.msra.mxu0 %v4964
        %7003 = vmatprep.subr.bf16.mxu0 %v4933
        %7004 = vmatpush1.bf16.msra.mxu0 %v4932
        %7005 = vmatprep.subr.bf16.mxu0 %v5413
        %7006 = vmatpush2.bf16.msra.mxu0 %v5412
        %7007 = vmatprep.subr.bf16.mxu0 %v5381
        %7008 = vmatpush2.bf16.msra.mxu0 %v5380
        %7009 = vmatprep.subr.bf16.mxu0 %v5349
        %7010 = vmatpush2.bf16.msra.mxu0 %v5348
        %7011 = vmatprep.subr.bf16.mxu0 %v5317
        %7012 = vmatpush2.bf16.msra.mxu0 %v5316
        %7013 = vmatprep.subr.bf16.mxu0 %v5285
        %7014 = vmatpush2.bf16.msra.mxu0 %v5284
        %7015 = vmatprep.subr.bf16.mxu0 %v5253
        %7016 = vmatpush2.bf16.msra.mxu0 %v5252
        %7017 = vmatprep.subr.bf16.mxu0 %v5221
        %7018 = vmatpush2.bf16.msra.mxu0 %v5220
        %7019 = vmatprep.subr.bf16.mxu0 %v5189
        %7020 = vmatpush2.bf16.msra.mxu0 %v5188
        %7021 = vmatprep.mubr.bf16.mxu0 %v1331
        %7022 = vmatmul.mubr.bf16.gmra.mxu0 %v1330
        %v7023 = vpop.f32.mrf.mxu0
        %v7024 = vadd.f32 %v6983, %v7023
        %v7025 = vpop.f32.mrf.mxu0
        %v7026 = vadd.f32 %v6985, %v7025
        %v7027 = vpop.f32.mrf.mxu0
        %v7028 = vpop.f32.mrf.mxu0
        %7029 = vdwg.mxu0
        %7030 = vmatprep.subr.bf16.mxu0 %v4647
        %7031 = vmatpush1.bf16.msra.mxu0 %v4646
        %7032 = vmatprep.subr.bf16.mxu0 %v4615
        %7033 = vmatpush1.bf16.msra.mxu0 %v4614
        %7034 = vmatprep.subr.bf16.mxu0 %v4583
        %7035 = vmatpush1.bf16.msra.mxu0 %v4582
        %7036 = vmatprep.subr.bf16.mxu0 %v4551
        %7037 = vmatpush1.bf16.msra.mxu0 %v4550
        %7038 = vmatprep.subr.bf16.mxu0 %v4519
        %7039 = vmatpush1.bf16.msra.mxu0 %v4518
        %7040 = vmatprep.subr.bf16.mxu0 %v4487
        %7041 = vmatpush1.bf16.msra.mxu0 %v4486
        %7042 = vmatprep.subr.bf16.mxu0 %v4455
        %7043 = vmatpush1.bf16.msra.mxu0 %v4454
        %7044 = vmatprep.subr.bf16.mxu0 %v4423
        %7045 = vmatpush1.bf16.msra.mxu0 %v4422
        %7046 = vmatprep.subr.bf16.mxu0 %v4903
        %7047 = vmatpush2.bf16.msra.mxu0 %v4902
        %7048 = vmatprep.subr.bf16.mxu0 %v4871
        %7049 = vmatpush2.bf16.msra.mxu0 %v4870
        %7050 = vmatprep.subr.bf16.mxu0 %v4839
        %7051 = vmatpush2.bf16.msra.mxu0 %v4838
        %7052 = vmatprep.subr.bf16.mxu0 %v4807
        %7053 = vmatpush2.bf16.msra.mxu0 %v4806
        %7054 = vmatprep.subr.bf16.mxu0 %v4775
        %7055 = vmatpush2.bf16.msra.mxu0 %v4774
        %7056 = vmatprep.subr.bf16.mxu0 %v4743
        %7057 = vmatpush2.bf16.msra.mxu0 %v4742
        %7058 = vmatprep.subr.bf16.mxu0 %v4711
        %7059 = vmatpush2.bf16.msra.mxu0 %v4710
        %7060 = vmatprep.subr.bf16.mxu0 %v4679
        %7061 = vmatpush2.bf16.msra.mxu0 %v4678
        %7062 = vmatprep.mubr.bf16.mxu0 %v1329
        %7063 = vmatmul.mubr.bf16.gmra.mxu0 %v1328
        %v7064 = vpop.f32.mrf.mxu0
        %v7065 = vadd.f32 0.0, %v7064
        %v7066 = vpop.f32.mrf.mxu0
        %v7067 = vadd.f32 0.0, %v7066
        %v7068 = vpop.f32.mrf.mxu0
        %v7069 = vpop.f32.mrf.mxu0
        %7070 = vdwg.mxu0
        %7071 = vmatprep.subr.bf16.mxu0 %v5159
        %7072 = vmatpush1.bf16.msra.mxu0 %v5158
        %7073 = vmatprep.subr.bf16.mxu0 %v5127
        %7074 = vmatpush1.bf16.msra.mxu0 %v5126
        %7075 = vmatprep.subr.bf16.mxu0 %v5095
        %7076 = vmatpush1.bf16.msra.mxu0 %v5094
        %7077 = vmatprep.subr.bf16.mxu0 %v5063
        %7078 = vmatpush1.bf16.msra.mxu0 %v5062
        %7079 = vmatprep.subr.bf16.mxu0 %v5031
        %7080 = vmatpush1.bf16.msra.mxu0 %v5030
        %7081 = vmatprep.subr.bf16.mxu0 %v4999
        %7082 = vmatpush1.bf16.msra.mxu0 %v4998
        %7083 = vmatprep.subr.bf16.mxu0 %v4967
        %7084 = vmatpush1.bf16.msra.mxu0 %v4966
        %7085 = vmatprep.subr.bf16.mxu0 %v4935
        %7086 = vmatpush1.bf16.msra.mxu0 %v4934
        %7087 = vmatprep.subr.bf16.mxu0 %v5415
        %7088 = vmatpush2.bf16.msra.mxu0 %v5414
        %7089 = vmatprep.subr.bf16.mxu0 %v5383
        %7090 = vmatpush2.bf16.msra.mxu0 %v5382
        %7091 = vmatprep.subr.bf16.mxu0 %v5351
        %7092 = vmatpush2.bf16.msra.mxu0 %v5350
        %7093 = vmatprep.subr.bf16.mxu0 %v5319
        %7094 = vmatpush2.bf16.msra.mxu0 %v5318
        %7095 = vmatprep.subr.bf16.mxu0 %v5287
        %7096 = vmatpush2.bf16.msra.mxu0 %v5286
        %7097 = vmatprep.subr.bf16.mxu0 %v5255
        %7098 = vmatpush2.bf16.msra.mxu0 %v5254
        %7099 = vmatprep.subr.bf16.mxu0 %v5223
        %7100 = vmatpush2.bf16.msra.mxu0 %v5222
        %7101 = vmatprep.subr.bf16.mxu0 %v5191
        %7102 = vmatpush2.bf16.msra.mxu0 %v5190
        %7103 = vmatprep.mubr.bf16.mxu0 %v1331
        %7104 = vmatmul.mubr.bf16.gmra.mxu0 %v1330
        %v7105 = vpop.f32.mrf.mxu0
        %v7106 = vadd.f32 %v7065, %v7105
        %v7107 = vpop.f32.mrf.mxu0
        %v7108 = vadd.f32 %v7067, %v7107
        %v7109 = vpop.f32.mrf.mxu0
        %v7110 = vpop.f32.mrf.mxu0
        %7111 = vdwg.mxu0
        %7112 = vmatprep.subr.bf16.mxu0 %v4649
        %7113 = vmatpush1.bf16.msra.mxu0 %v4648
        %7114 = vmatprep.subr.bf16.mxu0 %v4617
        %7115 = vmatpush1.bf16.msra.mxu0 %v4616
        %7116 = vmatprep.subr.bf16.mxu0 %v4585
        %7117 = vmatpush1.bf16.msra.mxu0 %v4584
        %7118 = vmatprep.subr.bf16.mxu0 %v4553
        %7119 = vmatpush1.bf16.msra.mxu0 %v4552
        %7120 = vmatprep.subr.bf16.mxu0 %v4521
        %7121 = vmatpush1.bf16.msra.mxu0 %v4520
        %7122 = vmatprep.subr.bf16.mxu0 %v4489
        %7123 = vmatpush1.bf16.msra.mxu0 %v4488
        %7124 = vmatprep.subr.bf16.mxu0 %v4457
        %7125 = vmatpush1.bf16.msra.mxu0 %v4456
        %7126 = vmatprep.subr.bf16.mxu0 %v4425
        %7127 = vmatpush1.bf16.msra.mxu0 %v4424
        %7128 = vmatprep.subr.bf16.mxu0 %v4905
        %7129 = vmatpush2.bf16.msra.mxu0 %v4904
        %7130 = vmatprep.subr.bf16.mxu0 %v4873
        %7131 = vmatpush2.bf16.msra.mxu0 %v4872
        %7132 = vmatprep.subr.bf16.mxu0 %v4841
        %7133 = vmatpush2.bf16.msra.mxu0 %v4840
        %7134 = vmatprep.subr.bf16.mxu0 %v4809
        %7135 = vmatpush2.bf16.msra.mxu0 %v4808
        %7136 = vmatprep.subr.bf16.mxu0 %v4777
        %7137 = vmatpush2.bf16.msra.mxu0 %v4776
        %7138 = vmatprep.subr.bf16.mxu0 %v4745
        %7139 = vmatpush2.bf16.msra.mxu0 %v4744
        %7140 = vmatprep.subr.bf16.mxu0 %v4713
        %7141 = vmatpush2.bf16.msra.mxu0 %v4712
        %7142 = vmatprep.subr.bf16.mxu0 %v4681
        %7143 = vmatpush2.bf16.msra.mxu0 %v4680
        %7144 = vmatprep.mubr.bf16.mxu0 %v1329
        %7145 = vmatmul.mubr.bf16.gmra.mxu0 %v1328
        %v7146 = vpop.f32.mrf.mxu0
        %v7147 = vadd.f32 0.0, %v7146
        %v7148 = vpop.f32.mrf.mxu0
        %v7149 = vadd.f32 0.0, %v7148
        %v7150 = vpop.f32.mrf.mxu0
        %v7151 = vpop.f32.mrf.mxu0
        %7152 = vdwg.mxu0
        %7153 = vmatprep.subr.bf16.mxu0 %v5161
        %7154 = vmatpush1.bf16.msra.mxu0 %v5160
        %7155 = vmatprep.subr.bf16.mxu0 %v5129
        %7156 = vmatpush1.bf16.msra.mxu0 %v5128
        %7157 = vmatprep.subr.bf16.mxu0 %v5097
        %7158 = vmatpush1.bf16.msra.mxu0 %v5096
        %7159 = vmatprep.subr.bf16.mxu0 %v5065
        %7160 = vmatpush1.bf16.msra.mxu0 %v5064
        %7161 = vmatprep.subr.bf16.mxu0 %v5033
        %7162 = vmatpush1.bf16.msra.mxu0 %v5032
        %7163 = vmatprep.subr.bf16.mxu0 %v5001
        %7164 = vmatpush1.bf16.msra.mxu0 %v5000
        %7165 = vmatprep.subr.bf16.mxu0 %v4969
        %7166 = vmatpush1.bf16.msra.mxu0 %v4968
        %7167 = vmatprep.subr.bf16.mxu0 %v4937
        %7168 = vmatpush1.bf16.msra.mxu0 %v4936
        %7169 = vmatprep.subr.bf16.mxu0 %v5417
        %7170 = vmatpush2.bf16.msra.mxu0 %v5416
        %7171 = vmatprep.subr.bf16.mxu0 %v5385
        %7172 = vmatpush2.bf16.msra.mxu0 %v5384
        %7173 = vmatprep.subr.bf16.mxu0 %v5353
        %7174 = vmatpush2.bf16.msra.mxu0 %v5352
        %7175 = vmatprep.subr.bf16.mxu0 %v5321
        %7176 = vmatpush2.bf16.msra.mxu0 %v5320
        %7177 = vmatprep.subr.bf16.mxu0 %v5289
        %7178 = vmatpush2.bf16.msra.mxu0 %v5288
        %7179 = vmatprep.subr.bf16.mxu0 %v5257
        %7180 = vmatpush2.bf16.msra.mxu0 %v5256
        %7181 = vmatprep.subr.bf16.mxu0 %v5225
        %7182 = vmatpush2.bf16.msra.mxu0 %v5224
        %7183 = vmatprep.subr.bf16.mxu0 %v5193
        %7184 = vmatpush2.bf16.msra.mxu0 %v5192
        %7185 = vmatprep.mubr.bf16.mxu0 %v1331
        %7186 = vmatmul.mubr.bf16.gmra.mxu0 %v1330
        %v7187 = vpop.f32.mrf.mxu0
        %v7188 = vadd.f32 %v7147, %v7187
        %v7189 = vpop.f32.mrf.mxu0
        %v7190 = vadd.f32 %v7149, %v7189
        %v7191 = vpop.f32.mrf.mxu0
        %v7192 = vpop.f32.mrf.mxu0
        %7193 = vdwg.mxu0
        %7194 = vmatprep.subr.bf16.mxu0 %v4651
        %7195 = vmatpush1.bf16.msra.mxu0 %v4650
        %7196 = vmatprep.subr.bf16.mxu0 %v4619
        %7197 = vmatpush1.bf16.msra.mxu0 %v4618
        %7198 = vmatprep.subr.bf16.mxu0 %v4587
        %7199 = vmatpush1.bf16.msra.mxu0 %v4586
        %7200 = vmatprep.subr.bf16.mxu0 %v4555
        %7201 = vmatpush1.bf16.msra.mxu0 %v4554
        %7202 = vmatprep.subr.bf16.mxu0 %v4523
        %7203 = vmatpush1.bf16.msra.mxu0 %v4522
        %7204 = vmatprep.subr.bf16.mxu0 %v4491
        %7205 = vmatpush1.bf16.msra.mxu0 %v4490
        %7206 = vmatprep.subr.bf16.mxu0 %v4459
        %7207 = vmatpush1.bf16.msra.mxu0 %v4458
        %7208 = vmatprep.subr.bf16.mxu0 %v4427
        %7209 = vmatpush1.bf16.msra.mxu0 %v4426
        %7210 = vmatprep.subr.bf16.mxu0 %v4907
        %7211 = vmatpush2.bf16.msra.mxu0 %v4906
        %7212 = vmatprep.subr.bf16.mxu0 %v4875
        %7213 = vmatpush2.bf16.msra.mxu0 %v4874
        %7214 = vmatprep.subr.bf16.mxu0 %v4843
        %7215 = vmatpush2.bf16.msra.mxu0 %v4842
        %7216 = vmatprep.subr.bf16.mxu0 %v4811
        %7217 = vmatpush2.bf16.msra.mxu0 %v4810
        %7218 = vmatprep.subr.bf16.mxu0 %v4779
        %7219 = vmatpush2.bf16.msra.mxu0 %v4778
        %7220 = vmatprep.subr.bf16.mxu0 %v4747
        %7221 = vmatpush2.bf16.msra.mxu0 %v4746
        %7222 = vmatprep.subr.bf16.mxu0 %v4715
        %7223 = vmatpush2.bf16.msra.mxu0 %v4714
        %7224 = vmatprep.subr.bf16.mxu0 %v4683
        %7225 = vmatpush2.bf16.msra.mxu0 %v4682
        %7226 = vmatprep.mubr.bf16.mxu0 %v1329
        %7227 = vmatmul.mubr.bf16.gmra.mxu0 %v1328
        %v7228 = vpop.f32.mrf.mxu0
        %v7229 = vadd.f32 0.0, %v7228
        %v7230 = vpop.f32.mrf.mxu0
        %v7231 = vadd.f32 0.0, %v7230
        %v7232 = vpop.f32.mrf.mxu0
        %v7233 = vpop.f32.mrf.mxu0
        %7234 = vdwg.mxu0
        %7235 = vmatprep.subr.bf16.mxu0 %v5163
        %7236 = vmatpush1.bf16.msra.mxu0 %v5162
        %7237 = vmatprep.subr.bf16.mxu0 %v5131
        %7238 = vmatpush1.bf16.msra.mxu0 %v5130
        %7239 = vmatprep.subr.bf16.mxu0 %v5099
        %7240 = vmatpush1.bf16.msra.mxu0 %v5098
        %7241 = vmatprep.subr.bf16.mxu0 %v5067
        %7242 = vmatpush1.bf16.msra.mxu0 %v5066
        %7243 = vmatprep.subr.bf16.mxu0 %v5035
        %7244 = vmatpush1.bf16.msra.mxu0 %v5034
        %7245 = vmatprep.subr.bf16.mxu0 %v5003
        %7246 = vmatpush1.bf16.msra.mxu0 %v5002
        %7247 = vmatprep.subr.bf16.mxu0 %v4971
        %7248 = vmatpush1.bf16.msra.mxu0 %v4970
        %7249 = vmatprep.subr.bf16.mxu0 %v4939
        %7250 = vmatpush1.bf16.msra.mxu0 %v4938
        %7251 = vmatprep.subr.bf16.mxu0 %v5419
        %7252 = vmatpush2.bf16.msra.mxu0 %v5418
        %7253 = vmatprep.subr.bf16.mxu0 %v5387
        %7254 = vmatpush2.bf16.msra.mxu0 %v5386
        %7255 = vmatprep.subr.bf16.mxu0 %v5355
        %7256 = vmatpush2.bf16.msra.mxu0 %v5354
        %7257 = vmatprep.subr.bf16.mxu0 %v5323
        %7258 = vmatpush2.bf16.msra.mxu0 %v5322
        %7259 = vmatprep.subr.bf16.mxu0 %v5291
        %7260 = vmatpush2.bf16.msra.mxu0 %v5290
        %7261 = vmatprep.subr.bf16.mxu0 %v5259
        %7262 = vmatpush2.bf16.msra.mxu0 %v5258
        %7263 = vmatprep.subr.bf16.mxu0 %v5227
        %7264 = vmatpush2.bf16.msra.mxu0 %v5226
        %7265 = vmatprep.subr.bf16.mxu0 %v5195
        %7266 = vmatpush2.bf16.msra.mxu0 %v5194
        %7267 = vmatprep.mubr.bf16.mxu0 %v1331
        %7268 = vmatmul.mubr.bf16.gmra.mxu0 %v1330
        %v7269 = vpop.f32.mrf.mxu0
        %v7270 = vadd.f32 %v7229, %v7269
        %v7271 = vpop.f32.mrf.mxu0
        %v7272 = vadd.f32 %v7231, %v7271
        %v7273 = vpop.f32.mrf.mxu0
        %v7274 = vpop.f32.mrf.mxu0
        %7275 = vdwg.mxu0
        %7276 = vmatprep.subr.bf16.mxu0 %v4653
        %7277 = vmatpush1.bf16.msra.mxu0 %v4652
        %7278 = vmatprep.subr.bf16.mxu0 %v4621
        %7279 = vmatpush1.bf16.msra.mxu0 %v4620
        %7280 = vmatprep.subr.bf16.mxu0 %v4589
        %7281 = vmatpush1.bf16.msra.mxu0 %v4588
        %7282 = vmatprep.subr.bf16.mxu0 %v4557
        %7283 = vmatpush1.bf16.msra.mxu0 %v4556
        %7284 = vmatprep.subr.bf16.mxu0 %v4525
        %7285 = vmatpush1.bf16.msra.mxu0 %v4524
        %7286 = vmatprep.subr.bf16.mxu0 %v4493
        %7287 = vmatpush1.bf16.msra.mxu0 %v4492
        %7288 = vmatprep.subr.bf16.mxu0 %v4461
        %7289 = vmatpush1.bf16.msra.mxu0 %v4460
        %7290 = vmatprep.subr.bf16.mxu0 %v4429
        %7291 = vmatpush1.bf16.msra.mxu0 %v4428
        %7292 = vmatprep.subr.bf16.mxu0 %v4909
        %7293 = vmatpush2.bf16.msra.mxu0 %v4908
        %7294 = vmatprep.subr.bf16.mxu0 %v4877
        %7295 = vmatpush2.bf16.msra.mxu0 %v4876
        %7296 = vmatprep.subr.bf16.mxu0 %v4845
        %7297 = vmatpush2.bf16.msra.mxu0 %v4844
        %7298 = vmatprep.subr.bf16.mxu0 %v4813
        %7299 = vmatpush2.bf16.msra.mxu0 %v4812
        %7300 = vmatprep.subr.bf16.mxu0 %v4781
        %7301 = vmatpush2.bf16.msra.mxu0 %v4780
        %7302 = vmatprep.subr.bf16.mxu0 %v4749
        %7303 = vmatpush2.bf16.msra.mxu0 %v4748
        %7304 = vmatprep.subr.bf16.mxu0 %v4717
        %7305 = vmatpush2.bf16.msra.mxu0 %v4716
        %7306 = vmatprep.subr.bf16.mxu0 %v4685
        %7307 = vmatpush2.bf16.msra.mxu0 %v4684
        %7308 = vmatprep.mubr.bf16.mxu0 %v1329
        %7309 = vmatmul.mubr.bf16.gmra.mxu0 %v1328
        %v7310 = vpop.f32.mrf.mxu0
        %v7311 = vadd.f32 0.0, %v7310
        %v7312 = vpop.f32.mrf.mxu0
        %v7313 = vadd.f32 0.0, %v7312
        %v7314 = vpop.f32.mrf.mxu0
        %v7315 = vpop.f32.mrf.mxu0
        %7316 = vdwg.mxu0
        %7317 = vmatprep.subr.bf16.mxu0 %v5165
        %7318 = vmatpush1.bf16.msra.mxu0 %v5164
        %7319 = vmatprep.subr.bf16.mxu0 %v5133
        %7320 = vmatpush1.bf16.msra.mxu0 %v5132
        %7321 = vmatprep.subr.bf16.mxu0 %v5101
        %7322 = vmatpush1.bf16.msra.mxu0 %v5100
        %7323 = vmatprep.subr.bf16.mxu0 %v5069
        %7324 = vmatpush1.bf16.msra.mxu0 %v5068
        %7325 = vmatprep.subr.bf16.mxu0 %v5037
        %7326 = vmatpush1.bf16.msra.mxu0 %v5036
        %7327 = vmatprep.subr.bf16.mxu0 %v5005
        %7328 = vmatpush1.bf16.msra.mxu0 %v5004
        %7329 = vmatprep.subr.bf16.mxu0 %v4973
        %7330 = vmatpush1.bf16.msra.mxu0 %v4972
        %7331 = vmatprep.subr.bf16.mxu0 %v4941
        %7332 = vmatpush1.bf16.msra.mxu0 %v4940
        %7333 = vmatprep.subr.bf16.mxu0 %v5421
        %7334 = vmatpush2.bf16.msra.mxu0 %v5420
        %7335 = vmatprep.subr.bf16.mxu0 %v5389
        %7336 = vmatpush2.bf16.msra.mxu0 %v5388
        %7337 = vmatprep.subr.bf16.mxu0 %v5357
        %7338 = vmatpush2.bf16.msra.mxu0 %v5356
        %7339 = vmatprep.subr.bf16.mxu0 %v5325
        %7340 = vmatpush2.bf16.msra.mxu0 %v5324
        %7341 = vmatprep.subr.bf16.mxu0 %v5293
        %7342 = vmatpush2.bf16.msra.mxu0 %v5292
        %7343 = vmatprep.subr.bf16.mxu0 %v5261
        %7344 = vmatpush2.bf16.msra.mxu0 %v5260
        %7345 = vmatprep.subr.bf16.mxu0 %v5229
        %7346 = vmatpush2.bf16.msra.mxu0 %v5228
        %7347 = vmatprep.subr.bf16.mxu0 %v5197
        %7348 = vmatpush2.bf16.msra.mxu0 %v5196
        %7349 = vmatprep.mubr.bf16.mxu0 %v1331
        %7350 = vmatmul.mubr.bf16.gmra.mxu0 %v1330
        %v7351 = vpop.f32.mrf.mxu0
        %v7352 = vadd.f32 %v7311, %v7351
        %v7353 = vpop.f32.mrf.mxu0
        %v7354 = vadd.f32 %v7313, %v7353
        %v7355 = vpop.f32.mrf.mxu0
        %v7356 = vpop.f32.mrf.mxu0
        %7357 = vdwg.mxu0
        %7358 = vmatprep.subr.bf16.mxu0 %v4655
        %7359 = vmatpush1.bf16.msra.mxu0 %v4654
        %7360 = vmatprep.subr.bf16.mxu0 %v4623
        %7361 = vmatpush1.bf16.msra.mxu0 %v4622
        %7362 = vmatprep.subr.bf16.mxu0 %v4591
        %7363 = vmatpush1.bf16.msra.mxu0 %v4590
        %7364 = vmatprep.subr.bf16.mxu0 %v4559
        %7365 = vmatpush1.bf16.msra.mxu0 %v4558
        %7366 = vmatprep.subr.bf16.mxu0 %v4527
        %7367 = vmatpush1.bf16.msra.mxu0 %v4526
        %7368 = vmatprep.subr.bf16.mxu0 %v4495
        %7369 = vmatpush1.bf16.msra.mxu0 %v4494
        %7370 = vmatprep.subr.bf16.mxu0 %v4463
        %7371 = vmatpush1.bf16.msra.mxu0 %v4462
        %7372 = vmatprep.subr.bf16.mxu0 %v4431
        %7373 = vmatpush1.bf16.msra.mxu0 %v4430
        %7374 = vmatprep.subr.bf16.mxu0 %v4911
        %7375 = vmatpush2.bf16.msra.mxu0 %v4910
        %7376 = vmatprep.subr.bf16.mxu0 %v4879
        %7377 = vmatpush2.bf16.msra.mxu0 %v4878
        %7378 = vmatprep.subr.bf16.mxu0 %v4847
        %7379 = vmatpush2.bf16.msra.mxu0 %v4846
        %7380 = vmatprep.subr.bf16.mxu0 %v4815
        %7381 = vmatpush2.bf16.msra.mxu0 %v4814
        %7382 = vmatprep.subr.bf16.mxu0 %v4783
        %7383 = vmatpush2.bf16.msra.mxu0 %v4782
        %7384 = vmatprep.subr.bf16.mxu0 %v4751
        %7385 = vmatpush2.bf16.msra.mxu0 %v4750
        %7386 = vmatprep.subr.bf16.mxu0 %v4719
        %7387 = vmatpush2.bf16.msra.mxu0 %v4718
        %7388 = vmatprep.subr.bf16.mxu0 %v4687
        %7389 = vmatpush2.bf16.msra.mxu0 %v4686
        %7390 = vmatprep.mubr.bf16.mxu0 %v1329
        %7391 = vmatmul.mubr.bf16.gmra.mxu0 %v1328
        %v7392 = vpop.f32.mrf.mxu0
        %v7393 = vadd.f32 0.0, %v7392
        %v7394 = vpop.f32.mrf.mxu0
        %v7395 = vadd.f32 0.0, %v7394
        %v7396 = vpop.f32.mrf.mxu0
        %v7397 = vpop.f32.mrf.mxu0
        %7398 = vdwg.mxu0
        %7399 = vmatprep.subr.bf16.mxu0 %v5167
        %7400 = vmatpush1.bf16.msra.mxu0 %v5166
        %7401 = vmatprep.subr.bf16.mxu0 %v5135
        %7402 = vmatpush1.bf16.msra.mxu0 %v5134
        %7403 = vmatprep.subr.bf16.mxu0 %v5103
        %7404 = vmatpush1.bf16.msra.mxu0 %v5102
        %7405 = vmatprep.subr.bf16.mxu0 %v5071
        %7406 = vmatpush1.bf16.msra.mxu0 %v5070
        %7407 = vmatprep.subr.bf16.mxu0 %v5039
        %7408 = vmatpush1.bf16.msra.mxu0 %v5038
        %7409 = vmatprep.subr.bf16.mxu0 %v5007
        %7410 = vmatpush1.bf16.msra.mxu0 %v5006
        %7411 = vmatprep.subr.bf16.mxu0 %v4975
        %7412 = vmatpush1.bf16.msra.mxu0 %v4974
        %7413 = vmatprep.subr.bf16.mxu0 %v4943
        %7414 = vmatpush1.bf16.msra.mxu0 %v4942
        %7415 = vmatprep.subr.bf16.mxu0 %v5423
        %7416 = vmatpush2.bf16.msra.mxu0 %v5422
        %7417 = vmatprep.subr.bf16.mxu0 %v5391
        %7418 = vmatpush2.bf16.msra.mxu0 %v5390
        %7419 = vmatprep.subr.bf16.mxu0 %v5359
        %7420 = vmatpush2.bf16.msra.mxu0 %v5358
        %7421 = vmatprep.subr.bf16.mxu0 %v5327
        %7422 = vmatpush2.bf16.msra.mxu0 %v5326
        %7423 = vmatprep.subr.bf16.mxu0 %v5295
        %7424 = vmatpush2.bf16.msra.mxu0 %v5294
        %7425 = vmatprep.subr.bf16.mxu0 %v5263
        %7426 = vmatpush2.bf16.msra.mxu0 %v5262
        %7427 = vmatprep.subr.bf16.mxu0 %v5231
        %7428 = vmatpush2.bf16.msra.mxu0 %v5230
        %7429 = vmatprep.subr.bf16.mxu0 %v5199
        %7430 = vmatpush2.bf16.msra.mxu0 %v5198
        %7431 = vmatprep.mubr.bf16.mxu0 %v1331
        %7432 = vmatmul.mubr.bf16.gmra.mxu0 %v1330
        %v7433 = vpop.f32.mrf.mxu0
        %v7434 = vadd.f32 %v7393, %v7433
        %v7435 = vpop.f32.mrf.mxu0
        %v7436 = vadd.f32 %v7395, %v7435
        %v7437 = vpop.f32.mrf.mxu0
        %v7438 = vpop.f32.mrf.mxu0
        %7439 = vdwg.mxu0
        %7440 = vmatprep.subr.bf16.mxu0 %v4657
        %7441 = vmatpush1.bf16.msra.mxu0 %v4656
        %7442 = vmatprep.subr.bf16.mxu0 %v4625
        %7443 = vmatpush1.bf16.msra.mxu0 %v4624
        %7444 = vmatprep.subr.bf16.mxu0 %v4593
        %7445 = vmatpush1.bf16.msra.mxu0 %v4592
        %7446 = vmatprep.subr.bf16.mxu0 %v4561
        %7447 = vmatpush1.bf16.msra.mxu0 %v4560
        %7448 = vmatprep.subr.bf16.mxu0 %v4529
        %7449 = vmatpush1.bf16.msra.mxu0 %v4528
        %7450 = vmatprep.subr.bf16.mxu0 %v4497
        %7451 = vmatpush1.bf16.msra.mxu0 %v4496
        %7452 = vmatprep.subr.bf16.mxu0 %v4465
        %7453 = vmatpush1.bf16.msra.mxu0 %v4464
        %7454 = vmatprep.subr.bf16.mxu0 %v4433
        %7455 = vmatpush1.bf16.msra.mxu0 %v4432
        %7456 = vmatprep.subr.bf16.mxu0 %v4913
        %7457 = vmatpush2.bf16.msra.mxu0 %v4912
        %7458 = vmatprep.subr.bf16.mxu0 %v4881
        %7459 = vmatpush2.bf16.msra.mxu0 %v4880
        %7460 = vmatprep.subr.bf16.mxu0 %v4849
        %7461 = vmatpush2.bf16.msra.mxu0 %v4848
        %7462 = vmatprep.subr.bf16.mxu0 %v4817
        %7463 = vmatpush2.bf16.msra.mxu0 %v4816
        %7464 = vmatprep.subr.bf16.mxu0 %v4785
        %7465 = vmatpush2.bf16.msra.mxu0 %v4784
        %7466 = vmatprep.subr.bf16.mxu0 %v4753
        %7467 = vmatpush2.bf16.msra.mxu0 %v4752
        %7468 = vmatprep.subr.bf16.mxu0 %v4721
        %7469 = vmatpush2.bf16.msra.mxu0 %v4720
        %7470 = vmatprep.subr.bf16.mxu0 %v4689
        %7471 = vmatpush2.bf16.msra.mxu0 %v4688
        %7472 = vmatprep.mubr.bf16.mxu0 %v1329
        %7473 = vmatmul.mubr.bf16.gmra.mxu0 %v1328
        %v7474 = vpop.f32.mrf.mxu0
        %v7475 = vadd.f32 0.0, %v7474
        %v7476 = vpop.f32.mrf.mxu0
        %v7477 = vadd.f32 0.0, %v7476
        %v7478 = vpop.f32.mrf.mxu0
        %v7479 = vpop.f32.mrf.mxu0
        %7480 = vdwg.mxu0
        %7481 = vmatprep.subr.bf16.mxu0 %v5169
        %7482 = vmatpush1.bf16.msra.mxu0 %v5168
        %7483 = vmatprep.subr.bf16.mxu0 %v5137
        %7484 = vmatpush1.bf16.msra.mxu0 %v5136
        %7485 = vmatprep.subr.bf16.mxu0 %v5105
        %7486 = vmatpush1.bf16.msra.mxu0 %v5104
        %7487 = vmatprep.subr.bf16.mxu0 %v5073
        %7488 = vmatpush1.bf16.msra.mxu0 %v5072
        %7489 = vmatprep.subr.bf16.mxu0 %v5041
        %7490 = vmatpush1.bf16.msra.mxu0 %v5040
        %7491 = vmatprep.subr.bf16.mxu0 %v5009
        %7492 = vmatpush1.bf16.msra.mxu0 %v5008
        %7493 = vmatprep.subr.bf16.mxu0 %v4977
        %7494 = vmatpush1.bf16.msra.mxu0 %v4976
        %7495 = vmatprep.subr.bf16.mxu0 %v4945
        %7496 = vmatpush1.bf16.msra.mxu0 %v4944
        %7497 = vmatprep.subr.bf16.mxu0 %v5425
        %7498 = vmatpush2.bf16.msra.mxu0 %v5424
        %7499 = vmatprep.subr.bf16.mxu0 %v5393
        %7500 = vmatpush2.bf16.msra.mxu0 %v5392
        %7501 = vmatprep.subr.bf16.mxu0 %v5361
        %7502 = vmatpush2.bf16.msra.mxu0 %v5360
        %7503 = vmatprep.subr.bf16.mxu0 %v5329
        %7504 = vmatpush2.bf16.msra.mxu0 %v5328
        %7505 = vmatprep.subr.bf16.mxu0 %v5297
        %7506 = vmatpush2.bf16.msra.mxu0 %v5296
        %7507 = vmatprep.subr.bf16.mxu0 %v5265
        %7508 = vmatpush2.bf16.msra.mxu0 %v5264
        %7509 = vmatprep.subr.bf16.mxu0 %v5233
        %7510 = vmatpush2.bf16.msra.mxu0 %v5232
        %7511 = vmatprep.subr.bf16.mxu0 %v5201
        %7512 = vmatpush2.bf16.msra.mxu0 %v5200
        %7513 = vmatprep.mubr.bf16.mxu0 %v1331
        %7514 = vmatmul.mubr.bf16.gmra.mxu0 %v1330
        %v7515 = vpop.f32.mrf.mxu0
        %v7516 = vadd.f32 %v7475, %v7515
        %v7517 = vpop.f32.mrf.mxu0
        %v7518 = vadd.f32 %v7477, %v7517
        %v7519 = vpop.f32.mrf.mxu0
        %v7520 = vpop.f32.mrf.mxu0
        %7521 = vdwg.mxu0
        %7522 = vmatprep.subr.bf16.mxu0 %v4659
        %7523 = vmatpush1.bf16.msra.mxu0 %v4658
        %7524 = vmatprep.subr.bf16.mxu0 %v4627
        %7525 = vmatpush1.bf16.msra.mxu0 %v4626
        %7526 = vmatprep.subr.bf16.mxu0 %v4595
        %7527 = vmatpush1.bf16.msra.mxu0 %v4594
        %7528 = vmatprep.subr.bf16.mxu0 %v4563
        %7529 = vmatpush1.bf16.msra.mxu0 %v4562
        %7530 = vmatprep.subr.bf16.mxu0 %v4531
        %7531 = vmatpush1.bf16.msra.mxu0 %v4530
        %7532 = vmatprep.subr.bf16.mxu0 %v4499
        %7533 = vmatpush1.bf16.msra.mxu0 %v4498
        %7534 = vmatprep.subr.bf16.mxu0 %v4467
        %7535 = vmatpush1.bf16.msra.mxu0 %v4466
        %7536 = vmatprep.subr.bf16.mxu0 %v4435
        %7537 = vmatpush1.bf16.msra.mxu0 %v4434
        %7538 = vmatprep.subr.bf16.mxu0 %v4915
        %7539 = vmatpush2.bf16.msra.mxu0 %v4914
        %7540 = vmatprep.subr.bf16.mxu0 %v4883
        %7541 = vmatpush2.bf16.msra.mxu0 %v4882
        %7542 = vmatprep.subr.bf16.mxu0 %v4851
        %7543 = vmatpush2.bf16.msra.mxu0 %v4850
        %7544 = vmatprep.subr.bf16.mxu0 %v4819
        %7545 = vmatpush2.bf16.msra.mxu0 %v4818
        %7546 = vmatprep.subr.bf16.mxu0 %v4787
        %7547 = vmatpush2.bf16.msra.mxu0 %v4786
        %7548 = vmatprep.subr.bf16.mxu0 %v4755
        %7549 = vmatpush2.bf16.msra.mxu0 %v4754
        %7550 = vmatprep.subr.bf16.mxu0 %v4723
        %7551 = vmatpush2.bf16.msra.mxu0 %v4722
        %7552 = vmatprep.subr.bf16.mxu0 %v4691
        %7553 = vmatpush2.bf16.msra.mxu0 %v4690
        %7554 = vmatprep.mubr.bf16.mxu0 %v1329
        %7555 = vmatmul.mubr.bf16.gmra.mxu0 %v1328
        %v7556 = vpop.f32.mrf.mxu0
        %v7557 = vadd.f32 0.0, %v7556
        %v7558 = vpop.f32.mrf.mxu0
        %v7559 = vadd.f32 0.0, %v7558
        %v7560 = vpop.f32.mrf.mxu0
        %v7561 = vpop.f32.mrf.mxu0
        %7562 = vdwg.mxu0
        %7563 = vmatprep.subr.bf16.mxu0 %v5171
        %7564 = vmatpush1.bf16.msra.mxu0 %v5170
        %7565 = vmatprep.subr.bf16.mxu0 %v5139
        %7566 = vmatpush1.bf16.msra.mxu0 %v5138
        %7567 = vmatprep.subr.bf16.mxu0 %v5107
        %7568 = vmatpush1.bf16.msra.mxu0 %v5106
        %7569 = vmatprep.subr.bf16.mxu0 %v5075
        %7570 = vmatpush1.bf16.msra.mxu0 %v5074
        %7571 = vmatprep.subr.bf16.mxu0 %v5043
        %7572 = vmatpush1.bf16.msra.mxu0 %v5042
        %7573 = vmatprep.subr.bf16.mxu0 %v5011
        %7574 = vmatpush1.bf16.msra.mxu0 %v5010
        %7575 = vmatprep.subr.bf16.mxu0 %v4979
        %7576 = vmatpush1.bf16.msra.mxu0 %v4978
        %7577 = vmatprep.subr.bf16.mxu0 %v4947
        %7578 = vmatpush1.bf16.msra.mxu0 %v4946
        %7579 = vmatprep.subr.bf16.mxu0 %v5427
        %7580 = vmatpush2.bf16.msra.mxu0 %v5426
        %7581 = vmatprep.subr.bf16.mxu0 %v5395
        %7582 = vmatpush2.bf16.msra.mxu0 %v5394
        %7583 = vmatprep.subr.bf16.mxu0 %v5363
        %7584 = vmatpush2.bf16.msra.mxu0 %v5362
        %7585 = vmatprep.subr.bf16.mxu0 %v5331
        %7586 = vmatpush2.bf16.msra.mxu0 %v5330
        %7587 = vmatprep.subr.bf16.mxu0 %v5299
        %7588 = vmatpush2.bf16.msra.mxu0 %v5298
        %7589 = vmatprep.subr.bf16.mxu0 %v5267
        %7590 = vmatpush2.bf16.msra.mxu0 %v5266
        %7591 = vmatprep.subr.bf16.mxu0 %v5235
        %7592 = vmatpush2.bf16.msra.mxu0 %v5234
        %7593 = vmatprep.subr.bf16.mxu0 %v5203
        %7594 = vmatpush2.bf16.msra.mxu0 %v5202
        %7595 = vmatprep.mubr.bf16.mxu0 %v1331
        %7596 = vmatmul.mubr.bf16.gmra.mxu0 %v1330
        %v7597 = vpop.f32.mrf.mxu0
        %v7598 = vadd.f32 %v7557, %v7597
        %v7599 = vpop.f32.mrf.mxu0
        %v7600 = vadd.f32 %v7559, %v7599
        %v7601 = vpop.f32.mrf.mxu0
        %v7602 = vpop.f32.mrf.mxu0
        %7603 = vdwg.mxu0
        %7604 = vmatprep.subr.bf16.mxu0 %v4661
        %7605 = vmatpush1.bf16.msra.mxu0 %v4660
        %7606 = vmatprep.subr.bf16.mxu0 %v4629
        %7607 = vmatpush1.bf16.msra.mxu0 %v4628
        %7608 = vmatprep.subr.bf16.mxu0 %v4597
        %7609 = vmatpush1.bf16.msra.mxu0 %v4596
        %7610 = vmatprep.subr.bf16.mxu0 %v4565
        %7611 = vmatpush1.bf16.msra.mxu0 %v4564
        %7612 = vmatprep.subr.bf16.mxu0 %v4533
        %7613 = vmatpush1.bf16.msra.mxu0 %v4532
        %7614 = vmatprep.subr.bf16.mxu0 %v4501
        %7615 = vmatpush1.bf16.msra.mxu0 %v4500
        %7616 = vmatprep.subr.bf16.mxu0 %v4469
        %7617 = vmatpush1.bf16.msra.mxu0 %v4468
        %7618 = vmatprep.subr.bf16.mxu0 %v4437
        %7619 = vmatpush1.bf16.msra.mxu0 %v4436
        %7620 = vmatprep.subr.bf16.mxu0 %v4917
        %7621 = vmatpush2.bf16.msra.mxu0 %v4916
        %7622 = vmatprep.subr.bf16.mxu0 %v4885
        %7623 = vmatpush2.bf16.msra.mxu0 %v4884
        %7624 = vmatprep.subr.bf16.mxu0 %v4853
        %7625 = vmatpush2.bf16.msra.mxu0 %v4852
        %7626 = vmatprep.subr.bf16.mxu0 %v4821
        %7627 = vmatpush2.bf16.msra.mxu0 %v4820
        %7628 = vmatprep.subr.bf16.mxu0 %v4789
        %7629 = vmatpush2.bf16.msra.mxu0 %v4788
        %7630 = vmatprep.subr.bf16.mxu0 %v4757
        %7631 = vmatpush2.bf16.msra.mxu0 %v4756
        %7632 = vmatprep.subr.bf16.mxu0 %v4725
        %7633 = vmatpush2.bf16.msra.mxu0 %v4724
        %7634 = vmatprep.subr.bf16.mxu0 %v4693
        %7635 = vmatpush2.bf16.msra.mxu0 %v4692
        %7636 = vmatprep.mubr.bf16.mxu0 %v1329
        %7637 = vmatmul.mubr.bf16.gmra.mxu0 %v1328
        %v7638 = vpop.f32.mrf.mxu0
        %v7639 = vadd.f32 0.0, %v7638
        %v7640 = vpop.f32.mrf.mxu0
        %v7641 = vadd.f32 0.0, %v7640
        %v7642 = vpop.f32.mrf.mxu0
        %v7643 = vpop.f32.mrf.mxu0
        %7644 = vdwg.mxu0
        %7645 = vmatprep.subr.bf16.mxu0 %v5173
        %7646 = vmatpush1.bf16.msra.mxu0 %v5172
        %7647 = vmatprep.subr.bf16.mxu0 %v5141
        %7648 = vmatpush1.bf16.msra.mxu0 %v5140
        %7649 = vmatprep.subr.bf16.mxu0 %v5109
        %7650 = vmatpush1.bf16.msra.mxu0 %v5108
        %7651 = vmatprep.subr.bf16.mxu0 %v5077
        %7652 = vmatpush1.bf16.msra.mxu0 %v5076
        %7653 = vmatprep.subr.bf16.mxu0 %v5045
        %7654 = vmatpush1.bf16.msra.mxu0 %v5044
        %7655 = vmatprep.subr.bf16.mxu0 %v5013
        %7656 = vmatpush1.bf16.msra.mxu0 %v5012
        %7657 = vmatprep.subr.bf16.mxu0 %v4981
        %7658 = vmatpush1.bf16.msra.mxu0 %v4980
        %7659 = vmatprep.subr.bf16.mxu0 %v4949
        %7660 = vmatpush1.bf16.msra.mxu0 %v4948
        %7661 = vmatprep.subr.bf16.mxu0 %v5429
        %7662 = vmatpush2.bf16.msra.mxu0 %v5428
        %7663 = vmatprep.subr.bf16.mxu0 %v5397
        %7664 = vmatpush2.bf16.msra.mxu0 %v5396
        %7665 = vmatprep.subr.bf16.mxu0 %v5365
        %7666 = vmatpush2.bf16.msra.mxu0 %v5364
        %7667 = vmatprep.subr.bf16.mxu0 %v5333
        %7668 = vmatpush2.bf16.msra.mxu0 %v5332
        %7669 = vmatprep.subr.bf16.mxu0 %v5301
        %7670 = vmatpush2.bf16.msra.mxu0 %v5300
        %7671 = vmatprep.subr.bf16.mxu0 %v5269
        %7672 = vmatpush2.bf16.msra.mxu0 %v5268
        %7673 = vmatprep.subr.bf16.mxu0 %v5237
        %7674 = vmatpush2.bf16.msra.mxu0 %v5236
        %7675 = vmatprep.subr.bf16.mxu0 %v5205
        %7676 = vmatpush2.bf16.msra.mxu0 %v5204
        %7677 = vmatprep.mubr.bf16.mxu0 %v1331
        %7678 = vmatmul.mubr.bf16.gmra.mxu0 %v1330
        %v7679 = vpop.f32.mrf.mxu0
        %v7680 = vadd.f32 %v7639, %v7679
        %v7681 = vpop.f32.mrf.mxu0
        %v7682 = vadd.f32 %v7641, %v7681
        %v7683 = vpop.f32.mrf.mxu0
        %v7684 = vpop.f32.mrf.mxu0
        %7685 = vdwg.mxu0
        %7686 = vmatprep.subr.bf16.mxu0 %v4663
        %7687 = vmatpush1.bf16.msra.mxu0 %v4662
        %7688 = vmatprep.subr.bf16.mxu0 %v4631
        %7689 = vmatpush1.bf16.msra.mxu0 %v4630
        %7690 = vmatprep.subr.bf16.mxu0 %v4599
        %7691 = vmatpush1.bf16.msra.mxu0 %v4598
        %7692 = vmatprep.subr.bf16.mxu0 %v4567
        %7693 = vmatpush1.bf16.msra.mxu0 %v4566
        %7694 = vmatprep.subr.bf16.mxu0 %v4535
        %7695 = vmatpush1.bf16.msra.mxu0 %v4534
        %7696 = vmatprep.subr.bf16.mxu0 %v4503
        %7697 = vmatpush1.bf16.msra.mxu0 %v4502
        %7698 = vmatprep.subr.bf16.mxu0 %v4471
        %7699 = vmatpush1.bf16.msra.mxu0 %v4470
        %7700 = vmatprep.subr.bf16.mxu0 %v4439
        %7701 = vmatpush1.bf16.msra.mxu0 %v4438
        %7702 = vmatprep.subr.bf16.mxu0 %v4919
        %7703 = vmatpush2.bf16.msra.mxu0 %v4918
        %7704 = vmatprep.subr.bf16.mxu0 %v4887
        %7705 = vmatpush2.bf16.msra.mxu0 %v4886
        %7706 = vmatprep.subr.bf16.mxu0 %v4855
        %7707 = vmatpush2.bf16.msra.mxu0 %v4854
        %7708 = vmatprep.subr.bf16.mxu0 %v4823
        %7709 = vmatpush2.bf16.msra.mxu0 %v4822
        %7710 = vmatprep.subr.bf16.mxu0 %v4791
        %7711 = vmatpush2.bf16.msra.mxu0 %v4790
        %7712 = vmatprep.subr.bf16.mxu0 %v4759
        %7713 = vmatpush2.bf16.msra.mxu0 %v4758
        %7714 = vmatprep.subr.bf16.mxu0 %v4727
        %7715 = vmatpush2.bf16.msra.mxu0 %v4726
        %7716 = vmatprep.subr.bf16.mxu0 %v4695
        %7717 = vmatpush2.bf16.msra.mxu0 %v4694
        %7718 = vmatprep.mubr.bf16.mxu0 %v1329
        %7719 = vmatmul.mubr.bf16.gmra.mxu0 %v1328
        %v7720 = vpop.f32.mrf.mxu0
        %v7721 = vadd.f32 0.0, %v7720
        %v7722 = vpop.f32.mrf.mxu0
        %v7723 = vadd.f32 0.0, %v7722
        %v7724 = vpop.f32.mrf.mxu0
        %v7725 = vpop.f32.mrf.mxu0
        %7726 = vdwg.mxu0
        %7727 = vmatprep.subr.bf16.mxu0 %v5175
        %7728 = vmatpush1.bf16.msra.mxu0 %v5174
        %7729 = vmatprep.subr.bf16.mxu0 %v5143
        %7730 = vmatpush1.bf16.msra.mxu0 %v5142
        %7731 = vmatprep.subr.bf16.mxu0 %v5111
        %7732 = vmatpush1.bf16.msra.mxu0 %v5110
        %7733 = vmatprep.subr.bf16.mxu0 %v5079
        %7734 = vmatpush1.bf16.msra.mxu0 %v5078
        %7735 = vmatprep.subr.bf16.mxu0 %v5047
        %7736 = vmatpush1.bf16.msra.mxu0 %v5046
        %7737 = vmatprep.subr.bf16.mxu0 %v5015
        %7738 = vmatpush1.bf16.msra.mxu0 %v5014
        %7739 = vmatprep.subr.bf16.mxu0 %v4983
        %7740 = vmatpush1.bf16.msra.mxu0 %v4982
        %7741 = vmatprep.subr.bf16.mxu0 %v4951
        %7742 = vmatpush1.bf16.msra.mxu0 %v4950
        %7743 = vmatprep.subr.bf16.mxu0 %v5431
        %7744 = vmatpush2.bf16.msra.mxu0 %v5430
        %7745 = vmatprep.subr.bf16.mxu0 %v5399
        %7746 = vmatpush2.bf16.msra.mxu0 %v5398
        %7747 = vmatprep.subr.bf16.mxu0 %v5367
        %7748 = vmatpush2.bf16.msra.mxu0 %v5366
        %7749 = vmatprep.subr.bf16.mxu0 %v5335
        %7750 = vmatpush2.bf16.msra.mxu0 %v5334
        %7751 = vmatprep.subr.bf16.mxu0 %v5303
        %7752 = vmatpush2.bf16.msra.mxu0 %v5302
        %7753 = vmatprep.subr.bf16.mxu0 %v5271
        %7754 = vmatpush2.bf16.msra.mxu0 %v5270
        %7755 = vmatprep.subr.bf16.mxu0 %v5239
        %7756 = vmatpush2.bf16.msra.mxu0 %v5238
        %7757 = vmatprep.subr.bf16.mxu0 %v5207
        %7758 = vmatpush2.bf16.msra.mxu0 %v5206
        %7759 = vmatprep.mubr.bf16.mxu0 %v1331
        %7760 = vmatmul.mubr.bf16.gmra.mxu0 %v1330
        %v7761 = vpop.f32.mrf.mxu0
        %v7762 = vadd.f32 %v7721, %v7761
        %v7763 = vpop.f32.mrf.mxu0
        %v7764 = vadd.f32 %v7723, %v7763
        %v7765 = vpop.f32.mrf.mxu0
        %v7766 = vpop.f32.mrf.mxu0
        %7767 = vdwg.mxu0
        %v7768 = vadd.f32 %v264, %v6532
        %v7769 = vadd.f32 %v265, %v6534
        %v7770 = vadd.f32 %v266, %v6614
        %v7771 = vadd.f32 %v267, %v6616
        %v7772 = vadd.f32 %v268, %v6696
        %v7773 = vadd.f32 %v269, %v6698
        %v7774 = vadd.f32 %v270, %v6778
        %v7775 = vadd.f32 %v271, %v6780
        %v7776 = vadd.f32 %v272, %v6860
        %v7777 = vadd.f32 %v273, %v6862
        %v7778 = vadd.f32 %v274, %v6942
        %v7779 = vadd.f32 %v275, %v6944
        %v7780 = vadd.f32 %v276, %v7024
        %v7781 = vadd.f32 %v277, %v7026
        %v7782 = vadd.f32 %v278, %v7106
        %v7783 = vadd.f32 %v279, %v7108
        %v7784 = vadd.f32 %v280, %v7188
        %v7785 = vadd.f32 %v281, %v7190
        %v7786 = vadd.f32 %v282, %v7270
        %v7787 = vadd.f32 %v283, %v7272
        %v7788 = vadd.f32 %v284, %v7352
        %v7789 = vadd.f32 %v285, %v7354
        %v7790 = vadd.f32 %v286, %v7434
        %v7791 = vadd.f32 %v287, %v7436
        %v7792 = vadd.f32 %v288, %v7516
        %v7793 = vadd.f32 %v289, %v7518
        %v7794 = vadd.f32 %v290, %v7598
        %v7795 = vadd.f32 %v291, %v7600
        %v7796 = vadd.f32 %v292, %v7680
        %v7797 = vadd.f32 %v293, %v7682
        %v7798 = vadd.f32 %v294, %v7762
        %v7799 = vadd.f32 %v295, %v7764
        %7800 = vst [vmem:[#allocation2] sm:$0xff] %v7768
        %7801 = vst [vmem:[#allocation2 + $0x8] sm:$0xff] %v7769
        %7802 = vst [vmem:[#allocation2 + $0x10] sm:$0xff] %v7770
        %7803 = vst [vmem:[#allocation2 + $0x18] sm:$0xff] %v7771
        %7804 = vst [vmem:[#allocation2 + $0x20] sm:$0xff] %v7772
        %7805 = vst [vmem:[#allocation2 + $0x28] sm:$0xff] %v7773
        %7806 = vst [vmem:[#allocation2 + $0x30] sm:$0xff] %v7774
        %7807 = vst [vmem:[#allocation2 + $0x38] sm:$0xff] %v7775
        %7808 = vst [vmem:[#allocation2 + $0x40] sm:$0xff] %v7776
        %7809 = vst [vmem:[#allocation2 + $0x48] sm:$0xff] %v7777
        %7810 = vst [vmem:[#allocation2 + $0x50] sm:$0xff] %v7778
        %7811 = vst [vmem:[#allocation2 + $0x58] sm:$0xff] %v7779
        %7812 = vst [vmem:[#allocation2 + $0x60] sm:$0xff] %v7780
        %7813 = vst [vmem:[#allocation2 + $0x68] sm:$0xff] %v7781
        %7814 = vst [vmem:[#allocation2 + $0x70] sm:$0xff] %v7782
        %7815 = vst [vmem:[#allocation2 + $0x78] sm:$0xff] %v7783
        %7816 = vst [vmem:[#allocation2 + $0x80] sm:$0xff] %v7784
        %7817 = vst [vmem:[#allocation2 + $0x88] sm:$0xff] %v7785
        %7818 = vst [vmem:[#allocation2 + $0x90] sm:$0xff] %v7786
        %7819 = vst [vmem:[#allocation2 + $0x98] sm:$0xff] %v7787
        %7820 = vst [vmem:[#allocation2 + $0xa0] sm:$0xff] %v7788
        %7821 = vst [vmem:[#allocation2 + $0xa8] sm:$0xff] %v7789
        %7822 = vst [vmem:[#allocation2 + $0xb0] sm:$0xff] %v7790
        %7823 = vst [vmem:[#allocation2 + $0xb8] sm:$0xff] %v7791
        %7824 = vst [vmem:[#allocation2 + $0xc0] sm:$0xff] %v7792
        %7825 = vst [vmem:[#allocation2 + $0xc8] sm:$0xff] %v7793
        %7826 = vst [vmem:[#allocation2 + $0xd0] sm:$0xff] %v7794
        %7827 = vst [vmem:[#allocation2 + $0xd8] sm:$0xff] %v7795
        %7828 = vst [vmem:[#allocation2 + $0xe0] sm:$0xff] %v7796
        %7829 = vst [vmem:[#allocation2 + $0xe8] sm:$0xff] %v7797
        %7830 = vst [vmem:[#allocation2 + $0xf0] sm:$0xff] %v7798
        %7831 = vst [vmem:[#allocation2 + $0xf8] sm:$0xff] %v7799
        %p7832 = scmp.eq.s32.totalorder %s18, 5
        // Predicated region
        $region45: #{eco_snn_forward.4} parent=35 // pred_check
          %p7833 = pneg %p7832
        $region46: #{eco_snn_forward.4} parent=35 // pred_check_branch
          %7835 = sbr.rel (%p7833) target = $region48
        $region47: #{eco_snn_forward.4} parent=35 // pred_region
          %v7836 = vld [vmem:[#allocation2] sm:$0xff]
          %v7837 = vld [vmem:[#allocation2 + $0x8] sm:$0xff]
          %v7838 = vld [vmem:[#allocation2 + $0x10] sm:$0xff]
          %v7839 = vld [vmem:[#allocation2 + $0x18] sm:$0xff]
          %v7840 = vld [vmem:[#allocation2 + $0x20] sm:$0xff]
          %v7841 = vld [vmem:[#allocation2 + $0x28] sm:$0xff]
          %v7842 = vld [vmem:[#allocation2 + $0x30] sm:$0xff]
          %v7843 = vld [vmem:[#allocation2 + $0x38] sm:$0xff]
          %v7844 = vld [vmem:[#allocation2 + $0x40] sm:$0xff]
          %v7845 = vld [vmem:[#allocation2 + $0x48] sm:$0xff]
          %v7846 = vld [vmem:[#allocation2 + $0x50] sm:$0xff]
          %v7847 = vld [vmem:[#allocation2 + $0x58] sm:$0xff]
          %v7848 = vld [vmem:[#allocation2 + $0x60] sm:$0xff]
          %v7849 = vld [vmem:[#allocation2 + $0x68] sm:$0xff]
          %v7850 = vld [vmem:[#allocation2 + $0x70] sm:$0xff]
          %v7851 = vld [vmem:[#allocation2 + $0x78] sm:$0xff]
          %v7852 = vld [vmem:[#allocation2 + $0x80] sm:$0xff]
          %v7853 = vld [vmem:[#allocation2 + $0x88] sm:$0xff]
          %v7854 = vld [vmem:[#allocation2 + $0x90] sm:$0xff]
          %v7855 = vld [vmem:[#allocation2 + $0x98] sm:$0xff]
          %v7856 = vld [vmem:[#allocation2 + $0xa0] sm:$0xff]
          %v7857 = vld [vmem:[#allocation2 + $0xa8] sm:$0xff]
          %v7858 = vld [vmem:[#allocation2 + $0xb0] sm:$0xff]
          %v7859 = vld [vmem:[#allocation2 + $0xb8] sm:$0xff]
          %v7860 = vld [vmem:[#allocation2 + $0xc0] sm:$0xff]
          %v7861 = vld [vmem:[#allocation2 + $0xc8] sm:$0xff]
          %v7862 = vld [vmem:[#allocation2 + $0xd0] sm:$0xff]
          %v7863 = vld [vmem:[#allocation2 + $0xd8] sm:$0xff]
          %v7864 = vld [vmem:[#allocation2 + $0xe0] sm:$0xff]
          %v7865 = vld [vmem:[#allocation2 + $0xe8] sm:$0xff]
          %v7866 = vld [vmem:[#allocation2 + $0xf0] sm:$0xff]
          %v7867 = vld [vmem:[#allocation2 + $0xf8] sm:$0xff]
          %v7868 = vpack.c.bf16 %v7836, %v7836
          %v7869 = vpack.c.bf16 %v7837, %v7837
          %v7870 = vpack.c.bf16 %v7838, %v7838
          %v7871 = vpack.c.bf16 %v7839, %v7839
          %v7872 = vpack.c.bf16 %v7840, %v7840
          %v7873 = vpack.c.bf16 %v7841, %v7841
          %v7874 = vpack.c.bf16 %v7842, %v7842
          %v7875 = vpack.c.bf16 %v7843, %v7843
          %v7876 = vpack.c.bf16 %v7844, %v7844
          %v7877 = vpack.c.bf16 %v7845, %v7845
          %v7878 = vpack.c.bf16 %v7846, %v7846
          %v7879 = vpack.c.bf16 %v7847, %v7847
          %v7880 = vpack.c.bf16 %v7848, %v7848
          %v7881 = vpack.c.bf16 %v7849, %v7849
          %v7882 = vpack.c.bf16 %v7850, %v7850
          %v7883 = vpack.c.bf16 %v7851, %v7851
          %v7884 = vpack.c.bf16 %v7852, %v7852
          %v7885 = vpack.c.bf16 %v7853, %v7853
          %v7886 = vpack.c.bf16 %v7854, %v7854
          %v7887 = vpack.c.bf16 %v7855, %v7855
          %v7888 = vpack.c.bf16 %v7856, %v7856
          %v7889 = vpack.c.bf16 %v7857, %v7857
          %v7890 = vpack.c.bf16 %v7858, %v7858
          %v7891 = vpack.c.bf16 %v7859, %v7859
          %v7892 = vpack.c.bf16 %v7860, %v7860
          %v7893 = vpack.c.bf16 %v7861, %v7861
          %v7894 = vpack.c.bf16 %v7862, %v7862
          %v7895 = vpack.c.bf16 %v7863, %v7863
          %v7896 = vpack.c.bf16 %v7864, %v7864
          %v7897 = vpack.c.bf16 %v7865, %v7865
          %v7898 = vpack.c.bf16 %v7866, %v7866
          %v7899 = vpack.c.bf16 %v7867, %v7867
          %v7900 = vld [vmem:[%s2] sm:$0xf]
          %v7901 = vld [vmem:[%s2 + $0x4] sm:$0xf]
          %v7902 = vld [vmem:[%s2 + $0x8] sm:$0xf]
          %v7903 = vld [vmem:[%s2 + $0xc] sm:$0xf]
          %v7904 = vld [vmem:[%s2 + $0x10] sm:$0xf]
          %v7905 = vld [vmem:[%s2 + $0x14] sm:$0xf]
          %v7906 = vld [vmem:[%s2 + $0x18] sm:$0xf]
          %v7907 = vld [vmem:[%s2 + $0x1c] sm:$0xf]
          %v7908 = vld [vmem:[%s2 + $0x20] sm:$0xf]
          %v7909 = vld [vmem:[%s2 + $0x24] sm:$0xf]
          %v7910 = vld [vmem:[%s2 + $0x28] sm:$0xf]
          %v7911 = vld [vmem:[%s2 + $0x2c] sm:$0xf]
          %v7912 = vld [vmem:[%s2 + $0x30] sm:$0xf]
          %v7913 = vld [vmem:[%s2 + $0x34] sm:$0xf]
          %v7914 = vld [vmem:[%s2 + $0x38] sm:$0xf]
          %v7915 = vld [vmem:[%s2 + $0x3c] sm:$0xf]
          %v7916 = vld [vmem:[%s2 + $0x40] sm:$0xf]
          %v7917 = vld [vmem:[%s2 + $0x44] sm:$0xf]
          %v7918 = vld [vmem:[%s2 + $0x48] sm:$0xf]
          %v7919 = vld [vmem:[%s2 + $0x4c] sm:$0xf]
          %v7920 = vld [vmem:[%s2 + $0x50] sm:$0xf]
          %v7921 = vld [vmem:[%s2 + $0x54] sm:$0xf]
          %v7922 = vld [vmem:[%s2 + $0x58] sm:$0xf]
          %v7923 = vld [vmem:[%s2 + $0x5c] sm:$0xf]
          %v7924 = vld [vmem:[%s2 + $0x60] sm:$0xf]
          %v7925 = vld [vmem:[%s2 + $0x64] sm:$0xf]
          %v7926 = vld [vmem:[%s2 + $0x68] sm:$0xf]
          %v7927 = vld [vmem:[%s2 + $0x6c] sm:$0xf]
          %v7928 = vld [vmem:[%s2 + $0x70] sm:$0xf]
          %v7929 = vld [vmem:[%s2 + $0x74] sm:$0xf]
          %v7930 = vld [vmem:[%s2 + $0x78] sm:$0xf]
          %v7931 = vld [vmem:[%s2 + $0x7c] sm:$0xf]
          %v7932 = vld [vmem:[%s2 + $0x80] sm:$0xf]
          %v7933 = vld [vmem:[%s2 + $0x84] sm:$0xf]
          %v7934 = vld [vmem:[%s2 + $0x88] sm:$0xf]
          %v7935 = vld [vmem:[%s2 + $0x8c] sm:$0xf]
          %v7936 = vld [vmem:[%s2 + $0x90] sm:$0xf]
          %v7937 = vld [vmem:[%s2 + $0x94] sm:$0xf]
          %v7938 = vld [vmem:[%s2 + $0x98] sm:$0xf]
          %v7939 = vld [vmem:[%s2 + $0x9c] sm:$0xf]
          %v7940 = vld [vmem:[%s2 + $0xa0] sm:$0xf]
          %v7941 = vld [vmem:[%s2 + $0xa4] sm:$0xf]
          %v7942 = vld [vmem:[%s2 + $0xa8] sm:$0xf]
          %v7943 = vld [vmem:[%s2 + $0xac] sm:$0xf]
          %v7944 = vld [vmem:[%s2 + $0xb0] sm:$0xf]
          %v7945 = vld [vmem:[%s2 + $0xb4] sm:$0xf]
          %v7946 = vld [vmem:[%s2 + $0xb8] sm:$0xf]
          %v7947 = vld [vmem:[%s2 + $0xbc] sm:$0xf]
          %v7948 = vld [vmem:[%s2 + $0xc0] sm:$0xf]
          %v7949 = vld [vmem:[%s2 + $0xc4] sm:$0xf]
          %v7950 = vld [vmem:[%s2 + $0xc8] sm:$0xf]
          %v7951 = vld [vmem:[%s2 + $0xcc] sm:$0xf]
          %v7952 = vld [vmem:[%s2 + $0xd0] sm:$0xf]
          %v7953 = vld [vmem:[%s2 + $0xd4] sm:$0xf]
          %v7954 = vld [vmem:[%s2 + $0xd8] sm:$0xf]
          %v7955 = vld [vmem:[%s2 + $0xdc] sm:$0xf]
          %v7956 = vld [vmem:[%s2 + $0xe0] sm:$0xf]
          %v7957 = vld [vmem:[%s2 + $0xe4] sm:$0xf]
          %v7958 = vld [vmem:[%s2 + $0xe8] sm:$0xf]
          %v7959 = vld [vmem:[%s2 + $0xec] sm:$0xf]
          %v7960 = vld [vmem:[%s2 + $0xf0] sm:$0xf]
          %v7961 = vld [vmem:[%s2 + $0xf4] sm:$0xf]
          %v7962 = vld [vmem:[%s2 + $0xf8] sm:$0xf]
          %v7963 = vld [vmem:[%s2 + $0xfc] sm:$0xf]
          %v7964 = vld [vmem:[%s2 + $0x100] sm:$0xf]
          %v7965 = vld [vmem:[%s2 + $0x104] sm:$0xf]
          %v7966 = vld [vmem:[%s2 + $0x108] sm:$0xf]
          %v7967 = vld [vmem:[%s2 + $0x10c] sm:$0xf]
          %v7968 = vld [vmem:[%s2 + $0x110] sm:$0xf]
          %v7969 = vld [vmem:[%s2 + $0x114] sm:$0xf]
          %v7970 = vld [vmem:[%s2 + $0x118] sm:$0xf]
          %v7971 = vld [vmem:[%s2 + $0x11c] sm:$0xf]
          %v7972 = vld [vmem:[%s2 + $0x120] sm:$0xf]
          %v7973 = vld [vmem:[%s2 + $0x124] sm:$0xf]
          %v7974 = vld [vmem:[%s2 + $0x128] sm:$0xf]
          %v7975 = vld [vmem:[%s2 + $0x12c] sm:$0xf]
          %v7976 = vld [vmem:[%s2 + $0x130] sm:$0xf]
          %v7977 = vld [vmem:[%s2 + $0x134] sm:$0xf]
          %v7978 = vld [vmem:[%s2 + $0x138] sm:$0xf]
          %v7979 = vld [vmem:[%s2 + $0x13c] sm:$0xf]
          %v7980 = vld [vmem:[%s2 + $0x140] sm:$0xf]
          %v7981 = vld [vmem:[%s2 + $0x144] sm:$0xf]
          %v7982 = vld [vmem:[%s2 + $0x148] sm:$0xf]
          %v7983 = vld [vmem:[%s2 + $0x14c] sm:$0xf]
          %v7984 = vld [vmem:[%s2 + $0x150] sm:$0xf]
          %v7985 = vld [vmem:[%s2 + $0x154] sm:$0xf]
          %v7986 = vld [vmem:[%s2 + $0x158] sm:$0xf]
          %v7987 = vld [vmem:[%s2 + $0x15c] sm:$0xf]
          %v7988 = vld [vmem:[%s2 + $0x160] sm:$0xf]
          %v7989 = vld [vmem:[%s2 + $0x164] sm:$0xf]
          %v7990 = vld [vmem:[%s2 + $0x168] sm:$0xf]
          %v7991 = vld [vmem:[%s2 + $0x16c] sm:$0xf]
          %v7992 = vld [vmem:[%s2 + $0x170] sm:$0xf]
          %v7993 = vld [vmem:[%s2 + $0x174] sm:$0xf]
          %v7994 = vld [vmem:[%s2 + $0x178] sm:$0xf]
          %v7995 = vld [vmem:[%s2 + $0x17c] sm:$0xf]
          %v7996 = vld [vmem:[%s2 + $0x180] sm:$0xf]
          %v7997 = vld [vmem:[%s2 + $0x184] sm:$0xf]
          %v7998 = vld [vmem:[%s2 + $0x188] sm:$0xf]
          %v7999 = vld [vmem:[%s2 + $0x18c] sm:$0xf]
          %v8000 = vld [vmem:[%s2 + $0x190] sm:$0xf]
          %v8001 = vld [vmem:[%s2 + $0x194] sm:$0xf]
          %v8002 = vld [vmem:[%s2 + $0x198] sm:$0xf]
          %v8003 = vld [vmem:[%s2 + $0x19c] sm:$0xf]
          %v8004 = vld [vmem:[%s2 + $0x1a0] sm:$0xf]
          %v8005 = vld [vmem:[%s2 + $0x1a4] sm:$0xf]
          %v8006 = vld [vmem:[%s2 + $0x1a8] sm:$0xf]
          %v8007 = vld [vmem:[%s2 + $0x1ac] sm:$0xf]
          %v8008 = vld [vmem:[%s2 + $0x1b0] sm:$0xf]
          %v8009 = vld [vmem:[%s2 + $0x1b4] sm:$0xf]
          %v8010 = vld [vmem:[%s2 + $0x1b8] sm:$0xf]
          %v8011 = vld [vmem:[%s2 + $0x1bc] sm:$0xf]
          %v8012 = vld [vmem:[%s2 + $0x1c0] sm:$0xf]
          %v8013 = vld [vmem:[%s2 + $0x1c4] sm:$0xf]
          %v8014 = vld [vmem:[%s2 + $0x1c8] sm:$0xf]
          %v8015 = vld [vmem:[%s2 + $0x1cc] sm:$0xf]
          %v8016 = vld [vmem:[%s2 + $0x1d0] sm:$0xf]
          %v8017 = vld [vmem:[%s2 + $0x1d4] sm:$0xf]
          %v8018 = vld [vmem:[%s2 + $0x1d8] sm:$0xf]
          %v8019 = vld [vmem:[%s2 + $0x1dc] sm:$0xf]
          %v8020 = vld [vmem:[%s2 + $0x1e0] sm:$0xf]
          %v8021 = vld [vmem:[%s2 + $0x1e4] sm:$0xf]
          %v8022 = vld [vmem:[%s2 + $0x1e8] sm:$0xf]
          %v8023 = vld [vmem:[%s2 + $0x1ec] sm:$0xf]
          %v8024 = vld [vmem:[%s2 + $0x1f0] sm:$0xf]
          %v8025 = vld [vmem:[%s2 + $0x1f4] sm:$0xf]
          %v8026 = vld [vmem:[%s2 + $0x1f8] sm:$0xf]
          %v8027 = vld [vmem:[%s2 + $0x1fc] sm:$0xf]
          %v8028 = vld [vmem:[%s2 + $0x200] sm:$0xf]
          %v8029 = vld [vmem:[%s2 + $0x204] sm:$0xf]
          %v8030 = vld [vmem:[%s2 + $0x208] sm:$0xf]
          %v8031 = vld [vmem:[%s2 + $0x20c] sm:$0xf]
          %v8032 = vld [vmem:[%s2 + $0x210] sm:$0xf]
          %v8033 = vld [vmem:[%s2 + $0x214] sm:$0xf]
          %v8034 = vld [vmem:[%s2 + $0x218] sm:$0xf]
          %v8035 = vld [vmem:[%s2 + $0x21c] sm:$0xf]
          %v8036 = vld [vmem:[%s2 + $0x220] sm:$0xf]
          %v8037 = vld [vmem:[%s2 + $0x224] sm:$0xf]
          %v8038 = vld [vmem:[%s2 + $0x228] sm:$0xf]
          %v8039 = vld [vmem:[%s2 + $0x22c] sm:$0xf]
          %v8040 = vld [vmem:[%s2 + $0x230] sm:$0xf]
          %v8041 = vld [vmem:[%s2 + $0x234] sm:$0xf]
          %v8042 = vld [vmem:[%s2 + $0x238] sm:$0xf]
          %v8043 = vld [vmem:[%s2 + $0x23c] sm:$0xf]
          %v8044 = vld [vmem:[%s2 + $0x240] sm:$0xf]
          %v8045 = vld [vmem:[%s2 + $0x244] sm:$0xf]
          %v8046 = vld [vmem:[%s2 + $0x248] sm:$0xf]
          %v8047 = vld [vmem:[%s2 + $0x24c] sm:$0xf]
          %v8048 = vld [vmem:[%s2 + $0x250] sm:$0xf]
          %v8049 = vld [vmem:[%s2 + $0x254] sm:$0xf]
          %v8050 = vld [vmem:[%s2 + $0x258] sm:$0xf]
          %v8051 = vld [vmem:[%s2 + $0x25c] sm:$0xf]
          %v8052 = vld [vmem:[%s2 + $0x260] sm:$0xf]
          %v8053 = vld [vmem:[%s2 + $0x264] sm:$0xf]
          %v8054 = vld [vmem:[%s2 + $0x268] sm:$0xf]
          %v8055 = vld [vmem:[%s2 + $0x26c] sm:$0xf]
          %v8056 = vld [vmem:[%s2 + $0x270] sm:$0xf]
          %v8057 = vld [vmem:[%s2 + $0x274] sm:$0xf]
          %v8058 = vld [vmem:[%s2 + $0x278] sm:$0xf]
          %v8059 = vld [vmem:[%s2 + $0x27c] sm:$0xf]
          %v8060 = vld [vmem:[%s2 + $0x280] sm:$0xf]
          %v8061 = vld [vmem:[%s2 + $0x284] sm:$0xf]
          %v8062 = vld [vmem:[%s2 + $0x288] sm:$0xf]
          %v8063 = vld [vmem:[%s2 + $0x28c] sm:$0xf]
          %v8064 = vld [vmem:[%s2 + $0x290] sm:$0xf]
          %v8065 = vld [vmem:[%s2 + $0x294] sm:$0xf]
          %v8066 = vld [vmem:[%s2 + $0x298] sm:$0xf]
          %v8067 = vld [vmem:[%s2 + $0x29c] sm:$0xf]
          %v8068 = vld [vmem:[%s2 + $0x2a0] sm:$0xf]
          %v8069 = vld [vmem:[%s2 + $0x2a4] sm:$0xf]
          %v8070 = vld [vmem:[%s2 + $0x2a8] sm:$0xf]
          %v8071 = vld [vmem:[%s2 + $0x2ac] sm:$0xf]
          %v8072 = vld [vmem:[%s2 + $0x2b0] sm:$0xf]
          %v8073 = vld [vmem:[%s2 + $0x2b4] sm:$0xf]
          %v8074 = vld [vmem:[%s2 + $0x2b8] sm:$0xf]
          %v8075 = vld [vmem:[%s2 + $0x2bc] sm:$0xf]
          %v8076 = vld [vmem:[%s2 + $0x2c0] sm:$0xf]
          %v8077 = vld [vmem:[%s2 + $0x2c4] sm:$0xf]
          %v8078 = vld [vmem:[%s2 + $0x2c8] sm:$0xf]
          %v8079 = vld [vmem:[%s2 + $0x2cc] sm:$0xf]
          %v8080 = vld [vmem:[%s2 + $0x2d0] sm:$0xf]
          %v8081 = vld [vmem:[%s2 + $0x2d4] sm:$0xf]
          %v8082 = vld [vmem:[%s2 + $0x2d8] sm:$0xf]
          %v8083 = vld [vmem:[%s2 + $0x2dc] sm:$0xf]
          %v8084 = vld [vmem:[%s2 + $0x2e0] sm:$0xf]
          %v8085 = vld [vmem:[%s2 + $0x2e4] sm:$0xf]
          %v8086 = vld [vmem:[%s2 + $0x2e8] sm:$0xf]
          %v8087 = vld [vmem:[%s2 + $0x2ec] sm:$0xf]
          %v8088 = vld [vmem:[%s2 + $0x2f0] sm:$0xf]
          %v8089 = vld [vmem:[%s2 + $0x2f4] sm:$0xf]
          %v8090 = vld [vmem:[%s2 + $0x2f8] sm:$0xf]
          %v8091 = vld [vmem:[%s2 + $0x2fc] sm:$0xf]
          %v8092 = vld [vmem:[%s2 + $0x300] sm:$0xf]
          %v8093 = vld [vmem:[%s2 + $0x304] sm:$0xf]
          %v8094 = vld [vmem:[%s2 + $0x308] sm:$0xf]
          %v8095 = vld [vmem:[%s2 + $0x30c] sm:$0xf]
          %v8096 = vld [vmem:[%s2 + $0x310] sm:$0xf]
          %v8097 = vld [vmem:[%s2 + $0x314] sm:$0xf]
          %v8098 = vld [vmem:[%s2 + $0x318] sm:$0xf]
          %v8099 = vld [vmem:[%s2 + $0x31c] sm:$0xf]
          %v8100 = vld [vmem:[%s2 + $0x320] sm:$0xf]
          %v8101 = vld [vmem:[%s2 + $0x324] sm:$0xf]
          %v8102 = vld [vmem:[%s2 + $0x328] sm:$0xf]
          %v8103 = vld [vmem:[%s2 + $0x32c] sm:$0xf]
          %v8104 = vld [vmem:[%s2 + $0x330] sm:$0xf]
          %v8105 = vld [vmem:[%s2 + $0x334] sm:$0xf]
          %v8106 = vld [vmem:[%s2 + $0x338] sm:$0xf]
          %v8107 = vld [vmem:[%s2 + $0x33c] sm:$0xf]
          %v8108 = vld [vmem:[%s2 + $0x340] sm:$0xf]
          %v8109 = vld [vmem:[%s2 + $0x344] sm:$0xf]
          %v8110 = vld [vmem:[%s2 + $0x348] sm:$0xf]
          %v8111 = vld [vmem:[%s2 + $0x34c] sm:$0xf]
          %v8112 = vld [vmem:[%s2 + $0x350] sm:$0xf]
          %v8113 = vld [vmem:[%s2 + $0x354] sm:$0xf]
          %v8114 = vld [vmem:[%s2 + $0x358] sm:$0xf]
          %v8115 = vld [vmem:[%s2 + $0x35c] sm:$0xf]
          %v8116 = vld [vmem:[%s2 + $0x360] sm:$0xf]
          %v8117 = vld [vmem:[%s2 + $0x364] sm:$0xf]
          %v8118 = vld [vmem:[%s2 + $0x368] sm:$0xf]
          %v8119 = vld [vmem:[%s2 + $0x36c] sm:$0xf]
          %v8120 = vld [vmem:[%s2 + $0x370] sm:$0xf]
          %v8121 = vld [vmem:[%s2 + $0x374] sm:$0xf]
          %v8122 = vld [vmem:[%s2 + $0x378] sm:$0xf]
          %v8123 = vld [vmem:[%s2 + $0x37c] sm:$0xf]
          %v8124 = vld [vmem:[%s2 + $0x380] sm:$0xf]
          %v8125 = vld [vmem:[%s2 + $0x384] sm:$0xf]
          %v8126 = vld [vmem:[%s2 + $0x388] sm:$0xf]
          %v8127 = vld [vmem:[%s2 + $0x38c] sm:$0xf]
          %v8128 = vld [vmem:[%s2 + $0x390] sm:$0xf]
          %v8129 = vld [vmem:[%s2 + $0x394] sm:$0xf]
          %v8130 = vld [vmem:[%s2 + $0x398] sm:$0xf]
          %v8131 = vld [vmem:[%s2 + $0x39c] sm:$0xf]
          %v8132 = vld [vmem:[%s2 + $0x3a0] sm:$0xf]
          %v8133 = vld [vmem:[%s2 + $0x3a4] sm:$0xf]
          %v8134 = vld [vmem:[%s2 + $0x3a8] sm:$0xf]
          %v8135 = vld [vmem:[%s2 + $0x3ac] sm:$0xf]
          %v8136 = vld [vmem:[%s2 + $0x3b0] sm:$0xf]
          %v8137 = vld [vmem:[%s2 + $0x3b4] sm:$0xf]
          %v8138 = vld [vmem:[%s2 + $0x3b8] sm:$0xf]
          %v8139 = vld [vmem:[%s2 + $0x3bc] sm:$0xf]
          %v8140 = vld [vmem:[%s2 + $0x3c0] sm:$0xf]
          %v8141 = vld [vmem:[%s2 + $0x3c4] sm:$0xf]
          %v8142 = vld [vmem:[%s2 + $0x3c8] sm:$0xf]
          %v8143 = vld [vmem:[%s2 + $0x3cc] sm:$0xf]
          %v8144 = vld [vmem:[%s2 + $0x3d0] sm:$0xf]
          %v8145 = vld [vmem:[%s2 + $0x3d4] sm:$0xf]
          %v8146 = vld [vmem:[%s2 + $0x3d8] sm:$0xf]
          %v8147 = vld [vmem:[%s2 + $0x3dc] sm:$0xf]
          %v8148 = vld [vmem:[%s2 + $0x3e0] sm:$0xf]
          %v8149 = vld [vmem:[%s2 + $0x3e4] sm:$0xf]
          %v8150 = vld [vmem:[%s2 + $0x3e8] sm:$0xf]
          %v8151 = vld [vmem:[%s2 + $0x3ec] sm:$0xf]
          %v8152 = vld [vmem:[%s2 + $0x3f0] sm:$0xf]
          %v8153 = vld [vmem:[%s2 + $0x3f4] sm:$0xf]
          %v8154 = vld [vmem:[%s2 + $0x3f8] sm:$0xf]
          %v8155 = vld [vmem:[%s2 + $0x3fc] sm:$0xf]
          %v8156 = vld [vmem:[%s2 + $0x400] sm:$0xf]
          %v8157 = vld [vmem:[%s2 + $0x404] sm:$0xf]
          %v8158 = vld [vmem:[%s2 + $0x408] sm:$0xf]
          %v8159 = vld [vmem:[%s2 + $0x40c] sm:$0xf]
          %v8160 = vld [vmem:[%s2 + $0x410] sm:$0xf]
          %v8161 = vld [vmem:[%s2 + $0x414] sm:$0xf]
          %v8162 = vld [vmem:[%s2 + $0x418] sm:$0xf]
          %v8163 = vld [vmem:[%s2 + $0x41c] sm:$0xf]
          %v8164 = vld [vmem:[%s2 + $0x420] sm:$0xf]
          %v8165 = vld [vmem:[%s2 + $0x424] sm:$0xf]
          %v8166 = vld [vmem:[%s2 + $0x428] sm:$0xf]
          %v8167 = vld [vmem:[%s2 + $0x42c] sm:$0xf]
          %v8168 = vld [vmem:[%s2 + $0x430] sm:$0xf]
          %v8169 = vld [vmem:[%s2 + $0x434] sm:$0xf]
          %v8170 = vld [vmem:[%s2 + $0x438] sm:$0xf]
          %v8171 = vld [vmem:[%s2 + $0x43c] sm:$0xf]
          %v8172 = vld [vmem:[%s2 + $0x440] sm:$0xf]
          %v8173 = vld [vmem:[%s2 + $0x444] sm:$0xf]
          %v8174 = vld [vmem:[%s2 + $0x448] sm:$0xf]
          %v8175 = vld [vmem:[%s2 + $0x44c] sm:$0xf]
          %v8176 = vld [vmem:[%s2 + $0x450] sm:$0xf]
          %v8177 = vld [vmem:[%s2 + $0x454] sm:$0xf]
          %v8178 = vld [vmem:[%s2 + $0x458] sm:$0xf]
          %v8179 = vld [vmem:[%s2 + $0x45c] sm:$0xf]
          %v8180 = vld [vmem:[%s2 + $0x460] sm:$0xf]
          %v8181 = vld [vmem:[%s2 + $0x464] sm:$0xf]
          %v8182 = vld [vmem:[%s2 + $0x468] sm:$0xf]
          %v8183 = vld [vmem:[%s2 + $0x46c] sm:$0xf]
          %v8184 = vld [vmem:[%s2 + $0x470] sm:$0xf]
          %v8185 = vld [vmem:[%s2 + $0x474] sm:$0xf]
          %v8186 = vld [vmem:[%s2 + $0x478] sm:$0xf]
          %v8187 = vld [vmem:[%s2 + $0x47c] sm:$0xf]
          %v8188 = vld [vmem:[%s2 + $0x480] sm:$0xf]
          %v8189 = vld [vmem:[%s2 + $0x484] sm:$0xf]
          %v8190 = vld [vmem:[%s2 + $0x488] sm:$0xf]
          %v8191 = vld [vmem:[%s2 + $0x48c] sm:$0xf]
          %v8192 = vld [vmem:[%s2 + $0x490] sm:$0xf]
          %v8193 = vld [vmem:[%s2 + $0x494] sm:$0xf]
          %v8194 = vld [vmem:[%s2 + $0x498] sm:$0xf]
          %v8195 = vld [vmem:[%s2 + $0x49c] sm:$0xf]
          %v8196 = vld [vmem:[%s2 + $0x4a0] sm:$0xf]
          %v8197 = vld [vmem:[%s2 + $0x4a4] sm:$0xf]
          %v8198 = vld [vmem:[%s2 + $0x4a8] sm:$0xf]
          %v8199 = vld [vmem:[%s2 + $0x4ac] sm:$0xf]
          %v8200 = vld [vmem:[%s2 + $0x4b0] sm:$0xf]
          %v8201 = vld [vmem:[%s2 + $0x4b4] sm:$0xf]
          %v8202 = vld [vmem:[%s2 + $0x4b8] sm:$0xf]
          %v8203 = vld [vmem:[%s2 + $0x4bc] sm:$0xf]
          %v8204 = vld [vmem:[%s2 + $0x4c0] sm:$0xf]
          %v8205 = vld [vmem:[%s2 + $0x4c4] sm:$0xf]
          %v8206 = vld [vmem:[%s2 + $0x4c8] sm:$0xf]
          %v8207 = vld [vmem:[%s2 + $0x4cc] sm:$0xf]
          %v8208 = vld [vmem:[%s2 + $0x4d0] sm:$0xf]
          %v8209 = vld [vmem:[%s2 + $0x4d4] sm:$0xf]
          %v8210 = vld [vmem:[%s2 + $0x4d8] sm:$0xf]
          %v8211 = vld [vmem:[%s2 + $0x4dc] sm:$0xf]
          %v8212 = vld [vmem:[%s2 + $0x4e0] sm:$0xf]
          %v8213 = vld [vmem:[%s2 + $0x4e4] sm:$0xf]
          %v8214 = vld [vmem:[%s2 + $0x4e8] sm:$0xf]
          %v8215 = vld [vmem:[%s2 + $0x4ec] sm:$0xf]
          %v8216 = vld [vmem:[%s2 + $0x4f0] sm:$0xf]
          %v8217 = vld [vmem:[%s2 + $0x4f4] sm:$0xf]
          %v8218 = vld [vmem:[%s2 + $0x4f8] sm:$0xf]
          %v8219 = vld [vmem:[%s2 + $0x4fc] sm:$0xf]
          %v8220 = vld [vmem:[%s2 + $0x500] sm:$0xf]
          %v8221 = vld [vmem:[%s2 + $0x504] sm:$0xf]
          %v8222 = vld [vmem:[%s2 + $0x508] sm:$0xf]
          %v8223 = vld [vmem:[%s2 + $0x50c] sm:$0xf]
          %v8224 = vld [vmem:[%s2 + $0x510] sm:$0xf]
          %v8225 = vld [vmem:[%s2 + $0x514] sm:$0xf]
          %v8226 = vld [vmem:[%s2 + $0x518] sm:$0xf]
          %v8227 = vld [vmem:[%s2 + $0x51c] sm:$0xf]
          %v8228 = vld [vmem:[%s2 + $0x520] sm:$0xf]
          %v8229 = vld [vmem:[%s2 + $0x524] sm:$0xf]
          %v8230 = vld [vmem:[%s2 + $0x528] sm:$0xf]
          %v8231 = vld [vmem:[%s2 + $0x52c] sm:$0xf]
          %v8232 = vld [vmem:[%s2 + $0x530] sm:$0xf]
          %v8233 = vld [vmem:[%s2 + $0x534] sm:$0xf]
          %v8234 = vld [vmem:[%s2 + $0x538] sm:$0xf]
          %v8235 = vld [vmem:[%s2 + $0x53c] sm:$0xf]
          %v8236 = vld [vmem:[%s2 + $0x540] sm:$0xf]
          %v8237 = vld [vmem:[%s2 + $0x544] sm:$0xf]
          %v8238 = vld [vmem:[%s2 + $0x548] sm:$0xf]
          %v8239 = vld [vmem:[%s2 + $0x54c] sm:$0xf]
          %v8240 = vld [vmem:[%s2 + $0x550] sm:$0xf]
          %v8241 = vld [vmem:[%s2 + $0x554] sm:$0xf]
          %v8242 = vld [vmem:[%s2 + $0x558] sm:$0xf]
          %v8243 = vld [vmem:[%s2 + $0x55c] sm:$0xf]
          %v8244 = vld [vmem:[%s2 + $0x560] sm:$0xf]
          %v8245 = vld [vmem:[%s2 + $0x564] sm:$0xf]
          %v8246 = vld [vmem:[%s2 + $0x568] sm:$0xf]
          %v8247 = vld [vmem:[%s2 + $0x56c] sm:$0xf]
          %v8248 = vld [vmem:[%s2 + $0x570] sm:$0xf]
          %v8249 = vld [vmem:[%s2 + $0x574] sm:$0xf]
          %v8250 = vld [vmem:[%s2 + $0x578] sm:$0xf]
          %v8251 = vld [vmem:[%s2 + $0x57c] sm:$0xf]
          %v8252 = vld [vmem:[%s2 + $0x580] sm:$0xf]
          %v8253 = vld [vmem:[%s2 + $0x584] sm:$0xf]
          %v8254 = vld [vmem:[%s2 + $0x588] sm:$0xf]
          %v8255 = vld [vmem:[%s2 + $0x58c] sm:$0xf]
          %v8256 = vld [vmem:[%s2 + $0x590] sm:$0xf]
          %v8257 = vld [vmem:[%s2 + $0x594] sm:$0xf]
          %v8258 = vld [vmem:[%s2 + $0x598] sm:$0xf]
          %v8259 = vld [vmem:[%s2 + $0x59c] sm:$0xf]
          %v8260 = vld [vmem:[%s2 + $0x5a0] sm:$0xf]
          %v8261 = vld [vmem:[%s2 + $0x5a4] sm:$0xf]
          %v8262 = vld [vmem:[%s2 + $0x5a8] sm:$0xf]
          %v8263 = vld [vmem:[%s2 + $0x5ac] sm:$0xf]
          %v8264 = vld [vmem:[%s2 + $0x5b0] sm:$0xf]
          %v8265 = vld [vmem:[%s2 + $0x5b4] sm:$0xf]
          %v8266 = vld [vmem:[%s2 + $0x5b8] sm:$0xf]
          %v8267 = vld [vmem:[%s2 + $0x5bc] sm:$0xf]
          %v8268 = vld [vmem:[%s2 + $0x5c0] sm:$0xf]
          %v8269 = vld [vmem:[%s2 + $0x5c4] sm:$0xf]
          %v8270 = vld [vmem:[%s2 + $0x5c8] sm:$0xf]
          %v8271 = vld [vmem:[%s2 + $0x5cc] sm:$0xf]
          %v8272 = vld [vmem:[%s2 + $0x5d0] sm:$0xf]
          %v8273 = vld [vmem:[%s2 + $0x5d4] sm:$0xf]
          %v8274 = vld [vmem:[%s2 + $0x5d8] sm:$0xf]
          %v8275 = vld [vmem:[%s2 + $0x5dc] sm:$0xf]
          %v8276 = vld [vmem:[%s2 + $0x5e0] sm:$0xf]
          %v8277 = vld [vmem:[%s2 + $0x5e4] sm:$0xf]
          %v8278 = vld [vmem:[%s2 + $0x5e8] sm:$0xf]
          %v8279 = vld [vmem:[%s2 + $0x5ec] sm:$0xf]
          %v8280 = vld [vmem:[%s2 + $0x5f0] sm:$0xf]
          %v8281 = vld [vmem:[%s2 + $0x5f4] sm:$0xf]
          %v8282 = vld [vmem:[%s2 + $0x5f8] sm:$0xf]
          %v8283 = vld [vmem:[%s2 + $0x5fc] sm:$0xf]
          %v8284 = vld [vmem:[%s2 + $0x600] sm:$0xf]
          %v8285 = vld [vmem:[%s2 + $0x604] sm:$0xf]
          %v8286 = vld [vmem:[%s2 + $0x608] sm:$0xf]
          %v8287 = vld [vmem:[%s2 + $0x60c] sm:$0xf]
          %v8288 = vld [vmem:[%s2 + $0x610] sm:$0xf]
          %v8289 = vld [vmem:[%s2 + $0x614] sm:$0xf]
          %v8290 = vld [vmem:[%s2 + $0x618] sm:$0xf]
          %v8291 = vld [vmem:[%s2 + $0x61c] sm:$0xf]
          %v8292 = vld [vmem:[%s2 + $0x620] sm:$0xf]
          %v8293 = vld [vmem:[%s2 + $0x624] sm:$0xf]
          %v8294 = vld [vmem:[%s2 + $0x628] sm:$0xf]
          %v8295 = vld [vmem:[%s2 + $0x62c] sm:$0xf]
          %v8296 = vld [vmem:[%s2 + $0x630] sm:$0xf]
          %v8297 = vld [vmem:[%s2 + $0x634] sm:$0xf]
          %v8298 = vld [vmem:[%s2 + $0x638] sm:$0xf]
          %v8299 = vld [vmem:[%s2 + $0x63c] sm:$0xf]
          %v8300 = vld [vmem:[%s2 + $0x640] sm:$0xf]
          %v8301 = vld [vmem:[%s2 + $0x644] sm:$0xf]
          %v8302 = vld [vmem:[%s2 + $0x648] sm:$0xf]
          %v8303 = vld [vmem:[%s2 + $0x64c] sm:$0xf]
          %v8304 = vld [vmem:[%s2 + $0x650] sm:$0xf]
          %v8305 = vld [vmem:[%s2 + $0x654] sm:$0xf]
          %v8306 = vld [vmem:[%s2 + $0x658] sm:$0xf]
          %v8307 = vld [vmem:[%s2 + $0x65c] sm:$0xf]
          %v8308 = vld [vmem:[%s2 + $0x660] sm:$0xf]
          %v8309 = vld [vmem:[%s2 + $0x664] sm:$0xf]
          %v8310 = vld [vmem:[%s2 + $0x668] sm:$0xf]
          %v8311 = vld [vmem:[%s2 + $0x66c] sm:$0xf]
          %v8312 = vld [vmem:[%s2 + $0x670] sm:$0xf]
          %v8313 = vld [vmem:[%s2 + $0x674] sm:$0xf]
          %v8314 = vld [vmem:[%s2 + $0x678] sm:$0xf]
          %v8315 = vld [vmem:[%s2 + $0x67c] sm:$0xf]
          %v8316 = vld [vmem:[%s2 + $0x680] sm:$0xf]
          %v8317 = vld [vmem:[%s2 + $0x684] sm:$0xf]
          %v8318 = vld [vmem:[%s2 + $0x688] sm:$0xf]
          %v8319 = vld [vmem:[%s2 + $0x68c] sm:$0xf]
          %v8320 = vld [vmem:[%s2 + $0x690] sm:$0xf]
          %v8321 = vld [vmem:[%s2 + $0x694] sm:$0xf]
          %v8322 = vld [vmem:[%s2 + $0x698] sm:$0xf]
          %v8323 = vld [vmem:[%s2 + $0x69c] sm:$0xf]
          %v8324 = vld [vmem:[%s2 + $0x6a0] sm:$0xf]
          %v8325 = vld [vmem:[%s2 + $0x6a4] sm:$0xf]
          %v8326 = vld [vmem:[%s2 + $0x6a8] sm:$0xf]
          %v8327 = vld [vmem:[%s2 + $0x6ac] sm:$0xf]
          %v8328 = vld [vmem:[%s2 + $0x6b0] sm:$0xf]
          %v8329 = vld [vmem:[%s2 + $0x6b4] sm:$0xf]
          %v8330 = vld [vmem:[%s2 + $0x6b8] sm:$0xf]
          %v8331 = vld [vmem:[%s2 + $0x6bc] sm:$0xf]
          %v8332 = vld [vmem:[%s2 + $0x6c0] sm:$0xf]
          %v8333 = vld [vmem:[%s2 + $0x6c4] sm:$0xf]
          %v8334 = vld [vmem:[%s2 + $0x6c8] sm:$0xf]
          %v8335 = vld [vmem:[%s2 + $0x6cc] sm:$0xf]
          %v8336 = vld [vmem:[%s2 + $0x6d0] sm:$0xf]
          %v8337 = vld [vmem:[%s2 + $0x6d4] sm:$0xf]
          %v8338 = vld [vmem:[%s2 + $0x6d8] sm:$0xf]
          %v8339 = vld [vmem:[%s2 + $0x6dc] sm:$0xf]
          %v8340 = vld [vmem:[%s2 + $0x6e0] sm:$0xf]
          %v8341 = vld [vmem:[%s2 + $0x6e4] sm:$0xf]
          %v8342 = vld [vmem:[%s2 + $0x6e8] sm:$0xf]
          %v8343 = vld [vmem:[%s2 + $0x6ec] sm:$0xf]
          %v8344 = vld [vmem:[%s2 + $0x6f0] sm:$0xf]
          %v8345 = vld [vmem:[%s2 + $0x6f4] sm:$0xf]
          %v8346 = vld [vmem:[%s2 + $0x6f8] sm:$0xf]
          %v8347 = vld [vmem:[%s2 + $0x6fc] sm:$0xf]
          %v8348 = vld [vmem:[%s2 + $0x700] sm:$0xf]
          %v8349 = vld [vmem:[%s2 + $0x704] sm:$0xf]
          %v8350 = vld [vmem:[%s2 + $0x708] sm:$0xf]
          %v8351 = vld [vmem:[%s2 + $0x70c] sm:$0xf]
          %v8352 = vld [vmem:[%s2 + $0x710] sm:$0xf]
          %v8353 = vld [vmem:[%s2 + $0x714] sm:$0xf]
          %v8354 = vld [vmem:[%s2 + $0x718] sm:$0xf]
          %v8355 = vld [vmem:[%s2 + $0x71c] sm:$0xf]
          %v8356 = vld [vmem:[%s2 + $0x720] sm:$0xf]
          %v8357 = vld [vmem:[%s2 + $0x724] sm:$0xf]
          %v8358 = vld [vmem:[%s2 + $0x728] sm:$0xf]
          %v8359 = vld [vmem:[%s2 + $0x72c] sm:$0xf]
          %v8360 = vld [vmem:[%s2 + $0x730] sm:$0xf]
          %v8361 = vld [vmem:[%s2 + $0x734] sm:$0xf]
          %v8362 = vld [vmem:[%s2 + $0x738] sm:$0xf]
          %v8363 = vld [vmem:[%s2 + $0x73c] sm:$0xf]
          %v8364 = vld [vmem:[%s2 + $0x740] sm:$0xf]
          %v8365 = vld [vmem:[%s2 + $0x744] sm:$0xf]
          %v8366 = vld [vmem:[%s2 + $0x748] sm:$0xf]
          %v8367 = vld [vmem:[%s2 + $0x74c] sm:$0xf]
          %v8368 = vld [vmem:[%s2 + $0x750] sm:$0xf]
          %v8369 = vld [vmem:[%s2 + $0x754] sm:$0xf]
          %v8370 = vld [vmem:[%s2 + $0x758] sm:$0xf]
          %v8371 = vld [vmem:[%s2 + $0x75c] sm:$0xf]
          %v8372 = vld [vmem:[%s2 + $0x760] sm:$0xf]
          %v8373 = vld [vmem:[%s2 + $0x764] sm:$0xf]
          %v8374 = vld [vmem:[%s2 + $0x768] sm:$0xf]
          %v8375 = vld [vmem:[%s2 + $0x76c] sm:$0xf]
          %v8376 = vld [vmem:[%s2 + $0x770] sm:$0xf]
          %v8377 = vld [vmem:[%s2 + $0x774] sm:$0xf]
          %v8378 = vld [vmem:[%s2 + $0x778] sm:$0xf]
          %v8379 = vld [vmem:[%s2 + $0x77c] sm:$0xf]
          %v8380 = vld [vmem:[%s2 + $0x780] sm:$0xf]
          %v8381 = vld [vmem:[%s2 + $0x784] sm:$0xf]
          %v8382 = vld [vmem:[%s2 + $0x788] sm:$0xf]
          %v8383 = vld [vmem:[%s2 + $0x78c] sm:$0xf]
          %v8384 = vld [vmem:[%s2 + $0x790] sm:$0xf]
          %v8385 = vld [vmem:[%s2 + $0x794] sm:$0xf]
          %v8386 = vld [vmem:[%s2 + $0x798] sm:$0xf]
          %v8387 = vld [vmem:[%s2 + $0x79c] sm:$0xf]
          %v8388 = vld [vmem:[%s2 + $0x7a0] sm:$0xf]
          %v8389 = vld [vmem:[%s2 + $0x7a4] sm:$0xf]
          %v8390 = vld [vmem:[%s2 + $0x7a8] sm:$0xf]
          %v8391 = vld [vmem:[%s2 + $0x7ac] sm:$0xf]
          %v8392 = vld [vmem:[%s2 + $0x7b0] sm:$0xf]
          %v8393 = vld [vmem:[%s2 + $0x7b4] sm:$0xf]
          %v8394 = vld [vmem:[%s2 + $0x7b8] sm:$0xf]
          %v8395 = vld [vmem:[%s2 + $0x7bc] sm:$0xf]
          %v8396 = vld [vmem:[%s2 + $0x7c0] sm:$0xf]
          %v8397 = vld [vmem:[%s2 + $0x7c4] sm:$0xf]
          %v8398 = vld [vmem:[%s2 + $0x7c8] sm:$0xf]
          %v8399 = vld [vmem:[%s2 + $0x7cc] sm:$0xf]
          %v8400 = vld [vmem:[%s2 + $0x7d0] sm:$0xf]
          %v8401 = vld [vmem:[%s2 + $0x7d4] sm:$0xf]
          %v8402 = vld [vmem:[%s2 + $0x7d8] sm:$0xf]
          %v8403 = vld [vmem:[%s2 + $0x7dc] sm:$0xf]
          %v8404 = vld [vmem:[%s2 + $0x7e0] sm:$0xf]
          %v8405 = vld [vmem:[%s2 + $0x7e4] sm:$0xf]
          %v8406 = vld [vmem:[%s2 + $0x7e8] sm:$0xf]
          %v8407 = vld [vmem:[%s2 + $0x7ec] sm:$0xf]
          %v8408 = vld [vmem:[%s2 + $0x7f0] sm:$0xf]
          %v8409 = vld [vmem:[%s2 + $0x7f4] sm:$0xf]
          %v8410 = vld [vmem:[%s2 + $0x7f8] sm:$0xf]
          %v8411 = vld [vmem:[%s2 + $0x7fc] sm:$0xf]
          %v8412 = vld [vmem:[%s3] sm:$0x1]
          %v8414 = vlaneseq
          %v8415 = vshrl.u32 %v8414, 7
          %v8416 = vsub.s32 0, %v8415
          %v8417 = vrot.slane %v8412, %v8416
          %v8931 = vunpack.c.l.b16 %v7900
          %v8932 = vunpack.c.l.b16 %v7901
          %v8933 = vunpack.c.l.b16 %v7902
          %v8934 = vunpack.c.l.b16 %v7903
          %v8935 = vunpack.c.l.b16 %v7904
          %v8936 = vunpack.c.l.b16 %v7905
          %v8937 = vunpack.c.l.b16 %v7906
          %v8938 = vunpack.c.l.b16 %v7907
          %v8939 = vunpack.c.l.b16 %v7908
          %v8940 = vunpack.c.l.b16 %v7909
          %v8941 = vunpack.c.l.b16 %v7910
          %v8942 = vunpack.c.l.b16 %v7911
          %v8943 = vunpack.c.l.b16 %v7912
          %v8944 = vunpack.c.l.b16 %v7913
          %v8945 = vunpack.c.l.b16 %v7914
          %v8946 = vunpack.c.l.b16 %v7915
          %v8947 = vunpack.c.l.b16 %v7916
          %v8948 = vunpack.c.l.b16 %v7917
          %v8949 = vunpack.c.l.b16 %v7918
          %v8950 = vunpack.c.l.b16 %v7919
          %v8951 = vunpack.c.l.b16 %v7920
          %v8952 = vunpack.c.l.b16 %v7921
          %v8953 = vunpack.c.l.b16 %v7922
          %v8954 = vunpack.c.l.b16 %v7923
          %v8955 = vunpack.c.l.b16 %v7924
          %v8956 = vunpack.c.l.b16 %v7925
          %v8957 = vunpack.c.l.b16 %v7926
          %v8958 = vunpack.c.l.b16 %v7927
          %v8959 = vunpack.c.l.b16 %v7928
          %v8960 = vunpack.c.l.b16 %v7929
          %v8961 = vunpack.c.l.b16 %v7930
          %v8962 = vunpack.c.l.b16 %v7931
          %v8963 = vunpack.c.l.b16 %v7932
          %v8964 = vunpack.c.l.b16 %v7933
          %v8965 = vunpack.c.l.b16 %v7934
          %v8966 = vunpack.c.l.b16 %v7935
          %v8967 = vunpack.c.l.b16 %v7936
          %v8968 = vunpack.c.l.b16 %v7937
          %v8969 = vunpack.c.l.b16 %v7938
          %v8970 = vunpack.c.l.b16 %v7939
          %v8971 = vunpack.c.l.b16 %v7940
          %v8972 = vunpack.c.l.b16 %v7941
          %v8973 = vunpack.c.l.b16 %v7942
          %v8974 = vunpack.c.l.b16 %v7943
          %v8975 = vunpack.c.l.b16 %v7944
          %v8976 = vunpack.c.l.b16 %v7945
          %v8977 = vunpack.c.l.b16 %v7946
          %v8978 = vunpack.c.l.b16 %v7947
          %v8979 = vunpack.c.l.b16 %v7948
          %v8980 = vunpack.c.l.b16 %v7949
          %v8981 = vunpack.c.l.b16 %v7950
          %v8982 = vunpack.c.l.b16 %v7951
          %v8983 = vunpack.c.l.b16 %v7952
          %v8984 = vunpack.c.l.b16 %v7953
          %v8985 = vunpack.c.l.b16 %v7954
          %v8986 = vunpack.c.l.b16 %v7955
          %v8987 = vunpack.c.l.b16 %v7956
          %v8988 = vunpack.c.l.b16 %v7957
          %v8989 = vunpack.c.l.b16 %v7958
          %v8990 = vunpack.c.l.b16 %v7959
          %v8991 = vunpack.c.l.b16 %v7960
          %v8992 = vunpack.c.l.b16 %v7961
          %v8993 = vunpack.c.l.b16 %v7962
          %v8994 = vunpack.c.l.b16 %v7963
          %v8995 = vunpack.c.l.b16 %v7964
          %v8996 = vunpack.c.l.b16 %v7965
          %v8997 = vunpack.c.l.b16 %v7966
          %v8998 = vunpack.c.l.b16 %v7967
          %v8999 = vunpack.c.l.b16 %v7968
          %v9000 = vunpack.c.l.b16 %v7969
          %v9001 = vunpack.c.l.b16 %v7970
          %v9002 = vunpack.c.l.b16 %v7971
          %v9003 = vunpack.c.l.b16 %v7972
          %v9004 = vunpack.c.l.b16 %v7973
          %v9005 = vunpack.c.l.b16 %v7974
          %v9006 = vunpack.c.l.b16 %v7975
          %v9007 = vunpack.c.l.b16 %v7976
          %v9008 = vunpack.c.l.b16 %v7977
          %v9009 = vunpack.c.l.b16 %v7978
          %v9010 = vunpack.c.l.b16 %v7979
          %v9011 = vunpack.c.l.b16 %v7980
          %v9012 = vunpack.c.l.b16 %v7981
          %v9013 = vunpack.c.l.b16 %v7982
          %v9014 = vunpack.c.l.b16 %v7983
          %v9015 = vunpack.c.l.b16 %v7984
          %v9016 = vunpack.c.l.b16 %v7985
          %v9017 = vunpack.c.l.b16 %v7986
          %v9018 = vunpack.c.l.b16 %v7987
          %v9019 = vunpack.c.l.b16 %v7988
          %v9020 = vunpack.c.l.b16 %v7989
          %v9021 = vunpack.c.l.b16 %v7990
          %v9022 = vunpack.c.l.b16 %v7991
          %v9023 = vunpack.c.l.b16 %v7992
          %v9024 = vunpack.c.l.b16 %v7993
          %v9025 = vunpack.c.l.b16 %v7994
          %v9026 = vunpack.c.l.b16 %v7995
          %v9027 = vunpack.c.l.b16 %v7996
          %v9028 = vunpack.c.l.b16 %v7997
          %v9029 = vunpack.c.l.b16 %v7998
          %v9030 = vunpack.c.l.b16 %v7999
          %v9031 = vunpack.c.l.b16 %v8000
          %v9032 = vunpack.c.l.b16 %v8001
          %v9033 = vunpack.c.l.b16 %v8002
          %v9034 = vunpack.c.l.b16 %v8003
          %v9035 = vunpack.c.l.b16 %v8004
          %v9036 = vunpack.c.l.b16 %v8005
          %v9037 = vunpack.c.l.b16 %v8006
          %v9038 = vunpack.c.l.b16 %v8007
          %v9039 = vunpack.c.l.b16 %v8008
          %v9040 = vunpack.c.l.b16 %v8009
          %v9041 = vunpack.c.l.b16 %v8010
          %v9042 = vunpack.c.l.b16 %v8011
          %v9043 = vunpack.c.l.b16 %v8012
          %v9044 = vunpack.c.l.b16 %v8013
          %v9045 = vunpack.c.l.b16 %v8014
          %v9046 = vunpack.c.l.b16 %v8015
          %v9047 = vunpack.c.l.b16 %v8016
          %v9048 = vunpack.c.l.b16 %v8017
          %v9049 = vunpack.c.l.b16 %v8018
          %v9050 = vunpack.c.l.b16 %v8019
          %v9051 = vunpack.c.l.b16 %v8020
          %v9052 = vunpack.c.l.b16 %v8021
          %v9053 = vunpack.c.l.b16 %v8022
          %v9054 = vunpack.c.l.b16 %v8023
          %v9055 = vunpack.c.l.b16 %v8024
          %v9056 = vunpack.c.l.b16 %v8025
          %v9057 = vunpack.c.l.b16 %v8026
          %v9058 = vunpack.c.l.b16 %v8027
          %v9059 = vunpack.c.l.b16 %v8028
          %v9060 = vunpack.c.l.b16 %v8029
          %v9061 = vunpack.c.l.b16 %v8030
          %v9062 = vunpack.c.l.b16 %v8031
          %v9063 = vunpack.c.l.b16 %v8032
          %v9064 = vunpack.c.l.b16 %v8033
          %v9065 = vunpack.c.l.b16 %v8034
          %v9066 = vunpack.c.l.b16 %v8035
          %v9067 = vunpack.c.l.b16 %v8036
          %v9068 = vunpack.c.l.b16 %v8037
          %v9069 = vunpack.c.l.b16 %v8038
          %v9070 = vunpack.c.l.b16 %v8039
          %v9071 = vunpack.c.l.b16 %v8040
          %v9072 = vunpack.c.l.b16 %v8041
          %v9073 = vunpack.c.l.b16 %v8042
          %v9074 = vunpack.c.l.b16 %v8043
          %v9075 = vunpack.c.l.b16 %v8044
          %v9076 = vunpack.c.l.b16 %v8045
          %v9077 = vunpack.c.l.b16 %v8046
          %v9078 = vunpack.c.l.b16 %v8047
          %v9079 = vunpack.c.l.b16 %v8048
          %v9080 = vunpack.c.l.b16 %v8049
          %v9081 = vunpack.c.l.b16 %v8050
          %v9082 = vunpack.c.l.b16 %v8051
          %v9083 = vunpack.c.l.b16 %v8052
          %v9084 = vunpack.c.l.b16 %v8053
          %v9085 = vunpack.c.l.b16 %v8054
          %v9086 = vunpack.c.l.b16 %v8055
          %v9087 = vunpack.c.l.b16 %v8056
          %v9088 = vunpack.c.l.b16 %v8057
          %v9089 = vunpack.c.l.b16 %v8058
          %v9090 = vunpack.c.l.b16 %v8059
          %v9091 = vunpack.c.l.b16 %v8060
          %v9092 = vunpack.c.l.b16 %v8061
          %v9093 = vunpack.c.l.b16 %v8062
          %v9094 = vunpack.c.l.b16 %v8063
          %v9095 = vunpack.c.l.b16 %v8064
          %v9096 = vunpack.c.l.b16 %v8065
          %v9097 = vunpack.c.l.b16 %v8066
          %v9098 = vunpack.c.l.b16 %v8067
          %v9099 = vunpack.c.l.b16 %v8068
          %v9100 = vunpack.c.l.b16 %v8069
          %v9101 = vunpack.c.l.b16 %v8070
          %v9102 = vunpack.c.l.b16 %v8071
          %v9103 = vunpack.c.l.b16 %v8072
          %v9104 = vunpack.c.l.b16 %v8073
          %v9105 = vunpack.c.l.b16 %v8074
          %v9106 = vunpack.c.l.b16 %v8075
          %v9107 = vunpack.c.l.b16 %v8076
          %v9108 = vunpack.c.l.b16 %v8077
          %v9109 = vunpack.c.l.b16 %v8078
          %v9110 = vunpack.c.l.b16 %v8079
          %v9111 = vunpack.c.l.b16 %v8080
          %v9112 = vunpack.c.l.b16 %v8081
          %v9113 = vunpack.c.l.b16 %v8082
          %v9114 = vunpack.c.l.b16 %v8083
          %v9115 = vunpack.c.l.b16 %v8084
          %v9116 = vunpack.c.l.b16 %v8085
          %v9117 = vunpack.c.l.b16 %v8086
          %v9118 = vunpack.c.l.b16 %v8087
          %v9119 = vunpack.c.l.b16 %v8088
          %v9120 = vunpack.c.l.b16 %v8089
          %v9121 = vunpack.c.l.b16 %v8090
          %v9122 = vunpack.c.l.b16 %v8091
          %v9123 = vunpack.c.l.b16 %v8092
          %v9124 = vunpack.c.l.b16 %v8093
          %v9125 = vunpack.c.l.b16 %v8094
          %v9126 = vunpack.c.l.b16 %v8095
          %v9127 = vunpack.c.l.b16 %v8096
          %v9128 = vunpack.c.l.b16 %v8097
          %v9129 = vunpack.c.l.b16 %v8098
          %v9130 = vunpack.c.l.b16 %v8099
          %v9131 = vunpack.c.l.b16 %v8100
          %v9132 = vunpack.c.l.b16 %v8101
          %v9133 = vunpack.c.l.b16 %v8102
          %v9134 = vunpack.c.l.b16 %v8103
          %v9135 = vunpack.c.l.b16 %v8104
          %v9136 = vunpack.c.l.b16 %v8105
          %v9137 = vunpack.c.l.b16 %v8106
          %v9138 = vunpack.c.l.b16 %v8107
          %v9139 = vunpack.c.l.b16 %v8108
          %v9140 = vunpack.c.l.b16 %v8109
          %v9141 = vunpack.c.l.b16 %v8110
          %v9142 = vunpack.c.l.b16 %v8111
          %v9143 = vunpack.c.l.b16 %v8112
          %v9144 = vunpack.c.l.b16 %v8113
          %v9145 = vunpack.c.l.b16 %v8114
          %v9146 = vunpack.c.l.b16 %v8115
          %v9147 = vunpack.c.l.b16 %v8116
          %v9148 = vunpack.c.l.b16 %v8117
          %v9149 = vunpack.c.l.b16 %v8118
          %v9150 = vunpack.c.l.b16 %v8119
          %v9151 = vunpack.c.l.b16 %v8120
          %v9152 = vunpack.c.l.b16 %v8121
          %v9153 = vunpack.c.l.b16 %v8122
          %v9154 = vunpack.c.l.b16 %v8123
          %v9155 = vunpack.c.l.b16 %v8124
          %v9156 = vunpack.c.l.b16 %v8125
          %v9157 = vunpack.c.l.b16 %v8126
          %v9158 = vunpack.c.l.b16 %v8127
          %v9159 = vunpack.c.l.b16 %v8128
          %v9160 = vunpack.c.l.b16 %v8129
          %v9161 = vunpack.c.l.b16 %v8130
          %v9162 = vunpack.c.l.b16 %v8131
          %v9163 = vunpack.c.l.b16 %v8132
          %v9164 = vunpack.c.l.b16 %v8133
          %v9165 = vunpack.c.l.b16 %v8134
          %v9166 = vunpack.c.l.b16 %v8135
          %v9167 = vunpack.c.l.b16 %v8136
          %v9168 = vunpack.c.l.b16 %v8137
          %v9169 = vunpack.c.l.b16 %v8138
          %v9170 = vunpack.c.l.b16 %v8139
          %v9171 = vunpack.c.l.b16 %v8140
          %v9172 = vunpack.c.l.b16 %v8141
          %v9173 = vunpack.c.l.b16 %v8142
          %v9174 = vunpack.c.l.b16 %v8143
          %v9175 = vunpack.c.l.b16 %v8144
          %v9176 = vunpack.c.l.b16 %v8145
          %v9177 = vunpack.c.l.b16 %v8146
          %v9178 = vunpack.c.l.b16 %v8147
          %v9179 = vunpack.c.l.b16 %v8148
          %v9180 = vunpack.c.l.b16 %v8149
          %v9181 = vunpack.c.l.b16 %v8150
          %v9182 = vunpack.c.l.b16 %v8151
          %v9183 = vunpack.c.l.b16 %v8152
          %v9184 = vunpack.c.l.b16 %v8153
          %v9185 = vunpack.c.l.b16 %v8154
          %v9186 = vunpack.c.l.b16 %v8155
          %v9187 = vunpack.c.l.b16 %v8156
          %v9188 = vunpack.c.l.b16 %v8157
          %v9189 = vunpack.c.l.b16 %v8158
          %v9190 = vunpack.c.l.b16 %v8159
          %v9191 = vunpack.c.l.b16 %v8160
          %v9192 = vunpack.c.l.b16 %v8161
          %v9193 = vunpack.c.l.b16 %v8162
          %v9194 = vunpack.c.l.b16 %v8163
          %v9195 = vunpack.c.l.b16 %v8164
          %v9196 = vunpack.c.l.b16 %v8165
          %v9197 = vunpack.c.l.b16 %v8166
          %v9198 = vunpack.c.l.b16 %v8167
          %v9199 = vunpack.c.l.b16 %v8168
          %v9200 = vunpack.c.l.b16 %v8169
          %v9201 = vunpack.c.l.b16 %v8170
          %v9202 = vunpack.c.l.b16 %v8171
          %v9203 = vunpack.c.l.b16 %v8172
          %v9204 = vunpack.c.l.b16 %v8173
          %v9205 = vunpack.c.l.b16 %v8174
          %v9206 = vunpack.c.l.b16 %v8175
          %v9207 = vunpack.c.l.b16 %v8176
          %v9208 = vunpack.c.l.b16 %v8177
          %v9209 = vunpack.c.l.b16 %v8178
          %v9210 = vunpack.c.l.b16 %v8179
          %v9211 = vunpack.c.l.b16 %v8180
          %v9212 = vunpack.c.l.b16 %v8181
          %v9213 = vunpack.c.l.b16 %v8182
          %v9214 = vunpack.c.l.b16 %v8183
          %v9215 = vunpack.c.l.b16 %v8184
          %v9216 = vunpack.c.l.b16 %v8185
          %v9217 = vunpack.c.l.b16 %v8186
          %v9218 = vunpack.c.l.b16 %v8187
          %v9219 = vunpack.c.l.b16 %v8188
          %v9220 = vunpack.c.l.b16 %v8189
          %v9221 = vunpack.c.l.b16 %v8190
          %v9222 = vunpack.c.l.b16 %v8191
          %v9223 = vunpack.c.l.b16 %v8192
          %v9224 = vunpack.c.l.b16 %v8193
          %v9225 = vunpack.c.l.b16 %v8194
          %v9226 = vunpack.c.l.b16 %v8195
          %v9227 = vunpack.c.l.b16 %v8196
          %v9228 = vunpack.c.l.b16 %v8197
          %v9229 = vunpack.c.l.b16 %v8198
          %v9230 = vunpack.c.l.b16 %v8199
          %v9231 = vunpack.c.l.b16 %v8200
          %v9232 = vunpack.c.l.b16 %v8201
          %v9233 = vunpack.c.l.b16 %v8202
          %v9234 = vunpack.c.l.b16 %v8203
          %v9235 = vunpack.c.l.b16 %v8204
          %v9236 = vunpack.c.l.b16 %v8205
          %v9237 = vunpack.c.l.b16 %v8206
          %v9238 = vunpack.c.l.b16 %v8207
          %v9239 = vunpack.c.l.b16 %v8208
          %v9240 = vunpack.c.l.b16 %v8209
          %v9241 = vunpack.c.l.b16 %v8210
          %v9242 = vunpack.c.l.b16 %v8211
          %v9243 = vunpack.c.l.b16 %v8212
          %v9244 = vunpack.c.l.b16 %v8213
          %v9245 = vunpack.c.l.b16 %v8214
          %v9246 = vunpack.c.l.b16 %v8215
          %v9247 = vunpack.c.l.b16 %v8216
          %v9248 = vunpack.c.l.b16 %v8217
          %v9249 = vunpack.c.l.b16 %v8218
          %v9250 = vunpack.c.l.b16 %v8219
          %v9251 = vunpack.c.l.b16 %v8220
          %v9252 = vunpack.c.l.b16 %v8221
          %v9253 = vunpack.c.l.b16 %v8222
          %v9254 = vunpack.c.l.b16 %v8223
          %v9255 = vunpack.c.l.b16 %v8224
          %v9256 = vunpack.c.l.b16 %v8225
          %v9257 = vunpack.c.l.b16 %v8226
          %v9258 = vunpack.c.l.b16 %v8227
          %v9259 = vunpack.c.l.b16 %v8228
          %v9260 = vunpack.c.l.b16 %v8229
          %v9261 = vunpack.c.l.b16 %v8230
          %v9262 = vunpack.c.l.b16 %v8231
          %v9263 = vunpack.c.l.b16 %v8232
          %v9264 = vunpack.c.l.b16 %v8233
          %v9265 = vunpack.c.l.b16 %v8234
          %v9266 = vunpack.c.l.b16 %v8235
          %v9267 = vunpack.c.l.b16 %v8236
          %v9268 = vunpack.c.l.b16 %v8237
          %v9269 = vunpack.c.l.b16 %v8238
          %v9270 = vunpack.c.l.b16 %v8239
          %v9271 = vunpack.c.l.b16 %v8240
          %v9272 = vunpack.c.l.b16 %v8241
          %v9273 = vunpack.c.l.b16 %v8242
          %v9274 = vunpack.c.l.b16 %v8243
          %v9275 = vunpack.c.l.b16 %v8244
          %v9276 = vunpack.c.l.b16 %v8245
          %v9277 = vunpack.c.l.b16 %v8246
          %v9278 = vunpack.c.l.b16 %v8247
          %v9279 = vunpack.c.l.b16 %v8248
          %v9280 = vunpack.c.l.b16 %v8249
          %v9281 = vunpack.c.l.b16 %v8250
          %v9282 = vunpack.c.l.b16 %v8251
          %v9283 = vunpack.c.l.b16 %v8252
          %v9284 = vunpack.c.l.b16 %v8253
          %v9285 = vunpack.c.l.b16 %v8254
          %v9286 = vunpack.c.l.b16 %v8255
          %v9287 = vunpack.c.l.b16 %v8256
          %v9288 = vunpack.c.l.b16 %v8257
          %v9289 = vunpack.c.l.b16 %v8258
          %v9290 = vunpack.c.l.b16 %v8259
          %v9291 = vunpack.c.l.b16 %v8260
          %v9292 = vunpack.c.l.b16 %v8261
          %v9293 = vunpack.c.l.b16 %v8262
          %v9294 = vunpack.c.l.b16 %v8263
          %v9295 = vunpack.c.l.b16 %v8264
          %v9296 = vunpack.c.l.b16 %v8265
          %v9297 = vunpack.c.l.b16 %v8266
          %v9298 = vunpack.c.l.b16 %v8267
          %v9299 = vunpack.c.l.b16 %v8268
          %v9300 = vunpack.c.l.b16 %v8269
          %v9301 = vunpack.c.l.b16 %v8270
          %v9302 = vunpack.c.l.b16 %v8271
          %v9303 = vunpack.c.l.b16 %v8272
          %v9304 = vunpack.c.l.b16 %v8273
          %v9305 = vunpack.c.l.b16 %v8274
          %v9306 = vunpack.c.l.b16 %v8275
          %v9307 = vunpack.c.l.b16 %v8276
          %v9308 = vunpack.c.l.b16 %v8277
          %v9309 = vunpack.c.l.b16 %v8278
          %v9310 = vunpack.c.l.b16 %v8279
          %v9311 = vunpack.c.l.b16 %v8280
          %v9312 = vunpack.c.l.b16 %v8281
          %v9313 = vunpack.c.l.b16 %v8282
          %v9314 = vunpack.c.l.b16 %v8283
          %v9315 = vunpack.c.l.b16 %v8284
          %v9316 = vunpack.c.l.b16 %v8285
          %v9317 = vunpack.c.l.b16 %v8286
          %v9318 = vunpack.c.l.b16 %v8287
          %v9319 = vunpack.c.l.b16 %v8288
          %v9320 = vunpack.c.l.b16 %v8289
          %v9321 = vunpack.c.l.b16 %v8290
          %v9322 = vunpack.c.l.b16 %v8291
          %v9323 = vunpack.c.l.b16 %v8292
          %v9324 = vunpack.c.l.b16 %v8293
          %v9325 = vunpack.c.l.b16 %v8294
          %v9326 = vunpack.c.l.b16 %v8295
          %v9327 = vunpack.c.l.b16 %v8296
          %v9328 = vunpack.c.l.b16 %v8297
          %v9329 = vunpack.c.l.b16 %v8298
          %v9330 = vunpack.c.l.b16 %v8299
          %v9331 = vunpack.c.l.b16 %v8300
          %v9332 = vunpack.c.l.b16 %v8301
          %v9333 = vunpack.c.l.b16 %v8302
          %v9334 = vunpack.c.l.b16 %v8303
          %v9335 = vunpack.c.l.b16 %v8304
          %v9336 = vunpack.c.l.b16 %v8305
          %v9337 = vunpack.c.l.b16 %v8306
          %v9338 = vunpack.c.l.b16 %v8307
          %v9339 = vunpack.c.l.b16 %v8308
          %v9340 = vunpack.c.l.b16 %v8309
          %v9341 = vunpack.c.l.b16 %v8310
          %v9342 = vunpack.c.l.b16 %v8311
          %v9343 = vunpack.c.l.b16 %v8312
          %v9344 = vunpack.c.l.b16 %v8313
          %v9345 = vunpack.c.l.b16 %v8314
          %v9346 = vunpack.c.l.b16 %v8315
          %v9347 = vunpack.c.l.b16 %v8316
          %v9348 = vunpack.c.l.b16 %v8317
          %v9349 = vunpack.c.l.b16 %v8318
          %v9350 = vunpack.c.l.b16 %v8319
          %v9351 = vunpack.c.l.b16 %v8320
          %v9352 = vunpack.c.l.b16 %v8321
          %v9353 = vunpack.c.l.b16 %v8322
          %v9354 = vunpack.c.l.b16 %v8323
          %v9355 = vunpack.c.l.b16 %v8324
          %v9356 = vunpack.c.l.b16 %v8325
          %v9357 = vunpack.c.l.b16 %v8326
          %v9358 = vunpack.c.l.b16 %v8327
          %v9359 = vunpack.c.l.b16 %v8328
          %v9360 = vunpack.c.l.b16 %v8329
          %v9361 = vunpack.c.l.b16 %v8330
          %v9362 = vunpack.c.l.b16 %v8331
          %v9363 = vunpack.c.l.b16 %v8332
          %v9364 = vunpack.c.l.b16 %v8333
          %v9365 = vunpack.c.l.b16 %v8334
          %v9366 = vunpack.c.l.b16 %v8335
          %v9367 = vunpack.c.l.b16 %v8336
          %v9368 = vunpack.c.l.b16 %v8337
          %v9369 = vunpack.c.l.b16 %v8338
          %v9370 = vunpack.c.l.b16 %v8339
          %v9371 = vunpack.c.l.b16 %v8340
          %v9372 = vunpack.c.l.b16 %v8341
          %v9373 = vunpack.c.l.b16 %v8342
          %v9374 = vunpack.c.l.b16 %v8343
          %v9375 = vunpack.c.l.b16 %v8344
          %v9376 = vunpack.c.l.b16 %v8345
          %v9377 = vunpack.c.l.b16 %v8346
          %v9378 = vunpack.c.l.b16 %v8347
          %v9379 = vunpack.c.l.b16 %v8348
          %v9380 = vunpack.c.l.b16 %v8349
          %v9381 = vunpack.c.l.b16 %v8350
          %v9382 = vunpack.c.l.b16 %v8351
          %v9383 = vunpack.c.l.b16 %v8352
          %v9384 = vunpack.c.l.b16 %v8353
          %v9385 = vunpack.c.l.b16 %v8354
          %v9386 = vunpack.c.l.b16 %v8355
          %v9387 = vunpack.c.l.b16 %v8356
          %v9388 = vunpack.c.l.b16 %v8357
          %v9389 = vunpack.c.l.b16 %v8358
          %v9390 = vunpack.c.l.b16 %v8359
          %v9391 = vunpack.c.l.b16 %v8360
          %v9392 = vunpack.c.l.b16 %v8361
          %v9393 = vunpack.c.l.b16 %v8362
          %v9394 = vunpack.c.l.b16 %v8363
          %v9395 = vunpack.c.l.b16 %v8364
          %v9396 = vunpack.c.l.b16 %v8365
          %v9397 = vunpack.c.l.b16 %v8366
          %v9398 = vunpack.c.l.b16 %v8367
          %v9399 = vunpack.c.l.b16 %v8368
          %v9400 = vunpack.c.l.b16 %v8369
          %v9401 = vunpack.c.l.b16 %v8370
          %v9402 = vunpack.c.l.b16 %v8371
          %v9403 = vunpack.c.l.b16 %v8372
          %v9404 = vunpack.c.l.b16 %v8373
          %v9405 = vunpack.c.l.b16 %v8374
          %v9406 = vunpack.c.l.b16 %v8375
          %v9407 = vunpack.c.l.b16 %v8376
          %v9408 = vunpack.c.l.b16 %v8377
          %v9409 = vunpack.c.l.b16 %v8378
          %v9410 = vunpack.c.l.b16 %v8379
          %v9411 = vunpack.c.l.b16 %v8380
          %v9412 = vunpack.c.l.b16 %v8381
          %v9413 = vunpack.c.l.b16 %v8382
          %v9414 = vunpack.c.l.b16 %v8383
          %v9415 = vunpack.c.l.b16 %v8384
          %v9416 = vunpack.c.l.b16 %v8385
          %v9417 = vunpack.c.l.b16 %v8386
          %v9418 = vunpack.c.l.b16 %v8387
          %v9419 = vunpack.c.l.b16 %v8388
          %v9420 = vunpack.c.l.b16 %v8389
          %v9421 = vunpack.c.l.b16 %v8390
          %v9422 = vunpack.c.l.b16 %v8391
          %v9423 = vunpack.c.l.b16 %v8392
          %v9424 = vunpack.c.l.b16 %v8393
          %v9425 = vunpack.c.l.b16 %v8394
          %v9426 = vunpack.c.l.b16 %v8395
          %v9427 = vunpack.c.l.b16 %v8396
          %v9428 = vunpack.c.l.b16 %v8397
          %v9429 = vunpack.c.l.b16 %v8398
          %v9430 = vunpack.c.l.b16 %v8399
          %v9431 = vunpack.c.l.b16 %v8400
          %v9432 = vunpack.c.l.b16 %v8401
          %v9433 = vunpack.c.l.b16 %v8402
          %v9434 = vunpack.c.l.b16 %v8403
          %v9435 = vunpack.c.l.b16 %v8404
          %v9436 = vunpack.c.l.b16 %v8405
          %v9437 = vunpack.c.l.b16 %v8406
          %v9438 = vunpack.c.l.b16 %v8407
          %v9439 = vunpack.c.l.b16 %v8408
          %v9440 = vunpack.c.l.b16 %v8409
          %v9441 = vunpack.c.l.b16 %v8410
          %v9442 = vunpack.c.l.b16 %v8411
          %v9443 = vpack.c.b16 %v8932, %v8931
          %v9444 = vpack.c.b16 %v8934, %v8933
          %v9445 = vpack.c.b16 %v8936, %v8935
          %v9446 = vpack.c.b16 %v8938, %v8937
          %v9447 = vpack.c.b16 %v8940, %v8939
          %v9448 = vpack.c.b16 %v8942, %v8941
          %v9449 = vpack.c.b16 %v8944, %v8943
          %v9450 = vpack.c.b16 %v8946, %v8945
          %v9451 = vpack.c.b16 %v8948, %v8947
          %v9452 = vpack.c.b16 %v8950, %v8949
          %v9453 = vpack.c.b16 %v8952, %v8951
          %v9454 = vpack.c.b16 %v8954, %v8953
          %v9455 = vpack.c.b16 %v8956, %v8955
          %v9456 = vpack.c.b16 %v8958, %v8957
          %v9457 = vpack.c.b16 %v8960, %v8959
          %v9458 = vpack.c.b16 %v8962, %v8961
          %v9459 = vpack.c.b16 %v8964, %v8963
          %v9460 = vpack.c.b16 %v8966, %v8965
          %v9461 = vpack.c.b16 %v8968, %v8967
          %v9462 = vpack.c.b16 %v8970, %v8969
          %v9463 = vpack.c.b16 %v8972, %v8971
          %v9464 = vpack.c.b16 %v8974, %v8973
          %v9465 = vpack.c.b16 %v8976, %v8975
          %v9466 = vpack.c.b16 %v8978, %v8977
          %v9467 = vpack.c.b16 %v8980, %v8979
          %v9468 = vpack.c.b16 %v8982, %v8981
          %v9469 = vpack.c.b16 %v8984, %v8983
          %v9470 = vpack.c.b16 %v8986, %v8985
          %v9471 = vpack.c.b16 %v8988, %v8987
          %v9472 = vpack.c.b16 %v8990, %v8989
          %v9473 = vpack.c.b16 %v8992, %v8991
          %v9474 = vpack.c.b16 %v8994, %v8993
          %v9475 = vpack.c.b16 %v8996, %v8995
          %v9476 = vpack.c.b16 %v8998, %v8997
          %v9477 = vpack.c.b16 %v9000, %v8999
          %v9478 = vpack.c.b16 %v9002, %v9001
          %v9479 = vpack.c.b16 %v9004, %v9003
          %v9480 = vpack.c.b16 %v9006, %v9005
          %v9481 = vpack.c.b16 %v9008, %v9007
          %v9482 = vpack.c.b16 %v9010, %v9009
          %v9483 = vpack.c.b16 %v9012, %v9011
          %v9484 = vpack.c.b16 %v9014, %v9013
          %v9485 = vpack.c.b16 %v9016, %v9015
          %v9486 = vpack.c.b16 %v9018, %v9017
          %v9487 = vpack.c.b16 %v9020, %v9019
          %v9488 = vpack.c.b16 %v9022, %v9021
          %v9489 = vpack.c.b16 %v9024, %v9023
          %v9490 = vpack.c.b16 %v9026, %v9025
          %v9491 = vpack.c.b16 %v9028, %v9027
          %v9492 = vpack.c.b16 %v9030, %v9029
          %v9493 = vpack.c.b16 %v9032, %v9031
          %v9494 = vpack.c.b16 %v9034, %v9033
          %v9495 = vpack.c.b16 %v9036, %v9035
          %v9496 = vpack.c.b16 %v9038, %v9037
          %v9497 = vpack.c.b16 %v9040, %v9039
          %v9498 = vpack.c.b16 %v9042, %v9041
          %v9499 = vpack.c.b16 %v9044, %v9043
          %v9500 = vpack.c.b16 %v9046, %v9045
          %v9501 = vpack.c.b16 %v9048, %v9047
          %v9502 = vpack.c.b16 %v9050, %v9049
          %v9503 = vpack.c.b16 %v9052, %v9051
          %v9504 = vpack.c.b16 %v9054, %v9053
          %v9505 = vpack.c.b16 %v9056, %v9055
          %v9506 = vpack.c.b16 %v9058, %v9057
          %v9507 = vpack.c.b16 %v9060, %v9059
          %v9508 = vpack.c.b16 %v9062, %v9061
          %v9509 = vpack.c.b16 %v9064, %v9063
          %v9510 = vpack.c.b16 %v9066, %v9065
          %v9511 = vpack.c.b16 %v9068, %v9067
          %v9512 = vpack.c.b16 %v9070, %v9069
          %v9513 = vpack.c.b16 %v9072, %v9071
          %v9514 = vpack.c.b16 %v9074, %v9073
          %v9515 = vpack.c.b16 %v9076, %v9075
          %v9516 = vpack.c.b16 %v9078, %v9077
          %v9517 = vpack.c.b16 %v9080, %v9079
          %v9518 = vpack.c.b16 %v9082, %v9081
          %v9519 = vpack.c.b16 %v9084, %v9083
          %v9520 = vpack.c.b16 %v9086, %v9085
          %v9521 = vpack.c.b16 %v9088, %v9087
          %v9522 = vpack.c.b16 %v9090, %v9089
          %v9523 = vpack.c.b16 %v9092, %v9091
          %v9524 = vpack.c.b16 %v9094, %v9093
          %v9525 = vpack.c.b16 %v9096, %v9095
          %v9526 = vpack.c.b16 %v9098, %v9097
          %v9527 = vpack.c.b16 %v9100, %v9099
          %v9528 = vpack.c.b16 %v9102, %v9101
          %v9529 = vpack.c.b16 %v9104, %v9103
          %v9530 = vpack.c.b16 %v9106, %v9105
          %v9531 = vpack.c.b16 %v9108, %v9107
          %v9532 = vpack.c.b16 %v9110, %v9109
          %v9533 = vpack.c.b16 %v9112, %v9111
          %v9534 = vpack.c.b16 %v9114, %v9113
          %v9535 = vpack.c.b16 %v9116, %v9115
          %v9536 = vpack.c.b16 %v9118, %v9117
          %v9537 = vpack.c.b16 %v9120, %v9119
          %v9538 = vpack.c.b16 %v9122, %v9121
          %v9539 = vpack.c.b16 %v9124, %v9123
          %v9540 = vpack.c.b16 %v9126, %v9125
          %v9541 = vpack.c.b16 %v9128, %v9127
          %v9542 = vpack.c.b16 %v9130, %v9129
          %v9543 = vpack.c.b16 %v9132, %v9131
          %v9544 = vpack.c.b16 %v9134, %v9133
          %v9545 = vpack.c.b16 %v9136, %v9135
          %v9546 = vpack.c.b16 %v9138, %v9137
          %v9547 = vpack.c.b16 %v9140, %v9139
          %v9548 = vpack.c.b16 %v9142, %v9141
          %v9549 = vpack.c.b16 %v9144, %v9143
          %v9550 = vpack.c.b16 %v9146, %v9145
          %v9551 = vpack.c.b16 %v9148, %v9147
          %v9552 = vpack.c.b16 %v9150, %v9149
          %v9553 = vpack.c.b16 %v9152, %v9151
          %v9554 = vpack.c.b16 %v9154, %v9153
          %v9555 = vpack.c.b16 %v9156, %v9155
          %v9556 = vpack.c.b16 %v9158, %v9157
          %v9557 = vpack.c.b16 %v9160, %v9159
          %v9558 = vpack.c.b16 %v9162, %v9161
          %v9559 = vpack.c.b16 %v9164, %v9163
          %v9560 = vpack.c.b16 %v9166, %v9165
          %v9561 = vpack.c.b16 %v9168, %v9167
          %v9562 = vpack.c.b16 %v9170, %v9169
          %v9563 = vpack.c.b16 %v9172, %v9171
          %v9564 = vpack.c.b16 %v9174, %v9173
          %v9565 = vpack.c.b16 %v9176, %v9175
          %v9566 = vpack.c.b16 %v9178, %v9177
          %v9567 = vpack.c.b16 %v9180, %v9179
          %v9568 = vpack.c.b16 %v9182, %v9181
          %v9569 = vpack.c.b16 %v9184, %v9183
          %v9570 = vpack.c.b16 %v9186, %v9185
          %v9571 = vpack.c.b16 %v9188, %v9187
          %v9572 = vpack.c.b16 %v9190, %v9189
          %v9573 = vpack.c.b16 %v9192, %v9191
          %v9574 = vpack.c.b16 %v9194, %v9193
          %v9575 = vpack.c.b16 %v9196, %v9195
          %v9576 = vpack.c.b16 %v9198, %v9197
          %v9577 = vpack.c.b16 %v9200, %v9199
          %v9578 = vpack.c.b16 %v9202, %v9201
          %v9579 = vpack.c.b16 %v9204, %v9203
          %v9580 = vpack.c.b16 %v9206, %v9205
          %v9581 = vpack.c.b16 %v9208, %v9207
          %v9582 = vpack.c.b16 %v9210, %v9209
          %v9583 = vpack.c.b16 %v9212, %v9211
          %v9584 = vpack.c.b16 %v9214, %v9213
          %v9585 = vpack.c.b16 %v9216, %v9215
          %v9586 = vpack.c.b16 %v9218, %v9217
          %v9587 = vpack.c.b16 %v9220, %v9219
          %v9588 = vpack.c.b16 %v9222, %v9221
          %v9589 = vpack.c.b16 %v9224, %v9223
          %v9590 = vpack.c.b16 %v9226, %v9225
          %v9591 = vpack.c.b16 %v9228, %v9227
          %v9592 = vpack.c.b16 %v9230, %v9229
          %v9593 = vpack.c.b16 %v9232, %v9231
          %v9594 = vpack.c.b16 %v9234, %v9233
          %v9595 = vpack.c.b16 %v9236, %v9235
          %v9596 = vpack.c.b16 %v9238, %v9237
          %v9597 = vpack.c.b16 %v9240, %v9239
          %v9598 = vpack.c.b16 %v9242, %v9241
          %v9599 = vpack.c.b16 %v9244, %v9243
          %v9600 = vpack.c.b16 %v9246, %v9245
          %v9601 = vpack.c.b16 %v9248, %v9247
          %v9602 = vpack.c.b16 %v9250, %v9249
          %v9603 = vpack.c.b16 %v9252, %v9251
          %v9604 = vpack.c.b16 %v9254, %v9253
          %v9605 = vpack.c.b16 %v9256, %v9255
          %v9606 = vpack.c.b16 %v9258, %v9257
          %v9607 = vpack.c.b16 %v9260, %v9259
          %v9608 = vpack.c.b16 %v9262, %v9261
          %v9609 = vpack.c.b16 %v9264, %v9263
          %v9610 = vpack.c.b16 %v9266, %v9265
          %v9611 = vpack.c.b16 %v9268, %v9267
          %v9612 = vpack.c.b16 %v9270, %v9269
          %v9613 = vpack.c.b16 %v9272, %v9271
          %v9614 = vpack.c.b16 %v9274, %v9273
          %v9615 = vpack.c.b16 %v9276, %v9275
          %v9616 = vpack.c.b16 %v9278, %v9277
          %v9617 = vpack.c.b16 %v9280, %v9279
          %v9618 = vpack.c.b16 %v9282, %v9281
          %v9619 = vpack.c.b16 %v9284, %v9283
          %v9620 = vpack.c.b16 %v9286, %v9285
          %v9621 = vpack.c.b16 %v9288, %v9287
          %v9622 = vpack.c.b16 %v9290, %v9289
          %v9623 = vpack.c.b16 %v9292, %v9291
          %v9624 = vpack.c.b16 %v9294, %v9293
          %v9625 = vpack.c.b16 %v9296, %v9295
          %v9626 = vpack.c.b16 %v9298, %v9297
          %v9627 = vpack.c.b16 %v9300, %v9299
          %v9628 = vpack.c.b16 %v9302, %v9301
          %v9629 = vpack.c.b16 %v9304, %v9303
          %v9630 = vpack.c.b16 %v9306, %v9305
          %v9631 = vpack.c.b16 %v9308, %v9307
          %v9632 = vpack.c.b16 %v9310, %v9309
          %v9633 = vpack.c.b16 %v9312, %v9311
          %v9634 = vpack.c.b16 %v9314, %v9313
          %v9635 = vpack.c.b16 %v9316, %v9315
          %v9636 = vpack.c.b16 %v9318, %v9317
          %v9637 = vpack.c.b16 %v9320, %v9319
          %v9638 = vpack.c.b16 %v9322, %v9321
          %v9639 = vpack.c.b16 %v9324, %v9323
          %v9640 = vpack.c.b16 %v9326, %v9325
          %v9641 = vpack.c.b16 %v9328, %v9327
          %v9642 = vpack.c.b16 %v9330, %v9329
          %v9643 = vpack.c.b16 %v9332, %v9331
          %v9644 = vpack.c.b16 %v9334, %v9333
          %v9645 = vpack.c.b16 %v9336, %v9335
          %v9646 = vpack.c.b16 %v9338, %v9337
          %v9647 = vpack.c.b16 %v9340, %v9339
          %v9648 = vpack.c.b16 %v9342, %v9341
          %v9649 = vpack.c.b16 %v9344, %v9343
          %v9650 = vpack.c.b16 %v9346, %v9345
          %v9651 = vpack.c.b16 %v9348, %v9347
          %v9652 = vpack.c.b16 %v9350, %v9349
          %v9653 = vpack.c.b16 %v9352, %v9351
          %v9654 = vpack.c.b16 %v9354, %v9353
          %v9655 = vpack.c.b16 %v9356, %v9355
          %v9656 = vpack.c.b16 %v9358, %v9357
          %v9657 = vpack.c.b16 %v9360, %v9359
          %v9658 = vpack.c.b16 %v9362, %v9361
          %v9659 = vpack.c.b16 %v9364, %v9363
          %v9660 = vpack.c.b16 %v9366, %v9365
          %v9661 = vpack.c.b16 %v9368, %v9367
          %v9662 = vpack.c.b16 %v9370, %v9369
          %v9663 = vpack.c.b16 %v9372, %v9371
          %v9664 = vpack.c.b16 %v9374, %v9373
          %v9665 = vpack.c.b16 %v9376, %v9375
          %v9666 = vpack.c.b16 %v9378, %v9377
          %v9667 = vpack.c.b16 %v9380, %v9379
          %v9668 = vpack.c.b16 %v9382, %v9381
          %v9669 = vpack.c.b16 %v9384, %v9383
          %v9670 = vpack.c.b16 %v9386, %v9385
          %v9671 = vpack.c.b16 %v9388, %v9387
          %v9672 = vpack.c.b16 %v9390, %v9389
          %v9673 = vpack.c.b16 %v9392, %v9391
          %v9674 = vpack.c.b16 %v9394, %v9393
          %v9675 = vpack.c.b16 %v9396, %v9395
          %v9676 = vpack.c.b16 %v9398, %v9397
          %v9677 = vpack.c.b16 %v9400, %v9399
          %v9678 = vpack.c.b16 %v9402, %v9401
          %v9679 = vpack.c.b16 %v9404, %v9403
          %v9680 = vpack.c.b16 %v9406, %v9405
          %v9681 = vpack.c.b16 %v9408, %v9407
          %v9682 = vpack.c.b16 %v9410, %v9409
          %v9683 = vpack.c.b16 %v9412, %v9411
          %v9684 = vpack.c.b16 %v9414, %v9413
          %v9685 = vpack.c.b16 %v9416, %v9415
          %v9686 = vpack.c.b16 %v9418, %v9417
          %v9687 = vpack.c.b16 %v9420, %v9419
          %v9688 = vpack.c.b16 %v9422, %v9421
          %v9689 = vpack.c.b16 %v9424, %v9423
          %v9690 = vpack.c.b16 %v9426, %v9425
          %v9691 = vpack.c.b16 %v9428, %v9427
          %v9692 = vpack.c.b16 %v9430, %v9429
          %v9693 = vpack.c.b16 %v9432, %v9431
          %v9694 = vpack.c.b16 %v9434, %v9433
          %v9695 = vpack.c.b16 %v9436, %v9435
          %v9696 = vpack.c.b16 %v9438, %v9437
          %v9697 = vpack.c.b16 %v9440, %v9439
          %v9698 = vpack.c.b16 %v9442, %v9441
          %9955 = vmatprep.subr.bf16.mxu0 0
          %9956 = vmatpush1.bf16.msra.mxu0 %v9450
          %9957 = vmatprep.subr.bf16.mxu0 0
          %9958 = vmatpush1.bf16.msra.mxu0 %v9449
          %9959 = vmatprep.subr.bf16.mxu0 0
          %9960 = vmatpush1.bf16.msra.mxu0 %v9448
          %9961 = vmatprep.subr.bf16.mxu0 0
          %9962 = vmatpush1.bf16.msra.mxu0 %v9447
          %9963 = vmatprep.subr.bf16.mxu0 0
          %9964 = vmatpush1.bf16.msra.mxu0 %v9446
          %9965 = vmatprep.subr.bf16.mxu0 0
          %9966 = vmatpush1.bf16.msra.mxu0 %v9445
          %9967 = vmatprep.subr.bf16.mxu0 0
          %9968 = vmatpush1.bf16.msra.mxu0 %v9444
          %9969 = vmatprep.subr.bf16.mxu0 0
          %9970 = vmatpush1.bf16.msra.mxu0 %v9443
          %9971 = vmatprep.subr.bf16.mxu0 0
          %9972 = vmatpush2.bf16.msra.mxu0 %v9458
          %9973 = vmatprep.subr.bf16.mxu0 0
          %9974 = vmatpush2.bf16.msra.mxu0 %v9457
          %9975 = vmatprep.subr.bf16.mxu0 0
          %9976 = vmatpush2.bf16.msra.mxu0 %v9456
          %9977 = vmatprep.subr.bf16.mxu0 0
          %9978 = vmatpush2.bf16.msra.mxu0 %v9455
          %9979 = vmatprep.subr.bf16.mxu0 0
          %9980 = vmatpush2.bf16.msra.mxu0 %v9454
          %9981 = vmatprep.subr.bf16.mxu0 0
          %9982 = vmatpush2.bf16.msra.mxu0 %v9453
          %9983 = vmatprep.subr.bf16.mxu0 0
          %9984 = vmatpush2.bf16.msra.mxu0 %v9452
          %9985 = vmatprep.subr.bf16.mxu0 0
          %9986 = vmatpush2.bf16.msra.mxu0 %v9451
          %9987 = vmatprep.mubr.bf16.mxu0 %v7869
          %9988 = vmatmul.mubr.bf16.gmra.mxu0 %v7868
          %v9989 = vpop.f32.mrf.mxu0
          %v9990 = vadd.f32 %v8417, %v9989
          %v9991 = vpop.f32.mrf.mxu0
          %v9992 = vpop.f32.mrf.mxu0
          %v9993 = vpop.f32.mrf.mxu0
          %9994 = vdwg.mxu0
          %9995 = vmatprep.subr.bf16.mxu0 0
          %9996 = vmatpush1.bf16.msra.mxu0 %v9466
          %9997 = vmatprep.subr.bf16.mxu0 0
          %9998 = vmatpush1.bf16.msra.mxu0 %v9465
          %9999 = vmatprep.subr.bf16.mxu0 0
          %10000 = vmatpush1.bf16.msra.mxu0 %v9464
          %10001 = vmatprep.subr.bf16.mxu0 0
          %10002 = vmatpush1.bf16.msra.mxu0 %v9463
          %10003 = vmatprep.subr.bf16.mxu0 0
          %10004 = vmatpush1.bf16.msra.mxu0 %v9462
          %10005 = vmatprep.subr.bf16.mxu0 0
          %10006 = vmatpush1.bf16.msra.mxu0 %v9461
          %10007 = vmatprep.subr.bf16.mxu0 0
          %10008 = vmatpush1.bf16.msra.mxu0 %v9460
          %10009 = vmatprep.subr.bf16.mxu0 0
          %10010 = vmatpush1.bf16.msra.mxu0 %v9459
          %10011 = vmatprep.subr.bf16.mxu0 0
          %10012 = vmatpush2.bf16.msra.mxu0 %v9474
          %10013 = vmatprep.subr.bf16.mxu0 0
          %10014 = vmatpush2.bf16.msra.mxu0 %v9473
          %10015 = vmatprep.subr.bf16.mxu0 0
          %10016 = vmatpush2.bf16.msra.mxu0 %v9472
          %10017 = vmatprep.subr.bf16.mxu0 0
          %10018 = vmatpush2.bf16.msra.mxu0 %v9471
          %10019 = vmatprep.subr.bf16.mxu0 0
          %10020 = vmatpush2.bf16.msra.mxu0 %v9470
          %10021 = vmatprep.subr.bf16.mxu0 0
          %10022 = vmatpush2.bf16.msra.mxu0 %v9469
          %10023 = vmatprep.subr.bf16.mxu0 0
          %10024 = vmatpush2.bf16.msra.mxu0 %v9468
          %10025 = vmatprep.subr.bf16.mxu0 0
          %10026 = vmatpush2.bf16.msra.mxu0 %v9467
          %10027 = vmatprep.mubr.bf16.mxu0 %v7871
          %10028 = vmatmul.mubr.bf16.gmra.mxu0 %v7870
          %v10029 = vpop.f32.mrf.mxu0
          %v10030 = vadd.f32 %v9990, %v10029
          %v10031 = vpop.f32.mrf.mxu0
          %v10032 = vpop.f32.mrf.mxu0
          %v10033 = vpop.f32.mrf.mxu0
          %10034 = vdwg.mxu0
          %10035 = vmatprep.subr.bf16.mxu0 0
          %10036 = vmatpush1.bf16.msra.mxu0 %v9482
          %10037 = vmatprep.subr.bf16.mxu0 0
          %10038 = vmatpush1.bf16.msra.mxu0 %v9481
          %10039 = vmatprep.subr.bf16.mxu0 0
          %10040 = vmatpush1.bf16.msra.mxu0 %v9480
          %10041 = vmatprep.subr.bf16.mxu0 0
          %10042 = vmatpush1.bf16.msra.mxu0 %v9479
          %10043 = vmatprep.subr.bf16.mxu0 0
          %10044 = vmatpush1.bf16.msra.mxu0 %v9478
          %10045 = vmatprep.subr.bf16.mxu0 0
          %10046 = vmatpush1.bf16.msra.mxu0 %v9477
          %10047 = vmatprep.subr.bf16.mxu0 0
          %10048 = vmatpush1.bf16.msra.mxu0 %v9476
          %10049 = vmatprep.subr.bf16.mxu0 0
          %10050 = vmatpush1.bf16.msra.mxu0 %v9475
          %10051 = vmatprep.subr.bf16.mxu0 0
          %10052 = vmatpush2.bf16.msra.mxu0 %v9490
          %10053 = vmatprep.subr.bf16.mxu0 0
          %10054 = vmatpush2.bf16.msra.mxu0 %v9489
          %10055 = vmatprep.subr.bf16.mxu0 0
          %10056 = vmatpush2.bf16.msra.mxu0 %v9488
          %10057 = vmatprep.subr.bf16.mxu0 0
          %10058 = vmatpush2.bf16.msra.mxu0 %v9487
          %10059 = vmatprep.subr.bf16.mxu0 0
          %10060 = vmatpush2.bf16.msra.mxu0 %v9486
          %10061 = vmatprep.subr.bf16.mxu0 0
          %10062 = vmatpush2.bf16.msra.mxu0 %v9485
          %10063 = vmatprep.subr.bf16.mxu0 0
          %10064 = vmatpush2.bf16.msra.mxu0 %v9484
          %10065 = vmatprep.subr.bf16.mxu0 0
          %10066 = vmatpush2.bf16.msra.mxu0 %v9483
          %10067 = vmatprep.mubr.bf16.mxu0 %v7873
          %10068 = vmatmul.mubr.bf16.gmra.mxu0 %v7872
          %v10069 = vpop.f32.mrf.mxu0
          %v10070 = vadd.f32 %v10030, %v10069
          %v10071 = vpop.f32.mrf.mxu0
          %v10072 = vpop.f32.mrf.mxu0
          %v10073 = vpop.f32.mrf.mxu0
          %10074 = vdwg.mxu0
          %10075 = vmatprep.subr.bf16.mxu0 0
          %10076 = vmatpush1.bf16.msra.mxu0 %v9498
          %10077 = vmatprep.subr.bf16.mxu0 0
          %10078 = vmatpush1.bf16.msra.mxu0 %v9497
          %10079 = vmatprep.subr.bf16.mxu0 0
          %10080 = vmatpush1.bf16.msra.mxu0 %v9496
          %10081 = vmatprep.subr.bf16.mxu0 0
          %10082 = vmatpush1.bf16.msra.mxu0 %v9495
          %10083 = vmatprep.subr.bf16.mxu0 0
          %10084 = vmatpush1.bf16.msra.mxu0 %v9494
          %10085 = vmatprep.subr.bf16.mxu0 0
          %10086 = vmatpush1.bf16.msra.mxu0 %v9493
          %10087 = vmatprep.subr.bf16.mxu0 0
          %10088 = vmatpush1.bf16.msra.mxu0 %v9492
          %10089 = vmatprep.subr.bf16.mxu0 0
          %10090 = vmatpush1.bf16.msra.mxu0 %v9491
          %10091 = vmatprep.subr.bf16.mxu0 0
          %10092 = vmatpush2.bf16.msra.mxu0 %v9506
          %10093 = vmatprep.subr.bf16.mxu0 0
          %10094 = vmatpush2.bf16.msra.mxu0 %v9505
          %10095 = vmatprep.subr.bf16.mxu0 0
          %10096 = vmatpush2.bf16.msra.mxu0 %v9504
          %10097 = vmatprep.subr.bf16.mxu0 0
          %10098 = vmatpush2.bf16.msra.mxu0 %v9503
          %10099 = vmatprep.subr.bf16.mxu0 0
          %10100 = vmatpush2.bf16.msra.mxu0 %v9502
          %10101 = vmatprep.subr.bf16.mxu0 0
          %10102 = vmatpush2.bf16.msra.mxu0 %v9501
          %10103 = vmatprep.subr.bf16.mxu0 0
          %10104 = vmatpush2.bf16.msra.mxu0 %v9500
          %10105 = vmatprep.subr.bf16.mxu0 0
          %10106 = vmatpush2.bf16.msra.mxu0 %v9499
          %10107 = vmatprep.mubr.bf16.mxu0 %v7875
          %10108 = vmatmul.mubr.bf16.gmra.mxu0 %v7874
          %v10109 = vpop.f32.mrf.mxu0
          %v10110 = vadd.f32 %v10070, %v10109
          %v10111 = vpop.f32.mrf.mxu0
          %v10112 = vpop.f32.mrf.mxu0
          %v10113 = vpop.f32.mrf.mxu0
          %10114 = vdwg.mxu0
          %10115 = vmatprep.subr.bf16.mxu0 0
          %10116 = vmatpush1.bf16.msra.mxu0 %v9514
          %10117 = vmatprep.subr.bf16.mxu0 0
          %10118 = vmatpush1.bf16.msra.mxu0 %v9513
          %10119 = vmatprep.subr.bf16.mxu0 0
          %10120 = vmatpush1.bf16.msra.mxu0 %v9512
          %10121 = vmatprep.subr.bf16.mxu0 0
          %10122 = vmatpush1.bf16.msra.mxu0 %v9511
          %10123 = vmatprep.subr.bf16.mxu0 0
          %10124 = vmatpush1.bf16.msra.mxu0 %v9510
          %10125 = vmatprep.subr.bf16.mxu0 0
          %10126 = vmatpush1.bf16.msra.mxu0 %v9509
          %10127 = vmatprep.subr.bf16.mxu0 0
          %10128 = vmatpush1.bf16.msra.mxu0 %v9508
          %10129 = vmatprep.subr.bf16.mxu0 0
          %10130 = vmatpush1.bf16.msra.mxu0 %v9507
          %10131 = vmatprep.subr.bf16.mxu0 0
          %10132 = vmatpush2.bf16.msra.mxu0 %v9522
          %10133 = vmatprep.subr.bf16.mxu0 0
          %10134 = vmatpush2.bf16.msra.mxu0 %v9521
          %10135 = vmatprep.subr.bf16.mxu0 0
          %10136 = vmatpush2.bf16.msra.mxu0 %v9520
          %10137 = vmatprep.subr.bf16.mxu0 0
          %10138 = vmatpush2.bf16.msra.mxu0 %v9519
          %10139 = vmatprep.subr.bf16.mxu0 0
          %10140 = vmatpush2.bf16.msra.mxu0 %v9518
          %10141 = vmatprep.subr.bf16.mxu0 0
          %10142 = vmatpush2.bf16.msra.mxu0 %v9517
          %10143 = vmatprep.subr.bf16.mxu0 0
          %10144 = vmatpush2.bf16.msra.mxu0 %v9516
          %10145 = vmatprep.subr.bf16.mxu0 0
          %10146 = vmatpush2.bf16.msra.mxu0 %v9515
          %10147 = vmatprep.mubr.bf16.mxu0 %v7877
          %10148 = vmatmul.mubr.bf16.gmra.mxu0 %v7876
          %v10149 = vpop.f32.mrf.mxu0
          %v10150 = vadd.f32 %v10110, %v10149
          %v10151 = vpop.f32.mrf.mxu0
          %v10152 = vpop.f32.mrf.mxu0
          %v10153 = vpop.f32.mrf.mxu0
          %10154 = vdwg.mxu0
          %10155 = vmatprep.subr.bf16.mxu0 0
          %10156 = vmatpush1.bf16.msra.mxu0 %v9530
          %10157 = vmatprep.subr.bf16.mxu0 0
          %10158 = vmatpush1.bf16.msra.mxu0 %v9529
          %10159 = vmatprep.subr.bf16.mxu0 0
          %10160 = vmatpush1.bf16.msra.mxu0 %v9528
          %10161 = vmatprep.subr.bf16.mxu0 0
          %10162 = vmatpush1.bf16.msra.mxu0 %v9527
          %10163 = vmatprep.subr.bf16.mxu0 0
          %10164 = vmatpush1.bf16.msra.mxu0 %v9526
          %10165 = vmatprep.subr.bf16.mxu0 0
          %10166 = vmatpush1.bf16.msra.mxu0 %v9525
          %10167 = vmatprep.subr.bf16.mxu0 0
          %10168 = vmatpush1.bf16.msra.mxu0 %v9524
          %10169 = vmatprep.subr.bf16.mxu0 0
          %10170 = vmatpush1.bf16.msra.mxu0 %v9523
          %10171 = vmatprep.subr.bf16.mxu0 0
          %10172 = vmatpush2.bf16.msra.mxu0 %v9538
          %10173 = vmatprep.subr.bf16.mxu0 0
          %10174 = vmatpush2.bf16.msra.mxu0 %v9537
          %10175 = vmatprep.subr.bf16.mxu0 0
          %10176 = vmatpush2.bf16.msra.mxu0 %v9536
          %10177 = vmatprep.subr.bf16.mxu0 0
          %10178 = vmatpush2.bf16.msra.mxu0 %v9535
          %10179 = vmatprep.subr.bf16.mxu0 0
          %10180 = vmatpush2.bf16.msra.mxu0 %v9534
          %10181 = vmatprep.subr.bf16.mxu0 0
          %10182 = vmatpush2.bf16.msra.mxu0 %v9533
          %10183 = vmatprep.subr.bf16.mxu0 0
          %10184 = vmatpush2.bf16.msra.mxu0 %v9532
          %10185 = vmatprep.subr.bf16.mxu0 0
          %10186 = vmatpush2.bf16.msra.mxu0 %v9531
          %10187 = vmatprep.mubr.bf16.mxu0 %v7879
          %10188 = vmatmul.mubr.bf16.gmra.mxu0 %v7878
          %v10189 = vpop.f32.mrf.mxu0
          %v10190 = vadd.f32 %v10150, %v10189
          %v10191 = vpop.f32.mrf.mxu0
          %v10192 = vpop.f32.mrf.mxu0
          %v10193 = vpop.f32.mrf.mxu0
          %10194 = vdwg.mxu0
          %10195 = vmatprep.subr.bf16.mxu0 0
          %10196 = vmatpush1.bf16.msra.mxu0 %v9546
          %10197 = vmatprep.subr.bf16.mxu0 0
          %10198 = vmatpush1.bf16.msra.mxu0 %v9545
          %10199 = vmatprep.subr.bf16.mxu0 0
          %10200 = vmatpush1.bf16.msra.mxu0 %v9544
          %10201 = vmatprep.subr.bf16.mxu0 0
          %10202 = vmatpush1.bf16.msra.mxu0 %v9543
          %10203 = vmatprep.subr.bf16.mxu0 0
          %10204 = vmatpush1.bf16.msra.mxu0 %v9542
          %10205 = vmatprep.subr.bf16.mxu0 0
          %10206 = vmatpush1.bf16.msra.mxu0 %v9541
          %10207 = vmatprep.subr.bf16.mxu0 0
          %10208 = vmatpush1.bf16.msra.mxu0 %v9540
          %10209 = vmatprep.subr.bf16.mxu0 0
          %10210 = vmatpush1.bf16.msra.mxu0 %v9539
          %10211 = vmatprep.subr.bf16.mxu0 0
          %10212 = vmatpush2.bf16.msra.mxu0 %v9554
          %10213 = vmatprep.subr.bf16.mxu0 0
          %10214 = vmatpush2.bf16.msra.mxu0 %v9553
          %10215 = vmatprep.subr.bf16.mxu0 0
          %10216 = vmatpush2.bf16.msra.mxu0 %v9552
          %10217 = vmatprep.subr.bf16.mxu0 0
          %10218 = vmatpush2.bf16.msra.mxu0 %v9551
          %10219 = vmatprep.subr.bf16.mxu0 0
          %10220 = vmatpush2.bf16.msra.mxu0 %v9550
          %10221 = vmatprep.subr.bf16.mxu0 0
          %10222 = vmatpush2.bf16.msra.mxu0 %v9549
          %10223 = vmatprep.subr.bf16.mxu0 0
          %10224 = vmatpush2.bf16.msra.mxu0 %v9548
          %10225 = vmatprep.subr.bf16.mxu0 0
          %10226 = vmatpush2.bf16.msra.mxu0 %v9547
          %10227 = vmatprep.mubr.bf16.mxu0 %v7881
          %10228 = vmatmul.mubr.bf16.gmra.mxu0 %v7880
          %v10229 = vpop.f32.mrf.mxu0
          %v10230 = vadd.f32 %v10190, %v10229
          %v10231 = vpop.f32.mrf.mxu0
          %v10232 = vpop.f32.mrf.mxu0
          %v10233 = vpop.f32.mrf.mxu0
          %10234 = vdwg.mxu0
          %10235 = vmatprep.subr.bf16.mxu0 0
          %10236 = vmatpush1.bf16.msra.mxu0 %v9562
          %10237 = vmatprep.subr.bf16.mxu0 0
          %10238 = vmatpush1.bf16.msra.mxu0 %v9561
          %10239 = vmatprep.subr.bf16.mxu0 0
          %10240 = vmatpush1.bf16.msra.mxu0 %v9560
          %10241 = vmatprep.subr.bf16.mxu0 0
          %10242 = vmatpush1.bf16.msra.mxu0 %v9559
          %10243 = vmatprep.subr.bf16.mxu0 0
          %10244 = vmatpush1.bf16.msra.mxu0 %v9558
          %10245 = vmatprep.subr.bf16.mxu0 0
          %10246 = vmatpush1.bf16.msra.mxu0 %v9557
          %10247 = vmatprep.subr.bf16.mxu0 0
          %10248 = vmatpush1.bf16.msra.mxu0 %v9556
          %10249 = vmatprep.subr.bf16.mxu0 0
          %10250 = vmatpush1.bf16.msra.mxu0 %v9555
          %10251 = vmatprep.subr.bf16.mxu0 0
          %10252 = vmatpush2.bf16.msra.mxu0 %v9570
          %10253 = vmatprep.subr.bf16.mxu0 0
          %10254 = vmatpush2.bf16.msra.mxu0 %v9569
          %10255 = vmatprep.subr.bf16.mxu0 0
          %10256 = vmatpush2.bf16.msra.mxu0 %v9568
          %10257 = vmatprep.subr.bf16.mxu0 0
          %10258 = vmatpush2.bf16.msra.mxu0 %v9567
          %10259 = vmatprep.subr.bf16.mxu0 0
          %10260 = vmatpush2.bf16.msra.mxu0 %v9566
          %10261 = vmatprep.subr.bf16.mxu0 0
          %10262 = vmatpush2.bf16.msra.mxu0 %v9565
          %10263 = vmatprep.subr.bf16.mxu0 0
          %10264 = vmatpush2.bf16.msra.mxu0 %v9564
          %10265 = vmatprep.subr.bf16.mxu0 0
          %10266 = vmatpush2.bf16.msra.mxu0 %v9563
          %10267 = vmatprep.mubr.bf16.mxu0 %v7883
          %10268 = vmatmul.mubr.bf16.gmra.mxu0 %v7882
          %v10269 = vpop.f32.mrf.mxu0
          %v10270 = vadd.f32 %v10230, %v10269
          %v10271 = vpop.f32.mrf.mxu0
          %v10272 = vpop.f32.mrf.mxu0
          %v10273 = vpop.f32.mrf.mxu0
          %10274 = vdwg.mxu0
          %10275 = vmatprep.subr.bf16.mxu0 0
          %10276 = vmatpush1.bf16.msra.mxu0 %v9578
          %10277 = vmatprep.subr.bf16.mxu0 0
          %10278 = vmatpush1.bf16.msra.mxu0 %v9577
          %10279 = vmatprep.subr.bf16.mxu0 0
          %10280 = vmatpush1.bf16.msra.mxu0 %v9576
          %10281 = vmatprep.subr.bf16.mxu0 0
          %10282 = vmatpush1.bf16.msra.mxu0 %v9575
          %10283 = vmatprep.subr.bf16.mxu0 0
          %10284 = vmatpush1.bf16.msra.mxu0 %v9574
          %10285 = vmatprep.subr.bf16.mxu0 0
          %10286 = vmatpush1.bf16.msra.mxu0 %v9573
          %10287 = vmatprep.subr.bf16.mxu0 0
          %10288 = vmatpush1.bf16.msra.mxu0 %v9572
          %10289 = vmatprep.subr.bf16.mxu0 0
          %10290 = vmatpush1.bf16.msra.mxu0 %v9571
          %10291 = vmatprep.subr.bf16.mxu0 0
          %10292 = vmatpush2.bf16.msra.mxu0 %v9586
          %10293 = vmatprep.subr.bf16.mxu0 0
          %10294 = vmatpush2.bf16.msra.mxu0 %v9585
          %10295 = vmatprep.subr.bf16.mxu0 0
          %10296 = vmatpush2.bf16.msra.mxu0 %v9584
          %10297 = vmatprep.subr.bf16.mxu0 0
          %10298 = vmatpush2.bf16.msra.mxu0 %v9583
          %10299 = vmatprep.subr.bf16.mxu0 0
          %10300 = vmatpush2.bf16.msra.mxu0 %v9582
          %10301 = vmatprep.subr.bf16.mxu0 0
          %10302 = vmatpush2.bf16.msra.mxu0 %v9581
          %10303 = vmatprep.subr.bf16.mxu0 0
          %10304 = vmatpush2.bf16.msra.mxu0 %v9580
          %10305 = vmatprep.subr.bf16.mxu0 0
          %10306 = vmatpush2.bf16.msra.mxu0 %v9579
          %10307 = vmatprep.mubr.bf16.mxu0 %v7885
          %10308 = vmatmul.mubr.bf16.gmra.mxu0 %v7884
          %v10309 = vpop.f32.mrf.mxu0
          %v10310 = vadd.f32 %v10270, %v10309
          %v10311 = vpop.f32.mrf.mxu0
          %v10312 = vpop.f32.mrf.mxu0
          %v10313 = vpop.f32.mrf.mxu0
          %10314 = vdwg.mxu0
          %10315 = vmatprep.subr.bf16.mxu0 0
          %10316 = vmatpush1.bf16.msra.mxu0 %v9594
          %10317 = vmatprep.subr.bf16.mxu0 0
          %10318 = vmatpush1.bf16.msra.mxu0 %v9593
          %10319 = vmatprep.subr.bf16.mxu0 0
          %10320 = vmatpush1.bf16.msra.mxu0 %v9592
          %10321 = vmatprep.subr.bf16.mxu0 0
          %10322 = vmatpush1.bf16.msra.mxu0 %v9591
          %10323 = vmatprep.subr.bf16.mxu0 0
          %10324 = vmatpush1.bf16.msra.mxu0 %v9590
          %10325 = vmatprep.subr.bf16.mxu0 0
          %10326 = vmatpush1.bf16.msra.mxu0 %v9589
          %10327 = vmatprep.subr.bf16.mxu0 0
          %10328 = vmatpush1.bf16.msra.mxu0 %v9588
          %10329 = vmatprep.subr.bf16.mxu0 0
          %10330 = vmatpush1.bf16.msra.mxu0 %v9587
          %10331 = vmatprep.subr.bf16.mxu0 0
          %10332 = vmatpush2.bf16.msra.mxu0 %v9602
          %10333 = vmatprep.subr.bf16.mxu0 0
          %10334 = vmatpush2.bf16.msra.mxu0 %v9601
          %10335 = vmatprep.subr.bf16.mxu0 0
          %10336 = vmatpush2.bf16.msra.mxu0 %v9600
          %10337 = vmatprep.subr.bf16.mxu0 0
          %10338 = vmatpush2.bf16.msra.mxu0 %v9599
          %10339 = vmatprep.subr.bf16.mxu0 0
          %10340 = vmatpush2.bf16.msra.mxu0 %v9598
          %10341 = vmatprep.subr.bf16.mxu0 0
          %10342 = vmatpush2.bf16.msra.mxu0 %v9597
          %10343 = vmatprep.subr.bf16.mxu0 0
          %10344 = vmatpush2.bf16.msra.mxu0 %v9596
          %10345 = vmatprep.subr.bf16.mxu0 0
          %10346 = vmatpush2.bf16.msra.mxu0 %v9595
          %10347 = vmatprep.mubr.bf16.mxu0 %v7887
          %10348 = vmatmul.mubr.bf16.gmra.mxu0 %v7886
          %v10349 = vpop.f32.mrf.mxu0
          %v10350 = vadd.f32 %v10310, %v10349
          %v10351 = vpop.f32.mrf.mxu0
          %v10352 = vpop.f32.mrf.mxu0
          %v10353 = vpop.f32.mrf.mxu0
          %10354 = vdwg.mxu0
          %10355 = vmatprep.subr.bf16.mxu0 0
          %10356 = vmatpush1.bf16.msra.mxu0 %v9610
          %10357 = vmatprep.subr.bf16.mxu0 0
          %10358 = vmatpush1.bf16.msra.mxu0 %v9609
          %10359 = vmatprep.subr.bf16.mxu0 0
          %10360 = vmatpush1.bf16.msra.mxu0 %v9608
          %10361 = vmatprep.subr.bf16.mxu0 0
          %10362 = vmatpush1.bf16.msra.mxu0 %v9607
          %10363 = vmatprep.subr.bf16.mxu0 0
          %10364 = vmatpush1.bf16.msra.mxu0 %v9606
          %10365 = vmatprep.subr.bf16.mxu0 0
          %10366 = vmatpush1.bf16.msra.mxu0 %v9605
          %10367 = vmatprep.subr.bf16.mxu0 0
          %10368 = vmatpush1.bf16.msra.mxu0 %v9604
          %10369 = vmatprep.subr.bf16.mxu0 0
          %10370 = vmatpush1.bf16.msra.mxu0 %v9603
          %10371 = vmatprep.subr.bf16.mxu0 0
          %10372 = vmatpush2.bf16.msra.mxu0 %v9618
          %10373 = vmatprep.subr.bf16.mxu0 0
          %10374 = vmatpush2.bf16.msra.mxu0 %v9617
          %10375 = vmatprep.subr.bf16.mxu0 0
          %10376 = vmatpush2.bf16.msra.mxu0 %v9616
          %10377 = vmatprep.subr.bf16.mxu0 0
          %10378 = vmatpush2.bf16.msra.mxu0 %v9615
          %10379 = vmatprep.subr.bf16.mxu0 0
          %10380 = vmatpush2.bf16.msra.mxu0 %v9614
          %10381 = vmatprep.subr.bf16.mxu0 0
          %10382 = vmatpush2.bf16.msra.mxu0 %v9613
          %10383 = vmatprep.subr.bf16.mxu0 0
          %10384 = vmatpush2.bf16.msra.mxu0 %v9612
          %10385 = vmatprep.subr.bf16.mxu0 0
          %10386 = vmatpush2.bf16.msra.mxu0 %v9611
          %10387 = vmatprep.mubr.bf16.mxu0 %v7889
          %10388 = vmatmul.mubr.bf16.gmra.mxu0 %v7888
          %v10389 = vpop.f32.mrf.mxu0
          %v10390 = vadd.f32 %v10350, %v10389
          %v10391 = vpop.f32.mrf.mxu0
          %v10392 = vpop.f32.mrf.mxu0
          %v10393 = vpop.f32.mrf.mxu0
          %10394 = vdwg.mxu0
          %10395 = vmatprep.subr.bf16.mxu0 0
          %10396 = vmatpush1.bf16.msra.mxu0 %v9626
          %10397 = vmatprep.subr.bf16.mxu0 0
          %10398 = vmatpush1.bf16.msra.mxu0 %v9625
          %10399 = vmatprep.subr.bf16.mxu0 0
          %10400 = vmatpush1.bf16.msra.mxu0 %v9624
          %10401 = vmatprep.subr.bf16.mxu0 0
          %10402 = vmatpush1.bf16.msra.mxu0 %v9623
          %10403 = vmatprep.subr.bf16.mxu0 0
          %10404 = vmatpush1.bf16.msra.mxu0 %v9622
          %10405 = vmatprep.subr.bf16.mxu0 0
          %10406 = vmatpush1.bf16.msra.mxu0 %v9621
          %10407 = vmatprep.subr.bf16.mxu0 0
          %10408 = vmatpush1.bf16.msra.mxu0 %v9620
          %10409 = vmatprep.subr.bf16.mxu0 0
          %10410 = vmatpush1.bf16.msra.mxu0 %v9619
          %10411 = vmatprep.subr.bf16.mxu0 0
          %10412 = vmatpush2.bf16.msra.mxu0 %v9634
          %10413 = vmatprep.subr.bf16.mxu0 0
          %10414 = vmatpush2.bf16.msra.mxu0 %v9633
          %10415 = vmatprep.subr.bf16.mxu0 0
          %10416 = vmatpush2.bf16.msra.mxu0 %v9632
          %10417 = vmatprep.subr.bf16.mxu0 0
          %10418 = vmatpush2.bf16.msra.mxu0 %v9631
          %10419 = vmatprep.subr.bf16.mxu0 0
          %10420 = vmatpush2.bf16.msra.mxu0 %v9630
          %10421 = vmatprep.subr.bf16.mxu0 0
          %10422 = vmatpush2.bf16.msra.mxu0 %v9629
          %10423 = vmatprep.subr.bf16.mxu0 0
          %10424 = vmatpush2.bf16.msra.mxu0 %v9628
          %10425 = vmatprep.subr.bf16.mxu0 0
          %10426 = vmatpush2.bf16.msra.mxu0 %v9627
          %10427 = vmatprep.mubr.bf16.mxu0 %v7891
          %10428 = vmatmul.mubr.bf16.gmra.mxu0 %v7890
          %v10429 = vpop.f32.mrf.mxu0
          %v10430 = vadd.f32 %v10390, %v10429
          %v10431 = vpop.f32.mrf.mxu0
          %v10432 = vpop.f32.mrf.mxu0
          %v10433 = vpop.f32.mrf.mxu0
          %10434 = vdwg.mxu0
          %10435 = vmatprep.subr.bf16.mxu0 0
          %10436 = vmatpush1.bf16.msra.mxu0 %v9642
          %10437 = vmatprep.subr.bf16.mxu0 0
          %10438 = vmatpush1.bf16.msra.mxu0 %v9641
          %10439 = vmatprep.subr.bf16.mxu0 0
          %10440 = vmatpush1.bf16.msra.mxu0 %v9640
          %10441 = vmatprep.subr.bf16.mxu0 0
          %10442 = vmatpush1.bf16.msra.mxu0 %v9639
          %10443 = vmatprep.subr.bf16.mxu0 0
          %10444 = vmatpush1.bf16.msra.mxu0 %v9638
          %10445 = vmatprep.subr.bf16.mxu0 0
          %10446 = vmatpush1.bf16.msra.mxu0 %v9637
          %10447 = vmatprep.subr.bf16.mxu0 0
          %10448 = vmatpush1.bf16.msra.mxu0 %v9636
          %10449 = vmatprep.subr.bf16.mxu0 0
          %10450 = vmatpush1.bf16.msra.mxu0 %v9635
          %10451 = vmatprep.subr.bf16.mxu0 0
          %10452 = vmatpush2.bf16.msra.mxu0 %v9650
          %10453 = vmatprep.subr.bf16.mxu0 0
          %10454 = vmatpush2.bf16.msra.mxu0 %v9649
          %10455 = vmatprep.subr.bf16.mxu0 0
          %10456 = vmatpush2.bf16.msra.mxu0 %v9648
          %10457 = vmatprep.subr.bf16.mxu0 0
          %10458 = vmatpush2.bf16.msra.mxu0 %v9647
          %10459 = vmatprep.subr.bf16.mxu0 0
          %10460 = vmatpush2.bf16.msra.mxu0 %v9646
          %10461 = vmatprep.subr.bf16.mxu0 0
          %10462 = vmatpush2.bf16.msra.mxu0 %v9645
          %10463 = vmatprep.subr.bf16.mxu0 0
          %10464 = vmatpush2.bf16.msra.mxu0 %v9644
          %10465 = vmatprep.subr.bf16.mxu0 0
          %10466 = vmatpush2.bf16.msra.mxu0 %v9643
          %10467 = vmatprep.mubr.bf16.mxu0 %v7893
          %10468 = vmatmul.mubr.bf16.gmra.mxu0 %v7892
          %v10469 = vpop.f32.mrf.mxu0
          %v10470 = vadd.f32 %v10430, %v10469
          %v10471 = vpop.f32.mrf.mxu0
          %v10472 = vpop.f32.mrf.mxu0
          %v10473 = vpop.f32.mrf.mxu0
          %10474 = vdwg.mxu0
          %10475 = vmatprep.subr.bf16.mxu0 0
          %10476 = vmatpush1.bf16.msra.mxu0 %v9658
          %10477 = vmatprep.subr.bf16.mxu0 0
          %10478 = vmatpush1.bf16.msra.mxu0 %v9657
          %10479 = vmatprep.subr.bf16.mxu0 0
          %10480 = vmatpush1.bf16.msra.mxu0 %v9656
          %10481 = vmatprep.subr.bf16.mxu0 0
          %10482 = vmatpush1.bf16.msra.mxu0 %v9655
          %10483 = vmatprep.subr.bf16.mxu0 0
          %10484 = vmatpush1.bf16.msra.mxu0 %v9654
          %10485 = vmatprep.subr.bf16.mxu0 0
          %10486 = vmatpush1.bf16.msra.mxu0 %v9653
          %10487 = vmatprep.subr.bf16.mxu0 0
          %10488 = vmatpush1.bf16.msra.mxu0 %v9652
          %10489 = vmatprep.subr.bf16.mxu0 0
          %10490 = vmatpush1.bf16.msra.mxu0 %v9651
          %10491 = vmatprep.subr.bf16.mxu0 0
          %10492 = vmatpush2.bf16.msra.mxu0 %v9666
          %10493 = vmatprep.subr.bf16.mxu0 0
          %10494 = vmatpush2.bf16.msra.mxu0 %v9665
          %10495 = vmatprep.subr.bf16.mxu0 0
          %10496 = vmatpush2.bf16.msra.mxu0 %v9664
          %10497 = vmatprep.subr.bf16.mxu0 0
          %10498 = vmatpush2.bf16.msra.mxu0 %v9663
          %10499 = vmatprep.subr.bf16.mxu0 0
          %10500 = vmatpush2.bf16.msra.mxu0 %v9662
          %10501 = vmatprep.subr.bf16.mxu0 0
          %10502 = vmatpush2.bf16.msra.mxu0 %v9661
          %10503 = vmatprep.subr.bf16.mxu0 0
          %10504 = vmatpush2.bf16.msra.mxu0 %v9660
          %10505 = vmatprep.subr.bf16.mxu0 0
          %10506 = vmatpush2.bf16.msra.mxu0 %v9659
          %10507 = vmatprep.mubr.bf16.mxu0 %v7895
          %10508 = vmatmul.mubr.bf16.gmra.mxu0 %v7894
          %v10509 = vpop.f32.mrf.mxu0
          %v10510 = vadd.f32 %v10470, %v10509
          %v10511 = vpop.f32.mrf.mxu0
          %v10512 = vpop.f32.mrf.mxu0
          %v10513 = vpop.f32.mrf.mxu0
          %10514 = vdwg.mxu0
          %10515 = vmatprep.subr.bf16.mxu0 0
          %10516 = vmatpush1.bf16.msra.mxu0 %v9674
          %10517 = vmatprep.subr.bf16.mxu0 0
          %10518 = vmatpush1.bf16.msra.mxu0 %v9673
          %10519 = vmatprep.subr.bf16.mxu0 0
          %10520 = vmatpush1.bf16.msra.mxu0 %v9672
          %10521 = vmatprep.subr.bf16.mxu0 0
          %10522 = vmatpush1.bf16.msra.mxu0 %v9671
          %10523 = vmatprep.subr.bf16.mxu0 0
          %10524 = vmatpush1.bf16.msra.mxu0 %v9670
          %10525 = vmatprep.subr.bf16.mxu0 0
          %10526 = vmatpush1.bf16.msra.mxu0 %v9669
          %10527 = vmatprep.subr.bf16.mxu0 0
          %10528 = vmatpush1.bf16.msra.mxu0 %v9668
          %10529 = vmatprep.subr.bf16.mxu0 0
          %10530 = vmatpush1.bf16.msra.mxu0 %v9667
          %10531 = vmatprep.subr.bf16.mxu0 0
          %10532 = vmatpush2.bf16.msra.mxu0 %v9682
          %10533 = vmatprep.subr.bf16.mxu0 0
          %10534 = vmatpush2.bf16.msra.mxu0 %v9681
          %10535 = vmatprep.subr.bf16.mxu0 0
          %10536 = vmatpush2.bf16.msra.mxu0 %v9680
          %10537 = vmatprep.subr.bf16.mxu0 0
          %10538 = vmatpush2.bf16.msra.mxu0 %v9679
          %10539 = vmatprep.subr.bf16.mxu0 0
          %10540 = vmatpush2.bf16.msra.mxu0 %v9678
          %10541 = vmatprep.subr.bf16.mxu0 0
          %10542 = vmatpush2.bf16.msra.mxu0 %v9677
          %10543 = vmatprep.subr.bf16.mxu0 0
          %10544 = vmatpush2.bf16.msra.mxu0 %v9676
          %10545 = vmatprep.subr.bf16.mxu0 0
          %10546 = vmatpush2.bf16.msra.mxu0 %v9675
          %10547 = vmatprep.mubr.bf16.mxu0 %v7897
          %10548 = vmatmul.mubr.bf16.gmra.mxu0 %v7896
          %v10549 = vpop.f32.mrf.mxu0
          %v10550 = vadd.f32 %v10510, %v10549
          %v10551 = vpop.f32.mrf.mxu0
          %v10552 = vpop.f32.mrf.mxu0
          %v10553 = vpop.f32.mrf.mxu0
          %10554 = vdwg.mxu0
          %10555 = vmatprep.subr.bf16.mxu0 0
          %10556 = vmatpush1.bf16.msra.mxu0 %v9690
          %10557 = vmatprep.subr.bf16.mxu0 0
          %10558 = vmatpush1.bf16.msra.mxu0 %v9689
          %10559 = vmatprep.subr.bf16.mxu0 0
          %10560 = vmatpush1.bf16.msra.mxu0 %v9688
          %10561 = vmatprep.subr.bf16.mxu0 0
          %10562 = vmatpush1.bf16.msra.mxu0 %v9687
          %10563 = vmatprep.subr.bf16.mxu0 0
          %10564 = vmatpush1.bf16.msra.mxu0 %v9686
          %10565 = vmatprep.subr.bf16.mxu0 0
          %10566 = vmatpush1.bf16.msra.mxu0 %v9685
          %10567 = vmatprep.subr.bf16.mxu0 0
          %10568 = vmatpush1.bf16.msra.mxu0 %v9684
          %10569 = vmatprep.subr.bf16.mxu0 0
          %10570 = vmatpush1.bf16.msra.mxu0 %v9683
          %10571 = vmatprep.subr.bf16.mxu0 0
          %10572 = vmatpush2.bf16.msra.mxu0 %v9698
          %10573 = vmatprep.subr.bf16.mxu0 0
          %10574 = vmatpush2.bf16.msra.mxu0 %v9697
          %10575 = vmatprep.subr.bf16.mxu0 0
          %10576 = vmatpush2.bf16.msra.mxu0 %v9696
          %10577 = vmatprep.subr.bf16.mxu0 0
          %10578 = vmatpush2.bf16.msra.mxu0 %v9695
          %10579 = vmatprep.subr.bf16.mxu0 0
          %10580 = vmatpush2.bf16.msra.mxu0 %v9694
          %10581 = vmatprep.subr.bf16.mxu0 0
          %10582 = vmatpush2.bf16.msra.mxu0 %v9693
          %10583 = vmatprep.subr.bf16.mxu0 0
          %10584 = vmatpush2.bf16.msra.mxu0 %v9692
          %10585 = vmatprep.subr.bf16.mxu0 0
          %10586 = vmatpush2.bf16.msra.mxu0 %v9691
          %10587 = vmatprep.mubr.bf16.mxu0 %v7899
          %10588 = vmatmul.mubr.bf16.gmra.mxu0 %v7898
          %v10589 = vpop.f32.mrf.mxu0
          %v10590 = vadd.f32 %v10550, %v10589
          %v10591 = vpop.f32.mrf.mxu0
          %v10592 = vpop.f32.mrf.mxu0
          %v10593 = vpop.f32.mrf.mxu0
          %10594 = vdwg.mxu0
          %10595 = vst [vmem:[%s4] sm:$0xff] %v10590
        $region48: #{eco_snn_forward.4} parent=35 // pred_fallthru
          _
        // Predicated region
        $region49: #{eco_snn_forward.4} parent=35 // pred_check
          %p10596 = pneg %p125
        $region50: #{eco_snn_forward.4} parent=35 // pred_check_branch
          %10598 = sbr.rel (%p10596) target = $region52
        $region51: #{eco_snn_forward.4} parent=35 // pred_region
          _
        $region52: #{eco_snn_forward.4} parent=35 // pred_fallthru
          _
        // Predicated region
        $region53: #{eco_snn_forward.4} parent=35 // pred_check
          %p10599 = pneg %p125
        $region54: #{eco_snn_forward.4} parent=35 // pred_check_branch
          %10601 = sbr.rel (%p10599) target = $region56
        $region55: #{eco_snn_forward.4} parent=35 // pred_region
          _
        $region56: #{eco_snn_forward.4} parent=35 // pred_fallthru
          _
      $region36: #{eco_snn_forward.4} parent=5 // pred_fallthru
        _
      %p10602 = scmp.le.s32.totalorder 2, %s13
      // Predicated region
      $region57: #{eco_snn_forward.4} parent=5 // pred_check
        %p10603 = pneg %p10602
      $region58: #{eco_snn_forward.4} parent=5 // pred_check_branch
        %10605 = sbr.rel (%p10603) target = $region60
      $region59: #{eco_snn_forward.4} parent=5 // pred_region
        %s10606 = ssub.s32 %s13, 2
      $region60: #{eco_snn_forward.4} parent=5 // pred_fallthru
        _
    $region6: #{eco_snn_forward.4} parent=1 // loop_footer
      %s17 = sadd.s32 1, %s13
    $region7: #{eco_snn_forward.4} parent=1 // loop_footer_branch
      %12 = sbr.rel target = $region3
    $region8: #{eco_snn_forward.4} parent=1 // loop_exit
      _
    %10607 = vsyncpa [#allocation4], 1
    %s10608 = scalar_lea.sflag [#allocation4], 1
    %10609 = vsyncpa %s10608, 1

</llo_original>
